<compile_context>
chip_gen: v5e
topology: v5e:2x2
jax: 0.10.0
libtpu: 0.0.40
codegen_flags: <defaults>
</compile_context>

<pallas_src>
import jax
import jax.numpy as jnp
from jax import lax
from jax.experimental import pallas as pl
from jax.experimental.pallas import tpu as pltpu

# ---------------- small config consistent with OadTransformer ----------------
B = 2
NUM_TOKENS = 8
ENC_DIM = 32
DEC_DIM = 32          # must equal ENC_DIM (decoder layernorms consume encoder output)
ENC_HEADS = 8
DEC_HEADS = 4
ENC_LAYERS = 2
DEC_LAYERS = 2
MLP_RATIO = 4.0
QUERY_FRAMES = 8      # decoder_query_frames
NUM_CLASS = 10
SEQ_LEN = NUM_TOKENS + 1              # + class token (appended at the END: torch.cat((x, cls)))
HIDDEN_DIM = int(ENC_DIM * MLP_RATIO)
LN_EPS = 1e-5
_MXU_DT = jnp.bfloat16                # MXU operand dtype; accumulation stays f32

# -------- canonical flat parameter order handed to the fused kernel --------
_GLOBAL_KEYS = ("cls_token", "enc_pos", "dec_cls", "pre_ln_g", "pre_ln_b",
                "cls_w", "cls_b", "head_w_enc", "head_w_dec", "head_b")
_ENC_KEYS = ("ln1_g", "ln1_b", "wqkv", "bqkv", "wo", "bo",
             "ln2_g", "ln2_b", "w1", "b1", "w2", "b2")
_DEC_KEYS = ("n1_g", "n1_b",
             "sa_wqkv", "sa_bqkv", "sa_wo", "sa_bo",
             "n3_g", "n3_b", "n3y_g", "n3y_b",
             "ca_wq", "ca_bq", "ca_wkv", "ca_bkv", "ca_wo", "ca_bo",
             "n2_g", "n2_b", "w1", "b1", "w2", "b2")
_PARAM_ORDER = (_GLOBAL_KEYS
                + tuple("enc_" + k for k in _ENC_KEYS)
                + tuple("dec_" + k for k in _DEC_KEYS))
# matmul weight matrices get cast to bf16; biases / LN params / pos-enc stay f32
_WEIGHT_KEYS = frozenset(
    ["cls_w", "head_w_enc", "head_w_dec"]
    + ["enc_" + k for k in ("wqkv", "wo", "w1", "w2")]
    + ["dec_" + k for k in ("sa_wqkv", "sa_wo", "ca_wq", "ca_wkv", "ca_wo", "w1", "w2")])


# =========================== in-kernel building blocks ===========================

def _ln(x, g, b):
    mu = jnp.mean(x, axis=-1, keepdims=True)
    xc = x - mu
    var = jnp.mean(xc * xc, axis=-1, keepdims=True)
    return xc * lax.rsqrt(var + LN_EPS) * g + b


def _erf(x):
    # Abramowitz & Stegun 7.1.26 (|err| < 1.5e-7).  Uses only mul/add/div/exp so it is
    # guaranteed to lower on Mosaic (lax.erf has no TPU lowering rule); exp goes to the EUP.
    a1, a2, a3, a4, a5 = 0.254829592, -0.284496736, 1.421413741, -1.453152027, 1.061405429
    pc = 0.3275911
    ax = jnp.abs(x)
    t = 1.0 / (1.0 + pc * ax)
    poly = ((((a5 * t + a4) * t + a3) * t + a2) * t + a1) * t
    y = 1.0 - poly * jnp.exp(-ax * ax)
    return jnp.where(x >= 0, y, -y)


def _gelu(x):
    # exact (erf-based) GELU, matching torch.nn.GELU() default; f32 on VPU/EUP.
    return 0.5 * x * (1.0 + _erf(x * 0.7071067811865476))


def _mlp(x, w1, b1, w2, b2):
    h = jnp.dot(x.astype(_MXU_DT), w1, preferred_element_type=jnp.float32) + b1
    h = _gelu(h)
    return jnp.dot(h.astype(_MXU_DT), w2, preferred_element_type=jnp.float32) + b2


def _attend(q, k, v, wo, bo, *, num_heads, mask):
    """Per-head score/softmax/AV on static lane slices, single fused output projection.
    softmax scale must already be folded into q (safe w.r.t. the -inf mask)."""
    N, D = q.shape
    hd = D // num_heads
    qk_t = (((1,), (1,)), ((), ()))            # contract last dims: Q @ K^T
    heads = []
    for h in range(num_heads):
        lo = h * hd
        qh = q[:, lo:lo + hd].astype(_MXU_DT)
        kh = k[:, lo:lo + hd].astype(_MXU_DT)
        vh = v[:, lo:lo + hd].astype(_MXU_DT)
        s = lax.dot_general(qh, kh, qk_t, preferred_element_type=jnp.float32)   # (N, M)
        if mask is not None:
            s = jnp.where(mask, -jnp.inf, s)   # masked_fill(-inf), as in the reference
        s = s - jnp.max(s, axis=-1, keepdims=True)
        e = jnp.exp(s)
        denom = jnp.sum(e, axis=-1, keepdims=True)
        oh = jnp.dot(e.astype(_MXU_DT), vh, preferred_element_type=jnp.float32)  # (N, hd)
        # 1/sum deferred onto (P @ V); approx reciprocal goes to the EUP slot.
        heads.append(oh * pl.reciprocal(denom, approx=True))
    o = jnp.concatenate(heads, axis=-1).astype(_MXU_DT)                          # (N, D)
    return jnp.dot(o, wo, preferred_element_type=jnp.float32) + bo


def _self_attn(x, wqkv, bqkv, wo, bo, *, num_heads, scale, mask):
    D = x.shape[-1]
    qkv = jnp.dot(x.astype(_MXU_DT), wqkv, preferred_element_type=jnp.float32) + bqkv
    q = qkv[:, :D] * scale
    k = qkv[:, D:2 * D]
    v = qkv[:, 2 * D:]
    return _attend(q, k, v, wo, bo, num_heads=num_heads, mask=mask)


def _cross_attn(xq, xkv, wq, bq, wkv, bkv, wo, bo, *, num_heads, scale):
    D = xq.shape[-1]
    q = (jnp.dot(xq.astype(_MXU_DT), wq, preferred_element_type=jnp.float32) + bq) * scale
    kv = jnp.dot(xkv.astype(_MXU_DT), wkv, preferred_element_type=jnp.float32) + bkv
    k = kv[:, :D]
    v = kv[:, D:]
    return _attend(q, k, v, wo, bo, num_heads=num_heads, mask=None)


# ================================ fused forward kernel ================================

def _fused_forward_kernel(x_ref, *rest):
    n_p = len(_PARAM_ORDER)
    p = dict(zip(_PARAM_ORDER, rest[:n_p]))
    out_ref = rest[n_p]

    # ---- encoder: append class token at the END (matches reference), add pos enc ----
    xs = jnp.concatenate([x_ref[0], p["cls_token"][...]], axis=0) + p["enc_pos"][...]
    enc_scale = (ENC_DIM // ENC_HEADS) ** -0.5
    for l in range(ENC_LAYERS):
        h = _ln(xs, p["enc_ln1_g"][l], p["enc_ln1_b"][l])
        xs = xs + _self_attn(h, p["enc_wqkv"][l], p["enc_bqkv"][l],
                             p["enc_wo"][l], p["enc_bo"][l],
                             num_heads=ENC_HEADS, scale=enc_scale, mask=None)
        h = _ln(xs, p["enc_ln2_g"][l], p["enc_ln2_b"][l])
        xs = xs + _mlp(h, p["enc_w1"][l], p["enc_b1"][l], p["enc_w2"][l], p["enc_b2"][l])
    xs = _ln(xs, p["pre_ln_g"][...], p["pre_ln_b"][...])         # pre_head_ln

    # ---- decoder: causal self-attn, cross-attn over encoder memory, MLP ----
    dq = p["dec_cls"][...]                                       # (Q, D) decoder_cls_token
    row = lax.broadcasted_iota(jnp.int32, (QUERY_FRAMES, QUERY_FRAMES), 0)
    col = lax.broadcasted_iota(jnp.int32, (QUERY_FRAMES, QUERY_FRAMES), 1)
    causal = col > row                                           # strictly-upper == masked
    dec_scale = (DEC_DIM // DEC_HEADS) ** -0.5
    for l in range(DEC_LAYERS):
        hq = _ln(dq, p["dec_n1_g"][l], p["dec_n1_b"][l])
        # norm1_y(y) is computed in the reference but unused (cross_attn_flag=False).
        dq = dq + _self_attn(hq, p["dec_sa_wqkv"][l], p["dec_sa_bqkv"][l],
                             p["dec_sa_wo"][l], p["dec_sa_bo"][l],
                             num_heads=DEC_HEADS, scale=dec_scale, mask=causal)
        hq = _ln(dq, p["dec_n3_g"][l], p["dec_n3_b"][l])
        hy = _ln(xs, p["dec_n3y_g"][l], p["dec_n3y_b"][l])
        dq = dq + _cross_attn(hq, hy,
                              p["dec_ca_wq"][l], p["dec_ca_bq"][l],
                              p["dec_ca_wkv"][l], p["dec_ca_bkv"][l],
                              p["dec_ca_wo"][l], p["dec_ca_bo"][l],
                              num_heads=DEC_HEADS, scale=dec_scale)
        h = _ln(dq, p["dec_n2_g"][l], p["dec_n2_b"][l])
        dq = dq + _mlp(h, p["dec_w1"][l], p["dec_b1"][l], p["dec_w2"][l], p["dec_b2"][l])
    # after_dropout = identity (eval)

    # ---- fused epilogue: classifier over decoder tokens + fused mlp_head ----
    dec_mean = jnp.mean(dq, axis=0, keepdims=True)               # (1, D)
    dec_cls_out = (jnp.dot(dq.astype(_MXU_DT), p["cls_w"][...],
                           preferred_element_type=jnp.float32) + p["cls_b"][...])
    x_last = xs[SEQ_LEN - 1:SEQ_LEN, :]                          # class-token row x[:, -1]
    # cat((x[:, -1], dec_for_token)) @ head_w  ==  split matmuls (avoids a lane concat)
    logits = (jnp.dot(x_last.astype(_MXU_DT), p["head_w_enc"][...],
                      preferred_element_type=jnp.float32)
              + jnp.dot(dec_mean.astype(_MXU_DT), p["head_w_dec"][...],
                        preferred_element_type=jnp.float32)
              + p["head_b"][...])
    # eval-mode return torch.cat((x.unsqueeze(1), dec_cls_out), dim=1) fused into one store
    out_ref[0] = jnp.concatenate([logits, dec_cls_out], axis=0).astype(out_ref.dtype)


# ============================ parameter initialization ============================

def _init_linear(key, din, dout):
    kw, kb = jax.random.split(key)
    w = jax.random.normal(kw, (din, dout), jnp.float32) * 0.02
    b = jax.random.normal(kb, (1, dout), jnp.float32) * 0.02
    return w, b


def init_params(key):
    keys = jax.random.split(key, 8)
    p = {}
    p["cls_token"] = jax.random.normal(keys[0], (1, ENC_DIM), jnp.float32) * 0.02
    p["enc_pos"] = jax.random.normal(keys[1], (SEQ_LEN, ENC_DIM), jnp.float32) * 0.02
    p["dec_cls"] = jax.random.normal(keys[2], (QUERY_FRAMES, DEC_DIM), jnp.float32) * 0.02
    p["pre_ln_g"] = jnp.ones((1, ENC_DIM), jnp.float32)
    p["pre_ln_b"] = jnp.zeros((1, ENC_DIM), jnp.float32)

    ones = jnp.ones((1, ENC_DIM), jnp.float32)
    zeros = jnp.zeros((1, ENC_DIM), jnp.float32)

    enc_layers = []
    for lk in jax.random.split(keys[3], ENC_LAYERS):
        k1, k2, k3 = jax.random.split(lk, 3)
        wqkv, bqkv = _init_linear(k1, ENC_DIM, 3 * ENC_DIM)   # fused qkv Linear (qkv_bias=True)
        wo, bo = _init_linear(k2, ENC_DIM, ENC_DIM)
        kw1, kw2 = jax.random.split(k3)
        w1, b1 = _init_linear(kw1, ENC_DIM, HIDDEN_DIM)
        w2, b2 = _init_linear(kw2, HIDDEN_DIM, ENC_DIM)
        enc_layers.append(dict(ln1_g=ones, ln1_b=zeros, wqkv=wqkv, bqkv=bqkv,
                               wo=wo, bo=bo, ln2_g=ones, ln2_b=zeros,
                               w1=w1, b1=b1, w2=w2, b2=b2))
    for k in _ENC_KEYS:
        p["enc_" + k] = jnp.stack([lyr[k] for lyr in enc_layers], axis=0)

    dec_layers = []
    for lk in jax.random.split(keys[4], DEC_LAYERS):
        ks = jax.random.split(lk, 10)
        sa_wq, sa_bq = _init_linear(ks[0], DEC_DIM, DEC_DIM)
        sa_wk, sa_bk = _init_linear(ks[1], DEC_DIM, DEC_DIM)
        sa_wv, sa_bv = _init_linear(ks[2], DEC_DIM, DEC_DIM)
        sa_wo, sa_bo = _init_linear(ks[3], DEC_DIM, DEC_DIM)
        ca_wq, ca_bq = _init_linear(ks[4], DEC_DIM, DEC_DIM)
        ca_wk, ca_bk = _init_linear(ks[5], DEC_DIM, DEC_DIM)
        ca_wv, ca_bv = _init_linear(ks[6], DEC_DIM, DEC_DIM)
        ca_wo, ca_bo = _init_linear(ks[7], DEC_DIM, DEC_DIM)
        w1, b1 = _init_linear(ks[8], DEC_DIM, HIDDEN_DIM)
        w2, b2 = _init_linear(ks[9], HIDDEN_DIM, DEC_DIM)
        dec_layers.append(dict(
            n1_g=ones, n1_b=zeros,
            sa_wqkv=jnp.concatenate([sa_wq, sa_wk, sa_wv], axis=1),   # pack separate q/k/v Linears
            sa_bqkv=jnp.concatenate([sa_bq, sa_bk, sa_bv], axis=1),
            sa_wo=sa_wo, sa_bo=sa_bo,
            n3_g=ones, n3_b=zeros, n3y_g=ones, n3y_b=zeros,
            ca_wq=ca_wq, ca_bq=ca_bq,
            ca_wkv=jnp.concatenate([ca_wk, ca_wv], axis=1),
            ca_bkv=jnp.concatenate([ca_bk, ca_bv], axis=1),
            ca_wo=ca_wo, ca_bo=ca_bo,
            n2_g=ones, n2_b=zeros,
            w1=w1, b1=b1, w2=w2, b2=b2))
    for k in _DEC_KEYS:
        p["dec_" + k] = jnp.stack([lyr[k] for lyr in dec_layers], axis=0)

    p["cls_w"], p["cls_b"] = _init_linear(keys[5], DEC_DIM, NUM_CLASS)
    head_w, head_b = _init_linear(keys[6], ENC_DIM + DEC_DIM, NUM_CLASS)
    p["head_w_enc"] = head_w[:ENC_DIM]       # split so the kernel never lane-concats (1, 2D)
    p["head_w_dec"] = head_w[ENC_DIM:]
    p["head_b"] = head_b
    return p


# ================================ wrapper ================================

def _const_index_map(ndim):
    return lambda b: (0,) * ndim


def _cost_estimate(batch, operands):
    d, hid, s, q, c = ENC_DIM, HIDDEN_DIM, SEQ_LEN, QUERY_FRAMES, NUM_CLASS
    enc = ENC_LAYERS * (8 * s * d * d + 4 * s * s * d + 4 * s * d * hid)
    dec = DEC_LAYERS * (8 * q * d * d + 4 * q * q * d
                        + 4 * q * d * d + 4 * s * d * d + 4 * q * s * d
                        + 4 * q * d * hid)
    head = 2 * q * d * c + 4 * d * c
    trans = (ENC_LAYERS * (ENC_HEADS * s * s + s * hid)
             + DEC_LAYERS * (DEC_HEADS * (q * q + q * s) + q * hid))
    param_bytes = sum(int(o.size) * o.dtype.itemsize for o in operands)
    io_bytes = batch * (NUM_TOKENS * d + (1 + q) * c) * 4
    return pl.CostEstimate(flops=int(batch * (enc + dec + head)),
                           transcendentals=int(batch * trans),
                           bytes_accessed=int(param_bytes + io_bytes))


@jax.jit
def oad_transformer_forward(x, params):
    """Eval-mode forward (zero_shot=False): dropout / drop-path are identity.
    The whole network is one fused pallas_call; only one (B, 1+Q, num_class) slab hits HBM."""
    Bb = x.shape[0]
    operands = [params[k].astype(_MXU_DT) if k in _WEIGHT_KEYS else params[k]
                for k in _PARAM_ORDER]
    in_specs = ([pl.BlockSpec((1, NUM_TOKENS, ENC_DIM), lambda b: (b, 0, 0))]
                + [pl.BlockSpec(op.shape, _const_index_map(op.ndim)) for op in operands])
    out_shape = jax.ShapeDtypeStruct((Bb, 1 + QUERY_FRAMES, NUM_CLASS), jnp.float32)
    out_specs = pl.BlockSpec((1, 1 + QUERY_FRAMES, NUM_CLASS), lambda b: (b, 0, 0))
    out = pl.pallas_call(
        _fused_forward_kernel,
        out_shape=out_shape,
        grid=(Bb,),
        in_specs=in_specs,
        out_specs=out_specs,
        compiler_params=pltpu.CompilerParams(dimension_semantics=("parallel",)),
        cost_estimate=_cost_estimate(Bb, operands),
    )(x, *operands)
    # not training: torch.cat((x.unsqueeze(1), dec_cls_out), dim=1) already fused -> (B, 1+Q, C)
    return out
    # TODO(synk): training-mode branch (CrossEntropyLoss dict) and zero_shot branch not implemented.


if __name__ == "__main__":
    key = jax.random.PRNGKey(0)
    kx, kp = jax.random.split(key)
    x = jax.random.normal(kx, (B, NUM_TOKENS, ENC_DIM), jnp.float32)
    params = init_params(kp)
    out = oad_transformer_forward(x, params)
    out = jax.block_until_ready(out)
    assert out.shape == (B, 1 + QUERY_FRAMES, NUM_CLASS), out.shape
    assert bool(jnp.all(jnp.isfinite(out)))
    print("KERNEL_OK")
</pallas_src>

<mosaic_0001>
module attributes {stable_mosaic.version = 11 : i64} {
  func.func @_fused_forward_kernel(%arg0: i32, %arg1: memref<1x8x32xf32, #tpu.memory_space<vmem>>, %arg2: memref<1x32xf32, #tpu.memory_space<vmem>>, %arg3: memref<9x32xf32, #tpu.memory_space<vmem>>, %arg4: memref<8x32xf32, #tpu.memory_space<vmem>>, %arg5: memref<1x32xf32, #tpu.memory_space<vmem>>, %arg6: memref<1x32xf32, #tpu.memory_space<vmem>>, %arg7: memref<32x10xbf16, #tpu.memory_space<vmem>>, %arg8: memref<1x10xf32, #tpu.memory_space<vmem>>, %arg9: memref<32x10xbf16, #tpu.memory_space<vmem>>, %arg10: memref<32x10xbf16, #tpu.memory_space<vmem>>, %arg11: memref<1x10xf32, #tpu.memory_space<vmem>>, %arg12: memref<2x1x32xf32, #tpu.memory_space<vmem>>, %arg13: memref<2x1x32xf32, #tpu.memory_space<vmem>>, %arg14: memref<2x32x96xbf16, #tpu.memory_space<vmem>>, %arg15: memref<2x1x96xf32, #tpu.memory_space<vmem>>, %arg16: memref<2x32x32xbf16, #tpu.memory_space<vmem>>, %arg17: memref<2x1x32xf32, #tpu.memory_space<vmem>>, %arg18: memref<2x1x32xf32, #tpu.memory_space<vmem>>, %arg19: memref<2x1x32xf32, #tpu.memory_space<vmem>>, %arg20: memref<2x32x128xbf16, #tpu.memory_space<vmem>>, %arg21: memref<2x1x128xf32, #tpu.memory_space<vmem>>, %arg22: memref<2x128x32xbf16, #tpu.memory_space<vmem>>, %arg23: memref<2x1x32xf32, #tpu.memory_space<vmem>>, %arg24: memref<2x1x32xf32, #tpu.memory_space<vmem>>, %arg25: memref<2x1x32xf32, #tpu.memory_space<vmem>>, %arg26: memref<2x32x96xbf16, #tpu.memory_space<vmem>>, %arg27: memref<2x1x96xf32, #tpu.memory_space<vmem>>, %arg28: memref<2x32x32xbf16, #tpu.memory_space<vmem>>, %arg29: memref<2x1x32xf32, #tpu.memory_space<vmem>>, %arg30: memref<2x1x32xf32, #tpu.memory_space<vmem>>, %arg31: memref<2x1x32xf32, #tpu.memory_space<vmem>>, %arg32: memref<2x1x32xf32, #tpu.memory_space<vmem>>, %arg33: memref<2x1x32xf32, #tpu.memory_space<vmem>>, %arg34: memref<2x32x32xbf16, #tpu.memory_space<vmem>>, %arg35: memref<2x1x32xf32, #tpu.memory_space<vmem>>, %arg36: memref<2x32x64xbf16, #tpu.memory_space<vmem>>, %arg37: memref<2x1x64xf32, #tpu.memory_space<vmem>>, %arg38: memref<2x32x32xbf16, #tpu.memory_space<vmem>>, %arg39: memref<2x1x32xf32, #tpu.memory_space<vmem>>, %arg40: memref<2x1x32xf32, #tpu.memory_space<vmem>>, %arg41: memref<2x1x32xf32, #tpu.memory_space<vmem>>, %arg42: memref<2x32x128xbf16, #tpu.memory_space<vmem>>, %arg43: memref<2x1x128xf32, #tpu.memory_space<vmem>>, %arg44: memref<2x128x32xbf16, #tpu.memory_space<vmem>>, %arg45: memref<2x1x32xf32, #tpu.memory_space<vmem>>, %arg46: memref<1x9x10xf32, #tpu.memory_space<vmem>>) attributes {dimension_semantics = [#tpu.dimension_semantics<parallel>], iteration_bounds = array<i64: 2>, scalar_prefetch = 0 : i64, scratch_operands = 0 : i64, tpu.core_type = #tpu.core_type<tc>, window_params = [{transform_indices = @transform_0, window_bounds = array<i64: 1, 8, 32>}, {pipeline_mode = #tpu.pipeline_mode<synchronous>, transform_indices = @transform_1, window_bounds = array<i64: 1, 32>}, {pipeline_mode = #tpu.pipeline_mode<synchronous>, transform_indices = @transform_2, window_bounds = array<i64: 9, 32>}, {pipeline_mode = #tpu.pipeline_mode<synchronous>, transform_indices = @transform_3, window_bounds = array<i64: 8, 32>}, {pipeline_mode = #tpu.pipeline_mode<synchronous>, transform_indices = @transform_4, window_bounds = array<i64: 1, 32>}, {pipeline_mode = #tpu.pipeline_mode<synchronous>, transform_indices = @transform_5, window_bounds = array<i64: 1, 32>}, {pipeline_mode = #tpu.pipeline_mode<synchronous>, transform_indices = @transform_6, window_bounds = array<i64: 32, 10>}, {pipeline_mode = #tpu.pipeline_mode<synchronous>, transform_indices = @transform_7, window_bounds = array<i64: 1, 10>}, {pipeline_mode = #tpu.pipeline_mode<synchronous>, transform_indices = @transform_8, window_bounds = array<i64: 32, 10>}, {pipeline_mode = #tpu.pipeline_mode<synchronous>, transform_indices = @transform_9, window_bounds = array<i64: 32, 10>}, {pipeline_mode = #tpu.pipeline_mode<synchronous>, transform_indices = @transform_10, window_bounds = array<i64: 1, 10>}, {pipeline_mode = #tpu.pipeline_mode<synchronous>, transform_indices = @transform_11, window_bounds = array<i64: 2, 1, 32>}, {pipeline_mode = #tpu.pipeline_mode<synchronous>, transform_indices = @transform_12, window_bounds = array<i64: 2, 1, 32>}, {pipeline_mode = #tpu.pipeline_mode<synchronous>, transform_indices = @transform_13, window_bounds = array<i64: 2, 32, 96>}, {pipeline_mode = #tpu.pipeline_mode<synchronous>, transform_indices = @transform_14, window_bounds = array<i64: 2, 1, 96>}, {pipeline_mode = #tpu.pipeline_mode<synchronous>, transform_indices = @transform_15, window_bounds = array<i64: 2, 32, 32>}, {pipeline_mode = #tpu.pipeline_mode<synchronous>, transform_indices = @transform_16, window_bounds = array<i64: 2, 1, 32>}, {pipeline_mode = #tpu.pipeline_mode<synchronous>, transform_indices = @transform_17, window_bounds = array<i64: 2, 1, 32>}, {pipeline_mode = #tpu.pipeline_mode<synchronous>, transform_indices = @transform_18, window_bounds = array<i64: 2, 1, 32>}, {pipeline_mode = #tpu.pipeline_mode<synchronous>, transform_indices = @transform_19, window_bounds = array<i64: 2, 32, 128>}, {pipeline_mode = #tpu.pipeline_mode<synchronous>, transform_indices = @transform_20, window_bounds = array<i64: 2, 1, 128>}, {pipeline_mode = #tpu.pipeline_mode<synchronous>, transform_indices = @transform_21, window_bounds = array<i64: 2, 128, 32>}, {pipeline_mode = #tpu.pipeline_mode<synchronous>, transform_indices = @transform_22, window_bounds = array<i64: 2, 1, 32>}, {pipeline_mode = #tpu.pipeline_mode<synchronous>, transform_indices = @transform_23, window_bounds = array<i64: 2, 1, 32>}, {pipeline_mode = #tpu.pipeline_mode<synchronous>, transform_indices = @transform_24, window_bounds = array<i64: 2, 1, 32>}, {pipeline_mode = #tpu.pipeline_mode<synchronous>, transform_indices = @transform_25, window_bounds = array<i64: 2, 32, 96>}, {pipeline_mode = #tpu.pipeline_mode<synchronous>, transform_indices = @transform_26, window_bounds = array<i64: 2, 1, 96>}, {pipeline_mode = #tpu.pipeline_mode<synchronous>, transform_indices = @transform_27, window_bounds = array<i64: 2, 32, 32>}, {pipeline_mode = #tpu.pipeline_mode<synchronous>, transform_indices = @transform_28, window_bounds = array<i64: 2, 1, 32>}, {pipeline_mode = #tpu.pipeline_mode<synchronous>, transform_indices = @transform_29, window_bounds = array<i64: 2, 1, 32>}, {pipeline_mode = #tpu.pipeline_mode<synchronous>, transform_indices = @transform_30, window_bounds = array<i64: 2, 1, 32>}, {pipeline_mode = #tpu.pipeline_mode<synchronous>, transform_indices = @transform_31, window_bounds = array<i64: 2, 1, 32>}, {pipeline_mode = #tpu.pipeline_mode<synchronous>, transform_indices = @transform_32, window_bounds = array<i64: 2, 1, 32>}, {pipeline_mode = #tpu.pipeline_mode<synchronous>, transform_indices = @transform_33, window_bounds = array<i64: 2, 32, 32>}, {pipeline_mode = #tpu.pipeline_mode<synchronous>, transform_indices = @transform_34, window_bounds = array<i64: 2, 1, 32>}, {pipeline_mode = #tpu.pipeline_mode<synchronous>, transform_indices = @transform_35, window_bounds = array<i64: 2, 32, 64>}, {pipeline_mode = #tpu.pipeline_mode<synchronous>, transform_indices = @transform_36, window_bounds = array<i64: 2, 1, 64>}, {pipeline_mode = #tpu.pipeline_mode<synchronous>, transform_indices = @transform_37, window_bounds = array<i64: 2, 32, 32>}, {pipeline_mode = #tpu.pipeline_mode<synchronous>, transform_indices = @transform_38, window_bounds = array<i64: 2, 1, 32>}, {pipeline_mode = #tpu.pipeline_mode<synchronous>, transform_indices = @transform_39, window_bounds = array<i64: 2, 1, 32>}, {pipeline_mode = #tpu.pipeline_mode<synchronous>, transform_indices = @transform_40, window_bounds = array<i64: 2, 1, 32>}, {pipeline_mode = #tpu.pipeline_mode<synchronous>, transform_indices = @transform_41, window_bounds = array<i64: 2, 32, 128>}, {pipeline_mode = #tpu.pipeline_mode<synchronous>, transform_indices = @transform_42, window_bounds = array<i64: 2, 1, 128>}, {pipeline_mode = #tpu.pipeline_mode<synchronous>, transform_indices = @transform_43, window_bounds = array<i64: 2, 128, 32>}, {pipeline_mode = #tpu.pipeline_mode<synchronous>, transform_indices = @transform_44, window_bounds = array<i64: 2, 1, 32>}, {transform_indices = @transform_45, window_bounds = array<i64: 1, 9, 10>}]} {
    %c0 = arith.constant 0 : index
    %c0_0 = arith.constant 0 : index
    %c0_1 = arith.constant 0 : index
    %0 = vector.load %arg1[%c0, %c0_0, %c0_1] : memref<1x8x32xf32, #tpu.memory_space<vmem>>, vector<1x8x32xf32>
    %1 = vector.shape_cast %0 : vector<1x8x32xf32> to vector<8x32xf32>
    %c0_2 = arith.constant 0 : index
    %c0_3 = arith.constant 0 : index
    %2 = vector.load %arg2[%c0_2, %c0_3] : memref<1x32xf32, #tpu.memory_space<vmem>>, vector<1x32xf32>
    %3 = tpu.concatenate %1, %2 in 0 : vector<8x32xf32>, vector<1x32xf32> -> vector<9x32xf32>
    %c0_4 = arith.constant 0 : index
    %c0_5 = arith.constant 0 : index
    %4 = vector.load %arg3[%c0_4, %c0_5] : memref<9x32xf32, #tpu.memory_space<vmem>>, vector<9x32xf32>
    %5 = arith.addf %3, %4 : vector<9x32xf32>
    %c0_6 = arith.constant 0 : index
    %c0_7 = arith.constant 0 : index
    %c0_8 = arith.constant 0 : index
    %6 = vector.load %arg12[%c0_6, %c0_7, %c0_8] : memref<2x1x32xf32, #tpu.memory_space<vmem>>, vector<1x1x32xf32>
    %7 = vector.shape_cast %6 : vector<1x1x32xf32> to vector<1x32xf32>
    %c0_9 = arith.constant 0 : index
    %c0_10 = arith.constant 0 : index
    %c0_11 = arith.constant 0 : index
    %8 = vector.load %arg13[%c0_9, %c0_10, %c0_11] : memref<2x1x32xf32, #tpu.memory_space<vmem>>, vector<1x1x32xf32>
    %9 = vector.shape_cast %8 : vector<1x1x32xf32> to vector<1x32xf32>
    %cst = arith.constant dense<0.000000e+00> : vector<9xf32>
    %10 = vector.multi_reduction <add>, %5, %cst [1] : vector<9x32xf32> to vector<9xf32>
    %11 = vector.shape_cast %10 : vector<9xf32> to vector<9x1xf32>
    %cst_12 = arith.constant 3.200000e+01 : f32
    %12 = vector.broadcast %cst_12 : f32 to vector<9x1xf32>
    %13 = arith.divf %11, %12 : vector<9x1xf32>
    %14 = vector.broadcast %13 : vector<9x1xf32> to vector<9x32xf32>
    %15 = arith.subf %5, %14 : vector<9x32xf32>
    %16 = arith.mulf %15, %15 : vector<9x32xf32>
    %cst_13 = arith.constant dense<0.000000e+00> : vector<9xf32>
    %17 = vector.multi_reduction <add>, %16, %cst_13 [1] : vector<9x32xf32> to vector<9xf32>
    %18 = vector.shape_cast %17 : vector<9xf32> to vector<9x1xf32>
    %cst_14 = arith.constant 3.200000e+01 : f32
    %19 = vector.broadcast %cst_14 : f32 to vector<9x1xf32>
    %20 = arith.divf %18, %19 : vector<9x1xf32>
    %cst_15 = arith.constant 9.99999974E-6 : f32
    %21 = vector.broadcast %cst_15 : f32 to vector<9x1xf32>
    %22 = arith.addf %20, %21 : vector<9x1xf32>
    %23 = math.rsqrt %22 : vector<9x1xf32>
    %24 = vector.broadcast %23 : vector<9x1xf32> to vector<9x32xf32>
    %25 = arith.mulf %15, %24 : vector<9x32xf32>
    %26 = vector.broadcast %7 : vector<1x32xf32> to vector<9x32xf32>
    %27 = arith.mulf %25, %26 : vector<9x32xf32>
    %28 = vector.broadcast %9 : vector<1x32xf32> to vector<9x32xf32>
    %29 = arith.addf %27, %28 : vector<9x32xf32>
    %c0_16 = arith.constant 0 : index
    %c0_17 = arith.constant 0 : index
    %c0_18 = arith.constant 0 : index
    %30 = vector.load %arg14[%c0_16, %c0_17, %c0_18] : memref<2x32x96xbf16, #tpu.memory_space<vmem>>, vector<1x32x96xbf16>
    %31 = vector.shape_cast %30 : vector<1x32x96xbf16> to vector<32x96xbf16>
    %c0_19 = arith.constant 0 : index
    %c0_20 = arith.constant 0 : index
    %c0_21 = arith.constant 0 : index
    %32 = vector.load %arg15[%c0_19, %c0_20, %c0_21] : memref<2x1x96xf32, #tpu.memory_space<vmem>>, vector<1x1x96xf32>
    %33 = vector.shape_cast %32 : vector<1x1x96xf32> to vector<1x96xf32>
    %c0_22 = arith.constant 0 : index
    %c0_23 = arith.constant 0 : index
    %c0_24 = arith.constant 0 : index
    %34 = vector.load %arg16[%c0_22, %c0_23, %c0_24] : memref<2x32x32xbf16, #tpu.memory_space<vmem>>, vector<1x32x32xbf16>
    %35 = vector.shape_cast %34 : vector<1x32x32xbf16> to vector<32x32xbf16>
    %c0_25 = arith.constant 0 : index
    %c0_26 = arith.constant 0 : index
    %c0_27 = arith.constant 0 : index
    %36 = vector.load %arg17[%c0_25, %c0_26, %c0_27] : memref<2x1x32xf32, #tpu.memory_space<vmem>>, vector<1x1x32xf32>
    %37 = vector.shape_cast %36 : vector<1x1x32xf32> to vector<1x32xf32>
    %38 = arith.truncf %29 : vector<9x32xf32> to vector<9x32xbf16>
    %cst_28 = arith.constant dense<0.000000e+00> : vector<9x96xf32>
    %39 = tpu.matmul %38, %31, %cst_28 {dimension_numbers = #tpu.dot_dimension_numbers<[1], [0], [0], [1], [0, 0, 1, 1], [], []>} : vector<9x32xbf16>, vector<32x96xbf16>, vector<9x96xf32> -> vector<9x96xf32>
    %40 = vector.broadcast %33 : vector<1x96xf32> to vector<9x96xf32>
    %41 = arith.addf %39, %40 : vector<9x96xf32>
    %42 = vector.extract_strided_slice %41 {offsets = [0, 0], sizes = [9, 32], strides = [1, 1]} : vector<9x96xf32> to vector<9x32xf32>
    %cst_29 = arith.constant 5.000000e-01 : f32
    %43 = vector.broadcast %cst_29 : f32 to vector<9x32xf32>
    %44 = arith.mulf %42, %43 : vector<9x32xf32>
    %45 = vector.extract_strided_slice %41 {offsets = [0, 32], sizes = [9, 32], strides = [1, 1]} : vector<9x96xf32> to vector<9x32xf32>
    %46 = vector.extract_strided_slice %41 {offsets = [0, 64], sizes = [9, 32], strides = [1, 1]} : vector<9x96xf32> to vector<9x32xf32>
    %47 = vector.extract_strided_slice %44 {offsets = [0, 0], sizes = [9, 4], strides = [1, 1]} : vector<9x32xf32> to vector<9x4xf32>
    %48 = arith.truncf %47 : vector<9x4xf32> to vector<9x4xbf16>
    %49 = vector.extract_strided_slice %45 {offsets = [0, 0], sizes = [9, 4], strides = [1, 1]} : vector<9x32xf32> to vector<9x4xf32>
    %50 = arith.truncf %49 : vector<9x4xf32> to vector<9x4xbf16>
    %51 = vector.extract_strided_slice %46 {offsets = [0, 0], sizes = [9, 4], strides = [1, 1]} : vector<9x32xf32> to vector<9x4xf32>
    %52 = arith.truncf %51 : vector<9x4xf32> to vector<9x4xbf16>
    %cst_30 = arith.constant dense<0.000000e+00> : vector<9x9xf32>
    %53 = tpu.matmul %48, %50, %cst_30 {dimension_numbers = #tpu.dot_dimension_numbers<[1], [1], [0], [0], [0, 0, 1, 0], [], []>} : vector<9x4xbf16>, vector<9x4xbf16>, vector<9x9xf32> -> vector<9x9xf32>
    %cst_31 = arith.constant dense<0xFF800000> : vector<9xf32>
    %54 = vector.multi_reduction <maximumf>, %53, %cst_31 [1] : vector<9x9xf32> to vector<9xf32>
    %55 = vector.shape_cast %54 : vector<9xf32> to vector<9x1xf32>
    %56 = vector.broadcast %55 : vector<9x1xf32> to vector<9x9xf32>
    %57 = arith.subf %53, %56 : vector<9x9xf32>
    %58 = math.exp %57 : vector<9x9xf32>
    %cst_32 = arith.constant dense<0.000000e+00> : vector<9xf32>
    %59 = vector.multi_reduction <add>, %58, %cst_32 [1] : vector<9x9xf32> to vector<9xf32>
    %60 = vector.shape_cast %59 : vector<9xf32> to vector<9x1xf32>
    %61 = arith.truncf %58 : vector<9x9xf32> to vector<9x9xbf16>
    %cst_33 = arith.constant dense<0.000000e+00> : vector<9x4xf32>
    %62 = tpu.matmul %61, %52, %cst_33 {dimension_numbers = #tpu.dot_dimension_numbers<[1], [0], [0], [1], [0, 0, 1, 1], [], []>} : vector<9x9xbf16>, vector<9x4xbf16>, vector<9x4xf32> -> vector<9x4xf32>
    %63 = tpu.reciprocal %60 {approx = true} : vector<9x1xf32> -> vector<9x1xf32>
    %64 = vector.broadcast %63 : vector<9x1xf32> to vector<9x4xf32>
    %65 = arith.mulf %62, %64 : vector<9x4xf32>
    %66 = vector.extract_strided_slice %44 {offsets = [0, 4], sizes = [9, 4], strides = [1, 1]} : vector<9x32xf32> to vector<9x4xf32>
    %67 = arith.truncf %66 : vector<9x4xf32> to vector<9x4xbf16>
    %68 = vector.extract_strided_slice %45 {offsets = [0, 4], sizes = [9, 4], strides = [1, 1]} : vector<9x32xf32> to vector<9x4xf32>
    %69 = arith.truncf %68 : vector<9x4xf32> to vector<9x4xbf16>
    %70 = vector.extract_strided_slice %46 {offsets = [0, 4], sizes = [9, 4], strides = [1, 1]} : vector<9x32xf32> to vector<9x4xf32>
    %71 = arith.truncf %70 : vector<9x4xf32> to vector<9x4xbf16>
    %cst_34 = arith.constant dense<0.000000e+00> : vector<9x9xf32>
    %72 = tpu.matmul %67, %69, %cst_34 {dimension_numbers = #tpu.dot_dimension_numbers<[1], [1], [0], [0], [0, 0, 1, 0], [], []>} : vector<9x4xbf16>, vector<9x4xbf16>, vector<9x9xf32> -> vector<9x9xf32>
    %cst_35 = arith.constant dense<0xFF800000> : vector<9xf32>
    %73 = vector.multi_reduction <maximumf>, %72, %cst_35 [1] : vector<9x9xf32> to vector<9xf32>
    %74 = vector.shape_cast %73 : vector<9xf32> to vector<9x1xf32>
    %75 = vector.broadcast %74 : vector<9x1xf32> to vector<9x9xf32>
    %76 = arith.subf %72, %75 : vector<9x9xf32>
    %77 = math.exp %76 : vector<9x9xf32>
    %cst_36 = arith.constant dense<0.000000e+00> : vector<9xf32>
    %78 = vector.multi_reduction <add>, %77, %cst_36 [1] : vector<9x9xf32> to vector<9xf32>
    %79 = vector.shape_cast %78 : vector<9xf32> to vector<9x1xf32>
    %80 = arith.truncf %77 : vector<9x9xf32> to vector<9x9xbf16>
    %cst_37 = arith.constant dense<0.000000e+00> : vector<9x4xf32>
    %81 = tpu.matmul %80, %71, %cst_37 {dimension_numbers = #tpu.dot_dimension_numbers<[1], [0], [0], [1], [0, 0, 1, 1], [], []>} : vector<9x9xbf16>, vector<9x4xbf16>, vector<9x4xf32> -> vector<9x4xf32>
    %82 = tpu.reciprocal %79 {approx = true} : vector<9x1xf32> -> vector<9x1xf32>
    %83 = vector.broadcast %82 : vector<9x1xf32> to vector<9x4xf32>
    %84 = arith.mulf %81, %83 : vector<9x4xf32>
    %85 = vector.extract_strided_slice %44 {offsets = [0, 8], sizes = [9, 4], strides = [1, 1]} : vector<9x32xf32> to vector<9x4xf32>
    %86 = arith.truncf %85 : vector<9x4xf32> to vector<9x4xbf16>
    %87 = vector.extract_strided_slice %45 {offsets = [0, 8], sizes = [9, 4], strides = [1, 1]} : vector<9x32xf32> to vector<9x4xf32>
    %88 = arith.truncf %87 : vector<9x4xf32> to vector<9x4xbf16>
    %89 = vector.extract_strided_slice %46 {offsets = [0, 8], sizes = [9, 4], strides = [1, 1]} : vector<9x32xf32> to vector<9x4xf32>
    %90 = arith.truncf %89 : vector<9x4xf32> to vector<9x4xbf16>
    %cst_38 = arith.constant dense<0.000000e+00> : vector<9x9xf32>
    %91 = tpu.matmul %86, %88, %cst_38 {dimension_numbers = #tpu.dot_dimension_numbers<[1], [1], [0], [0], [0, 0, 1, 0], [], []>} : vector<9x4xbf16>, vector<9x4xbf16>, vector<9x9xf32> -> vector<9x9xf32>
    %cst_39 = arith.constant dense<0xFF800000> : vector<9xf32>
    %92 = vector.multi_reduction <maximumf>, %91, %cst_39 [1] : vector<9x9xf32> to vector<9xf32>
    %93 = vector.shape_cast %92 : vector<9xf32> to vector<9x1xf32>
    %94 = vector.broadcast %93 : vector<9x1xf32> to vector<9x9xf32>
    %95 = arith.subf %91, %94 : vector<9x9xf32>
    %96 = math.exp %95 : vector<9x9xf32>
    %cst_40 = arith.constant dense<0.000000e+00> : vector<9xf32>
    %97 = vector.multi_reduction <add>, %96, %cst_40 [1] : vector<9x9xf32> to vector<9xf32>
    %98 = vector.shape_cast %97 : vector<9xf32> to vector<9x1xf32>
    %99 = arith.truncf %96 : vector<9x9xf32> to vector<9x9xbf16>
    %cst_41 = arith.constant dense<0.000000e+00> : vector<9x4xf32>
    %100 = tpu.matmul %99, %90, %cst_41 {dimension_numbers = #tpu.dot_dimension_numbers<[1], [0], [0], [1], [0, 0, 1, 1], [], []>} : vector<9x9xbf16>, vector<9x4xbf16>, vector<9x4xf32> -> vector<9x4xf32>
    %101 = tpu.reciprocal %98 {approx = true} : vector<9x1xf32> -> vector<9x1xf32>
    %102 = vector.broadcast %101 : vector<9x1xf32> to vector<9x4xf32>
    %103 = arith.mulf %100, %102 : vector<9x4xf32>
    %104 = vector.extract_strided_slice %44 {offsets = [0, 12], sizes = [9, 4], strides = [1, 1]} : vector<9x32xf32> to vector<9x4xf32>
    %105 = arith.truncf %104 : vector<9x4xf32> to vector<9x4xbf16>
    %106 = vector.extract_strided_slice %45 {offsets = [0, 12], sizes = [9, 4], strides = [1, 1]} : vector<9x32xf32> to vector<9x4xf32>
    %107 = arith.truncf %106 : vector<9x4xf32> to vector<9x4xbf16>
    %108 = vector.extract_strided_slice %46 {offsets = [0, 12], sizes = [9, 4], strides = [1, 1]} : vector<9x32xf32> to vector<9x4xf32>
    %109 = arith.truncf %108 : vector<9x4xf32> to vector<9x4xbf16>
    %cst_42 = arith.constant dense<0.000000e+00> : vector<9x9xf32>
    %110 = tpu.matmul %105, %107, %cst_42 {dimension_numbers = #tpu.dot_dimension_numbers<[1], [1], [0], [0], [0, 0, 1, 0], [], []>} : vector<9x4xbf16>, vector<9x4xbf16>, vector<9x9xf32> -> vector<9x9xf32>
    %cst_43 = arith.constant dense<0xFF800000> : vector<9xf32>
    %111 = vector.multi_reduction <maximumf>, %110, %cst_43 [1] : vector<9x9xf32> to vector<9xf32>
    %112 = vector.shape_cast %111 : vector<9xf32> to vector<9x1xf32>
    %113 = vector.broadcast %112 : vector<9x1xf32> to vector<9x9xf32>
    %114 = arith.subf %110, %113 : vector<9x9xf32>
    %115 = math.exp %114 : vector<9x9xf32>
    %cst_44 = arith.constant dense<0.000000e+00> : vector<9xf32>
    %116 = vector.multi_reduction <add>, %115, %cst_44 [1] : vector<9x9xf32> to vector<9xf32>
    %117 = vector.shape_cast %116 : vector<9xf32> to vector<9x1xf32>
    %118 = arith.truncf %115 : vector<9x9xf32> to vector<9x9xbf16>
    %cst_45 = arith.constant dense<0.000000e+00> : vector<9x4xf32>
    %119 = tpu.matmul %118, %109, %cst_45 {dimension_numbers = #tpu.dot_dimension_numbers<[1], [0], [0], [1], [0, 0, 1, 1], [], []>} : vector<9x9xbf16>, vector<9x4xbf16>, vector<9x4xf32> -> vector<9x4xf32>
    %120 = tpu.reciprocal %117 {approx = true} : vector<9x1xf32> -> vector<9x1xf32>
    %121 = vector.broadcast %120 : vector<9x1xf32> to vector<9x4xf32>
    %122 = arith.mulf %119, %121 : vector<9x4xf32>
    %123 = vector.extract_strided_slice %44 {offsets = [0, 16], sizes = [9, 4], strides = [1, 1]} : vector<9x32xf32> to vector<9x4xf32>
    %124 = arith.truncf %123 : vector<9x4xf32> to vector<9x4xbf16>
    %125 = vector.extract_strided_slice %45 {offsets = [0, 16], sizes = [9, 4], strides = [1, 1]} : vector<9x32xf32> to vector<9x4xf32>
    %126 = arith.truncf %125 : vector<9x4xf32> to vector<9x4xbf16>
    %127 = vector.extract_strided_slice %46 {offsets = [0, 16], sizes = [9, 4], strides = [1, 1]} : vector<9x32xf32> to vector<9x4xf32>
    %128 = arith.truncf %127 : vector<9x4xf32> to vector<9x4xbf16>
    %cst_46 = arith.constant dense<0.000000e+00> : vector<9x9xf32>
    %129 = tpu.matmul %124, %126, %cst_46 {dimension_numbers = #tpu.dot_dimension_numbers<[1], [1], [0], [0], [0, 0, 1, 0], [], []>} : vector<9x4xbf16>, vector<9x4xbf16>, vector<9x9xf32> -> vector<9x9xf32>
    %cst_47 = arith.constant dense<0xFF800000> : vector<9xf32>
    %130 = vector.multi_reduction <maximumf>, %129, %cst_47 [1] : vector<9x9xf32> to vector<9xf32>
    %131 = vector.shape_cast %130 : vector<9xf32> to vector<9x1xf32>
    %132 = vector.broadcast %131 : vector<9x1xf32> to vector<9x9xf32>
    %133 = arith.subf %129, %132 : vector<9x9xf32>
    %134 = math.exp %133 : vector<9x9xf32>
    %cst_48 = arith.constant dense<0.000000e+00> : vector<9xf32>
    %135 = vector.multi_reduction <add>, %134, %cst_48 [1] : vector<9x9xf32> to vector<9xf32>
    %136 = vector.shape_cast %135 : vector<9xf32> to vector<9x1xf32>
    %137 = arith.truncf %134 : vector<9x9xf32> to vector<9x9xbf16>
    %cst_49 = arith.constant dense<0.000000e+00> : vector<9x4xf32>
    %138 = tpu.matmul %137, %128, %cst_49 {dimension_numbers = #tpu.dot_dimension_numbers<[1], [0], [0], [1], [0, 0, 1, 1], [], []>} : vector<9x9xbf16>, vector<9x4xbf16>, vector<9x4xf32> -> vector<9x4xf32>
    %139 = tpu.reciprocal %136 {approx = true} : vector<9x1xf32> -> vector<9x1xf32>
    %140 = vector.broadcast %139 : vector<9x1xf32> to vector<9x4xf32>
    %141 = arith.mulf %138, %140 : vector<9x4xf32>
    %142 = vector.extract_strided_slice %44 {offsets = [0, 20], sizes = [9, 4], strides = [1, 1]} : vector<9x32xf32> to vector<9x4xf32>
    %143 = arith.truncf %142 : vector<9x4xf32> to vector<9x4xbf16>
    %144 = vector.extract_strided_slice %45 {offsets = [0, 20], sizes = [9, 4], strides = [1, 1]} : vector<9x32xf32> to vector<9x4xf32>
    %145 = arith.truncf %144 : vector<9x4xf32> to vector<9x4xbf16>
    %146 = vector.extract_strided_slice %46 {offsets = [0, 20], sizes = [9, 4], strides = [1, 1]} : vector<9x32xf32> to vector<9x4xf32>
    %147 = arith.truncf %146 : vector<9x4xf32> to vector<9x4xbf16>
    %cst_50 = arith.constant dense<0.000000e+00> : vector<9x9xf32>
    %148 = tpu.matmul %143, %145, %cst_50 {dimension_numbers = #tpu.dot_dimension_numbers<[1], [1], [0], [0], [0, 0, 1, 0], [], []>} : vector<9x4xbf16>, vector<9x4xbf16>, vector<9x9xf32> -> vector<9x9xf32>
    %cst_51 = arith.constant dense<0xFF800000> : vector<9xf32>
    %149 = vector.multi_reduction <maximumf>, %148, %cst_51 [1] : vector<9x9xf32> to vector<9xf32>
    %150 = vector.shape_cast %149 : vector<9xf32> to vector<9x1xf32>
    %151 = vector.broadcast %150 : vector<9x1xf32> to vector<9x9xf32>
    %152 = arith.subf %148, %151 : vector<9x9xf32>
    %153 = math.exp %152 : vector<9x9xf32>
    %cst_52 = arith.constant dense<0.000000e+00> : vector<9xf32>
    %154 = vector.multi_reduction <add>, %153, %cst_52 [1] : vector<9x9xf32> to vector<9xf32>
    %155 = vector.shape_cast %154 : vector<9xf32> to vector<9x1xf32>
    %156 = arith.truncf %153 : vector<9x9xf32> to vector<9x9xbf16>
    %cst_53 = arith.constant dense<0.000000e+00> : vector<9x4xf32>
    %157 = tpu.matmul %156, %147, %cst_53 {dimension_numbers = #tpu.dot_dimension_numbers<[1], [0], [0], [1], [0, 0, 1, 1], [], []>} : vector<9x9xbf16>, vector<9x4xbf16>, vector<9x4xf32> -> vector<9x4xf32>
    %158 = tpu.reciprocal %155 {approx = true} : vector<9x1xf32> -> vector<9x1xf32>
    %159 = vector.broadcast %158 : vector<9x1xf32> to vector<9x4xf32>
    %160 = arith.mulf %157, %159 : vector<9x4xf32>
    %161 = vector.extract_strided_slice %44 {offsets = [0, 24], sizes = [9, 4], strides = [1, 1]} : vector<9x32xf32> to vector<9x4xf32>
    %162 = arith.truncf %161 : vector<9x4xf32> to vector<9x4xbf16>
    %163 = vector.extract_strided_slice %45 {offsets = [0, 24], sizes = [9, 4], strides = [1, 1]} : vector<9x32xf32> to vector<9x4xf32>
    %164 = arith.truncf %163 : vector<9x4xf32> to vector<9x4xbf16>
    %165 = vector.extract_strided_slice %46 {offsets = [0, 24], sizes = [9, 4], strides = [1, 1]} : vector<9x32xf32> to vector<9x4xf32>
    %166 = arith.truncf %165 : vector<9x4xf32> to vector<9x4xbf16>
    %cst_54 = arith.constant dense<0.000000e+00> : vector<9x9xf32>
    %167 = tpu.matmul %162, %164, %cst_54 {dimension_numbers = #tpu.dot_dimension_numbers<[1], [1], [0], [0], [0, 0, 1, 0], [], []>} : vector<9x4xbf16>, vector<9x4xbf16>, vector<9x9xf32> -> vector<9x9xf32>
    %cst_55 = arith.constant dense<0xFF800000> : vector<9xf32>
    %168 = vector.multi_reduction <maximumf>, %167, %cst_55 [1] : vector<9x9xf32> to vector<9xf32>
    %169 = vector.shape_cast %168 : vector<9xf32> to vector<9x1xf32>
    %170 = vector.broadcast %169 : vector<9x1xf32> to vector<9x9xf32>
    %171 = arith.subf %167, %170 : vector<9x9xf32>
    %172 = math.exp %171 : vector<9x9xf32>
    %cst_56 = arith.constant dense<0.000000e+00> : vector<9xf32>
    %173 = vector.multi_reduction <add>, %172, %cst_56 [1] : vector<9x9xf32> to vector<9xf32>
    %174 = vector.shape_cast %173 : vector<9xf32> to vector<9x1xf32>
    %175 = arith.truncf %172 : vector<9x9xf32> to vector<9x9xbf16>
    %cst_57 = arith.constant dense<0.000000e+00> : vector<9x4xf32>
    %176 = tpu.matmul %175, %166, %cst_57 {dimension_numbers = #tpu.dot_dimension_numbers<[1], [0], [0], [1], [0, 0, 1, 1], [], []>} : vector<9x9xbf16>, vector<9x4xbf16>, vector<9x4xf32> -> vector<9x4xf32>
    %177 = tpu.reciprocal %174 {approx = true} : vector<9x1xf32> -> vector<9x1xf32>
    %178 = vector.broadcast %177 : vector<9x1xf32> to vector<9x4xf32>
    %179 = arith.mulf %176, %178 : vector<9x4xf32>
    %180 = vector.extract_strided_slice %44 {offsets = [0, 28], sizes = [9, 4], strides = [1, 1]} : vector<9x32xf32> to vector<9x4xf32>
    %181 = arith.truncf %180 : vector<9x4xf32> to vector<9x4xbf16>
    %182 = vector.extract_strided_slice %45 {offsets = [0, 28], sizes = [9, 4], strides = [1, 1]} : vector<9x32xf32> to vector<9x4xf32>
    %183 = arith.truncf %182 : vector<9x4xf32> to vector<9x4xbf16>
    %184 = vector.extract_strided_slice %46 {offsets = [0, 28], sizes = [9, 4], strides = [1, 1]} : vector<9x32xf32> to vector<9x4xf32>
    %185 = arith.truncf %184 : vector<9x4xf32> to vector<9x4xbf16>
    %cst_58 = arith.constant dense<0.000000e+00> : vector<9x9xf32>
    %186 = tpu.matmul %181, %183, %cst_58 {dimension_numbers = #tpu.dot_dimension_numbers<[1], [1], [0], [0], [0, 0, 1, 0], [], []>} : vector<9x4xbf16>, vector<9x4xbf16>, vector<9x9xf32> -> vector<9x9xf32>
    %cst_59 = arith.constant dense<0xFF800000> : vector<9xf32>
    %187 = vector.multi_reduction <maximumf>, %186, %cst_59 [1] : vector<9x9xf32> to vector<9xf32>
    %188 = vector.shape_cast %187 : vector<9xf32> to vector<9x1xf32>
    %189 = vector.broadcast %188 : vector<9x1xf32> to vector<9x9xf32>
    %190 = arith.subf %186, %189 : vector<9x9xf32>
    %191 = math.exp %190 : vector<9x9xf32>
    %cst_60 = arith.constant dense<0.000000e+00> : vector<9xf32>
    %192 = vector.multi_reduction <add>, %191, %cst_60 [1] : vector<9x9xf32> to vector<9xf32>
    %193 = vector.shape_cast %192 : vector<9xf32> to vector<9x1xf32>
    %194 = arith.truncf %191 : vector<9x9xf32> to vector<9x9xbf16>
    %cst_61 = arith.constant dense<0.000000e+00> : vector<9x4xf32>
    %195 = tpu.matmul %194, %185, %cst_61 {dimension_numbers = #tpu.dot_dimension_numbers<[1], [0], [0], [1], [0, 0, 1, 1], [], []>} : vector<9x9xbf16>, vector<9x4xbf16>, vector<9x4xf32> -> vector<9x4xf32>
    %196 = tpu.reciprocal %193 {approx = true} : vector<9x1xf32> -> vector<9x1xf32>
    %197 = vector.broadcast %196 : vector<9x1xf32> to vector<9x4xf32>
    %198 = arith.mulf %195, %197 : vector<9x4xf32>
    %199 = tpu.concatenate %65, %84, %103, %122, %141, %160, %179, %198 in 1 : vector<9x4xf32>, vector<9x4xf32>, vector<9x4xf32>, vector<9x4xf32>, vector<9x4xf32>, vector<9x4xf32>, vector<9x4xf32>, vector<9x4xf32> -> vector<9x32xf32>
    %200 = arith.truncf %199 : vector<9x32xf32> to vector<9x32xbf16>
    %cst_62 = arith.constant dense<0.000000e+00> : vector<9x32xf32>
    %201 = tpu.matmul %200, %35, %cst_62 {dimension_numbers = #tpu.dot_dimension_numbers<[1], [0], [0], [1], [0, 0, 1, 1], [], []>} : vector<9x32xbf16>, vector<32x32xbf16>, vector<9x32xf32> -> vector<9x32xf32>
    %202 = vector.broadcast %37 : vector<1x32xf32> to vector<9x32xf32>
    %203 = arith.addf %201, %202 : vector<9x32xf32>
    %204 = arith.addf %5, %203 : vector<9x32xf32>
    %c0_63 = arith.constant 0 : index
    %c0_64 = arith.constant 0 : index
    %c0_65 = arith.constant 0 : index
    %205 = vector.load %arg18[%c0_63, %c0_64, %c0_65] : memref<2x1x32xf32, #tpu.memory_space<vmem>>, vector<1x1x32xf32>
    %206 = vector.shape_cast %205 : vector<1x1x32xf32> to vector<1x32xf32>
    %c0_66 = arith.constant 0 : index
    %c0_67 = arith.constant 0 : index
    %c0_68 = arith.constant 0 : index
    %207 = vector.load %arg19[%c0_66, %c0_67, %c0_68] : memref<2x1x32xf32, #tpu.memory_space<vmem>>, vector<1x1x32xf32>
    %208 = vector.shape_cast %207 : vector<1x1x32xf32> to vector<1x32xf32>
    %cst_69 = arith.constant dense<0.000000e+00> : vector<9xf32>
    %209 = vector.multi_reduction <add>, %204, %cst_69 [1] : vector<9x32xf32> to vector<9xf32>
    %210 = vector.shape_cast %209 : vector<9xf32> to vector<9x1xf32>
    %cst_70 = arith.constant 3.200000e+01 : f32
    %211 = vector.broadcast %cst_70 : f32 to vector<9x1xf32>
    %212 = arith.divf %210, %211 : vector<9x1xf32>
    %213 = vector.broadcast %212 : vector<9x1xf32> to vector<9x32xf32>
    %214 = arith.subf %204, %213 : vector<9x32xf32>
    %215 = arith.mulf %214, %214 : vector<9x32xf32>
    %cst_71 = arith.constant dense<0.000000e+00> : vector<9xf32>
    %216 = vector.multi_reduction <add>, %215, %cst_71 [1] : vector<9x32xf32> to vector<9xf32>
    %217 = vector.shape_cast %216 : vector<9xf32> to vector<9x1xf32>
    %cst_72 = arith.constant 3.200000e+01 : f32
    %218 = vector.broadcast %cst_72 : f32 to vector<9x1xf32>
    %219 = arith.divf %217, %218 : vector<9x1xf32>
    %cst_73 = arith.constant 9.99999974E-6 : f32
    %220 = vector.broadcast %cst_73 : f32 to vector<9x1xf32>
    %221 = arith.addf %219, %220 : vector<9x1xf32>
    %222 = math.rsqrt %221 : vector<9x1xf32>
    %223 = vector.broadcast %222 : vector<9x1xf32> to vector<9x32xf32>
    %224 = arith.mulf %214, %223 : vector<9x32xf32>
    %225 = vector.broadcast %206 : vector<1x32xf32> to vector<9x32xf32>
    %226 = arith.mulf %224, %225 : vector<9x32xf32>
    %227 = vector.broadcast %208 : vector<1x32xf32> to vector<9x32xf32>
    %228 = arith.addf %226, %227 : vector<9x32xf32>
    %c0_74 = arith.constant 0 : index
    %c0_75 = arith.constant 0 : index
    %c0_76 = arith.constant 0 : index
    %229 = vector.load %arg20[%c0_74, %c0_75, %c0_76] : memref<2x32x128xbf16, #tpu.memory_space<vmem>>, vector<1x32x128xbf16>
    %230 = vector.shape_cast %229 : vector<1x32x128xbf16> to vector<32x128xbf16>
    %c0_77 = arith.constant 0 : index
    %c0_78 = arith.constant 0 : index
    %c0_79 = arith.constant 0 : index
    %231 = vector.load %arg21[%c0_77, %c0_78, %c0_79] : memref<2x1x128xf32, #tpu.memory_space<vmem>>, vector<1x1x128xf32>
    %232 = vector.shape_cast %231 : vector<1x1x128xf32> to vector<1x128xf32>
    %c0_80 = arith.constant 0 : index
    %c0_81 = arith.constant 0 : index
    %c0_82 = arith.constant 0 : index
    %233 = vector.load %arg22[%c0_80, %c0_81, %c0_82] : memref<2x128x32xbf16, #tpu.memory_space<vmem>>, vector<1x128x32xbf16>
    %234 = vector.shape_cast %233 : vector<1x128x32xbf16> to vector<128x32xbf16>
    %c0_83 = arith.constant 0 : index
    %c0_84 = arith.constant 0 : index
    %c0_85 = arith.constant 0 : index
    %235 = vector.load %arg23[%c0_83, %c0_84, %c0_85] : memref<2x1x32xf32, #tpu.memory_space<vmem>>, vector<1x1x32xf32>
    %236 = vector.shape_cast %235 : vector<1x1x32xf32> to vector<1x32xf32>
    %237 = arith.truncf %228 : vector<9x32xf32> to vector<9x32xbf16>
    %cst_86 = arith.constant dense<0.000000e+00> : vector<9x128xf32>
    %238 = tpu.matmul %237, %230, %cst_86 {dimension_numbers = #tpu.dot_dimension_numbers<[1], [0], [0], [1], [0, 0, 1, 1], [], []>} : vector<9x32xbf16>, vector<32x128xbf16>, vector<9x128xf32> -> vector<9x128xf32>
    %239 = vector.broadcast %232 : vector<1x128xf32> to vector<9x128xf32>
    %240 = arith.addf %238, %239 : vector<9x128xf32>
    %cst_87 = arith.constant 5.000000e-01 : f32
    %241 = vector.broadcast %cst_87 : f32 to vector<9x128xf32>
    %242 = arith.mulf %241, %240 : vector<9x128xf32>
    %cst_88 = arith.constant 0.707106769 : f32
    %243 = vector.broadcast %cst_88 : f32 to vector<9x128xf32>
    %244 = arith.mulf %240, %243 : vector<9x128xf32>
    %245 = math.absf %244 : vector<9x128xf32>
    %cst_89 = arith.constant 0.327591091 : f32
    %246 = vector.broadcast %cst_89 : f32 to vector<9x128xf32>
    %247 = arith.mulf %246, %245 : vector<9x128xf32>
    %cst_90 = arith.constant 1.000000e+00 : f32
    %248 = vector.broadcast %cst_90 : f32 to vector<9x128xf32>
    %249 = arith.addf %248, %247 : vector<9x128xf32>
    %cst_91 = arith.constant 1.000000e+00 : f32
    %250 = vector.broadcast %cst_91 : f32 to vector<9x128xf32>
    %251 = arith.divf %250, %249 : vector<9x128xf32>
    %cst_92 = arith.constant 1.06140542 : f32
    %252 = vector.broadcast %cst_92 : f32 to vector<9x128xf32>
    %253 = arith.mulf %252, %251 : vector<9x128xf32>
    %cst_93 = arith.constant -1.45315206 : f32
    %254 = vector.broadcast %cst_93 : f32 to vector<9x128xf32>
    %255 = arith.addf %253, %254 : vector<9x128xf32>
    %256 = arith.mulf %255, %251 : vector<9x128xf32>
    %cst_94 = arith.constant 1.42141378 : f32
    %257 = vector.broadcast %cst_94 : f32 to vector<9x128xf32>
    %258 = arith.addf %256, %257 : vector<9x128xf32>
    %259 = arith.mulf %258, %251 : vector<9x128xf32>
    %cst_95 = arith.constant -0.284496725 : f32
    %260 = vector.broadcast %cst_95 : f32 to vector<9x128xf32>
    %261 = arith.addf %259, %260 : vector<9x128xf32>
    %262 = arith.mulf %261, %251 : vector<9x128xf32>
    %cst_96 = arith.constant 0.254829586 : f32
    %263 = vector.broadcast %cst_96 : f32 to vector<9x128xf32>
    %264 = arith.addf %262, %263 : vector<9x128xf32>
    %265 = arith.mulf %264, %251 : vector<9x128xf32>
    %cst_97 = arith.constant 0.000000e+00 : f32
    %266 = vector.broadcast %cst_97 : f32 to vector<9x128xf32>
    %267 = arith.subf %266, %245 : vector<9x128xf32>
    %268 = arith.mulf %267, %245 : vector<9x128xf32>
    %269 = math.exp %268 : vector<9x128xf32>
    %270 = arith.mulf %265, %269 : vector<9x128xf32>
    %cst_98 = arith.constant 1.000000e+00 : f32
    %271 = vector.broadcast %cst_98 : f32 to vector<9x128xf32>
    %272 = arith.subf %271, %270 : vector<9x128xf32>
    %cst_99 = arith.constant 0.000000e+00 : f32
    %273 = vector.broadcast %cst_99 : f32 to vector<9x128xf32>
    %274 = arith.cmpf oge, %244, %273 : vector<9x128xf32>
    %cst_100 = arith.constant 0.000000e+00 : f32
    %275 = vector.broadcast %cst_100 : f32 to vector<9x128xf32>
    %276 = arith.subf %275, %272 : vector<9x128xf32>
    %277 = arith.select %274, %272, %276 : vector<9x128xi1>, vector<9x128xf32>
    %cst_101 = arith.constant 1.000000e+00 : f32
    %278 = vector.broadcast %cst_101 : f32 to vector<9x128xf32>
    %279 = arith.addf %278, %277 : vector<9x128xf32>
    %280 = arith.mulf %242, %279 : vector<9x128xf32>
    %281 = arith.truncf %280 : vector<9x128xf32> to vector<9x128xbf16>
    %cst_102 = arith.constant dense<0.000000e+00> : vector<9x32xf32>
    %282 = tpu.matmul %281, %234, %cst_102 {dimension_numbers = #tpu.dot_dimension_numbers<[1], [0], [0], [1], [0, 0, 1, 1], [], []>} : vector<9x128xbf16>, vector<128x32xbf16>, vector<9x32xf32> -> vector<9x32xf32>
    %283 = vector.broadcast %236 : vector<1x32xf32> to vector<9x32xf32>
    %284 = arith.addf %282, %283 : vector<9x32xf32>
    %285 = arith.addf %204, %284 : vector<9x32xf32>
    %c1 = arith.constant 1 : index
    %c0_103 = arith.constant 0 : index
    %c0_104 = arith.constant 0 : index
    %286 = vector.load %arg12[%c1, %c0_103, %c0_104] : memref<2x1x32xf32, #tpu.memory_space<vmem>>, vector<1x1x32xf32>
    %287 = vector.shape_cast %286 : vector<1x1x32xf32> to vector<1x32xf32>
    %c1_105 = arith.constant 1 : index
    %c0_106 = arith.constant 0 : index
    %c0_107 = arith.constant 0 : index
    %288 = vector.load %arg13[%c1_105, %c0_106, %c0_107] : memref<2x1x32xf32, #tpu.memory_space<vmem>>, vector<1x1x32xf32>
    %289 = vector.shape_cast %288 : vector<1x1x32xf32> to vector<1x32xf32>
    %cst_108 = arith.constant dense<0.000000e+00> : vector<9xf32>
    %290 = vector.multi_reduction <add>, %285, %cst_108 [1] : vector<9x32xf32> to vector<9xf32>
    %291 = vector.shape_cast %290 : vector<9xf32> to vector<9x1xf32>
    %cst_109 = arith.constant 3.200000e+01 : f32
    %292 = vector.broadcast %cst_109 : f32 to vector<9x1xf32>
    %293 = arith.divf %291, %292 : vector<9x1xf32>
    %294 = vector.broadcast %293 : vector<9x1xf32> to vector<9x32xf32>
    %295 = arith.subf %285, %294 : vector<9x32xf32>
    %296 = arith.mulf %295, %295 : vector<9x32xf32>
    %cst_110 = arith.constant dense<0.000000e+00> : vector<9xf32>
    %297 = vector.multi_reduction <add>, %296, %cst_110 [1] : vector<9x32xf32> to vector<9xf32>
    %298 = vector.shape_cast %297 : vector<9xf32> to vector<9x1xf32>
    %cst_111 = arith.constant 3.200000e+01 : f32
    %299 = vector.broadcast %cst_111 : f32 to vector<9x1xf32>
    %300 = arith.divf %298, %299 : vector<9x1xf32>
    %cst_112 = arith.constant 9.99999974E-6 : f32
    %301 = vector.broadcast %cst_112 : f32 to vector<9x1xf32>
    %302 = arith.addf %300, %301 : vector<9x1xf32>
    %303 = math.rsqrt %302 : vector<9x1xf32>
    %304 = vector.broadcast %303 : vector<9x1xf32> to vector<9x32xf32>
    %305 = arith.mulf %295, %304 : vector<9x32xf32>
    %306 = vector.broadcast %287 : vector<1x32xf32> to vector<9x32xf32>
    %307 = arith.mulf %305, %306 : vector<9x32xf32>
    %308 = vector.broadcast %289 : vector<1x32xf32> to vector<9x32xf32>
    %309 = arith.addf %307, %308 : vector<9x32xf32>
    %c1_113 = arith.constant 1 : index
    %c0_114 = arith.constant 0 : index
    %c0_115 = arith.constant 0 : index
    %310 = vector.load %arg14[%c1_113, %c0_114, %c0_115] : memref<2x32x96xbf16, #tpu.memory_space<vmem>>, vector<1x32x96xbf16>
    %311 = vector.shape_cast %310 : vector<1x32x96xbf16> to vector<32x96xbf16>
    %c1_116 = arith.constant 1 : index
    %c0_117 = arith.constant 0 : index
    %c0_118 = arith.constant 0 : index
    %312 = vector.load %arg15[%c1_116, %c0_117, %c0_118] : memref<2x1x96xf32, #tpu.memory_space<vmem>>, vector<1x1x96xf32>
    %313 = vector.shape_cast %312 : vector<1x1x96xf32> to vector<1x96xf32>
    %c1_119 = arith.constant 1 : index
    %c0_120 = arith.constant 0 : index
    %c0_121 = arith.constant 0 : index
    %314 = vector.load %arg16[%c1_119, %c0_120, %c0_121] : memref<2x32x32xbf16, #tpu.memory_space<vmem>>, vector<1x32x32xbf16>
    %315 = vector.shape_cast %314 : vector<1x32x32xbf16> to vector<32x32xbf16>
    %c1_122 = arith.constant 1 : index
    %c0_123 = arith.constant 0 : index
    %c0_124 = arith.constant 0 : index
    %316 = vector.load %arg17[%c1_122, %c0_123, %c0_124] : memref<2x1x32xf32, #tpu.memory_space<vmem>>, vector<1x1x32xf32>
    %317 = vector.shape_cast %316 : vector<1x1x32xf32> to vector<1x32xf32>
    %318 = arith.truncf %309 : vector<9x32xf32> to vector<9x32xbf16>
    %cst_125 = arith.constant dense<0.000000e+00> : vector<9x96xf32>
    %319 = tpu.matmul %318, %311, %cst_125 {dimension_numbers = #tpu.dot_dimension_numbers<[1], [0], [0], [1], [0, 0, 1, 1], [], []>} : vector<9x32xbf16>, vector<32x96xbf16>, vector<9x96xf32> -> vector<9x96xf32>
    %320 = vector.broadcast %313 : vector<1x96xf32> to vector<9x96xf32>
    %321 = arith.addf %319, %320 : vector<9x96xf32>
    %322 = vector.extract_strided_slice %321 {offsets = [0, 0], sizes = [9, 32], strides = [1, 1]} : vector<9x96xf32> to vector<9x32xf32>
    %cst_126 = arith.constant 5.000000e-01 : f32
    %323 = vector.broadcast %cst_126 : f32 to vector<9x32xf32>
    %324 = arith.mulf %322, %323 : vector<9x32xf32>
    %325 = vector.extract_strided_slice %321 {offsets = [0, 32], sizes = [9, 32], strides = [1, 1]} : vector<9x96xf32> to vector<9x32xf32>
    %326 = vector.extract_strided_slice %321 {offsets = [0, 64], sizes = [9, 32], strides = [1, 1]} : vector<9x96xf32> to vector<9x32xf32>
    %327 = vector.extract_strided_slice %324 {offsets = [0, 0], sizes = [9, 4], strides = [1, 1]} : vector<9x32xf32> to vector<9x4xf32>
    %328 = arith.truncf %327 : vector<9x4xf32> to vector<9x4xbf16>
    %329 = vector.extract_strided_slice %325 {offsets = [0, 0], sizes = [9, 4], strides = [1, 1]} : vector<9x32xf32> to vector<9x4xf32>
    %330 = arith.truncf %329 : vector<9x4xf32> to vector<9x4xbf16>
    %331 = vector.extract_strided_slice %326 {offsets = [0, 0], sizes = [9, 4], strides = [1, 1]} : vector<9x32xf32> to vector<9x4xf32>
    %332 = arith.truncf %331 : vector<9x4xf32> to vector<9x4xbf16>
    %cst_127 = arith.constant dense<0.000000e+00> : vector<9x9xf32>
    %333 = tpu.matmul %328, %330, %cst_127 {dimension_numbers = #tpu.dot_dimension_numbers<[1], [1], [0], [0], [0, 0, 1, 0], [], []>} : vector<9x4xbf16>, vector<9x4xbf16>, vector<9x9xf32> -> vector<9x9xf32>
    %cst_128 = arith.constant dense<0xFF800000> : vector<9xf32>
    %334 = vector.multi_reduction <maximumf>, %333, %cst_128 [1] : vector<9x9xf32> to vector<9xf32>
    %335 = vector.shape_cast %334 : vector<9xf32> to vector<9x1xf32>
    %336 = vector.broadcast %335 : vector<9x1xf32> to vector<9x9xf32>
    %337 = arith.subf %333, %336 : vector<9x9xf32>
    %338 = math.exp %337 : vector<9x9xf32>
    %cst_129 = arith.constant dense<0.000000e+00> : vector<9xf32>
    %339 = vector.multi_reduction <add>, %338, %cst_129 [1] : vector<9x9xf32> to vector<9xf32>
    %340 = vector.shape_cast %339 : vector<9xf32> to vector<9x1xf32>
    %341 = arith.truncf %338 : vector<9x9xf32> to vector<9x9xbf16>
    %cst_130 = arith.constant dense<0.000000e+00> : vector<9x4xf32>
    %342 = tpu.matmul %341, %332, %cst_130 {dimension_numbers = #tpu.dot_dimension_numbers<[1], [0], [0], [1], [0, 0, 1, 1], [], []>} : vector<9x9xbf16>, vector<9x4xbf16>, vector<9x4xf32> -> vector<9x4xf32>
    %343 = tpu.reciprocal %340 {approx = true} : vector<9x1xf32> -> vector<9x1xf32>
    %344 = vector.broadcast %343 : vector<9x1xf32> to vector<9x4xf32>
    %345 = arith.mulf %342, %344 : vector<9x4xf32>
    %346 = vector.extract_strided_slice %324 {offsets = [0, 4], sizes = [9, 4], strides = [1, 1]} : vector<9x32xf32> to vector<9x4xf32>
    %347 = arith.truncf %346 : vector<9x4xf32> to vector<9x4xbf16>
    %348 = vector.extract_strided_slice %325 {offsets = [0, 4], sizes = [9, 4], strides = [1, 1]} : vector<9x32xf32> to vector<9x4xf32>
    %349 = arith.truncf %348 : vector<9x4xf32> to vector<9x4xbf16>
    %350 = vector.extract_strided_slice %326 {offsets = [0, 4], sizes = [9, 4], strides = [1, 1]} : vector<9x32xf32> to vector<9x4xf32>
    %351 = arith.truncf %350 : vector<9x4xf32> to vector<9x4xbf16>
    %cst_131 = arith.constant dense<0.000000e+00> : vector<9x9xf32>
    %352 = tpu.matmul %347, %349, %cst_131 {dimension_numbers = #tpu.dot_dimension_numbers<[1], [1], [0], [0], [0, 0, 1, 0], [], []>} : vector<9x4xbf16>, vector<9x4xbf16>, vector<9x9xf32> -> vector<9x9xf32>
    %cst_132 = arith.constant dense<0xFF800000> : vector<9xf32>
    %353 = vector.multi_reduction <maximumf>, %352, %cst_132 [1] : vector<9x9xf32> to vector<9xf32>
    %354 = vector.shape_cast %353 : vector<9xf32> to vector<9x1xf32>
    %355 = vector.broadcast %354 : vector<9x1xf32> to vector<9x9xf32>
    %356 = arith.subf %352, %355 : vector<9x9xf32>
    %357 = math.exp %356 : vector<9x9xf32>
    %cst_133 = arith.constant dense<0.000000e+00> : vector<9xf32>
    %358 = vector.multi_reduction <add>, %357, %cst_133 [1] : vector<9x9xf32> to vector<9xf32>
    %359 = vector.shape_cast %358 : vector<9xf32> to vector<9x1xf32>
    %360 = arith.truncf %357 : vector<9x9xf32> to vector<9x9xbf16>
    %cst_134 = arith.constant dense<0.000000e+00> : vector<9x4xf32>
    %361 = tpu.matmul %360, %351, %cst_134 {dimension_numbers = #tpu.dot_dimension_numbers<[1], [0], [0], [1], [0, 0, 1, 1], [], []>} : vector<9x9xbf16>, vector<9x4xbf16>, vector<9x4xf32> -> vector<9x4xf32>
    %362 = tpu.reciprocal %359 {approx = true} : vector<9x1xf32> -> vector<9x1xf32>
    %363 = vector.broadcast %362 : vector<9x1xf32> to vector<9x4xf32>
    %364 = arith.mulf %361, %363 : vector<9x4xf32>
    %365 = vector.extract_strided_slice %324 {offsets = [0, 8], sizes = [9, 4], strides = [1, 1]} : vector<9x32xf32> to vector<9x4xf32>
    %366 = arith.truncf %365 : vector<9x4xf32> to vector<9x4xbf16>
    %367 = vector.extract_strided_slice %325 {offsets = [0, 8], sizes = [9, 4], strides = [1, 1]} : vector<9x32xf32> to vector<9x4xf32>
    %368 = arith.truncf %367 : vector<9x4xf32> to vector<9x4xbf16>
    %369 = vector.extract_strided_slice %326 {offsets = [0, 8], sizes = [9, 4], strides = [1, 1]} : vector<9x32xf32> to vector<9x4xf32>
    %370 = arith.truncf %369 : vector<9x4xf32> to vector<9x4xbf16>
    %cst_135 = arith.constant dense<0.000000e+00> : vector<9x9xf32>
    %371 = tpu.matmul %366, %368, %cst_135 {dimension_numbers = #tpu.dot_dimension_numbers<[1], [1], [0], [0], [0, 0, 1, 0], [], []>} : vector<9x4xbf16>, vector<9x4xbf16>, vector<9x9xf32> -> vector<9x9xf32>
    %cst_136 = arith.constant dense<0xFF800000> : vector<9xf32>
    %372 = vector.multi_reduction <maximumf>, %371, %cst_136 [1] : vector<9x9xf32> to vector<9xf32>
    %373 = vector.shape_cast %372 : vector<9xf32> to vector<9x1xf32>
    %374 = vector.broadcast %373 : vector<9x1xf32> to vector<9x9xf32>
    %375 = arith.subf %371, %374 : vector<9x9xf32>
    %376 = math.exp %375 : vector<9x9xf32>
    %cst_137 = arith.constant dense<0.000000e+00> : vector<9xf32>
    %377 = vector.multi_reduction <add>, %376, %cst_137 [1] : vector<9x9xf32> to vector<9xf32>
    %378 = vector.shape_cast %377 : vector<9xf32> to vector<9x1xf32>
    %379 = arith.truncf %376 : vector<9x9xf32> to vector<9x9xbf16>
    %cst_138 = arith.constant dense<0.000000e+00> : vector<9x4xf32>
    %380 = tpu.matmul %379, %370, %cst_138 {dimension_numbers = #tpu.dot_dimension_numbers<[1], [0], [0], [1], [0, 0, 1, 1], [], []>} : vector<9x9xbf16>, vector<9x4xbf16>, vector<9x4xf32> -> vector<9x4xf32>
    %381 = tpu.reciprocal %378 {approx = true} : vector<9x1xf32> -> vector<9x1xf32>
    %382 = vector.broadcast %381 : vector<9x1xf32> to vector<9x4xf32>
    %383 = arith.mulf %380, %382 : vector<9x4xf32>
    %384 = vector.extract_strided_slice %324 {offsets = [0, 12], sizes = [9, 4], strides = [1, 1]} : vector<9x32xf32> to vector<9x4xf32>
    %385 = arith.truncf %384 : vector<9x4xf32> to vector<9x4xbf16>
    %386 = vector.extract_strided_slice %325 {offsets = [0, 12], sizes = [9, 4], strides = [1, 1]} : vector<9x32xf32> to vector<9x4xf32>
    %387 = arith.truncf %386 : vector<9x4xf32> to vector<9x4xbf16>
    %388 = vector.extract_strided_slice %326 {offsets = [0, 12], sizes = [9, 4], strides = [1, 1]} : vector<9x32xf32> to vector<9x4xf32>
    %389 = arith.truncf %388 : vector<9x4xf32> to vector<9x4xbf16>
    %cst_139 = arith.constant dense<0.000000e+00> : vector<9x9xf32>
    %390 = tpu.matmul %385, %387, %cst_139 {dimension_numbers = #tpu.dot_dimension_numbers<[1], [1], [0], [0], [0, 0, 1, 0], [], []>} : vector<9x4xbf16>, vector<9x4xbf16>, vector<9x9xf32> -> vector<9x9xf32>
    %cst_140 = arith.constant dense<0xFF800000> : vector<9xf32>
    %391 = vector.multi_reduction <maximumf>, %390, %cst_140 [1] : vector<9x9xf32> to vector<9xf32>
    %392 = vector.shape_cast %391 : vector<9xf32> to vector<9x1xf32>
    %393 = vector.broadcast %392 : vector<9x1xf32> to vector<9x9xf32>
    %394 = arith.subf %390, %393 : vector<9x9xf32>
    %395 = math.exp %394 : vector<9x9xf32>
    %cst_141 = arith.constant dense<0.000000e+00> : vector<9xf32>
    %396 = vector.multi_reduction <add>, %395, %cst_141 [1] : vector<9x9xf32> to vector<9xf32>
    %397 = vector.shape_cast %396 : vector<9xf32> to vector<9x1xf32>
    %398 = arith.truncf %395 : vector<9x9xf32> to vector<9x9xbf16>
    %cst_142 = arith.constant dense<0.000000e+00> : vector<9x4xf32>
    %399 = tpu.matmul %398, %389, %cst_142 {dimension_numbers = #tpu.dot_dimension_numbers<[1], [0], [0], [1], [0, 0, 1, 1], [], []>} : vector<9x9xbf16>, vector<9x4xbf16>, vector<9x4xf32> -> vector<9x4xf32>
    %400 = tpu.reciprocal %397 {approx = true} : vector<9x1xf32> -> vector<9x1xf32>
    %401 = vector.broadcast %400 : vector<9x1xf32> to vector<9x4xf32>
    %402 = arith.mulf %399, %401 : vector<9x4xf32>
    %403 = vector.extract_strided_slice %324 {offsets = [0, 16], sizes = [9, 4], strides = [1, 1]} : vector<9x32xf32> to vector<9x4xf32>
    %404 = arith.truncf %403 : vector<9x4xf32> to vector<9x4xbf16>
    %405 = vector.extract_strided_slice %325 {offsets = [0, 16], sizes = [9, 4], strides = [1, 1]} : vector<9x32xf32> to vector<9x4xf32>
    %406 = arith.truncf %405 : vector<9x4xf32> to vector<9x4xbf16>
    %407 = vector.extract_strided_slice %326 {offsets = [0, 16], sizes = [9, 4], strides = [1, 1]} : vector<9x32xf32> to vector<9x4xf32>
    %408 = arith.truncf %407 : vector<9x4xf32> to vector<9x4xbf16>
    %cst_143 = arith.constant dense<0.000000e+00> : vector<9x9xf32>
    %409 = tpu.matmul %404, %406, %cst_143 {dimension_numbers = #tpu.dot_dimension_numbers<[1], [1], [0], [0], [0, 0, 1, 0], [], []>} : vector<9x4xbf16>, vector<9x4xbf16>, vector<9x9xf32> -> vector<9x9xf32>
    %cst_144 = arith.constant dense<0xFF800000> : vector<9xf32>
    %410 = vector.multi_reduction <maximumf>, %409, %cst_144 [1] : vector<9x9xf32> to vector<9xf32>
    %411 = vector.shape_cast %410 : vector<9xf32> to vector<9x1xf32>
    %412 = vector.broadcast %411 : vector<9x1xf32> to vector<9x9xf32>
    %413 = arith.subf %409, %412 : vector<9x9xf32>
    %414 = math.exp %413 : vector<9x9xf32>
    %cst_145 = arith.constant dense<0.000000e+00> : vector<9xf32>
    %415 = vector.multi_reduction <add>, %414, %cst_145 [1] : vector<9x9xf32> to vector<9xf32>
    %416 = vector.shape_cast %415 : vector<9xf32> to vector<9x1xf32>
    %417 = arith.truncf %414 : vector<9x9xf32> to vector<9x9xbf16>
    %cst_146 = arith.constant dense<0.000000e+00> : vector<9x4xf32>
    %418 = tpu.matmul %417, %408, %cst_146 {dimension_numbers = #tpu.dot_dimension_numbers<[1], [0], [0], [1], [0, 0, 1, 1], [], []>} : vector<9x9xbf16>, vector<9x4xbf16>, vector<9x4xf32> -> vector<9x4xf32>
    %419 = tpu.reciprocal %416 {approx = true} : vector<9x1xf32> -> vector<9x1xf32>
    %420 = vector.broadcast %419 : vector<9x1xf32> to vector<9x4xf32>
    %421 = arith.mulf %418, %420 : vector<9x4xf32>
    %422 = vector.extract_strided_slice %324 {offsets = [0, 20], sizes = [9, 4], strides = [1, 1]} : vector<9x32xf32> to vector<9x4xf32>
    %423 = arith.truncf %422 : vector<9x4xf32> to vector<9x4xbf16>
    %424 = vector.extract_strided_slice %325 {offsets = [0, 20], sizes = [9, 4], strides = [1, 1]} : vector<9x32xf32> to vector<9x4xf32>
    %425 = arith.truncf %424 : vector<9x4xf32> to vector<9x4xbf16>
    %426 = vector.extract_strided_slice %326 {offsets = [0, 20], sizes = [9, 4], strides = [1, 1]} : vector<9x32xf32> to vector<9x4xf32>
    %427 = arith.truncf %426 : vector<9x4xf32> to vector<9x4xbf16>
    %cst_147 = arith.constant dense<0.000000e+00> : vector<9x9xf32>
    %428 = tpu.matmul %423, %425, %cst_147 {dimension_numbers = #tpu.dot_dimension_numbers<[1], [1], [0], [0], [0, 0, 1, 0], [], []>} : vector<9x4xbf16>, vector<9x4xbf16>, vector<9x9xf32> -> vector<9x9xf32>
    %cst_148 = arith.constant dense<0xFF800000> : vector<9xf32>
    %429 = vector.multi_reduction <maximumf>, %428, %cst_148 [1] : vector<9x9xf32> to vector<9xf32>
    %430 = vector.shape_cast %429 : vector<9xf32> to vector<9x1xf32>
    %431 = vector.broadcast %430 : vector<9x1xf32> to vector<9x9xf32>
    %432 = arith.subf %428, %431 : vector<9x9xf32>
    %433 = math.exp %432 : vector<9x9xf32>
    %cst_149 = arith.constant dense<0.000000e+00> : vector<9xf32>
    %434 = vector.multi_reduction <add>, %433, %cst_149 [1] : vector<9x9xf32> to vector<9xf32>
    %435 = vector.shape_cast %434 : vector<9xf32> to vector<9x1xf32>
    %436 = arith.truncf %433 : vector<9x9xf32> to vector<9x9xbf16>
    %cst_150 = arith.constant dense<0.000000e+00> : vector<9x4xf32>
    %437 = tpu.matmul %436, %427, %cst_150 {dimension_numbers = #tpu.dot_dimension_numbers<[1], [0], [0], [1], [0, 0, 1, 1], [], []>} : vector<9x9xbf16>, vector<9x4xbf16>, vector<9x4xf32> -> vector<9x4xf32>
    %438 = tpu.reciprocal %435 {approx = true} : vector<9x1xf32> -> vector<9x1xf32>
    %439 = vector.broadcast %438 : vector<9x1xf32> to vector<9x4xf32>
    %440 = arith.mulf %437, %439 : vector<9x4xf32>
    %441 = vector.extract_strided_slice %324 {offsets = [0, 24], sizes = [9, 4], strides = [1, 1]} : vector<9x32xf32> to vector<9x4xf32>
    %442 = arith.truncf %441 : vector<9x4xf32> to vector<9x4xbf16>
    %443 = vector.extract_strided_slice %325 {offsets = [0, 24], sizes = [9, 4], strides = [1, 1]} : vector<9x32xf32> to vector<9x4xf32>
    %444 = arith.truncf %443 : vector<9x4xf32> to vector<9x4xbf16>
    %445 = vector.extract_strided_slice %326 {offsets = [0, 24], sizes = [9, 4], strides = [1, 1]} : vector<9x32xf32> to vector<9x4xf32>
    %446 = arith.truncf %445 : vector<9x4xf32> to vector<9x4xbf16>
    %cst_151 = arith.constant dense<0.000000e+00> : vector<9x9xf32>
    %447 = tpu.matmul %442, %444, %cst_151 {dimension_numbers = #tpu.dot_dimension_numbers<[1], [1], [0], [0], [0, 0, 1, 0], [], []>} : vector<9x4xbf16>, vector<9x4xbf16>, vector<9x9xf32> -> vector<9x9xf32>
    %cst_152 = arith.constant dense<0xFF800000> : vector<9xf32>
    %448 = vector.multi_reduction <maximumf>, %447, %cst_152 [1] : vector<9x9xf32> to vector<9xf32>
    %449 = vector.shape_cast %448 : vector<9xf32> to vector<9x1xf32>
    %450 = vector.broadcast %449 : vector<9x1xf32> to vector<9x9xf32>
    %451 = arith.subf %447, %450 : vector<9x9xf32>
    %452 = math.exp %451 : vector<9x9xf32>
    %cst_153 = arith.constant dense<0.000000e+00> : vector<9xf32>
    %453 = vector.multi_reduction <add>, %452, %cst_153 [1] : vector<9x9xf32> to vector<9xf32>
    %454 = vector.shape_cast %453 : vector<9xf32> to vector<9x1xf32>
    %455 = arith.truncf %452 : vector<9x9xf32> to vector<9x9xbf16>
    %cst_154 = arith.constant dense<0.000000e+00> : vector<9x4xf32>
    %456 = tpu.matmul %455, %446, %cst_154 {dimension_numbers = #tpu.dot_dimension_numbers<[1], [0], [0], [1], [0, 0, 1, 1], [], []>} : vector<9x9xbf16>, vector<9x4xbf16>, vector<9x4xf32> -> vector<9x4xf32>
    %457 = tpu.reciprocal %454 {approx = true} : vector<9x1xf32> -> vector<9x1xf32>
    %458 = vector.broadcast %457 : vector<9x1xf32> to vector<9x4xf32>
    %459 = arith.mulf %456, %458 : vector<9x4xf32>
    %460 = vector.extract_strided_slice %324 {offsets = [0, 28], sizes = [9, 4], strides = [1, 1]} : vector<9x32xf32> to vector<9x4xf32>
    %461 = arith.truncf %460 : vector<9x4xf32> to vector<9x4xbf16>
    %462 = vector.extract_strided_slice %325 {offsets = [0, 28], sizes = [9, 4], strides = [1, 1]} : vector<9x32xf32> to vector<9x4xf32>
    %463 = arith.truncf %462 : vector<9x4xf32> to vector<9x4xbf16>
    %464 = vector.extract_strided_slice %326 {offsets = [0, 28], sizes = [9, 4], strides = [1, 1]} : vector<9x32xf32> to vector<9x4xf32>
    %465 = arith.truncf %464 : vector<9x4xf32> to vector<9x4xbf16>
    %cst_155 = arith.constant dense<0.000000e+00> : vector<9x9xf32>
    %466 = tpu.matmul %461, %463, %cst_155 {dimension_numbers = #tpu.dot_dimension_numbers<[1], [1], [0], [0], [0, 0, 1, 0], [], []>} : vector<9x4xbf16>, vector<9x4xbf16>, vector<9x9xf32> -> vector<9x9xf32>
    %cst_156 = arith.constant dense<0xFF800000> : vector<9xf32>
    %467 = vector.multi_reduction <maximumf>, %466, %cst_156 [1] : vector<9x9xf32> to vector<9xf32>
    %468 = vector.shape_cast %467 : vector<9xf32> to vector<9x1xf32>
    %469 = vector.broadcast %468 : vector<9x1xf32> to vector<9x9xf32>
    %470 = arith.subf %466, %469 : vector<9x9xf32>
    %471 = math.exp %470 : vector<9x9xf32>
    %cst_157 = arith.constant dense<0.000000e+00> : vector<9xf32>
    %472 = vector.multi_reduction <add>, %471, %cst_157 [1] : vector<9x9xf32> to vector<9xf32>
    %473 = vector.shape_cast %472 : vector<9xf32> to vector<9x1xf32>
    %474 = arith.truncf %471 : vector<9x9xf32> to vector<9x9xbf16>
    %cst_158 = arith.constant dense<0.000000e+00> : vector<9x4xf32>
    %475 = tpu.matmul %474, %465, %cst_158 {dimension_numbers = #tpu.dot_dimension_numbers<[1], [0], [0], [1], [0, 0, 1, 1], [], []>} : vector<9x9xbf16>, vector<9x4xbf16>, vector<9x4xf32> -> vector<9x4xf32>
    %476 = tpu.reciprocal %473 {approx = true} : vector<9x1xf32> -> vector<9x1xf32>
    %477 = vector.broadcast %476 : vector<9x1xf32> to vector<9x4xf32>
    %478 = arith.mulf %475, %477 : vector<9x4xf32>
    %479 = tpu.concatenate %345, %364, %383, %402, %421, %440, %459, %478 in 1 : vector<9x4xf32>, vector<9x4xf32>, vector<9x4xf32>, vector<9x4xf32>, vector<9x4xf32>, vector<9x4xf32>, vector<9x4xf32>, vector<9x4xf32> -> vector<9x32xf32>
    %480 = arith.truncf %479 : vector<9x32xf32> to vector<9x32xbf16>
    %cst_159 = arith.constant dense<0.000000e+00> : vector<9x32xf32>
    %481 = tpu.matmul %480, %315, %cst_159 {dimension_numbers = #tpu.dot_dimension_numbers<[1], [0], [0], [1], [0, 0, 1, 1], [], []>} : vector<9x32xbf16>, vector<32x32xbf16>, vector<9x32xf32> -> vector<9x32xf32>
    %482 = vector.broadcast %317 : vector<1x32xf32> to vector<9x32xf32>
    %483 = arith.addf %481, %482 : vector<9x32xf32>
    %484 = arith.addf %285, %483 : vector<9x32xf32>
    %c1_160 = arith.constant 1 : index
    %c0_161 = arith.constant 0 : index
    %c0_162 = arith.constant 0 : index
    %485 = vector.load %arg18[%c1_160, %c0_161, %c0_162] : memref<2x1x32xf32, #tpu.memory_space<vmem>>, vector<1x1x32xf32>
    %486 = vector.shape_cast %485 : vector<1x1x32xf32> to vector<1x32xf32>
    %c1_163 = arith.constant 1 : index
    %c0_164 = arith.constant 0 : index
    %c0_165 = arith.constant 0 : index
    %487 = vector.load %arg19[%c1_163, %c0_164, %c0_165] : memref<2x1x32xf32, #tpu.memory_space<vmem>>, vector<1x1x32xf32>
    %488 = vector.shape_cast %487 : vector<1x1x32xf32> to vector<1x32xf32>
    %cst_166 = arith.constant dense<0.000000e+00> : vector<9xf32>
    %489 = vector.multi_reduction <add>, %484, %cst_166 [1] : vector<9x32xf32> to vector<9xf32>
    %490 = vector.shape_cast %489 : vector<9xf32> to vector<9x1xf32>
    %cst_167 = arith.constant 3.200000e+01 : f32
    %491 = vector.broadcast %cst_167 : f32 to vector<9x1xf32>
    %492 = arith.divf %490, %491 : vector<9x1xf32>
    %493 = vector.broadcast %492 : vector<9x1xf32> to vector<9x32xf32>
    %494 = arith.subf %484, %493 : vector<9x32xf32>
    %495 = arith.mulf %494, %494 : vector<9x32xf32>
    %cst_168 = arith.constant dense<0.000000e+00> : vector<9xf32>
    %496 = vector.multi_reduction <add>, %495, %cst_168 [1] : vector<9x32xf32> to vector<9xf32>
    %497 = vector.shape_cast %496 : vector<9xf32> to vector<9x1xf32>
    %cst_169 = arith.constant 3.200000e+01 : f32
    %498 = vector.broadcast %cst_169 : f32 to vector<9x1xf32>
    %499 = arith.divf %497, %498 : vector<9x1xf32>
    %cst_170 = arith.constant 9.99999974E-6 : f32
    %500 = vector.broadcast %cst_170 : f32 to vector<9x1xf32>
    %501 = arith.addf %499, %500 : vector<9x1xf32>
    %502 = math.rsqrt %501 : vector<9x1xf32>
    %503 = vector.broadcast %502 : vector<9x1xf32> to vector<9x32xf32>
    %504 = arith.mulf %494, %503 : vector<9x32xf32>
    %505 = vector.broadcast %486 : vector<1x32xf32> to vector<9x32xf32>
    %506 = arith.mulf %504, %505 : vector<9x32xf32>
    %507 = vector.broadcast %488 : vector<1x32xf32> to vector<9x32xf32>
    %508 = arith.addf %506, %507 : vector<9x32xf32>
    %c1_171 = arith.constant 1 : index
    %c0_172 = arith.constant 0 : index
    %c0_173 = arith.constant 0 : index
    %509 = vector.load %arg20[%c1_171, %c0_172, %c0_173] : memref<2x32x128xbf16, #tpu.memory_space<vmem>>, vector<1x32x128xbf16>
    %510 = vector.shape_cast %509 : vector<1x32x128xbf16> to vector<32x128xbf16>
    %c1_174 = arith.constant 1 : index
    %c0_175 = arith.constant 0 : index
    %c0_176 = arith.constant 0 : index
    %511 = vector.load %arg21[%c1_174, %c0_175, %c0_176] : memref<2x1x128xf32, #tpu.memory_space<vmem>>, vector<1x1x128xf32>
    %512 = vector.shape_cast %511 : vector<1x1x128xf32> to vector<1x128xf32>
    %c1_177 = arith.constant 1 : index
    %c0_178 = arith.constant 0 : index
    %c0_179 = arith.constant 0 : index
    %513 = vector.load %arg22[%c1_177, %c0_178, %c0_179] : memref<2x128x32xbf16, #tpu.memory_space<vmem>>, vector<1x128x32xbf16>
    %514 = vector.shape_cast %513 : vector<1x128x32xbf16> to vector<128x32xbf16>
    %c1_180 = arith.constant 1 : index
    %c0_181 = arith.constant 0 : index
    %c0_182 = arith.constant 0 : index
    %515 = vector.load %arg23[%c1_180, %c0_181, %c0_182] : memref<2x1x32xf32, #tpu.memory_space<vmem>>, vector<1x1x32xf32>
    %516 = vector.shape_cast %515 : vector<1x1x32xf32> to vector<1x32xf32>
    %517 = arith.truncf %508 : vector<9x32xf32> to vector<9x32xbf16>
    %cst_183 = arith.constant dense<0.000000e+00> : vector<9x128xf32>
    %518 = tpu.matmul %517, %510, %cst_183 {dimension_numbers = #tpu.dot_dimension_numbers<[1], [0], [0], [1], [0, 0, 1, 1], [], []>} : vector<9x32xbf16>, vector<32x128xbf16>, vector<9x128xf32> -> vector<9x128xf32>
    %519 = vector.broadcast %512 : vector<1x128xf32> to vector<9x128xf32>
    %520 = arith.addf %518, %519 : vector<9x128xf32>
    %cst_184 = arith.constant 5.000000e-01 : f32
    %521 = vector.broadcast %cst_184 : f32 to vector<9x128xf32>
    %522 = arith.mulf %521, %520 : vector<9x128xf32>
    %cst_185 = arith.constant 0.707106769 : f32
    %523 = vector.broadcast %cst_185 : f32 to vector<9x128xf32>
    %524 = arith.mulf %520, %523 : vector<9x128xf32>
    %525 = math.absf %524 : vector<9x128xf32>
    %cst_186 = arith.constant 0.327591091 : f32
    %526 = vector.broadcast %cst_186 : f32 to vector<9x128xf32>
    %527 = arith.mulf %526, %525 : vector<9x128xf32>
    %cst_187 = arith.constant 1.000000e+00 : f32
    %528 = vector.broadcast %cst_187 : f32 to vector<9x128xf32>
    %529 = arith.addf %528, %527 : vector<9x128xf32>
    %cst_188 = arith.constant 1.000000e+00 : f32
    %530 = vector.broadcast %cst_188 : f32 to vector<9x128xf32>
    %531 = arith.divf %530, %529 : vector<9x128xf32>
    %cst_189 = arith.constant 1.06140542 : f32
    %532 = vector.broadcast %cst_189 : f32 to vector<9x128xf32>
    %533 = arith.mulf %532, %531 : vector<9x128xf32>
    %cst_190 = arith.constant -1.45315206 : f32
    %534 = vector.broadcast %cst_190 : f32 to vector<9x128xf32>
    %535 = arith.addf %533, %534 : vector<9x128xf32>
    %536 = arith.mulf %535, %531 : vector<9x128xf32>
    %cst_191 = arith.constant 1.42141378 : f32
    %537 = vector.broadcast %cst_191 : f32 to vector<9x128xf32>
    %538 = arith.addf %536, %537 : vector<9x128xf32>
    %539 = arith.mulf %538, %531 : vector<9x128xf32>
    %cst_192 = arith.constant -0.284496725 : f32
    %540 = vector.broadcast %cst_192 : f32 to vector<9x128xf32>
    %541 = arith.addf %539, %540 : vector<9x128xf32>
    %542 = arith.mulf %541, %531 : vector<9x128xf32>
    %cst_193 = arith.constant 0.254829586 : f32
    %543 = vector.broadcast %cst_193 : f32 to vector<9x128xf32>
    %544 = arith.addf %542, %543 : vector<9x128xf32>
    %545 = arith.mulf %544, %531 : vector<9x128xf32>
    %cst_194 = arith.constant 0.000000e+00 : f32
    %546 = vector.broadcast %cst_194 : f32 to vector<9x128xf32>
    %547 = arith.subf %546, %525 : vector<9x128xf32>
    %548 = arith.mulf %547, %525 : vector<9x128xf32>
    %549 = math.exp %548 : vector<9x128xf32>
    %550 = arith.mulf %545, %549 : vector<9x128xf32>
    %cst_195 = arith.constant 1.000000e+00 : f32
    %551 = vector.broadcast %cst_195 : f32 to vector<9x128xf32>
    %552 = arith.subf %551, %550 : vector<9x128xf32>
    %cst_196 = arith.constant 0.000000e+00 : f32
    %553 = vector.broadcast %cst_196 : f32 to vector<9x128xf32>
    %554 = arith.cmpf oge, %524, %553 : vector<9x128xf32>
    %cst_197 = arith.constant 0.000000e+00 : f32
    %555 = vector.broadcast %cst_197 : f32 to vector<9x128xf32>
    %556 = arith.subf %555, %552 : vector<9x128xf32>
    %557 = arith.select %554, %552, %556 : vector<9x128xi1>, vector<9x128xf32>
    %cst_198 = arith.constant 1.000000e+00 : f32
    %558 = vector.broadcast %cst_198 : f32 to vector<9x128xf32>
    %559 = arith.addf %558, %557 : vector<9x128xf32>
    %560 = arith.mulf %522, %559 : vector<9x128xf32>
    %561 = arith.truncf %560 : vector<9x128xf32> to vector<9x128xbf16>
    %cst_199 = arith.constant dense<0.000000e+00> : vector<9x32xf32>
    %562 = tpu.matmul %561, %514, %cst_199 {dimension_numbers = #tpu.dot_dimension_numbers<[1], [0], [0], [1], [0, 0, 1, 1], [], []>} : vector<9x128xbf16>, vector<128x32xbf16>, vector<9x32xf32> -> vector<9x32xf32>
    %563 = vector.broadcast %516 : vector<1x32xf32> to vector<9x32xf32>
    %564 = arith.addf %562, %563 : vector<9x32xf32>
    %565 = arith.addf %484, %564 : vector<9x32xf32>
    %c0_200 = arith.constant 0 : index
    %c0_201 = arith.constant 0 : index
    %566 = vector.load %arg5[%c0_200, %c0_201] : memref<1x32xf32, #tpu.memory_space<vmem>>, vector<1x32xf32>
    %c0_202 = arith.constant 0 : index
    %c0_203 = arith.constant 0 : index
    %567 = vector.load %arg6[%c0_202, %c0_203] : memref<1x32xf32, #tpu.memory_space<vmem>>, vector<1x32xf32>
    %cst_204 = arith.constant dense<0.000000e+00> : vector<9xf32>
    %568 = vector.multi_reduction <add>, %565, %cst_204 [1] : vector<9x32xf32> to vector<9xf32>
    %569 = vector.shape_cast %568 : vector<9xf32> to vector<9x1xf32>
    %cst_205 = arith.constant 3.200000e+01 : f32
    %570 = vector.broadcast %cst_205 : f32 to vector<9x1xf32>
    %571 = arith.divf %569, %570 : vector<9x1xf32>
    %572 = vector.broadcast %571 : vector<9x1xf32> to vector<9x32xf32>
    %573 = arith.subf %565, %572 : vector<9x32xf32>
    %574 = arith.mulf %573, %573 : vector<9x32xf32>
    %cst_206 = arith.constant dense<0.000000e+00> : vector<9xf32>
    %575 = vector.multi_reduction <add>, %574, %cst_206 [1] : vector<9x32xf32> to vector<9xf32>
    %576 = vector.shape_cast %575 : vector<9xf32> to vector<9x1xf32>
    %cst_207 = arith.constant 3.200000e+01 : f32
    %577 = vector.broadcast %cst_207 : f32 to vector<9x1xf32>
    %578 = arith.divf %576, %577 : vector<9x1xf32>
    %cst_208 = arith.constant 9.99999974E-6 : f32
    %579 = vector.broadcast %cst_208 : f32 to vector<9x1xf32>
    %580 = arith.addf %578, %579 : vector<9x1xf32>
    %581 = math.rsqrt %580 : vector<9x1xf32>
    %582 = vector.broadcast %581 : vector<9x1xf32> to vector<9x32xf32>
    %583 = arith.mulf %573, %582 : vector<9x32xf32>
    %584 = vector.broadcast %566 : vector<1x32xf32> to vector<9x32xf32>
    %585 = arith.mulf %583, %584 : vector<9x32xf32>
    %586 = vector.broadcast %567 : vector<1x32xf32> to vector<9x32xf32>
    %587 = arith.addf %585, %586 : vector<9x32xf32>
    %c0_209 = arith.constant 0 : index
    %c0_210 = arith.constant 0 : index
    %588 = vector.load %arg4[%c0_209, %c0_210] : memref<8x32xf32, #tpu.memory_space<vmem>>, vector<8x32xf32>
    %589 = tpu.iota {dimensions = array<i32: 0>} : vector<8x8xi32>
    %590 = tpu.iota {dimensions = array<i32: 1>} : vector<8x8xi32>
    %591 = arith.cmpi sgt, %590, %589 : vector<8x8xi32>
    %c0_211 = arith.constant 0 : index
    %c0_212 = arith.constant 0 : index
    %c0_213 = arith.constant 0 : index
    %592 = vector.load %arg24[%c0_211, %c0_212, %c0_213] : memref<2x1x32xf32, #tpu.memory_space<vmem>>, vector<1x1x32xf32>
    %593 = vector.shape_cast %592 : vector<1x1x32xf32> to vector<1x32xf32>
    %c0_214 = arith.constant 0 : index
    %c0_215 = arith.constant 0 : index
    %c0_216 = arith.constant 0 : index
    %594 = vector.load %arg25[%c0_214, %c0_215, %c0_216] : memref<2x1x32xf32, #tpu.memory_space<vmem>>, vector<1x1x32xf32>
    %595 = vector.shape_cast %594 : vector<1x1x32xf32> to vector<1x32xf32>
    %cst_217 = arith.constant dense<0.000000e+00> : vector<8xf32>
    %596 = vector.multi_reduction <add>, %588, %cst_217 [1] : vector<8x32xf32> to vector<8xf32>
    %597 = vector.shape_cast %596 : vector<8xf32> to vector<8x1xf32>
    %cst_218 = arith.constant 3.200000e+01 : f32
    %598 = vector.broadcast %cst_218 : f32 to vector<8x1xf32>
    %599 = arith.divf %597, %598 : vector<8x1xf32>
    %600 = vector.broadcast %599 : vector<8x1xf32> to vector<8x32xf32>
    %601 = arith.subf %588, %600 : vector<8x32xf32>
    %602 = arith.mulf %601, %601 : vector<8x32xf32>
    %cst_219 = arith.constant dense<0.000000e+00> : vector<8xf32>
    %603 = vector.multi_reduction <add>, %602, %cst_219 [1] : vector<8x32xf32> to vector<8xf32>
    %604 = vector.shape_cast %603 : vector<8xf32> to vector<8x1xf32>
    %cst_220 = arith.constant 3.200000e+01 : f32
    %605 = vector.broadcast %cst_220 : f32 to vector<8x1xf32>
    %606 = arith.divf %604, %605 : vector<8x1xf32>
    %cst_221 = arith.constant 9.99999974E-6 : f32
    %607 = vector.broadcast %cst_221 : f32 to vector<8x1xf32>
    %608 = arith.addf %606, %607 : vector<8x1xf32>
    %609 = math.rsqrt %608 : vector<8x1xf32>
    %610 = vector.broadcast %609 : vector<8x1xf32> to vector<8x32xf32>
    %611 = arith.mulf %601, %610 : vector<8x32xf32>
    %612 = vector.broadcast %593 : vector<1x32xf32> to vector<8x32xf32>
    %613 = arith.mulf %611, %612 : vector<8x32xf32>
    %614 = vector.broadcast %595 : vector<1x32xf32> to vector<8x32xf32>
    %615 = arith.addf %613, %614 : vector<8x32xf32>
    %c0_222 = arith.constant 0 : index
    %c0_223 = arith.constant 0 : index
    %c0_224 = arith.constant 0 : index
    %616 = vector.load %arg26[%c0_222, %c0_223, %c0_224] : memref<2x32x96xbf16, #tpu.memory_space<vmem>>, vector<1x32x96xbf16>
    %617 = vector.shape_cast %616 : vector<1x32x96xbf16> to vector<32x96xbf16>
    %c0_225 = arith.constant 0 : index
    %c0_226 = arith.constant 0 : index
    %c0_227 = arith.constant 0 : index
    %618 = vector.load %arg27[%c0_225, %c0_226, %c0_227] : memref<2x1x96xf32, #tpu.memory_space<vmem>>, vector<1x1x96xf32>
    %619 = vector.shape_cast %618 : vector<1x1x96xf32> to vector<1x96xf32>
    %c0_228 = arith.constant 0 : index
    %c0_229 = arith.constant 0 : index
    %c0_230 = arith.constant 0 : index
    %620 = vector.load %arg28[%c0_228, %c0_229, %c0_230] : memref<2x32x32xbf16, #tpu.memory_space<vmem>>, vector<1x32x32xbf16>
    %621 = vector.shape_cast %620 : vector<1x32x32xbf16> to vector<32x32xbf16>
    %c0_231 = arith.constant 0 : index
    %c0_232 = arith.constant 0 : index
    %c0_233 = arith.constant 0 : index
    %622 = vector.load %arg29[%c0_231, %c0_232, %c0_233] : memref<2x1x32xf32, #tpu.memory_space<vmem>>, vector<1x1x32xf32>
    %623 = vector.shape_cast %622 : vector<1x1x32xf32> to vector<1x32xf32>
    %624 = arith.truncf %615 : vector<8x32xf32> to vector<8x32xbf16>
    %cst_234 = arith.constant dense<0.000000e+00> : vector<8x96xf32>
    %625 = tpu.matmul %624, %617, %cst_234 {dimension_numbers = #tpu.dot_dimension_numbers<[1], [0], [0], [1], [0, 0, 1, 1], [], []>} : vector<8x32xbf16>, vector<32x96xbf16>, vector<8x96xf32> -> vector<8x96xf32>
    %626 = vector.broadcast %619 : vector<1x96xf32> to vector<8x96xf32>
    %627 = arith.addf %625, %626 : vector<8x96xf32>
    %628 = vector.extract_strided_slice %627 {offsets = [0, 0], sizes = [8, 32], strides = [1, 1]} : vector<8x96xf32> to vector<8x32xf32>
    %cst_235 = arith.constant 0.353553385 : f32
    %629 = vector.broadcast %cst_235 : f32 to vector<8x32xf32>
    %630 = arith.mulf %628, %629 : vector<8x32xf32>
    %631 = vector.extract_strided_slice %627 {offsets = [0, 32], sizes = [8, 32], strides = [1, 1]} : vector<8x96xf32> to vector<8x32xf32>
    %632 = vector.extract_strided_slice %627 {offsets = [0, 64], sizes = [8, 32], strides = [1, 1]} : vector<8x96xf32> to vector<8x32xf32>
    %633 = vector.extract_strided_slice %630 {offsets = [0, 0], sizes = [8, 8], strides = [1, 1]} : vector<8x32xf32> to vector<8x8xf32>
    %634 = arith.truncf %633 : vector<8x8xf32> to vector<8x8xbf16>
    %635 = vector.extract_strided_slice %631 {offsets = [0, 0], sizes = [8, 8], strides = [1, 1]} : vector<8x32xf32> to vector<8x8xf32>
    %636 = arith.truncf %635 : vector<8x8xf32> to vector<8x8xbf16>
    %637 = vector.extract_strided_slice %632 {offsets = [0, 0], sizes = [8, 8], strides = [1, 1]} : vector<8x32xf32> to vector<8x8xf32>
    %638 = arith.truncf %637 : vector<8x8xf32> to vector<8x8xbf16>
    %cst_236 = arith.constant dense<0.000000e+00> : vector<8x8xf32>
    %639 = tpu.matmul %634, %636, %cst_236 {dimension_numbers = #tpu.dot_dimension_numbers<[1], [1], [0], [0], [0, 0, 1, 0], [], []>} : vector<8x8xbf16>, vector<8x8xbf16>, vector<8x8xf32> -> vector<8x8xf32>
    %cst_237 = arith.constant 0xFF800000 : f32
    %640 = vector.broadcast %cst_237 : f32 to vector<8x8xf32>
    %641 = arith.select %591, %640, %639 : vector<8x8xi1>, vector<8x8xf32>
    %cst_238 = arith.constant dense<0xFF800000> : vector<8xf32>
    %642 = vector.multi_reduction <maximumf>, %641, %cst_238 [1] : vector<8x8xf32> to vector<8xf32>
    %643 = vector.shape_cast %642 : vector<8xf32> to vector<8x1xf32>
    %644 = vector.broadcast %643 : vector<8x1xf32> to vector<8x8xf32>
    %645 = arith.subf %641, %644 : vector<8x8xf32>
    %646 = math.exp %645 : vector<8x8xf32>
    %cst_239 = arith.constant dense<0.000000e+00> : vector<8xf32>
    %647 = vector.multi_reduction <add>, %646, %cst_239 [1] : vector<8x8xf32> to vector<8xf32>
    %648 = vector.shape_cast %647 : vector<8xf32> to vector<8x1xf32>
    %649 = arith.truncf %646 : vector<8x8xf32> to vector<8x8xbf16>
    %cst_240 = arith.constant dense<0.000000e+00> : vector<8x8xf32>
    %650 = tpu.matmul %649, %638, %cst_240 {dimension_numbers = #tpu.dot_dimension_numbers<[1], [0], [0], [1], [0, 0, 1, 1], [], []>} : vector<8x8xbf16>, vector<8x8xbf16>, vector<8x8xf32> -> vector<8x8xf32>
    %651 = tpu.reciprocal %648 {approx = true} : vector<8x1xf32> -> vector<8x1xf32>
    %652 = vector.broadcast %651 : vector<8x1xf32> to vector<8x8xf32>
    %653 = arith.mulf %650, %652 : vector<8x8xf32>
    %654 = vector.extract_strided_slice %630 {offsets = [0, 8], sizes = [8, 8], strides = [1, 1]} : vector<8x32xf32> to vector<8x8xf32>
    %655 = arith.truncf %654 : vector<8x8xf32> to vector<8x8xbf16>
    %656 = vector.extract_strided_slice %631 {offsets = [0, 8], sizes = [8, 8], strides = [1, 1]} : vector<8x32xf32> to vector<8x8xf32>
    %657 = arith.truncf %656 : vector<8x8xf32> to vector<8x8xbf16>
    %658 = vector.extract_strided_slice %632 {offsets = [0, 8], sizes = [8, 8], strides = [1, 1]} : vector<8x32xf32> to vector<8x8xf32>
    %659 = arith.truncf %658 : vector<8x8xf32> to vector<8x8xbf16>
    %cst_241 = arith.constant dense<0.000000e+00> : vector<8x8xf32>
    %660 = tpu.matmul %655, %657, %cst_241 {dimension_numbers = #tpu.dot_dimension_numbers<[1], [1], [0], [0], [0, 0, 1, 0], [], []>} : vector<8x8xbf16>, vector<8x8xbf16>, vector<8x8xf32> -> vector<8x8xf32>
    %cst_242 = arith.constant 0xFF800000 : f32
    %661 = vector.broadcast %cst_242 : f32 to vector<8x8xf32>
    %662 = arith.select %591, %661, %660 : vector<8x8xi1>, vector<8x8xf32>
    %cst_243 = arith.constant dense<0xFF800000> : vector<8xf32>
    %663 = vector.multi_reduction <maximumf>, %662, %cst_243 [1] : vector<8x8xf32> to vector<8xf32>
    %664 = vector.shape_cast %663 : vector<8xf32> to vector<8x1xf32>
    %665 = vector.broadcast %664 : vector<8x1xf32> to vector<8x8xf32>
    %666 = arith.subf %662, %665 : vector<8x8xf32>
    %667 = math.exp %666 : vector<8x8xf32>
    %cst_244 = arith.constant dense<0.000000e+00> : vector<8xf32>
    %668 = vector.multi_reduction <add>, %667, %cst_244 [1] : vector<8x8xf32> to vector<8xf32>
    %669 = vector.shape_cast %668 : vector<8xf32> to vector<8x1xf32>
    %670 = arith.truncf %667 : vector<8x8xf32> to vector<8x8xbf16>
    %cst_245 = arith.constant dense<0.000000e+00> : vector<8x8xf32>
    %671 = tpu.matmul %670, %659, %cst_245 {dimension_numbers = #tpu.dot_dimension_numbers<[1], [0], [0], [1], [0, 0, 1, 1], [], []>} : vector<8x8xbf16>, vector<8x8xbf16>, vector<8x8xf32> -> vector<8x8xf32>
    %672 = tpu.reciprocal %669 {approx = true} : vector<8x1xf32> -> vector<8x1xf32>
    %673 = vector.broadcast %672 : vector<8x1xf32> to vector<8x8xf32>
    %674 = arith.mulf %671, %673 : vector<8x8xf32>
    %675 = vector.extract_strided_slice %630 {offsets = [0, 16], sizes = [8, 8], strides = [1, 1]} : vector<8x32xf32> to vector<8x8xf32>
    %676 = arith.truncf %675 : vector<8x8xf32> to vector<8x8xbf16>
    %677 = vector.extract_strided_slice %631 {offsets = [0, 16], sizes = [8, 8], strides = [1, 1]} : vector<8x32xf32> to vector<8x8xf32>
    %678 = arith.truncf %677 : vector<8x8xf32> to vector<8x8xbf16>
    %679 = vector.extract_strided_slice %632 {offsets = [0, 16], sizes = [8, 8], strides = [1, 1]} : vector<8x32xf32> to vector<8x8xf32>
    %680 = arith.truncf %679 : vector<8x8xf32> to vector<8x8xbf16>
    %cst_246 = arith.constant dense<0.000000e+00> : vector<8x8xf32>
    %681 = tpu.matmul %676, %678, %cst_246 {dimension_numbers = #tpu.dot_dimension_numbers<[1], [1], [0], [0], [0, 0, 1, 0], [], []>} : vector<8x8xbf16>, vector<8x8xbf16>, vector<8x8xf32> -> vector<8x8xf32>
    %cst_247 = arith.constant 0xFF800000 : f32
    %682 = vector.broadcast %cst_247 : f32 to vector<8x8xf32>
    %683 = arith.select %591, %682, %681 : vector<8x8xi1>, vector<8x8xf32>
    %cst_248 = arith.constant dense<0xFF800000> : vector<8xf32>
    %684 = vector.multi_reduction <maximumf>, %683, %cst_248 [1] : vector<8x8xf32> to vector<8xf32>
    %685 = vector.shape_cast %684 : vector<8xf32> to vector<8x1xf32>
    %686 = vector.broadcast %685 : vector<8x1xf32> to vector<8x8xf32>
    %687 = arith.subf %683, %686 : vector<8x8xf32>
    %688 = math.exp %687 : vector<8x8xf32>
    %cst_249 = arith.constant dense<0.000000e+00> : vector<8xf32>
    %689 = vector.multi_reduction <add>, %688, %cst_249 [1] : vector<8x8xf32> to vector<8xf32>
    %690 = vector.shape_cast %689 : vector<8xf32> to vector<8x1xf32>
    %691 = arith.truncf %688 : vector<8x8xf32> to vector<8x8xbf16>
    %cst_250 = arith.constant dense<0.000000e+00> : vector<8x8xf32>
    %692 = tpu.matmul %691, %680, %cst_250 {dimension_numbers = #tpu.dot_dimension_numbers<[1], [0], [0], [1], [0, 0, 1, 1], [], []>} : vector<8x8xbf16>, vector<8x8xbf16>, vector<8x8xf32> -> vector<8x8xf32>
    %693 = tpu.reciprocal %690 {approx = true} : vector<8x1xf32> -> vector<8x1xf32>
    %694 = vector.broadcast %693 : vector<8x1xf32> to vector<8x8xf32>
    %695 = arith.mulf %692, %694 : vector<8x8xf32>
    %696 = vector.extract_strided_slice %630 {offsets = [0, 24], sizes = [8, 8], strides = [1, 1]} : vector<8x32xf32> to vector<8x8xf32>
    %697 = arith.truncf %696 : vector<8x8xf32> to vector<8x8xbf16>
    %698 = vector.extract_strided_slice %631 {offsets = [0, 24], sizes = [8, 8], strides = [1, 1]} : vector<8x32xf32> to vector<8x8xf32>
    %699 = arith.truncf %698 : vector<8x8xf32> to vector<8x8xbf16>
    %700 = vector.extract_strided_slice %632 {offsets = [0, 24], sizes = [8, 8], strides = [1, 1]} : vector<8x32xf32> to vector<8x8xf32>
    %701 = arith.truncf %700 : vector<8x8xf32> to vector<8x8xbf16>
    %cst_251 = arith.constant dense<0.000000e+00> : vector<8x8xf32>
    %702 = tpu.matmul %697, %699, %cst_251 {dimension_numbers = #tpu.dot_dimension_numbers<[1], [1], [0], [0], [0, 0, 1, 0], [], []>} : vector<8x8xbf16>, vector<8x8xbf16>, vector<8x8xf32> -> vector<8x8xf32>
    %cst_252 = arith.constant 0xFF800000 : f32
    %703 = vector.broadcast %cst_252 : f32 to vector<8x8xf32>
    %704 = arith.select %591, %703, %702 : vector<8x8xi1>, vector<8x8xf32>
    %cst_253 = arith.constant dense<0xFF800000> : vector<8xf32>
    %705 = vector.multi_reduction <maximumf>, %704, %cst_253 [1] : vector<8x8xf32> to vector<8xf32>
    %706 = vector.shape_cast %705 : vector<8xf32> to vector<8x1xf32>
    %707 = vector.broadcast %706 : vector<8x1xf32> to vector<8x8xf32>
    %708 = arith.subf %704, %707 : vector<8x8xf32>
    %709 = math.exp %708 : vector<8x8xf32>
    %cst_254 = arith.constant dense<0.000000e+00> : vector<8xf32>
    %710 = vector.multi_reduction <add>, %709, %cst_254 [1] : vector<8x8xf32> to vector<8xf32>
    %711 = vector.shape_cast %710 : vector<8xf32> to vector<8x1xf32>
    %712 = arith.truncf %709 : vector<8x8xf32> to vector<8x8xbf16>
    %cst_255 = arith.constant dense<0.000000e+00> : vector<8x8xf32>
    %713 = tpu.matmul %712, %701, %cst_255 {dimension_numbers = #tpu.dot_dimension_numbers<[1], [0], [0], [1], [0, 0, 1, 1], [], []>} : vector<8x8xbf16>, vector<8x8xbf16>, vector<8x8xf32> -> vector<8x8xf32>
    %714 = tpu.reciprocal %711 {approx = true} : vector<8x1xf32> -> vector<8x1xf32>
    %715 = vector.broadcast %714 : vector<8x1xf32> to vector<8x8xf32>
    %716 = arith.mulf %713, %715 : vector<8x8xf32>
    %717 = tpu.concatenate %653, %674, %695, %716 in 1 : vector<8x8xf32>, vector<8x8xf32>, vector<8x8xf32>, vector<8x8xf32> -> vector<8x32xf32>
    %718 = arith.truncf %717 : vector<8x32xf32> to vector<8x32xbf16>
    %cst_256 = arith.constant dense<0.000000e+00> : vector<8x32xf32>
    %719 = tpu.matmul %718, %621, %cst_256 {dimension_numbers = #tpu.dot_dimension_numbers<[1], [0], [0], [1], [0, 0, 1, 1], [], []>} : vector<8x32xbf16>, vector<32x32xbf16>, vector<8x32xf32> -> vector<8x32xf32>
    %720 = vector.broadcast %623 : vector<1x32xf32> to vector<8x32xf32>
    %721 = arith.addf %719, %720 : vector<8x32xf32>
    %722 = arith.addf %588, %721 : vector<8x32xf32>
    %c0_257 = arith.constant 0 : index
    %c0_258 = arith.constant 0 : index
    %c0_259 = arith.constant 0 : index
    %723 = vector.load %arg30[%c0_257, %c0_258, %c0_259] : memref<2x1x32xf32, #tpu.memory_space<vmem>>, vector<1x1x32xf32>
    %724 = vector.shape_cast %723 : vector<1x1x32xf32> to vector<1x32xf32>
    %c0_260 = arith.constant 0 : index
    %c0_261 = arith.constant 0 : index
    %c0_262 = arith.constant 0 : index
    %725 = vector.load %arg31[%c0_260, %c0_261, %c0_262] : memref<2x1x32xf32, #tpu.memory_space<vmem>>, vector<1x1x32xf32>
    %726 = vector.shape_cast %725 : vector<1x1x32xf32> to vector<1x32xf32>
    %cst_263 = arith.constant dense<0.000000e+00> : vector<8xf32>
    %727 = vector.multi_reduction <add>, %722, %cst_263 [1] : vector<8x32xf32> to vector<8xf32>
    %728 = vector.shape_cast %727 : vector<8xf32> to vector<8x1xf32>
    %cst_264 = arith.constant 3.200000e+01 : f32
    %729 = vector.broadcast %cst_264 : f32 to vector<8x1xf32>
    %730 = arith.divf %728, %729 : vector<8x1xf32>
    %731 = vector.broadcast %730 : vector<8x1xf32> to vector<8x32xf32>
    %732 = arith.subf %722, %731 : vector<8x32xf32>
    %733 = arith.mulf %732, %732 : vector<8x32xf32>
    %cst_265 = arith.constant dense<0.000000e+00> : vector<8xf32>
    %734 = vector.multi_reduction <add>, %733, %cst_265 [1] : vector<8x32xf32> to vector<8xf32>
    %735 = vector.shape_cast %734 : vector<8xf32> to vector<8x1xf32>
    %cst_266 = arith.constant 3.200000e+01 : f32
    %736 = vector.broadcast %cst_266 : f32 to vector<8x1xf32>
    %737 = arith.divf %735, %736 : vector<8x1xf32>
    %cst_267 = arith.constant 9.99999974E-6 : f32
    %738 = vector.broadcast %cst_267 : f32 to vector<8x1xf32>
    %739 = arith.addf %737, %738 : vector<8x1xf32>
    %740 = math.rsqrt %739 : vector<8x1xf32>
    %741 = vector.broadcast %740 : vector<8x1xf32> to vector<8x32xf32>
    %742 = arith.mulf %732, %741 : vector<8x32xf32>
    %743 = vector.broadcast %724 : vector<1x32xf32> to vector<8x32xf32>
    %744 = arith.mulf %742, %743 : vector<8x32xf32>
    %745 = vector.broadcast %726 : vector<1x32xf32> to vector<8x32xf32>
    %746 = arith.addf %744, %745 : vector<8x32xf32>
    %c0_268 = arith.constant 0 : index
    %c0_269 = arith.constant 0 : index
    %c0_270 = arith.constant 0 : index
    %747 = vector.load %arg32[%c0_268, %c0_269, %c0_270] : memref<2x1x32xf32, #tpu.memory_space<vmem>>, vector<1x1x32xf32>
    %748 = vector.shape_cast %747 : vector<1x1x32xf32> to vector<1x32xf32>
    %c0_271 = arith.constant 0 : index
    %c0_272 = arith.constant 0 : index
    %c0_273 = arith.constant 0 : index
    %749 = vector.load %arg33[%c0_271, %c0_272, %c0_273] : memref<2x1x32xf32, #tpu.memory_space<vmem>>, vector<1x1x32xf32>
    %750 = vector.shape_cast %749 : vector<1x1x32xf32> to vector<1x32xf32>
    %cst_274 = arith.constant dense<0.000000e+00> : vector<9xf32>
    %751 = vector.multi_reduction <add>, %587, %cst_274 [1] : vector<9x32xf32> to vector<9xf32>
    %752 = vector.shape_cast %751 : vector<9xf32> to vector<9x1xf32>
    %cst_275 = arith.constant 3.200000e+01 : f32
    %753 = vector.broadcast %cst_275 : f32 to vector<9x1xf32>
    %754 = arith.divf %752, %753 : vector<9x1xf32>
    %755 = vector.broadcast %754 : vector<9x1xf32> to vector<9x32xf32>
    %756 = arith.subf %587, %755 : vector<9x32xf32>
    %757 = arith.mulf %756, %756 : vector<9x32xf32>
    %cst_276 = arith.constant dense<0.000000e+00> : vector<9xf32>
    %758 = vector.multi_reduction <add>, %757, %cst_276 [1] : vector<9x32xf32> to vector<9xf32>
    %759 = vector.shape_cast %758 : vector<9xf32> to vector<9x1xf32>
    %cst_277 = arith.constant 3.200000e+01 : f32
    %760 = vector.broadcast %cst_277 : f32 to vector<9x1xf32>
    %761 = arith.divf %759, %760 : vector<9x1xf32>
    %cst_278 = arith.constant 9.99999974E-6 : f32
    %762 = vector.broadcast %cst_278 : f32 to vector<9x1xf32>
    %763 = arith.addf %761, %762 : vector<9x1xf32>
    %764 = math.rsqrt %763 : vector<9x1xf32>
    %765 = vector.broadcast %764 : vector<9x1xf32> to vector<9x32xf32>
    %766 = arith.mulf %756, %765 : vector<9x32xf32>
    %767 = vector.broadcast %748 : vector<1x32xf32> to vector<9x32xf32>
    %768 = arith.mulf %766, %767 : vector<9x32xf32>
    %769 = vector.broadcast %750 : vector<1x32xf32> to vector<9x32xf32>
    %770 = arith.addf %768, %769 : vector<9x32xf32>
    %c0_279 = arith.constant 0 : index
    %c0_280 = arith.constant 0 : index
    %c0_281 = arith.constant 0 : index
    %771 = vector.load %arg34[%c0_279, %c0_280, %c0_281] : memref<2x32x32xbf16, #tpu.memory_space<vmem>>, vector<1x32x32xbf16>
    %772 = vector.shape_cast %771 : vector<1x32x32xbf16> to vector<32x32xbf16>
    %c0_282 = arith.constant 0 : index
    %c0_283 = arith.constant 0 : index
    %c0_284 = arith.constant 0 : index
    %773 = vector.load %arg35[%c0_282, %c0_283, %c0_284] : memref<2x1x32xf32, #tpu.memory_space<vmem>>, vector<1x1x32xf32>
    %774 = vector.shape_cast %773 : vector<1x1x32xf32> to vector<1x32xf32>
    %c0_285 = arith.constant 0 : index
    %c0_286 = arith.constant 0 : index
    %c0_287 = arith.constant 0 : index
    %775 = vector.load %arg36[%c0_285, %c0_286, %c0_287] : memref<2x32x64xbf16, #tpu.memory_space<vmem>>, vector<1x32x64xbf16>
    %776 = vector.shape_cast %775 : vector<1x32x64xbf16> to vector<32x64xbf16>
    %c0_288 = arith.constant 0 : index
    %c0_289 = arith.constant 0 : index
    %c0_290 = arith.constant 0 : index
    %777 = vector.load %arg37[%c0_288, %c0_289, %c0_290] : memref<2x1x64xf32, #tpu.memory_space<vmem>>, vector<1x1x64xf32>
    %778 = vector.shape_cast %777 : vector<1x1x64xf32> to vector<1x64xf32>
    %c0_291 = arith.constant 0 : index
    %c0_292 = arith.constant 0 : index
    %c0_293 = arith.constant 0 : index
    %779 = vector.load %arg38[%c0_291, %c0_292, %c0_293] : memref<2x32x32xbf16, #tpu.memory_space<vmem>>, vector<1x32x32xbf16>
    %780 = vector.shape_cast %779 : vector<1x32x32xbf16> to vector<32x32xbf16>
    %c0_294 = arith.constant 0 : index
    %c0_295 = arith.constant 0 : index
    %c0_296 = arith.constant 0 : index
    %781 = vector.load %arg39[%c0_294, %c0_295, %c0_296] : memref<2x1x32xf32, #tpu.memory_space<vmem>>, vector<1x1x32xf32>
    %782 = vector.shape_cast %781 : vector<1x1x32xf32> to vector<1x32xf32>
    %783 = arith.truncf %746 : vector<8x32xf32> to vector<8x32xbf16>
    %cst_297 = arith.constant dense<0.000000e+00> : vector<8x32xf32>
    %784 = tpu.matmul %783, %772, %cst_297 {dimension_numbers = #tpu.dot_dimension_numbers<[1], [0], [0], [1], [0, 0, 1, 1], [], []>} : vector<8x32xbf16>, vector<32x32xbf16>, vector<8x32xf32> -> vector<8x32xf32>
    %785 = vector.broadcast %774 : vector<1x32xf32> to vector<8x32xf32>
    %786 = arith.addf %784, %785 : vector<8x32xf32>
    %cst_298 = arith.constant 0.353553385 : f32
    %787 = vector.broadcast %cst_298 : f32 to vector<8x32xf32>
    %788 = arith.mulf %786, %787 : vector<8x32xf32>
    %789 = arith.truncf %770 : vector<9x32xf32> to vector<9x32xbf16>
    %cst_299 = arith.constant dense<0.000000e+00> : vector<9x64xf32>
    %790 = tpu.matmul %789, %776, %cst_299 {dimension_numbers = #tpu.dot_dimension_numbers<[1], [0], [0], [1], [0, 0, 1, 1], [], []>} : vector<9x32xbf16>, vector<32x64xbf16>, vector<9x64xf32> -> vector<9x64xf32>
    %791 = vector.broadcast %778 : vector<1x64xf32> to vector<9x64xf32>
    %792 = arith.addf %790, %791 : vector<9x64xf32>
    %793 = vector.extract_strided_slice %792 {offsets = [0, 0], sizes = [9, 32], strides = [1, 1]} : vector<9x64xf32> to vector<9x32xf32>
    %794 = vector.extract_strided_slice %792 {offsets = [0, 32], sizes = [9, 32], strides = [1, 1]} : vector<9x64xf32> to vector<9x32xf32>
    %795 = vector.extract_strided_slice %788 {offsets = [0, 0], sizes = [8, 8], strides = [1, 1]} : vector<8x32xf32> to vector<8x8xf32>
    %796 = arith.truncf %795 : vector<8x8xf32> to vector<8x8xbf16>
    %797 = vector.extract_strided_slice %793 {offsets = [0, 0], sizes = [9, 8], strides = [1, 1]} : vector<9x32xf32> to vector<9x8xf32>
    %798 = arith.truncf %797 : vector<9x8xf32> to vector<9x8xbf16>
    %799 = vector.extract_strided_slice %794 {offsets = [0, 0], sizes = [9, 8], strides = [1, 1]} : vector<9x32xf32> to vector<9x8xf32>
    %800 = arith.truncf %799 : vector<9x8xf32> to vector<9x8xbf16>
    %cst_300 = arith.constant dense<0.000000e+00> : vector<8x9xf32>
    %801 = tpu.matmul %796, %798, %cst_300 {dimension_numbers = #tpu.dot_dimension_numbers<[1], [1], [0], [0], [0, 0, 1, 0], [], []>} : vector<8x8xbf16>, vector<9x8xbf16>, vector<8x9xf32> -> vector<8x9xf32>
    %cst_301 = arith.constant dense<0xFF800000> : vector<8xf32>
    %802 = vector.multi_reduction <maximumf>, %801, %cst_301 [1] : vector<8x9xf32> to vector<8xf32>
    %803 = vector.shape_cast %802 : vector<8xf32> to vector<8x1xf32>
    %804 = vector.broadcast %803 : vector<8x1xf32> to vector<8x9xf32>
    %805 = arith.subf %801, %804 : vector<8x9xf32>
    %806 = math.exp %805 : vector<8x9xf32>
    %cst_302 = arith.constant dense<0.000000e+00> : vector<8xf32>
    %807 = vector.multi_reduction <add>, %806, %cst_302 [1] : vector<8x9xf32> to vector<8xf32>
    %808 = vector.shape_cast %807 : vector<8xf32> to vector<8x1xf32>
    %809 = arith.truncf %806 : vector<8x9xf32> to vector<8x9xbf16>
    %cst_303 = arith.constant dense<0.000000e+00> : vector<8x8xf32>
    %810 = tpu.matmul %809, %800, %cst_303 {dimension_numbers = #tpu.dot_dimension_numbers<[1], [0], [0], [1], [0, 0, 1, 1], [], []>} : vector<8x9xbf16>, vector<9x8xbf16>, vector<8x8xf32> -> vector<8x8xf32>
    %811 = tpu.reciprocal %808 {approx = true} : vector<8x1xf32> -> vector<8x1xf32>
    %812 = vector.broadcast %811 : vector<8x1xf32> to vector<8x8xf32>
    %813 = arith.mulf %810, %812 : vector<8x8xf32>
    %814 = vector.extract_strided_slice %788 {offsets = [0, 8], sizes = [8, 8], strides = [1, 1]} : vector<8x32xf32> to vector<8x8xf32>
    %815 = arith.truncf %814 : vector<8x8xf32> to vector<8x8xbf16>
    %816 = vector.extract_strided_slice %793 {offsets = [0, 8], sizes = [9, 8], strides = [1, 1]} : vector<9x32xf32> to vector<9x8xf32>
    %817 = arith.truncf %816 : vector<9x8xf32> to vector<9x8xbf16>
    %818 = vector.extract_strided_slice %794 {offsets = [0, 8], sizes = [9, 8], strides = [1, 1]} : vector<9x32xf32> to vector<9x8xf32>
    %819 = arith.truncf %818 : vector<9x8xf32> to vector<9x8xbf16>
    %cst_304 = arith.constant dense<0.000000e+00> : vector<8x9xf32>
    %820 = tpu.matmul %815, %817, %cst_304 {dimension_numbers = #tpu.dot_dimension_numbers<[1], [1], [0], [0], [0, 0, 1, 0], [], []>} : vector<8x8xbf16>, vector<9x8xbf16>, vector<8x9xf32> -> vector<8x9xf32>
    %cst_305 = arith.constant dense<0xFF800000> : vector<8xf32>
    %821 = vector.multi_reduction <maximumf>, %820, %cst_305 [1] : vector<8x9xf32> to vector<8xf32>
    %822 = vector.shape_cast %821 : vector<8xf32> to vector<8x1xf32>
    %823 = vector.broadcast %822 : vector<8x1xf32> to vector<8x9xf32>
    %824 = arith.subf %820, %823 : vector<8x9xf32>
    %825 = math.exp %824 : vector<8x9xf32>
    %cst_306 = arith.constant dense<0.000000e+00> : vector<8xf32>
    %826 = vector.multi_reduction <add>, %825, %cst_306 [1] : vector<8x9xf32> to vector<8xf32>
    %827 = vector.shape_cast %826 : vector<8xf32> to vector<8x1xf32>
    %828 = arith.truncf %825 : vector<8x9xf32> to vector<8x9xbf16>
    %cst_307 = arith.constant dense<0.000000e+00> : vector<8x8xf32>
    %829 = tpu.matmul %828, %819, %cst_307 {dimension_numbers = #tpu.dot_dimension_numbers<[1], [0], [0], [1], [0, 0, 1, 1], [], []>} : vector<8x9xbf16>, vector<9x8xbf16>, vector<8x8xf32> -> vector<8x8xf32>
    %830 = tpu.reciprocal %827 {approx = true} : vector<8x1xf32> -> vector<8x1xf32>
    %831 = vector.broadcast %830 : vector<8x1xf32> to vector<8x8xf32>
    %832 = arith.mulf %829, %831 : vector<8x8xf32>
    %833 = vector.extract_strided_slice %788 {offsets = [0, 16], sizes = [8, 8], strides = [1, 1]} : vector<8x32xf32> to vector<8x8xf32>
    %834 = arith.truncf %833 : vector<8x8xf32> to vector<8x8xbf16>
    %835 = vector.extract_strided_slice %793 {offsets = [0, 16], sizes = [9, 8], strides = [1, 1]} : vector<9x32xf32> to vector<9x8xf32>
    %836 = arith.truncf %835 : vector<9x8xf32> to vector<9x8xbf16>
    %837 = vector.extract_strided_slice %794 {offsets = [0, 16], sizes = [9, 8], strides = [1, 1]} : vector<9x32xf32> to vector<9x8xf32>
    %838 = arith.truncf %837 : vector<9x8xf32> to vector<9x8xbf16>
    %cst_308 = arith.constant dense<0.000000e+00> : vector<8x9xf32>
    %839 = tpu.matmul %834, %836, %cst_308 {dimension_numbers = #tpu.dot_dimension_numbers<[1], [1], [0], [0], [0, 0, 1, 0], [], []>} : vector<8x8xbf16>, vector<9x8xbf16>, vector<8x9xf32> -> vector<8x9xf32>
    %cst_309 = arith.constant dense<0xFF800000> : vector<8xf32>
    %840 = vector.multi_reduction <maximumf>, %839, %cst_309 [1] : vector<8x9xf32> to vector<8xf32>
    %841 = vector.shape_cast %840 : vector<8xf32> to vector<8x1xf32>
    %842 = vector.broadcast %841 : vector<8x1xf32> to vector<8x9xf32>
    %843 = arith.subf %839, %842 : vector<8x9xf32>
    %844 = math.exp %843 : vector<8x9xf32>
    %cst_310 = arith.constant dense<0.000000e+00> : vector<8xf32>
    %845 = vector.multi_reduction <add>, %844, %cst_310 [1] : vector<8x9xf32> to vector<8xf32>
    %846 = vector.shape_cast %845 : vector<8xf32> to vector<8x1xf32>
    %847 = arith.truncf %844 : vector<8x9xf32> to vector<8x9xbf16>
    %cst_311 = arith.constant dense<0.000000e+00> : vector<8x8xf32>
    %848 = tpu.matmul %847, %838, %cst_311 {dimension_numbers = #tpu.dot_dimension_numbers<[1], [0], [0], [1], [0, 0, 1, 1], [], []>} : vector<8x9xbf16>, vector<9x8xbf16>, vector<8x8xf32> -> vector<8x8xf32>
    %849 = tpu.reciprocal %846 {approx = true} : vector<8x1xf32> -> vector<8x1xf32>
    %850 = vector.broadcast %849 : vector<8x1xf32> to vector<8x8xf32>
    %851 = arith.mulf %848, %850 : vector<8x8xf32>
    %852 = vector.extract_strided_slice %788 {offsets = [0, 24], sizes = [8, 8], strides = [1, 1]} : vector<8x32xf32> to vector<8x8xf32>
    %853 = arith.truncf %852 : vector<8x8xf32> to vector<8x8xbf16>
    %854 = vector.extract_strided_slice %793 {offsets = [0, 24], sizes = [9, 8], strides = [1, 1]} : vector<9x32xf32> to vector<9x8xf32>
    %855 = arith.truncf %854 : vector<9x8xf32> to vector<9x8xbf16>
    %856 = vector.extract_strided_slice %794 {offsets = [0, 24], sizes = [9, 8], strides = [1, 1]} : vector<9x32xf32> to vector<9x8xf32>
    %857 = arith.truncf %856 : vector<9x8xf32> to vector<9x8xbf16>
    %cst_312 = arith.constant dense<0.000000e+00> : vector<8x9xf32>
    %858 = tpu.matmul %853, %855, %cst_312 {dimension_numbers = #tpu.dot_dimension_numbers<[1], [1], [0], [0], [0, 0, 1, 0], [], []>} : vector<8x8xbf16>, vector<9x8xbf16>, vector<8x9xf32> -> vector<8x9xf32>
    %cst_313 = arith.constant dense<0xFF800000> : vector<8xf32>
    %859 = vector.multi_reduction <maximumf>, %858, %cst_313 [1] : vector<8x9xf32> to vector<8xf32>
    %860 = vector.shape_cast %859 : vector<8xf32> to vector<8x1xf32>
    %861 = vector.broadcast %860 : vector<8x1xf32> to vector<8x9xf32>
    %862 = arith.subf %858, %861 : vector<8x9xf32>
    %863 = math.exp %862 : vector<8x9xf32>
    %cst_314 = arith.constant dense<0.000000e+00> : vector<8xf32>
    %864 = vector.multi_reduction <add>, %863, %cst_314 [1] : vector<8x9xf32> to vector<8xf32>
    %865 = vector.shape_cast %864 : vector<8xf32> to vector<8x1xf32>
    %866 = arith.truncf %863 : vector<8x9xf32> to vector<8x9xbf16>
    %cst_315 = arith.constant dense<0.000000e+00> : vector<8x8xf32>
    %867 = tpu.matmul %866, %857, %cst_315 {dimension_numbers = #tpu.dot_dimension_numbers<[1], [0], [0], [1], [0, 0, 1, 1], [], []>} : vector<8x9xbf16>, vector<9x8xbf16>, vector<8x8xf32> -> vector<8x8xf32>
    %868 = tpu.reciprocal %865 {approx = true} : vector<8x1xf32> -> vector<8x1xf32>
    %869 = vector.broadcast %868 : vector<8x1xf32> to vector<8x8xf32>
    %870 = arith.mulf %867, %869 : vector<8x8xf32>
    %871 = tpu.concatenate %813, %832, %851, %870 in 1 : vector<8x8xf32>, vector<8x8xf32>, vector<8x8xf32>, vector<8x8xf32> -> vector<8x32xf32>
    %872 = arith.truncf %871 : vector<8x32xf32> to vector<8x32xbf16>
    %cst_316 = arith.constant dense<0.000000e+00> : vector<8x32xf32>
    %873 = tpu.matmul %872, %780, %cst_316 {dimension_numbers = #tpu.dot_dimension_numbers<[1], [0], [0], [1], [0, 0, 1, 1], [], []>} : vector<8x32xbf16>, vector<32x32xbf16>, vector<8x32xf32> -> vector<8x32xf32>
    %874 = vector.broadcast %782 : vector<1x32xf32> to vector<8x32xf32>
    %875 = arith.addf %873, %874 : vector<8x32xf32>
    %876 = arith.addf %722, %875 : vector<8x32xf32>
    %c0_317 = arith.constant 0 : index
    %c0_318 = arith.constant 0 : index
    %c0_319 = arith.constant 0 : index
    %877 = vector.load %arg40[%c0_317, %c0_318, %c0_319] : memref<2x1x32xf32, #tpu.memory_space<vmem>>, vector<1x1x32xf32>
    %878 = vector.shape_cast %877 : vector<1x1x32xf32> to vector<1x32xf32>
    %c0_320 = arith.constant 0 : index
    %c0_321 = arith.constant 0 : index
    %c0_322 = arith.constant 0 : index
    %879 = vector.load %arg41[%c0_320, %c0_321, %c0_322] : memref<2x1x32xf32, #tpu.memory_space<vmem>>, vector<1x1x32xf32>
    %880 = vector.shape_cast %879 : vector<1x1x32xf32> to vector<1x32xf32>
    %cst_323 = arith.constant dense<0.000000e+00> : vector<8xf32>
    %881 = vector.multi_reduction <add>, %876, %cst_323 [1] : vector<8x32xf32> to vector<8xf32>
    %882 = vector.shape_cast %881 : vector<8xf32> to vector<8x1xf32>
    %cst_324 = arith.constant 3.200000e+01 : f32
    %883 = vector.broadcast %cst_324 : f32 to vector<8x1xf32>
    %884 = arith.divf %882, %883 : vector<8x1xf32>
    %885 = vector.broadcast %884 : vector<8x1xf32> to vector<8x32xf32>
    %886 = arith.subf %876, %885 : vector<8x32xf32>
    %887 = arith.mulf %886, %886 : vector<8x32xf32>
    %cst_325 = arith.constant dense<0.000000e+00> : vector<8xf32>
    %888 = vector.multi_reduction <add>, %887, %cst_325 [1] : vector<8x32xf32> to vector<8xf32>
    %889 = vector.shape_cast %888 : vector<8xf32> to vector<8x1xf32>
    %cst_326 = arith.constant 3.200000e+01 : f32
    %890 = vector.broadcast %cst_326 : f32 to vector<8x1xf32>
    %891 = arith.divf %889, %890 : vector<8x1xf32>
    %cst_327 = arith.constant 9.99999974E-6 : f32
    %892 = vector.broadcast %cst_327 : f32 to vector<8x1xf32>
    %893 = arith.addf %891, %892 : vector<8x1xf32>
    %894 = math.rsqrt %893 : vector<8x1xf32>
    %895 = vector.broadcast %894 : vector<8x1xf32> to vector<8x32xf32>
    %896 = arith.mulf %886, %895 : vector<8x32xf32>
    %897 = vector.broadcast %878 : vector<1x32xf32> to vector<8x32xf32>
    %898 = arith.mulf %896, %897 : vector<8x32xf32>
    %899 = vector.broadcast %880 : vector<1x32xf32> to vector<8x32xf32>
    %900 = arith.addf %898, %899 : vector<8x32xf32>
    %c0_328 = arith.constant 0 : index
    %c0_329 = arith.constant 0 : index
    %c0_330 = arith.constant 0 : index
    %901 = vector.load %arg42[%c0_328, %c0_329, %c0_330] : memref<2x32x128xbf16, #tpu.memory_space<vmem>>, vector<1x32x128xbf16>
    %902 = vector.shape_cast %901 : vector<1x32x128xbf16> to vector<32x128xbf16>
    %c0_331 = arith.constant 0 : index
    %c0_332 = arith.constant 0 : index
    %c0_333 = arith.constant 0 : index
    %903 = vector.load %arg43[%c0_331, %c0_332, %c0_333] : memref<2x1x128xf32, #tpu.memory_space<vmem>>, vector<1x1x128xf32>
    %904 = vector.shape_cast %903 : vector<1x1x128xf32> to vector<1x128xf32>
    %c0_334 = arith.constant 0 : index
    %c0_335 = arith.constant 0 : index
    %c0_336 = arith.constant 0 : index
    %905 = vector.load %arg44[%c0_334, %c0_335, %c0_336] : memref<2x128x32xbf16, #tpu.memory_space<vmem>>, vector<1x128x32xbf16>
    %906 = vector.shape_cast %905 : vector<1x128x32xbf16> to vector<128x32xbf16>
    %c0_337 = arith.constant 0 : index
    %c0_338 = arith.constant 0 : index
    %c0_339 = arith.constant 0 : index
    %907 = vector.load %arg45[%c0_337, %c0_338, %c0_339] : memref<2x1x32xf32, #tpu.memory_space<vmem>>, vector<1x1x32xf32>
    %908 = vector.shape_cast %907 : vector<1x1x32xf32> to vector<1x32xf32>
    %909 = arith.truncf %900 : vector<8x32xf32> to vector<8x32xbf16>
    %cst_340 = arith.constant dense<0.000000e+00> : vector<8x128xf32>
    %910 = tpu.matmul %909, %902, %cst_340 {dimension_numbers = #tpu.dot_dimension_numbers<[1], [0], [0], [1], [0, 0, 1, 1], [], []>} : vector<8x32xbf16>, vector<32x128xbf16>, vector<8x128xf32> -> vector<8x128xf32>
    %911 = vector.broadcast %904 : vector<1x128xf32> to vector<8x128xf32>
    %912 = arith.addf %910, %911 : vector<8x128xf32>
    %cst_341 = arith.constant 5.000000e-01 : f32
    %913 = vector.broadcast %cst_341 : f32 to vector<8x128xf32>
    %914 = arith.mulf %913, %912 : vector<8x128xf32>
    %cst_342 = arith.constant 0.707106769 : f32
    %915 = vector.broadcast %cst_342 : f32 to vector<8x128xf32>
    %916 = arith.mulf %912, %915 : vector<8x128xf32>
    %917 = math.absf %916 : vector<8x128xf32>
    %cst_343 = arith.constant 0.327591091 : f32
    %918 = vector.broadcast %cst_343 : f32 to vector<8x128xf32>
    %919 = arith.mulf %918, %917 : vector<8x128xf32>
    %cst_344 = arith.constant 1.000000e+00 : f32
    %920 = vector.broadcast %cst_344 : f32 to vector<8x128xf32>
    %921 = arith.addf %920, %919 : vector<8x128xf32>
    %cst_345 = arith.constant 1.000000e+00 : f32
    %922 = vector.broadcast %cst_345 : f32 to vector<8x128xf32>
    %923 = arith.divf %922, %921 : vector<8x128xf32>
    %cst_346 = arith.constant 1.06140542 : f32
    %924 = vector.broadcast %cst_346 : f32 to vector<8x128xf32>
    %925 = arith.mulf %924, %923 : vector<8x128xf32>
    %cst_347 = arith.constant -1.45315206 : f32
    %926 = vector.broadcast %cst_347 : f32 to vector<8x128xf32>
    %927 = arith.addf %925, %926 : vector<8x128xf32>
    %928 = arith.mulf %927, %923 : vector<8x128xf32>
    %cst_348 = arith.constant 1.42141378 : f32
    %929 = vector.broadcast %cst_348 : f32 to vector<8x128xf32>
    %930 = arith.addf %928, %929 : vector<8x128xf32>
    %931 = arith.mulf %930, %923 : vector<8x128xf32>
    %cst_349 = arith.constant -0.284496725 : f32
    %932 = vector.broadcast %cst_349 : f32 to vector<8x128xf32>
    %933 = arith.addf %931, %932 : vector<8x128xf32>
    %934 = arith.mulf %933, %923 : vector<8x128xf32>
    %cst_350 = arith.constant 0.254829586 : f32
    %935 = vector.broadcast %cst_350 : f32 to vector<8x128xf32>
    %936 = arith.addf %934, %935 : vector<8x128xf32>
    %937 = arith.mulf %936, %923 : vector<8x128xf32>
    %cst_351 = arith.constant 0.000000e+00 : f32
    %938 = vector.broadcast %cst_351 : f32 to vector<8x128xf32>
    %939 = arith.subf %938, %917 : vector<8x128xf32>
    %940 = arith.mulf %939, %917 : vector<8x128xf32>
    %941 = math.exp %940 : vector<8x128xf32>
    %942 = arith.mulf %937, %941 : vector<8x128xf32>
    %cst_352 = arith.constant 1.000000e+00 : f32
    %943 = vector.broadcast %cst_352 : f32 to vector<8x128xf32>
    %944 = arith.subf %943, %942 : vector<8x128xf32>
    %cst_353 = arith.constant 0.000000e+00 : f32
    %945 = vector.broadcast %cst_353 : f32 to vector<8x128xf32>
    %946 = arith.cmpf oge, %916, %945 : vector<8x128xf32>
    %cst_354 = arith.constant 0.000000e+00 : f32
    %947 = vector.broadcast %cst_354 : f32 to vector<8x128xf32>
    %948 = arith.subf %947, %944 : vector<8x128xf32>
    %949 = arith.select %946, %944, %948 : vector<8x128xi1>, vector<8x128xf32>
    %cst_355 = arith.constant 1.000000e+00 : f32
    %950 = vector.broadcast %cst_355 : f32 to vector<8x128xf32>
    %951 = arith.addf %950, %949 : vector<8x128xf32>
    %952 = arith.mulf %914, %951 : vector<8x128xf32>
    %953 = arith.truncf %952 : vector<8x128xf32> to vector<8x128xbf16>
    %cst_356 = arith.constant dense<0.000000e+00> : vector<8x32xf32>
    %954 = tpu.matmul %953, %906, %cst_356 {dimension_numbers = #tpu.dot_dimension_numbers<[1], [0], [0], [1], [0, 0, 1, 1], [], []>} : vector<8x128xbf16>, vector<128x32xbf16>, vector<8x32xf32> -> vector<8x32xf32>
    %955 = vector.broadcast %908 : vector<1x32xf32> to vector<8x32xf32>
    %956 = arith.addf %954, %955 : vector<8x32xf32>
    %957 = arith.addf %876, %956 : vector<8x32xf32>
    %c1_357 = arith.constant 1 : index
    %c0_358 = arith.constant 0 : index
    %c0_359 = arith.constant 0 : index
    %958 = vector.load %arg24[%c1_357, %c0_358, %c0_359] : memref<2x1x32xf32, #tpu.memory_space<vmem>>, vector<1x1x32xf32>
    %959 = vector.shape_cast %958 : vector<1x1x32xf32> to vector<1x32xf32>
    %c1_360 = arith.constant 1 : index
    %c0_361 = arith.constant 0 : index
    %c0_362 = arith.constant 0 : index
    %960 = vector.load %arg25[%c1_360, %c0_361, %c0_362] : memref<2x1x32xf32, #tpu.memory_space<vmem>>, vector<1x1x32xf32>
    %961 = vector.shape_cast %960 : vector<1x1x32xf32> to vector<1x32xf32>
    %cst_363 = arith.constant dense<0.000000e+00> : vector<8xf32>
    %962 = vector.multi_reduction <add>, %957, %cst_363 [1] : vector<8x32xf32> to vector<8xf32>
    %963 = vector.shape_cast %962 : vector<8xf32> to vector<8x1xf32>
    %cst_364 = arith.constant 3.200000e+01 : f32
    %964 = vector.broadcast %cst_364 : f32 to vector<8x1xf32>
    %965 = arith.divf %963, %964 : vector<8x1xf32>
    %966 = vector.broadcast %965 : vector<8x1xf32> to vector<8x32xf32>
    %967 = arith.subf %957, %966 : vector<8x32xf32>
    %968 = arith.mulf %967, %967 : vector<8x32xf32>
    %cst_365 = arith.constant dense<0.000000e+00> : vector<8xf32>
    %969 = vector.multi_reduction <add>, %968, %cst_365 [1] : vector<8x32xf32> to vector<8xf32>
    %970 = vector.shape_cast %969 : vector<8xf32> to vector<8x1xf32>
    %cst_366 = arith.constant 3.200000e+01 : f32
    %971 = vector.broadcast %cst_366 : f32 to vector<8x1xf32>
    %972 = arith.divf %970, %971 : vector<8x1xf32>
    %cst_367 = arith.constant 9.99999974E-6 : f32
    %973 = vector.broadcast %cst_367 : f32 to vector<8x1xf32>
    %974 = arith.addf %972, %973 : vector<8x1xf32>
    %975 = math.rsqrt %974 : vector<8x1xf32>
    %976 = vector.broadcast %975 : vector<8x1xf32> to vector<8x32xf32>
    %977 = arith.mulf %967, %976 : vector<8x32xf32>
    %978 = vector.broadcast %959 : vector<1x32xf32> to vector<8x32xf32>
    %979 = arith.mulf %977, %978 : vector<8x32xf32>
    %980 = vector.broadcast %961 : vector<1x32xf32> to vector<8x32xf32>
    %981 = arith.addf %979, %980 : vector<8x32xf32>
    %c1_368 = arith.constant 1 : index
    %c0_369 = arith.constant 0 : index
    %c0_370 = arith.constant 0 : index
    %982 = vector.load %arg26[%c1_368, %c0_369, %c0_370] : memref<2x32x96xbf16, #tpu.memory_space<vmem>>, vector<1x32x96xbf16>
    %983 = vector.shape_cast %982 : vector<1x32x96xbf16> to vector<32x96xbf16>
    %c1_371 = arith.constant 1 : index
    %c0_372 = arith.constant 0 : index
    %c0_373 = arith.constant 0 : index
    %984 = vector.load %arg27[%c1_371, %c0_372, %c0_373] : memref<2x1x96xf32, #tpu.memory_space<vmem>>, vector<1x1x96xf32>
    %985 = vector.shape_cast %984 : vector<1x1x96xf32> to vector<1x96xf32>
    %c1_374 = arith.constant 1 : index
    %c0_375 = arith.constant 0 : index
    %c0_376 = arith.constant 0 : index
    %986 = vector.load %arg28[%c1_374, %c0_375, %c0_376] : memref<2x32x32xbf16, #tpu.memory_space<vmem>>, vector<1x32x32xbf16>
    %987 = vector.shape_cast %986 : vector<1x32x32xbf16> to vector<32x32xbf16>
    %c1_377 = arith.constant 1 : index
    %c0_378 = arith.constant 0 : index
    %c0_379 = arith.constant 0 : index
    %988 = vector.load %arg29[%c1_377, %c0_378, %c0_379] : memref<2x1x32xf32, #tpu.memory_space<vmem>>, vector<1x1x32xf32>
    %989 = vector.shape_cast %988 : vector<1x1x32xf32> to vector<1x32xf32>
    %990 = arith.truncf %981 : vector<8x32xf32> to vector<8x32xbf16>
    %cst_380 = arith.constant dense<0.000000e+00> : vector<8x96xf32>
    %991 = tpu.matmul %990, %983, %cst_380 {dimension_numbers = #tpu.dot_dimension_numbers<[1], [0], [0], [1], [0, 0, 1, 1], [], []>} : vector<8x32xbf16>, vector<32x96xbf16>, vector<8x96xf32> -> vector<8x96xf32>
    %992 = vector.broadcast %985 : vector<1x96xf32> to vector<8x96xf32>
    %993 = arith.addf %991, %992 : vector<8x96xf32>
    %994 = vector.extract_strided_slice %993 {offsets = [0, 0], sizes = [8, 32], strides = [1, 1]} : vector<8x96xf32> to vector<8x32xf32>
    %cst_381 = arith.constant 0.353553385 : f32
    %995 = vector.broadcast %cst_381 : f32 to vector<8x32xf32>
    %996 = arith.mulf %994, %995 : vector<8x32xf32>
    %997 = vector.extract_strided_slice %993 {offsets = [0, 32], sizes = [8, 32], strides = [1, 1]} : vector<8x96xf32> to vector<8x32xf32>
    %998 = vector.extract_strided_slice %993 {offsets = [0, 64], sizes = [8, 32], strides = [1, 1]} : vector<8x96xf32> to vector<8x32xf32>
    %999 = vector.extract_strided_slice %996 {offsets = [0, 0], sizes = [8, 8], strides = [1, 1]} : vector<8x32xf32> to vector<8x8xf32>
    %1000 = arith.truncf %999 : vector<8x8xf32> to vector<8x8xbf16>
    %1001 = vector.extract_strided_slice %997 {offsets = [0, 0], sizes = [8, 8], strides = [1, 1]} : vector<8x32xf32> to vector<8x8xf32>
    %1002 = arith.truncf %1001 : vector<8x8xf32> to vector<8x8xbf16>
    %1003 = vector.extract_strided_slice %998 {offsets = [0, 0], sizes = [8, 8], strides = [1, 1]} : vector<8x32xf32> to vector<8x8xf32>
    %1004 = arith.truncf %1003 : vector<8x8xf32> to vector<8x8xbf16>
    %cst_382 = arith.constant dense<0.000000e+00> : vector<8x8xf32>
    %1005 = tpu.matmul %1000, %1002, %cst_382 {dimension_numbers = #tpu.dot_dimension_numbers<[1], [1], [0], [0], [0, 0, 1, 0], [], []>} : vector<8x8xbf16>, vector<8x8xbf16>, vector<8x8xf32> -> vector<8x8xf32>
    %cst_383 = arith.constant 0xFF800000 : f32
    %1006 = vector.broadcast %cst_383 : f32 to vector<8x8xf32>
    %1007 = arith.select %591, %1006, %1005 : vector<8x8xi1>, vector<8x8xf32>
    %cst_384 = arith.constant dense<0xFF800000> : vector<8xf32>
    %1008 = vector.multi_reduction <maximumf>, %1007, %cst_384 [1] : vector<8x8xf32> to vector<8xf32>
    %1009 = vector.shape_cast %1008 : vector<8xf32> to vector<8x1xf32>
    %1010 = vector.broadcast %1009 : vector<8x1xf32> to vector<8x8xf32>
    %1011 = arith.subf %1007, %1010 : vector<8x8xf32>
    %1012 = math.exp %1011 : vector<8x8xf32>
    %cst_385 = arith.constant dense<0.000000e+00> : vector<8xf32>
    %1013 = vector.multi_reduction <add>, %1012, %cst_385 [1] : vector<8x8xf32> to vector<8xf32>
    %1014 = vector.shape_cast %1013 : vector<8xf32> to vector<8x1xf32>
    %1015 = arith.truncf %1012 : vector<8x8xf32> to vector<8x8xbf16>
    %cst_386 = arith.constant dense<0.000000e+00> : vector<8x8xf32>
    %1016 = tpu.matmul %1015, %1004, %cst_386 {dimension_numbers = #tpu.dot_dimension_numbers<[1], [0], [0], [1], [0, 0, 1, 1], [], []>} : vector<8x8xbf16>, vector<8x8xbf16>, vector<8x8xf32> -> vector<8x8xf32>
    %1017 = tpu.reciprocal %1014 {approx = true} : vector<8x1xf32> -> vector<8x1xf32>
    %1018 = vector.broadcast %1017 : vector<8x1xf32> to vector<8x8xf32>
    %1019 = arith.mulf %1016, %1018 : vector<8x8xf32>
    %1020 = vector.extract_strided_slice %996 {offsets = [0, 8], sizes = [8, 8], strides = [1, 1]} : vector<8x32xf32> to vector<8x8xf32>
    %1021 = arith.truncf %1020 : vector<8x8xf32> to vector<8x8xbf16>
    %1022 = vector.extract_strided_slice %997 {offsets = [0, 8], sizes = [8, 8], strides = [1, 1]} : vector<8x32xf32> to vector<8x8xf32>
    %1023 = arith.truncf %1022 : vector<8x8xf32> to vector<8x8xbf16>
    %1024 = vector.extract_strided_slice %998 {offsets = [0, 8], sizes = [8, 8], strides = [1, 1]} : vector<8x32xf32> to vector<8x8xf32>
    %1025 = arith.truncf %1024 : vector<8x8xf32> to vector<8x8xbf16>
    %cst_387 = arith.constant dense<0.000000e+00> : vector<8x8xf32>
    %1026 = tpu.matmul %1021, %1023, %cst_387 {dimension_numbers = #tpu.dot_dimension_numbers<[1], [1], [0], [0], [0, 0, 1, 0], [], []>} : vector<8x8xbf16>, vector<8x8xbf16>, vector<8x8xf32> -> vector<8x8xf32>
    %cst_388 = arith.constant 0xFF800000 : f32
    %1027 = vector.broadcast %cst_388 : f32 to vector<8x8xf32>
    %1028 = arith.select %591, %1027, %1026 : vector<8x8xi1>, vector<8x8xf32>
    %cst_389 = arith.constant dense<0xFF800000> : vector<8xf32>
    %1029 = vector.multi_reduction <maximumf>, %1028, %cst_389 [1] : vector<8x8xf32> to vector<8xf32>
    %1030 = vector.shape_cast %1029 : vector<8xf32> to vector<8x1xf32>
    %1031 = vector.broadcast %1030 : vector<8x1xf32> to vector<8x8xf32>
    %1032 = arith.subf %1028, %1031 : vector<8x8xf32>
    %1033 = math.exp %1032 : vector<8x8xf32>
    %cst_390 = arith.constant dense<0.000000e+00> : vector<8xf32>
    %1034 = vector.multi_reduction <add>, %1033, %cst_390 [1] : vector<8x8xf32> to vector<8xf32>
    %1035 = vector.shape_cast %1034 : vector<8xf32> to vector<8x1xf32>
    %1036 = arith.truncf %1033 : vector<8x8xf32> to vector<8x8xbf16>
    %cst_391 = arith.constant dense<0.000000e+00> : vector<8x8xf32>
    %1037 = tpu.matmul %1036, %1025, %cst_391 {dimension_numbers = #tpu.dot_dimension_numbers<[1], [0], [0], [1], [0, 0, 1, 1], [], []>} : vector<8x8xbf16>, vector<8x8xbf16>, vector<8x8xf32> -> vector<8x8xf32>
    %1038 = tpu.reciprocal %1035 {approx = true} : vector<8x1xf32> -> vector<8x1xf32>
    %1039 = vector.broadcast %1038 : vector<8x1xf32> to vector<8x8xf32>
    %1040 = arith.mulf %1037, %1039 : vector<8x8xf32>
    %1041 = vector.extract_strided_slice %996 {offsets = [0, 16], sizes = [8, 8], strides = [1, 1]} : vector<8x32xf32> to vector<8x8xf32>
    %1042 = arith.truncf %1041 : vector<8x8xf32> to vector<8x8xbf16>
    %1043 = vector.extract_strided_slice %997 {offsets = [0, 16], sizes = [8, 8], strides = [1, 1]} : vector<8x32xf32> to vector<8x8xf32>
    %1044 = arith.truncf %1043 : vector<8x8xf32> to vector<8x8xbf16>
    %1045 = vector.extract_strided_slice %998 {offsets = [0, 16], sizes = [8, 8], strides = [1, 1]} : vector<8x32xf32> to vector<8x8xf32>
    %1046 = arith.truncf %1045 : vector<8x8xf32> to vector<8x8xbf16>
    %cst_392 = arith.constant dense<0.000000e+00> : vector<8x8xf32>
    %1047 = tpu.matmul %1042, %1044, %cst_392 {dimension_numbers = #tpu.dot_dimension_numbers<[1], [1], [0], [0], [0, 0, 1, 0], [], []>} : vector<8x8xbf16>, vector<8x8xbf16>, vector<8x8xf32> -> vector<8x8xf32>
    %cst_393 = arith.constant 0xFF800000 : f32
    %1048 = vector.broadcast %cst_393 : f32 to vector<8x8xf32>
    %1049 = arith.select %591, %1048, %1047 : vector<8x8xi1>, vector<8x8xf32>
    %cst_394 = arith.constant dense<0xFF800000> : vector<8xf32>
    %1050 = vector.multi_reduction <maximumf>, %1049, %cst_394 [1] : vector<8x8xf32> to vector<8xf32>
    %1051 = vector.shape_cast %1050 : vector<8xf32> to vector<8x1xf32>
    %1052 = vector.broadcast %1051 : vector<8x1xf32> to vector<8x8xf32>
    %1053 = arith.subf %1049, %1052 : vector<8x8xf32>
    %1054 = math.exp %1053 : vector<8x8xf32>
    %cst_395 = arith.constant dense<0.000000e+00> : vector<8xf32>
    %1055 = vector.multi_reduction <add>, %1054, %cst_395 [1] : vector<8x8xf32> to vector<8xf32>
    %1056 = vector.shape_cast %1055 : vector<8xf32> to vector<8x1xf32>
    %1057 = arith.truncf %1054 : vector<8x8xf32> to vector<8x8xbf16>
    %cst_396 = arith.constant dense<0.000000e+00> : vector<8x8xf32>
    %1058 = tpu.matmul %1057, %1046, %cst_396 {dimension_numbers = #tpu.dot_dimension_numbers<[1], [0], [0], [1], [0, 0, 1, 1], [], []>} : vector<8x8xbf16>, vector<8x8xbf16>, vector<8x8xf32> -> vector<8x8xf32>
    %1059 = tpu.reciprocal %1056 {approx = true} : vector<8x1xf32> -> vector<8x1xf32>
    %1060 = vector.broadcast %1059 : vector<8x1xf32> to vector<8x8xf32>
    %1061 = arith.mulf %1058, %1060 : vector<8x8xf32>
    %1062 = vector.extract_strided_slice %996 {offsets = [0, 24], sizes = [8, 8], strides = [1, 1]} : vector<8x32xf32> to vector<8x8xf32>
    %1063 = arith.truncf %1062 : vector<8x8xf32> to vector<8x8xbf16>
    %1064 = vector.extract_strided_slice %997 {offsets = [0, 24], sizes = [8, 8], strides = [1, 1]} : vector<8x32xf32> to vector<8x8xf32>
    %1065 = arith.truncf %1064 : vector<8x8xf32> to vector<8x8xbf16>
    %1066 = vector.extract_strided_slice %998 {offsets = [0, 24], sizes = [8, 8], strides = [1, 1]} : vector<8x32xf32> to vector<8x8xf32>
    %1067 = arith.truncf %1066 : vector<8x8xf32> to vector<8x8xbf16>
    %cst_397 = arith.constant dense<0.000000e+00> : vector<8x8xf32>
    %1068 = tpu.matmul %1063, %1065, %cst_397 {dimension_numbers = #tpu.dot_dimension_numbers<[1], [1], [0], [0], [0, 0, 1, 0], [], []>} : vector<8x8xbf16>, vector<8x8xbf16>, vector<8x8xf32> -> vector<8x8xf32>
    %cst_398 = arith.constant 0xFF800000 : f32
    %1069 = vector.broadcast %cst_398 : f32 to vector<8x8xf32>
    %1070 = arith.select %591, %1069, %1068 : vector<8x8xi1>, vector<8x8xf32>
    %cst_399 = arith.constant dense<0xFF800000> : vector<8xf32>
    %1071 = vector.multi_reduction <maximumf>, %1070, %cst_399 [1] : vector<8x8xf32> to vector<8xf32>
    %1072 = vector.shape_cast %1071 : vector<8xf32> to vector<8x1xf32>
    %1073 = vector.broadcast %1072 : vector<8x1xf32> to vector<8x8xf32>
    %1074 = arith.subf %1070, %1073 : vector<8x8xf32>
    %1075 = math.exp %1074 : vector<8x8xf32>
    %cst_400 = arith.constant dense<0.000000e+00> : vector<8xf32>
    %1076 = vector.multi_reduction <add>, %1075, %cst_400 [1] : vector<8x8xf32> to vector<8xf32>
    %1077 = vector.shape_cast %1076 : vector<8xf32> to vector<8x1xf32>
    %1078 = arith.truncf %1075 : vector<8x8xf32> to vector<8x8xbf16>
    %cst_401 = arith.constant dense<0.000000e+00> : vector<8x8xf32>
    %1079 = tpu.matmul %1078, %1067, %cst_401 {dimension_numbers = #tpu.dot_dimension_numbers<[1], [0], [0], [1], [0, 0, 1, 1], [], []>} : vector<8x8xbf16>, vector<8x8xbf16>, vector<8x8xf32> -> vector<8x8xf32>
    %1080 = tpu.reciprocal %1077 {approx = true} : vector<8x1xf32> -> vector<8x1xf32>
    %1081 = vector.broadcast %1080 : vector<8x1xf32> to vector<8x8xf32>
    %1082 = arith.mulf %1079, %1081 : vector<8x8xf32>
    %1083 = tpu.concatenate %1019, %1040, %1061, %1082 in 1 : vector<8x8xf32>, vector<8x8xf32>, vector<8x8xf32>, vector<8x8xf32> -> vector<8x32xf32>
    %1084 = arith.truncf %1083 : vector<8x32xf32> to vector<8x32xbf16>
    %cst_402 = arith.constant dense<0.000000e+00> : vector<8x32xf32>
    %1085 = tpu.matmul %1084, %987, %cst_402 {dimension_numbers = #tpu.dot_dimension_numbers<[1], [0], [0], [1], [0, 0, 1, 1], [], []>} : vector<8x32xbf16>, vector<32x32xbf16>, vector<8x32xf32> -> vector<8x32xf32>
    %1086 = vector.broadcast %989 : vector<1x32xf32> to vector<8x32xf32>
    %1087 = arith.addf %1085, %1086 : vector<8x32xf32>
    %1088 = arith.addf %957, %1087 : vector<8x32xf32>
    %c1_403 = arith.constant 1 : index
    %c0_404 = arith.constant 0 : index
    %c0_405 = arith.constant 0 : index
    %1089 = vector.load %arg30[%c1_403, %c0_404, %c0_405] : memref<2x1x32xf32, #tpu.memory_space<vmem>>, vector<1x1x32xf32>
    %1090 = vector.shape_cast %1089 : vector<1x1x32xf32> to vector<1x32xf32>
    %c1_406 = arith.constant 1 : index
    %c0_407 = arith.constant 0 : index
    %c0_408 = arith.constant 0 : index
    %1091 = vector.load %arg31[%c1_406, %c0_407, %c0_408] : memref<2x1x32xf32, #tpu.memory_space<vmem>>, vector<1x1x32xf32>
    %1092 = vector.shape_cast %1091 : vector<1x1x32xf32> to vector<1x32xf32>
    %cst_409 = arith.constant dense<0.000000e+00> : vector<8xf32>
    %1093 = vector.multi_reduction <add>, %1088, %cst_409 [1] : vector<8x32xf32> to vector<8xf32>
    %1094 = vector.shape_cast %1093 : vector<8xf32> to vector<8x1xf32>
    %cst_410 = arith.constant 3.200000e+01 : f32
    %1095 = vector.broadcast %cst_410 : f32 to vector<8x1xf32>
    %1096 = arith.divf %1094, %1095 : vector<8x1xf32>
    %1097 = vector.broadcast %1096 : vector<8x1xf32> to vector<8x32xf32>
    %1098 = arith.subf %1088, %1097 : vector<8x32xf32>
    %1099 = arith.mulf %1098, %1098 : vector<8x32xf32>
    %cst_411 = arith.constant dense<0.000000e+00> : vector<8xf32>
    %1100 = vector.multi_reduction <add>, %1099, %cst_411 [1] : vector<8x32xf32> to vector<8xf32>
    %1101 = vector.shape_cast %1100 : vector<8xf32> to vector<8x1xf32>
    %cst_412 = arith.constant 3.200000e+01 : f32
    %1102 = vector.broadcast %cst_412 : f32 to vector<8x1xf32>
    %1103 = arith.divf %1101, %1102 : vector<8x1xf32>
    %cst_413 = arith.constant 9.99999974E-6 : f32
    %1104 = vector.broadcast %cst_413 : f32 to vector<8x1xf32>
    %1105 = arith.addf %1103, %1104 : vector<8x1xf32>
    %1106 = math.rsqrt %1105 : vector<8x1xf32>
    %1107 = vector.broadcast %1106 : vector<8x1xf32> to vector<8x32xf32>
    %1108 = arith.mulf %1098, %1107 : vector<8x32xf32>
    %1109 = vector.broadcast %1090 : vector<1x32xf32> to vector<8x32xf32>
    %1110 = arith.mulf %1108, %1109 : vector<8x32xf32>
    %1111 = vector.broadcast %1092 : vector<1x32xf32> to vector<8x32xf32>
    %1112 = arith.addf %1110, %1111 : vector<8x32xf32>
    %c1_414 = arith.constant 1 : index
    %c0_415 = arith.constant 0 : index
    %c0_416 = arith.constant 0 : index
    %1113 = vector.load %arg32[%c1_414, %c0_415, %c0_416] : memref<2x1x32xf32, #tpu.memory_space<vmem>>, vector<1x1x32xf32>
    %1114 = vector.shape_cast %1113 : vector<1x1x32xf32> to vector<1x32xf32>
    %c1_417 = arith.constant 1 : index
    %c0_418 = arith.constant 0 : index
    %c0_419 = arith.constant 0 : index
    %1115 = vector.load %arg33[%c1_417, %c0_418, %c0_419] : memref<2x1x32xf32, #tpu.memory_space<vmem>>, vector<1x1x32xf32>
    %1116 = vector.shape_cast %1115 : vector<1x1x32xf32> to vector<1x32xf32>
    %cst_420 = arith.constant dense<0.000000e+00> : vector<9xf32>
    %1117 = vector.multi_reduction <add>, %587, %cst_420 [1] : vector<9x32xf32> to vector<9xf32>
    %1118 = vector.shape_cast %1117 : vector<9xf32> to vector<9x1xf32>
    %cst_421 = arith.constant 3.200000e+01 : f32
    %1119 = vector.broadcast %cst_421 : f32 to vector<9x1xf32>
    %1120 = arith.divf %1118, %1119 : vector<9x1xf32>
    %1121 = vector.broadcast %1120 : vector<9x1xf32> to vector<9x32xf32>
    %1122 = arith.subf %587, %1121 : vector<9x32xf32>
    %1123 = arith.mulf %1122, %1122 : vector<9x32xf32>
    %cst_422 = arith.constant dense<0.000000e+00> : vector<9xf32>
    %1124 = vector.multi_reduction <add>, %1123, %cst_422 [1] : vector<9x32xf32> to vector<9xf32>
    %1125 = vector.shape_cast %1124 : vector<9xf32> to vector<9x1xf32>
    %cst_423 = arith.constant 3.200000e+01 : f32
    %1126 = vector.broadcast %cst_423 : f32 to vector<9x1xf32>
    %1127 = arith.divf %1125, %1126 : vector<9x1xf32>
    %cst_424 = arith.constant 9.99999974E-6 : f32
    %1128 = vector.broadcast %cst_424 : f32 to vector<9x1xf32>
    %1129 = arith.addf %1127, %1128 : vector<9x1xf32>
    %1130 = math.rsqrt %1129 : vector<9x1xf32>
    %1131 = vector.broadcast %1130 : vector<9x1xf32> to vector<9x32xf32>
    %1132 = arith.mulf %1122, %1131 : vector<9x32xf32>
    %1133 = vector.broadcast %1114 : vector<1x32xf32> to vector<9x32xf32>
    %1134 = arith.mulf %1132, %1133 : vector<9x32xf32>
    %1135 = vector.broadcast %1116 : vector<1x32xf32> to vector<9x32xf32>
    %1136 = arith.addf %1134, %1135 : vector<9x32xf32>
    %c1_425 = arith.constant 1 : index
    %c0_426 = arith.constant 0 : index
    %c0_427 = arith.constant 0 : index
    %1137 = vector.load %arg34[%c1_425, %c0_426, %c0_427] : memref<2x32x32xbf16, #tpu.memory_space<vmem>>, vector<1x32x32xbf16>
    %1138 = vector.shape_cast %1137 : vector<1x32x32xbf16> to vector<32x32xbf16>
    %c1_428 = arith.constant 1 : index
    %c0_429 = arith.constant 0 : index
    %c0_430 = arith.constant 0 : index
    %1139 = vector.load %arg35[%c1_428, %c0_429, %c0_430] : memref<2x1x32xf32, #tpu.memory_space<vmem>>, vector<1x1x32xf32>
    %1140 = vector.shape_cast %1139 : vector<1x1x32xf32> to vector<1x32xf32>
    %c1_431 = arith.constant 1 : index
    %c0_432 = arith.constant 0 : index
    %c0_433 = arith.constant 0 : index
    %1141 = vector.load %arg36[%c1_431, %c0_432, %c0_433] : memref<2x32x64xbf16, #tpu.memory_space<vmem>>, vector<1x32x64xbf16>
    %1142 = vector.shape_cast %1141 : vector<1x32x64xbf16> to vector<32x64xbf16>
    %c1_434 = arith.constant 1 : index
    %c0_435 = arith.constant 0 : index
    %c0_436 = arith.constant 0 : index
    %1143 = vector.load %arg37[%c1_434, %c0_435, %c0_436] : memref<2x1x64xf32, #tpu.memory_space<vmem>>, vector<1x1x64xf32>
    %1144 = vector.shape_cast %1143 : vector<1x1x64xf32> to vector<1x64xf32>
    %c1_437 = arith.constant 1 : index
    %c0_438 = arith.constant 0 : index
    %c0_439 = arith.constant 0 : index
    %1145 = vector.load %arg38[%c1_437, %c0_438, %c0_439] : memref<2x32x32xbf16, #tpu.memory_space<vmem>>, vector<1x32x32xbf16>
    %1146 = vector.shape_cast %1145 : vector<1x32x32xbf16> to vector<32x32xbf16>
    %c1_440 = arith.constant 1 : index
    %c0_441 = arith.constant 0 : index
    %c0_442 = arith.constant 0 : index
    %1147 = vector.load %arg39[%c1_440, %c0_441, %c0_442] : memref<2x1x32xf32, #tpu.memory_space<vmem>>, vector<1x1x32xf32>
    %1148 = vector.shape_cast %1147 : vector<1x1x32xf32> to vector<1x32xf32>
    %1149 = arith.truncf %1112 : vector<8x32xf32> to vector<8x32xbf16>
    %cst_443 = arith.constant dense<0.000000e+00> : vector<8x32xf32>
    %1150 = tpu.matmul %1149, %1138, %cst_443 {dimension_numbers = #tpu.dot_dimension_numbers<[1], [0], [0], [1], [0, 0, 1, 1], [], []>} : vector<8x32xbf16>, vector<32x32xbf16>, vector<8x32xf32> -> vector<8x32xf32>
    %1151 = vector.broadcast %1140 : vector<1x32xf32> to vector<8x32xf32>
    %1152 = arith.addf %1150, %1151 : vector<8x32xf32>
    %cst_444 = arith.constant 0.353553385 : f32
    %1153 = vector.broadcast %cst_444 : f32 to vector<8x32xf32>
    %1154 = arith.mulf %1152, %1153 : vector<8x32xf32>
    %1155 = arith.truncf %1136 : vector<9x32xf32> to vector<9x32xbf16>
    %cst_445 = arith.constant dense<0.000000e+00> : vector<9x64xf32>
    %1156 = tpu.matmul %1155, %1142, %cst_445 {dimension_numbers = #tpu.dot_dimension_numbers<[1], [0], [0], [1], [0, 0, 1, 1], [], []>} : vector<9x32xbf16>, vector<32x64xbf16>, vector<9x64xf32> -> vector<9x64xf32>
    %1157 = vector.broadcast %1144 : vector<1x64xf32> to vector<9x64xf32>
    %1158 = arith.addf %1156, %1157 : vector<9x64xf32>
    %1159 = vector.extract_strided_slice %1158 {offsets = [0, 0], sizes = [9, 32], strides = [1, 1]} : vector<9x64xf32> to vector<9x32xf32>
    %1160 = vector.extract_strided_slice %1158 {offsets = [0, 32], sizes = [9, 32], strides = [1, 1]} : vector<9x64xf32> to vector<9x32xf32>
    %1161 = vector.extract_strided_slice %1154 {offsets = [0, 0], sizes = [8, 8], strides = [1, 1]} : vector<8x32xf32> to vector<8x8xf32>
    %1162 = arith.truncf %1161 : vector<8x8xf32> to vector<8x8xbf16>
    %1163 = vector.extract_strided_slice %1159 {offsets = [0, 0], sizes = [9, 8], strides = [1, 1]} : vector<9x32xf32> to vector<9x8xf32>
    %1164 = arith.truncf %1163 : vector<9x8xf32> to vector<9x8xbf16>
    %1165 = vector.extract_strided_slice %1160 {offsets = [0, 0], sizes = [9, 8], strides = [1, 1]} : vector<9x32xf32> to vector<9x8xf32>
    %1166 = arith.truncf %1165 : vector<9x8xf32> to vector<9x8xbf16>
    %cst_446 = arith.constant dense<0.000000e+00> : vector<8x9xf32>
    %1167 = tpu.matmul %1162, %1164, %cst_446 {dimension_numbers = #tpu.dot_dimension_numbers<[1], [1], [0], [0], [0, 0, 1, 0], [], []>} : vector<8x8xbf16>, vector<9x8xbf16>, vector<8x9xf32> -> vector<8x9xf32>
    %cst_447 = arith.constant dense<0xFF800000> : vector<8xf32>
    %1168 = vector.multi_reduction <maximumf>, %1167, %cst_447 [1] : vector<8x9xf32> to vector<8xf32>
    %1169 = vector.shape_cast %1168 : vector<8xf32> to vector<8x1xf32>
    %1170 = vector.broadcast %1169 : vector<8x1xf32> to vector<8x9xf32>
    %1171 = arith.subf %1167, %1170 : vector<8x9xf32>
    %1172 = math.exp %1171 : vector<8x9xf32>
    %cst_448 = arith.constant dense<0.000000e+00> : vector<8xf32>
    %1173 = vector.multi_reduction <add>, %1172, %cst_448 [1] : vector<8x9xf32> to vector<8xf32>
    %1174 = vector.shape_cast %1173 : vector<8xf32> to vector<8x1xf32>
    %1175 = arith.truncf %1172 : vector<8x9xf32> to vector<8x9xbf16>
    %cst_449 = arith.constant dense<0.000000e+00> : vector<8x8xf32>
    %1176 = tpu.matmul %1175, %1166, %cst_449 {dimension_numbers = #tpu.dot_dimension_numbers<[1], [0], [0], [1], [0, 0, 1, 1], [], []>} : vector<8x9xbf16>, vector<9x8xbf16>, vector<8x8xf32> -> vector<8x8xf32>
    %1177 = tpu.reciprocal %1174 {approx = true} : vector<8x1xf32> -> vector<8x1xf32>
    %1178 = vector.broadcast %1177 : vector<8x1xf32> to vector<8x8xf32>
    %1179 = arith.mulf %1176, %1178 : vector<8x8xf32>
    %1180 = vector.extract_strided_slice %1154 {offsets = [0, 8], sizes = [8, 8], strides = [1, 1]} : vector<8x32xf32> to vector<8x8xf32>
    %1181 = arith.truncf %1180 : vector<8x8xf32> to vector<8x8xbf16>
    %1182 = vector.extract_strided_slice %1159 {offsets = [0, 8], sizes = [9, 8], strides = [1, 1]} : vector<9x32xf32> to vector<9x8xf32>
    %1183 = arith.truncf %1182 : vector<9x8xf32> to vector<9x8xbf16>
    %1184 = vector.extract_strided_slice %1160 {offsets = [0, 8], sizes = [9, 8], strides = [1, 1]} : vector<9x32xf32> to vector<9x8xf32>
    %1185 = arith.truncf %1184 : vector<9x8xf32> to vector<9x8xbf16>
    %cst_450 = arith.constant dense<0.000000e+00> : vector<8x9xf32>
    %1186 = tpu.matmul %1181, %1183, %cst_450 {dimension_numbers = #tpu.dot_dimension_numbers<[1], [1], [0], [0], [0, 0, 1, 0], [], []>} : vector<8x8xbf16>, vector<9x8xbf16>, vector<8x9xf32> -> vector<8x9xf32>
    %cst_451 = arith.constant dense<0xFF800000> : vector<8xf32>
    %1187 = vector.multi_reduction <maximumf>, %1186, %cst_451 [1] : vector<8x9xf32> to vector<8xf32>
    %1188 = vector.shape_cast %1187 : vector<8xf32> to vector<8x1xf32>
    %1189 = vector.broadcast %1188 : vector<8x1xf32> to vector<8x9xf32>
    %1190 = arith.subf %1186, %1189 : vector<8x9xf32>
    %1191 = math.exp %1190 : vector<8x9xf32>
    %cst_452 = arith.constant dense<0.000000e+00> : vector<8xf32>
    %1192 = vector.multi_reduction <add>, %1191, %cst_452 [1] : vector<8x9xf32> to vector<8xf32>
    %1193 = vector.shape_cast %1192 : vector<8xf32> to vector<8x1xf32>
    %1194 = arith.truncf %1191 : vector<8x9xf32> to vector<8x9xbf16>
    %cst_453 = arith.constant dense<0.000000e+00> : vector<8x8xf32>
    %1195 = tpu.matmul %1194, %1185, %cst_453 {dimension_numbers = #tpu.dot_dimension_numbers<[1], [0], [0], [1], [0, 0, 1, 1], [], []>} : vector<8x9xbf16>, vector<9x8xbf16>, vector<8x8xf32> -> vector<8x8xf32>
    %1196 = tpu.reciprocal %1193 {approx = true} : vector<8x1xf32> -> vector<8x1xf32>
    %1197 = vector.broadcast %1196 : vector<8x1xf32> to vector<8x8xf32>
    %1198 = arith.mulf %1195, %1197 : vector<8x8xf32>
    %1199 = vector.extract_strided_slice %1154 {offsets = [0, 16], sizes = [8, 8], strides = [1, 1]} : vector<8x32xf32> to vector<8x8xf32>
    %1200 = arith.truncf %1199 : vector<8x8xf32> to vector<8x8xbf16>
    %1201 = vector.extract_strided_slice %1159 {offsets = [0, 16], sizes = [9, 8], strides = [1, 1]} : vector<9x32xf32> to vector<9x8xf32>
    %1202 = arith.truncf %1201 : vector<9x8xf32> to vector<9x8xbf16>
    %1203 = vector.extract_strided_slice %1160 {offsets = [0, 16], sizes = [9, 8], strides = [1, 1]} : vector<9x32xf32> to vector<9x8xf32>
    %1204 = arith.truncf %1203 : vector<9x8xf32> to vector<9x8xbf16>
    %cst_454 = arith.constant dense<0.000000e+00> : vector<8x9xf32>
    %1205 = tpu.matmul %1200, %1202, %cst_454 {dimension_numbers = #tpu.dot_dimension_numbers<[1], [1], [0], [0], [0, 0, 1, 0], [], []>} : vector<8x8xbf16>, vector<9x8xbf16>, vector<8x9xf32> -> vector<8x9xf32>
    %cst_455 = arith.constant dense<0xFF800000> : vector<8xf32>
    %1206 = vector.multi_reduction <maximumf>, %1205, %cst_455 [1] : vector<8x9xf32> to vector<8xf32>
    %1207 = vector.shape_cast %1206 : vector<8xf32> to vector<8x1xf32>
    %1208 = vector.broadcast %1207 : vector<8x1xf32> to vector<8x9xf32>
    %1209 = arith.subf %1205, %1208 : vector<8x9xf32>
    %1210 = math.exp %1209 : vector<8x9xf32>
    %cst_456 = arith.constant dense<0.000000e+00> : vector<8xf32>
    %1211 = vector.multi_reduction <add>, %1210, %cst_456 [1] : vector<8x9xf32> to vector<8xf32>
    %1212 = vector.shape_cast %1211 : vector<8xf32> to vector<8x1xf32>
    %1213 = arith.truncf %1210 : vector<8x9xf32> to vector<8x9xbf16>
    %cst_457 = arith.constant dense<0.000000e+00> : vector<8x8xf32>
    %1214 = tpu.matmul %1213, %1204, %cst_457 {dimension_numbers = #tpu.dot_dimension_numbers<[1], [0], [0], [1], [0, 0, 1, 1], [], []>} : vector<8x9xbf16>, vector<9x8xbf16>, vector<8x8xf32> -> vector<8x8xf32>
    %1215 = tpu.reciprocal %1212 {approx = true} : vector<8x1xf32> -> vector<8x1xf32>
    %1216 = vector.broadcast %1215 : vector<8x1xf32> to vector<8x8xf32>
    %1217 = arith.mulf %1214, %1216 : vector<8x8xf32>
    %1218 = vector.extract_strided_slice %1154 {offsets = [0, 24], sizes = [8, 8], strides = [1, 1]} : vector<8x32xf32> to vector<8x8xf32>
    %1219 = arith.truncf %1218 : vector<8x8xf32> to vector<8x8xbf16>
    %1220 = vector.extract_strided_slice %1159 {offsets = [0, 24], sizes = [9, 8], strides = [1, 1]} : vector<9x32xf32> to vector<9x8xf32>
    %1221 = arith.truncf %1220 : vector<9x8xf32> to vector<9x8xbf16>
    %1222 = vector.extract_strided_slice %1160 {offsets = [0, 24], sizes = [9, 8], strides = [1, 1]} : vector<9x32xf32> to vector<9x8xf32>
    %1223 = arith.truncf %1222 : vector<9x8xf32> to vector<9x8xbf16>
    %cst_458 = arith.constant dense<0.000000e+00> : vector<8x9xf32>
    %1224 = tpu.matmul %1219, %1221, %cst_458 {dimension_numbers = #tpu.dot_dimension_numbers<[1], [1], [0], [0], [0, 0, 1, 0], [], []>} : vector<8x8xbf16>, vector<9x8xbf16>, vector<8x9xf32> -> vector<8x9xf32>
    %cst_459 = arith.constant dense<0xFF800000> : vector<8xf32>
    %1225 = vector.multi_reduction <maximumf>, %1224, %cst_459 [1] : vector<8x9xf32> to vector<8xf32>
    %1226 = vector.shape_cast %1225 : vector<8xf32> to vector<8x1xf32>
    %1227 = vector.broadcast %1226 : vector<8x1xf32> to vector<8x9xf32>
    %1228 = arith.subf %1224, %1227 : vector<8x9xf32>
    %1229 = math.exp %1228 : vector<8x9xf32>
    %cst_460 = arith.constant dense<0.000000e+00> : vector<8xf32>
    %1230 = vector.multi_reduction <add>, %1229, %cst_460 [1] : vector<8x9xf32> to vector<8xf32>
    %1231 = vector.shape_cast %1230 : vector<8xf32> to vector<8x1xf32>
    %1232 = arith.truncf %1229 : vector<8x9xf32> to vector<8x9xbf16>
    %cst_461 = arith.constant dense<0.000000e+00> : vector<8x8xf32>
    %1233 = tpu.matmul %1232, %1223, %cst_461 {dimension_numbers = #tpu.dot_dimension_numbers<[1], [0], [0], [1], [0, 0, 1, 1], [], []>} : vector<8x9xbf16>, vector<9x8xbf16>, vector<8x8xf32> -> vector<8x8xf32>
    %1234 = tpu.reciprocal %1231 {approx = true} : vector<8x1xf32> -> vector<8x1xf32>
    %1235 = vector.broadcast %1234 : vector<8x1xf32> to vector<8x8xf32>
    %1236 = arith.mulf %1233, %1235 : vector<8x8xf32>
    %1237 = tpu.concatenate %1179, %1198, %1217, %1236 in 1 : vector<8x8xf32>, vector<8x8xf32>, vector<8x8xf32>, vector<8x8xf32> -> vector<8x32xf32>
    %1238 = arith.truncf %1237 : vector<8x32xf32> to vector<8x32xbf16>
    %cst_462 = arith.constant dense<0.000000e+00> : vector<8x32xf32>
    %1239 = tpu.matmul %1238, %1146, %cst_462 {dimension_numbers = #tpu.dot_dimension_numbers<[1], [0], [0], [1], [0, 0, 1, 1], [], []>} : vector<8x32xbf16>, vector<32x32xbf16>, vector<8x32xf32> -> vector<8x32xf32>
    %1240 = vector.broadcast %1148 : vector<1x32xf32> to vector<8x32xf32>
    %1241 = arith.addf %1239, %1240 : vector<8x32xf32>
    %1242 = arith.addf %1088, %1241 : vector<8x32xf32>
    %c1_463 = arith.constant 1 : index
    %c0_464 = arith.constant 0 : index
    %c0_465 = arith.constant 0 : index
    %1243 = vector.load %arg40[%c1_463, %c0_464, %c0_465] : memref<2x1x32xf32, #tpu.memory_space<vmem>>, vector<1x1x32xf32>
    %1244 = vector.shape_cast %1243 : vector<1x1x32xf32> to vector<1x32xf32>
    %c1_466 = arith.constant 1 : index
    %c0_467 = arith.constant 0 : index
    %c0_468 = arith.constant 0 : index
    %1245 = vector.load %arg41[%c1_466, %c0_467, %c0_468] : memref<2x1x32xf32, #tpu.memory_space<vmem>>, vector<1x1x32xf32>
    %1246 = vector.shape_cast %1245 : vector<1x1x32xf32> to vector<1x32xf32>
    %cst_469 = arith.constant dense<0.000000e+00> : vector<8xf32>
    %1247 = vector.multi_reduction <add>, %1242, %cst_469 [1] : vector<8x32xf32> to vector<8xf32>
    %1248 = vector.shape_cast %1247 : vector<8xf32> to vector<8x1xf32>
    %cst_470 = arith.constant 3.200000e+01 : f32
    %1249 = vector.broadcast %cst_470 : f32 to vector<8x1xf32>
    %1250 = arith.divf %1248, %1249 : vector<8x1xf32>
    %1251 = vector.broadcast %1250 : vector<8x1xf32> to vector<8x32xf32>
    %1252 = arith.subf %1242, %1251 : vector<8x32xf32>
    %1253 = arith.mulf %1252, %1252 : vector<8x32xf32>
    %cst_471 = arith.constant dense<0.000000e+00> : vector<8xf32>
    %1254 = vector.multi_reduction <add>, %1253, %cst_471 [1] : vector<8x32xf32> to vector<8xf32>
    %1255 = vector.shape_cast %1254 : vector<8xf32> to vector<8x1xf32>
    %cst_472 = arith.constant 3.200000e+01 : f32
    %1256 = vector.broadcast %cst_472 : f32 to vector<8x1xf32>
    %1257 = arith.divf %1255, %1256 : vector<8x1xf32>
    %cst_473 = arith.constant 9.99999974E-6 : f32
    %1258 = vector.broadcast %cst_473 : f32 to vector<8x1xf32>
    %1259 = arith.addf %1257, %1258 : vector<8x1xf32>
    %1260 = math.rsqrt %1259 : vector<8x1xf32>
    %1261 = vector.broadcast %1260 : vector<8x1xf32> to vector<8x32xf32>
    %1262 = arith.mulf %1252, %1261 : vector<8x32xf32>
    %1263 = vector.broadcast %1244 : vector<1x32xf32> to vector<8x32xf32>
    %1264 = arith.mulf %1262, %1263 : vector<8x32xf32>
    %1265 = vector.broadcast %1246 : vector<1x32xf32> to vector<8x32xf32>
    %1266 = arith.addf %1264, %1265 : vector<8x32xf32>
    %c1_474 = arith.constant 1 : index
    %c0_475 = arith.constant 0 : index
    %c0_476 = arith.constant 0 : index
    %1267 = vector.load %arg42[%c1_474, %c0_475, %c0_476] : memref<2x32x128xbf16, #tpu.memory_space<vmem>>, vector<1x32x128xbf16>
    %1268 = vector.shape_cast %1267 : vector<1x32x128xbf16> to vector<32x128xbf16>
    %c1_477 = arith.constant 1 : index
    %c0_478 = arith.constant 0 : index
    %c0_479 = arith.constant 0 : index
    %1269 = vector.load %arg43[%c1_477, %c0_478, %c0_479] : memref<2x1x128xf32, #tpu.memory_space<vmem>>, vector<1x1x128xf32>
    %1270 = vector.shape_cast %1269 : vector<1x1x128xf32> to vector<1x128xf32>
    %c1_480 = arith.constant 1 : index
    %c0_481 = arith.constant 0 : index
    %c0_482 = arith.constant 0 : index
    %1271 = vector.load %arg44[%c1_480, %c0_481, %c0_482] : memref<2x128x32xbf16, #tpu.memory_space<vmem>>, vector<1x128x32xbf16>
    %1272 = vector.shape_cast %1271 : vector<1x128x32xbf16> to vector<128x32xbf16>
    %c1_483 = arith.constant 1 : index
    %c0_484 = arith.constant 0 : index
    %c0_485 = arith.constant 0 : index
    %1273 = vector.load %arg45[%c1_483, %c0_484, %c0_485] : memref<2x1x32xf32, #tpu.memory_space<vmem>>, vector<1x1x32xf32>
    %1274 = vector.shape_cast %1273 : vector<1x1x32xf32> to vector<1x32xf32>
    %1275 = arith.truncf %1266 : vector<8x32xf32> to vector<8x32xbf16>
    %cst_486 = arith.constant dense<0.000000e+00> : vector<8x128xf32>
    %1276 = tpu.matmul %1275, %1268, %cst_486 {dimension_numbers = #tpu.dot_dimension_numbers<[1], [0], [0], [1], [0, 0, 1, 1], [], []>} : vector<8x32xbf16>, vector<32x128xbf16>, vector<8x128xf32> -> vector<8x128xf32>
    %1277 = vector.broadcast %1270 : vector<1x128xf32> to vector<8x128xf32>
    %1278 = arith.addf %1276, %1277 : vector<8x128xf32>
    %cst_487 = arith.constant 5.000000e-01 : f32
    %1279 = vector.broadcast %cst_487 : f32 to vector<8x128xf32>
    %1280 = arith.mulf %1279, %1278 : vector<8x128xf32>
    %cst_488 = arith.constant 0.707106769 : f32
    %1281 = vector.broadcast %cst_488 : f32 to vector<8x128xf32>
    %1282 = arith.mulf %1278, %1281 : vector<8x128xf32>
    %1283 = math.absf %1282 : vector<8x128xf32>
    %cst_489 = arith.constant 0.327591091 : f32
    %1284 = vector.broadcast %cst_489 : f32 to vector<8x128xf32>
    %1285 = arith.mulf %1284, %1283 : vector<8x128xf32>
    %cst_490 = arith.constant 1.000000e+00 : f32
    %1286 = vector.broadcast %cst_490 : f32 to vector<8x128xf32>
    %1287 = arith.addf %1286, %1285 : vector<8x128xf32>
    %cst_491 = arith.constant 1.000000e+00 : f32
    %1288 = vector.broadcast %cst_491 : f32 to vector<8x128xf32>
    %1289 = arith.divf %1288, %1287 : vector<8x128xf32>
    %cst_492 = arith.constant 1.06140542 : f32
    %1290 = vector.broadcast %cst_492 : f32 to vector<8x128xf32>
    %1291 = arith.mulf %1290, %1289 : vector<8x128xf32>
    %cst_493 = arith.constant -1.45315206 : f32
    %1292 = vector.broadcast %cst_493 : f32 to vector<8x128xf32>
    %1293 = arith.addf %1291, %1292 : vector<8x128xf32>
    %1294 = arith.mulf %1293, %1289 : vector<8x128xf32>
    %cst_494 = arith.constant 1.42141378 : f32
    %1295 = vector.broadcast %cst_494 : f32 to vector<8x128xf32>
    %1296 = arith.addf %1294, %1295 : vector<8x128xf32>
    %1297 = arith.mulf %1296, %1289 : vector<8x128xf32>
    %cst_495 = arith.constant -0.284496725 : f32
    %1298 = vector.broadcast %cst_495 : f32 to vector<8x128xf32>
    %1299 = arith.addf %1297, %1298 : vector<8x128xf32>
    %1300 = arith.mulf %1299, %1289 : vector<8x128xf32>
    %cst_496 = arith.constant 0.254829586 : f32
    %1301 = vector.broadcast %cst_496 : f32 to vector<8x128xf32>
    %1302 = arith.addf %1300, %1301 : vector<8x128xf32>
    %1303 = arith.mulf %1302, %1289 : vector<8x128xf32>
    %cst_497 = arith.constant 0.000000e+00 : f32
    %1304 = vector.broadcast %cst_497 : f32 to vector<8x128xf32>
    %1305 = arith.subf %1304, %1283 : vector<8x128xf32>
    %1306 = arith.mulf %1305, %1283 : vector<8x128xf32>
    %1307 = math.exp %1306 : vector<8x128xf32>
    %1308 = arith.mulf %1303, %1307 : vector<8x128xf32>
    %cst_498 = arith.constant 1.000000e+00 : f32
    %1309 = vector.broadcast %cst_498 : f32 to vector<8x128xf32>
    %1310 = arith.subf %1309, %1308 : vector<8x128xf32>
    %cst_499 = arith.constant 0.000000e+00 : f32
    %1311 = vector.broadcast %cst_499 : f32 to vector<8x128xf32>
    %1312 = arith.cmpf oge, %1282, %1311 : vector<8x128xf32>
    %cst_500 = arith.constant 0.000000e+00 : f32
    %1313 = vector.broadcast %cst_500 : f32 to vector<8x128xf32>
    %1314 = arith.subf %1313, %1310 : vector<8x128xf32>
    %1315 = arith.select %1312, %1310, %1314 : vector<8x128xi1>, vector<8x128xf32>
    %cst_501 = arith.constant 1.000000e+00 : f32
    %1316 = vector.broadcast %cst_501 : f32 to vector<8x128xf32>
    %1317 = arith.addf %1316, %1315 : vector<8x128xf32>
    %1318 = arith.mulf %1280, %1317 : vector<8x128xf32>
    %1319 = arith.truncf %1318 : vector<8x128xf32> to vector<8x128xbf16>
    %cst_502 = arith.constant dense<0.000000e+00> : vector<8x32xf32>
    %1320 = tpu.matmul %1319, %1272, %cst_502 {dimension_numbers = #tpu.dot_dimension_numbers<[1], [0], [0], [1], [0, 0, 1, 1], [], []>} : vector<8x128xbf16>, vector<128x32xbf16>, vector<8x32xf32> -> vector<8x32xf32>
    %1321 = vector.broadcast %1274 : vector<1x32xf32> to vector<8x32xf32>
    %1322 = arith.addf %1320, %1321 : vector<8x32xf32>
    %1323 = arith.addf %1242, %1322 : vector<8x32xf32>
    %cst_503 = arith.constant dense<0.000000e+00> : vector<32xf32>
    %1324 = vector.multi_reduction <add>, %1323, %cst_503 [0] : vector<8x32xf32> to vector<32xf32>
    %1325 = vector.shape_cast %1324 : vector<32xf32> to vector<1x32xf32>
    %cst_504 = arith.constant 8.000000e+00 : f32
    %1326 = vector.broadcast %cst_504 : f32 to vector<1x32xf32>
    %1327 = arith.divf %1325, %1326 : vector<1x32xf32>
    %1328 = arith.truncf %1323 : vector<8x32xf32> to vector<8x32xbf16>
    %c0_505 = arith.constant 0 : index
    %c0_506 = arith.constant 0 : index
    %1329 = vector.load %arg7[%c0_505, %c0_506] : memref<32x10xbf16, #tpu.memory_space<vmem>>, vector<32x10xbf16>
    %cst_507 = arith.constant dense<0.000000e+00> : vector<8x10xf32>
    %1330 = tpu.matmul %1328, %1329, %cst_507 {dimension_numbers = #tpu.dot_dimension_numbers<[1], [0], [0], [1], [0, 0, 1, 1], [], []>} : vector<8x32xbf16>, vector<32x10xbf16>, vector<8x10xf32> -> vector<8x10xf32>
    %c0_508 = arith.constant 0 : index
    %c0_509 = arith.constant 0 : index
    %1331 = vector.load %arg8[%c0_508, %c0_509] : memref<1x10xf32, #tpu.memory_space<vmem>>, vector<1x10xf32>
    %1332 = vector.broadcast %1331 : vector<1x10xf32> to vector<8x10xf32>
    %1333 = arith.addf %1330, %1332 : vector<8x10xf32>
    %1334 = vector.extract_strided_slice %587 {offsets = [8, 0], sizes = [1, 32], strides = [1, 1]} : vector<9x32xf32> to vector<1x32xf32>
    %1335 = arith.truncf %1334 : vector<1x32xf32> to vector<1x32xbf16>
    %c0_510 = arith.constant 0 : index
    %c0_511 = arith.constant 0 : index
    %1336 = vector.load %arg9[%c0_510, %c0_511] : memref<32x10xbf16, #tpu.memory_space<vmem>>, vector<32x10xbf16>
    %cst_512 = arith.constant dense<0.000000e+00> : vector<1x10xf32>
    %1337 = tpu.matmul %1335, %1336, %cst_512 {dimension_numbers = #tpu.dot_dimension_numbers<[1], [0], [0], [1], [0, 0, 1, 1], [], []>} : vector<1x32xbf16>, vector<32x10xbf16>, vector<1x10xf32> -> vector<1x10xf32>
    %1338 = arith.truncf %1327 : vector<1x32xf32> to vector<1x32xbf16>
    %c0_513 = arith.constant 0 : index
    %c0_514 = arith.constant 0 : index
    %1339 = vector.load %arg10[%c0_513, %c0_514] : memref<32x10xbf16, #tpu.memory_space<vmem>>, vector<32x10xbf16>
    %cst_515 = arith.constant dense<0.000000e+00> : vector<1x10xf32>
    %1340 = tpu.matmul %1338, %1339, %cst_515 {dimension_numbers = #tpu.dot_dimension_numbers<[1], [0], [0], [1], [0, 0, 1, 1], [], []>} : vector<1x32xbf16>, vector<32x10xbf16>, vector<1x10xf32> -> vector<1x10xf32>
    %1341 = arith.addf %1337, %1340 : vector<1x10xf32>
    %c0_516 = arith.constant 0 : index
    %c0_517 = arith.constant 0 : index
    %1342 = vector.load %arg11[%c0_516, %c0_517] : memref<1x10xf32, #tpu.memory_space<vmem>>, vector<1x10xf32>
    %1343 = arith.addf %1341, %1342 : vector<1x10xf32>
    %1344 = tpu.concatenate %1343, %1333 in 0 : vector<1x10xf32>, vector<8x10xf32> -> vector<9x10xf32>
    %c0_518 = arith.constant 0 : index
    %c0_519 = arith.constant 0 : index
    %c0_520 = arith.constant 0 : index
    %1345 = vector.load %arg46[%c0_518, %c0_519, %c0_520] : memref<1x9x10xf32, #tpu.memory_space<vmem>>, vector<1x9x10xf32>
    %1346 = vector.shape_cast %1345 : vector<1x9x10xf32> to vector<9x10xf32>
    %1347 = vector.shape_cast %1344 : vector<9x10xf32> to vector<1x9x10xf32>
    tpu.vector_store %arg46[%c0_518, %c0_519, %c0_520], %1347 {strides = array<i32>} : memref<1x9x10xf32, #tpu.memory_space<vmem>>, vector<1x9x10xf32>,
    return
  }
  func.func @transform_0(%arg0: i32) -> (i32, i32, i32) {
    %c0_i32 = arith.constant 0 : i32
    %c0_i32_0 = arith.constant 0 : i32
    %c0_i32_1 = arith.constant 0 : i32
    return %arg0, %c0_i32, %c0_i32_0 : i32, i32, i32
  }
  func.func @transform_1(%arg0: i32) -> (i32, i32) {
    %c0_i32 = arith.constant 0 : i32
    %c0_i32_0 = arith.constant 0 : i32
    %c0_i32_1 = arith.constant 0 : i32
    return %c0_i32, %c0_i32_0 : i32, i32
  }
  func.func @transform_2(%arg0: i32) -> (i32, i32) {
    %c0_i32 = arith.constant 0 : i32
    %c0_i32_0 = arith.constant 0 : i32
    %c0_i32_1 = arith.constant 0 : i32
    return %c0_i32, %c0_i32_0 : i32, i32
  }
  func.func @transform_3(%arg0: i32) -> (i32, i32) {
    %c0_i32 = arith.constant 0 : i32
    %c0_i32_0 = arith.constant 0 : i32
    %c0_i32_1 = arith.constant 0 : i32
    return %c0_i32, %c0_i32_0 : i32, i32
  }
  func.func @transform_4(%arg0: i32) -> (i32, i32) {
    %c0_i32 = arith.constant 0 : i32
    %c0_i32_0 = arith.constant 0 : i32
    %c0_i32_1 = arith.constant 0 : i32
    return %c0_i32, %c0_i32_0 : i32, i32
  }
  func.func @transform_5(%arg0: i32) -> (i32, i32) {
    %c0_i32 = arith.constant 0 : i32
    %c0_i32_0 = arith.constant 0 : i32
    %c0_i32_1 = arith.constant 0 : i32
    return %c0_i32, %c0_i32_0 : i32, i32
  }
  func.func @transform_6(%arg0: i32) -> (i32, i32) {
    %c0_i32 = arith.constant 0 : i32
    %c0_i32_0 = arith.constant 0 : i32
    %c0_i32_1 = arith.constant 0 : i32
    return %c0_i32, %c0_i32_0 : i32, i32
  }
  func.func @transform_7(%arg0: i32) -> (i32, i32) {
    %c0_i32 = arith.constant 0 : i32
    %c0_i32_0 = arith.constant 0 : i32
    %c0_i32_1 = arith.constant 0 : i32
    return %c0_i32, %c0_i32_0 : i32, i32
  }
  func.func @transform_8(%arg0: i32) -> (i32, i32) {
    %c0_i32 = arith.constant 0 : i32
    %c0_i32_0 = arith.constant 0 : i32
    %c0_i32_1 = arith.constant 0 : i32
    return %c0_i32, %c0_i32_0 : i32, i32
  }
  func.func @transform_9(%arg0: i32) -> (i32, i32) {
    %c0_i32 = arith.constant 0 : i32
    %c0_i32_0 = arith.constant 0 : i32
    %c0_i32_1 = arith.constant 0 : i32
    return %c0_i32, %c0_i32_0 : i32, i32
  }
  func.func @transform_10(%arg0: i32) -> (i32, i32) {
    %c0_i32 = arith.constant 0 : i32
    %c0_i32_0 = arith.constant 0 : i32
    %c0_i32_1 = arith.constant 0 : i32
    return %c0_i32, %c0_i32_0 : i32, i32
  }
  func.func @transform_11(%arg0: i32) -> (i32, i32, i32) {
    %c0_i32 = arith.constant 0 : i32
    %c0_i32_0 = arith.constant 0 : i32
    %c0_i32_1 = arith.constant 0 : i32
    %c0_i32_2 = arith.constant 0 : i32
    return %c0_i32, %c0_i32_0, %c0_i32_1 : i32, i32, i32
  }
  func.func @transform_12(%arg0: i32) -> (i32, i32, i32) {
    %c0_i32 = arith.constant 0 : i32
    %c0_i32_0 = arith.constant 0 : i32
    %c0_i32_1 = arith.constant 0 : i32
    %c0_i32_2 = arith.constant 0 : i32
    return %c0_i32, %c0_i32_0, %c0_i32_1 : i32, i32, i32
  }
  func.func @transform_13(%arg0: i32) -> (i32, i32, i32) {
    %c0_i32 = arith.constant 0 : i32
    %c0_i32_0 = arith.constant 0 : i32
    %c0_i32_1 = arith.constant 0 : i32
    %c0_i32_2 = arith.constant 0 : i32
    return %c0_i32, %c0_i32_0, %c0_i32_1 : i32, i32, i32
  }
  func.func @transform_14(%arg0: i32) -> (i32, i32, i32) {
    %c0_i32 = arith.constant 0 : i32
    %c0_i32_0 = arith.constant 0 : i32
    %c0_i32_1 = arith.constant 0 : i32
    %c0_i32_2 = arith.constant 0 : i32
    return %c0_i32, %c0_i32_0, %c0_i32_1 : i32, i32, i32
  }
  func.func @transform_15(%arg0: i32) -> (i32, i32, i32) {
    %c0_i32 = arith.constant 0 : i32
    %c0_i32_0 = arith.constant 0 : i32
    %c0_i32_1 = arith.constant 0 : i32
    %c0_i32_2 = arith.constant 0 : i32
    return %c0_i32, %c0_i32_0, %c0_i32_1 : i32, i32, i32
  }
  func.func @transform_16(%arg0: i32) -> (i32, i32, i32) {
    %c0_i32 = arith.constant 0 : i32
    %c0_i32_0 = arith.constant 0 : i32
    %c0_i32_1 = arith.constant 0 : i32
    %c0_i32_2 = arith.constant 0 : i32
    return %c0_i32, %c0_i32_0, %c0_i32_1 : i32, i32, i32
  }
  func.func @transform_17(%arg0: i32) -> (i32, i32, i32) {
    %c0_i32 = arith.constant 0 : i32
    %c0_i32_0 = arith.constant 0 : i32
    %c0_i32_1 = arith.constant 0 : i32
    %c0_i32_2 = arith.constant 0 : i32
    return %c0_i32, %c0_i32_0, %c0_i32_1 : i32, i32, i32
  }
  func.func @transform_18(%arg0: i32) -> (i32, i32, i32) {
    %c0_i32 = arith.constant 0 : i32
    %c0_i32_0 = arith.constant 0 : i32
    %c0_i32_1 = arith.constant 0 : i32
    %c0_i32_2 = arith.constant 0 : i32
    return %c0_i32, %c0_i32_0, %c0_i32_1 : i32, i32, i32
  }
  func.func @transform_19(%arg0: i32) -> (i32, i32, i32) {
    %c0_i32 = arith.constant 0 : i32
    %c0_i32_0 = arith.constant 0 : i32
    %c0_i32_1 = arith.constant 0 : i32
    %c0_i32_2 = arith.constant 0 : i32
    return %c0_i32, %c0_i32_0, %c0_i32_1 : i32, i32, i32
  }
  func.func @transform_20(%arg0: i32) -> (i32, i32, i32) {
    %c0_i32 = arith.constant 0 : i32
    %c0_i32_0 = arith.constant 0 : i32
    %c0_i32_1 = arith.constant 0 : i32
    %c0_i32_2 = arith.constant 0 : i32
    return %c0_i32, %c0_i32_0, %c0_i32_1 : i32, i32, i32
  }
  func.func @transform_21(%arg0: i32) -> (i32, i32, i32) {
    %c0_i32 = arith.constant 0 : i32
    %c0_i32_0 = arith.constant 0 : i32
    %c0_i32_1 = arith.constant 0 : i32
    %c0_i32_2 = arith.constant 0 : i32
    return %c0_i32, %c0_i32_0, %c0_i32_1 : i32, i32, i32
  }
  func.func @transform_22(%arg0: i32) -> (i32, i32, i32) {
    %c0_i32 = arith.constant 0 : i32
    %c0_i32_0 = arith.constant 0 : i32
    %c0_i32_1 = arith.constant 0 : i32
    %c0_i32_2 = arith.constant 0 : i32
    return %c0_i32, %c0_i32_0, %c0_i32_1 : i32, i32, i32
  }
  func.func @transform_23(%arg0: i32) -> (i32, i32, i32) {
    %c0_i32 = arith.constant 0 : i32
    %c0_i32_0 = arith.constant 0 : i32
    %c0_i32_1 = arith.constant 0 : i32
    %c0_i32_2 = arith.constant 0 : i32
    return %c0_i32, %c0_i32_0, %c0_i32_1 : i32, i32, i32
  }
  func.func @transform_24(%arg0: i32) -> (i32, i32, i32) {
    %c0_i32 = arith.constant 0 : i32
    %c0_i32_0 = arith.constant 0 : i32
    %c0_i32_1 = arith.constant 0 : i32
    %c0_i32_2 = arith.constant 0 : i32
    return %c0_i32, %c0_i32_0, %c0_i32_1 : i32, i32, i32
  }
  func.func @transform_25(%arg0: i32) -> (i32, i32, i32) {
    %c0_i32 = arith.constant 0 : i32
    %c0_i32_0 = arith.constant 0 : i32
    %c0_i32_1 = arith.constant 0 : i32
    %c0_i32_2 = arith.constant 0 : i32
    return %c0_i32, %c0_i32_0, %c0_i32_1 : i32, i32, i32
  }
  func.func @transform_26(%arg0: i32) -> (i32, i32, i32) {
    %c0_i32 = arith.constant 0 : i32
    %c0_i32_0 = arith.constant 0 : i32
    %c0_i32_1 = arith.constant 0 : i32
    %c0_i32_2 = arith.constant 0 : i32
    return %c0_i32, %c0_i32_0, %c0_i32_1 : i32, i32, i32
  }
  func.func @transform_27(%arg0: i32) -> (i32, i32, i32) {
    %c0_i32 = arith.constant 0 : i32
    %c0_i32_0 = arith.constant 0 : i32
    %c0_i32_1 = arith.constant 0 : i32
    %c0_i32_2 = arith.constant 0 : i32
    return %c0_i32, %c0_i32_0, %c0_i32_1 : i32, i32, i32
  }
  func.func @transform_28(%arg0: i32) -> (i32, i32, i32) {
    %c0_i32 = arith.constant 0 : i32
    %c0_i32_0 = arith.constant 0 : i32
    %c0_i32_1 = arith.constant 0 : i32
    %c0_i32_2 = arith.constant 0 : i32
    return %c0_i32, %c0_i32_0, %c0_i32_1 : i32, i32, i32
  }
  func.func @transform_29(%arg0: i32) -> (i32, i32, i32) {
    %c0_i32 = arith.constant 0 : i32
    %c0_i32_0 = arith.constant 0 : i32
    %c0_i32_1 = arith.constant 0 : i32
    %c0_i32_2 = arith.constant 0 : i32
    return %c0_i32, %c0_i32_0, %c0_i32_1 : i32, i32, i32
  }
  func.func @transform_30(%arg0: i32) -> (i32, i32, i32) {
    %c0_i32 = arith.constant 0 : i32
    %c0_i32_0 = arith.constant 0 : i32
    %c0_i32_1 = arith.constant 0 : i32
    %c0_i32_2 = arith.constant 0 : i32
    return %c0_i32, %c0_i32_0, %c0_i32_1 : i32, i32, i32
  }
  func.func @transform_31(%arg0: i32) -> (i32, i32, i32) {
    %c0_i32 = arith.constant 0 : i32
    %c0_i32_0 = arith.constant 0 : i32
    %c0_i32_1 = arith.constant 0 : i32
    %c0_i32_2 = arith.constant 0 : i32
    return %c0_i32, %c0_i32_0, %c0_i32_1 : i32, i32, i32
  }
  func.func @transform_32(%arg0: i32) -> (i32, i32, i32) {
    %c0_i32 = arith.constant 0 : i32
    %c0_i32_0 = arith.constant 0 : i32
    %c0_i32_1 = arith.constant 0 : i32
    %c0_i32_2 = arith.constant 0 : i32
    return %c0_i32, %c0_i32_0, %c0_i32_1 : i32, i32, i32
  }
  func.func @transform_33(%arg0: i32) -> (i32, i32, i32) {
    %c0_i32 = arith.constant 0 : i32
    %c0_i32_0 = arith.constant 0 : i32
    %c0_i32_1 = arith.constant 0 : i32
    %c0_i32_2 = arith.constant 0 : i32
    return %c0_i32, %c0_i32_0, %c0_i32_1 : i32, i32, i32
  }
  func.func @transform_34(%arg0: i32) -> (i32, i32, i32) {
    %c0_i32 = arith.constant 0 : i32
    %c0_i32_0 = arith.constant 0 : i32
    %c0_i32_1 = arith.constant 0 : i32
    %c0_i32_2 = arith.constant 0 : i32
    return %c0_i32, %c0_i32_0, %c0_i32_1 : i32, i32, i32
  }
  func.func @transform_35(%arg0: i32) -> (i32, i32, i32) {
    %c0_i32 = arith.constant 0 : i32
    %c0_i32_0 = arith.constant 0 : i32
    %c0_i32_1 = arith.constant 0 : i32
    %c0_i32_2 = arith.constant 0 : i32
    return %c0_i32, %c0_i32_0, %c0_i32_1 : i32, i32, i32
  }
  func.func @transform_36(%arg0: i32) -> (i32, i32, i32) {
    %c0_i32 = arith.constant 0 : i32
    %c0_i32_0 = arith.constant 0 : i32
    %c0_i32_1 = arith.constant 0 : i32
    %c0_i32_2 = arith.constant 0 : i32
    return %c0_i32, %c0_i32_0, %c0_i32_1 : i32, i32, i32
  }
  func.func @transform_37(%arg0: i32) -> (i32, i32, i32) {
    %c0_i32 = arith.constant 0 : i32
    %c0_i32_0 = arith.constant 0 : i32
    %c0_i32_1 = arith.constant 0 : i32
    %c0_i32_2 = arith.constant 0 : i32
    return %c0_i32, %c0_i32_0, %c0_i32_1 : i32, i32, i32
  }
  func.func @transform_38(%arg0: i32) -> (i32, i32, i32) {
    %c0_i32 = arith.constant 0 : i32
    %c0_i32_0 = arith.constant 0 : i32
    %c0_i32_1 = arith.constant 0 : i32
    %c0_i32_2 = arith.constant 0 : i32
    return %c0_i32, %c0_i32_0, %c0_i32_1 : i32, i32, i32
  }
  func.func @transform_39(%arg0: i32) -> (i32, i32, i32) {
    %c0_i32 = arith.constant 0 : i32
    %c0_i32_0 = arith.constant 0 : i32
    %c0_i32_1 = arith.constant 0 : i32
    %c0_i32_2 = arith.constant 0 : i32
    return %c0_i32, %c0_i32_0, %c0_i32_1 : i32, i32, i32
  }
  func.func @transform_40(%arg0: i32) -> (i32, i32, i32) {
    %c0_i32 = arith.constant 0 : i32
    %c0_i32_0 = arith.constant 0 : i32
    %c0_i32_1 = arith.constant 0 : i32
    %c0_i32_2 = arith.constant 0 : i32
    return %c0_i32, %c0_i32_0, %c0_i32_1 : i32, i32, i32
  }
  func.func @transform_41(%arg0: i32) -> (i32, i32, i32) {
    %c0_i32 = arith.constant 0 : i32
    %c0_i32_0 = arith.constant 0 : i32
    %c0_i32_1 = arith.constant 0 : i32
    %c0_i32_2 = arith.constant 0 : i32
    return %c0_i32, %c0_i32_0, %c0_i32_1 : i32, i32, i32
  }
  func.func @transform_42(%arg0: i32) -> (i32, i32, i32) {
    %c0_i32 = arith.constant 0 : i32
    %c0_i32_0 = arith.constant 0 : i32
    %c0_i32_1 = arith.constant 0 : i32
    %c0_i32_2 = arith.constant 0 : i32
    return %c0_i32, %c0_i32_0, %c0_i32_1 : i32, i32, i32
  }
  func.func @transform_43(%arg0: i32) -> (i32, i32, i32) {
    %c0_i32 = arith.constant 0 : i32
    %c0_i32_0 = arith.constant 0 : i32
    %c0_i32_1 = arith.constant 0 : i32
    %c0_i32_2 = arith.constant 0 : i32
    return %c0_i32, %c0_i32_0, %c0_i32_1 : i32, i32, i32
  }
  func.func @transform_44(%arg0: i32) -> (i32, i32, i32) {
    %c0_i32 = arith.constant 0 : i32
    %c0_i32_0 = arith.constant 0 : i32
    %c0_i32_1 = arith.constant 0 : i32
    %c0_i32_2 = arith.constant 0 : i32
    return %c0_i32, %c0_i32_0, %c0_i32_1 : i32, i32, i32
  }
  func.func @transform_45(%arg0: i32) -> (i32, i32, i32) {
    %c0_i32 = arith.constant 0 : i32
    %c0_i32_0 = arith.constant 0 : i32
    %c0_i32_1 = arith.constant 0 : i32
    return %arg0, %c0_i32, %c0_i32_0 : i32, i32, i32
  }
}

</mosaic_0001>

<llo_original>
// kernel: oad_transformer_forward.1
$region0: #{oad_transformer_forward.1}
  #allocation0 [shape = 'u32[]', space=smem, size = 0x4, offset = 0x4, fixed_abs, tag = 'smem constant byte address 0x4 - core index']
  #allocation1 [shape = 'u32[72,128]{1,0:T(1,128)}', space=vmem, size = 0x9000, scoped, tag = 'internal scratch']
  %s0 = inlined_call_operand.smem [shape: u32[46], index: -1, kind: input, shape index: {}]
  %s1 = sld [smem:[%s0]]
  %s2 = scalar_lea.smem %s0, 1
  %s3 = sld [smem:[%s2]]
  %s4 = scalar_lea.smem %s0, 2
  %s5 = sld [smem:[%s4]]
  %s6 = scalar_lea.smem %s0, 3
  %s7 = sld [smem:[%s6]]
  %s8 = scalar_lea.smem %s0, 4
  %s9 = sld [smem:[%s8]]
  %s10 = scalar_lea.smem %s0, 5
  %s11 = sld [smem:[%s10]]
  %s12 = scalar_lea.smem %s0, 6
  %s13 = sld [smem:[%s12]]
  %s14 = scalar_lea.smem %s0, 7
  %s15 = sld [smem:[%s14]]
  %s16 = scalar_lea.smem %s0, 8
  %s17 = sld [smem:[%s16]]
  %s18 = scalar_lea.smem %s0, 9
  %s19 = sld [smem:[%s18]]
  %s20 = scalar_lea.smem %s0, 10
  %s21 = sld [smem:[%s20]]
  %s22 = scalar_lea.smem %s0, 11
  %s23 = sld [smem:[%s22]]
  %s24 = scalar_lea.smem %s0, 12
  %s25 = sld [smem:[%s24]]
  %s26 = scalar_lea.smem %s0, 13
  %s27 = sld [smem:[%s26]]
  %s28 = scalar_lea.smem %s0, 14
  %s29 = sld [smem:[%s28]]
  %s30 = scalar_lea.smem %s0, 15
  %s31 = sld [smem:[%s30]]
  %s32 = scalar_lea.smem %s0, 16
  %s33 = sld [smem:[%s32]]
  %s34 = scalar_lea.smem %s0, 17
  %s35 = sld [smem:[%s34]]
  %s36 = scalar_lea.smem %s0, 18
  %s37 = sld [smem:[%s36]]
  %s38 = scalar_lea.smem %s0, 19
  %s39 = sld [smem:[%s38]]
  %s40 = scalar_lea.smem %s0, 20
  %s41 = sld [smem:[%s40]]
  %s42 = scalar_lea.smem %s0, 21
  %s43 = sld [smem:[%s42]]
  %s44 = scalar_lea.smem %s0, 22
  %s45 = sld [smem:[%s44]]
  %s46 = scalar_lea.smem %s0, 23
  %s47 = sld [smem:[%s46]]
  %s48 = scalar_lea.smem %s0, 24
  %s49 = sld [smem:[%s48]]
  %s50 = scalar_lea.smem %s0, 25
  %s51 = sld [smem:[%s50]]
  %s52 = scalar_lea.smem %s0, 26
  %s53 = sld [smem:[%s52]]
  %s54 = scalar_lea.smem %s0, 27
  %s55 = sld [smem:[%s54]]
  %s56 = scalar_lea.smem %s0, 28
  %s57 = sld [smem:[%s56]]
  %s58 = scalar_lea.smem %s0, 29
  %s59 = sld [smem:[%s58]]
  %s60 = scalar_lea.smem %s0, 30
  %s61 = sld [smem:[%s60]]
  %s62 = scalar_lea.smem %s0, 31
  %s63 = sld [smem:[%s62]]
  %s64 = scalar_lea.smem %s0, 32
  %s65 = sld [smem:[%s64]]
  %s66 = scalar_lea.smem %s0, 33
  %s67 = sld [smem:[%s66]]
  %s68 = scalar_lea.smem %s0, 34
  %s69 = sld [smem:[%s68]]
  %s70 = scalar_lea.smem %s0, 35
  %s71 = sld [smem:[%s70]]
  %s72 = scalar_lea.smem %s0, 36
  %s73 = sld [smem:[%s72]]
  %s74 = scalar_lea.smem %s0, 37
  %s75 = sld [smem:[%s74]]
  %s76 = scalar_lea.smem %s0, 38
  %s77 = sld [smem:[%s76]]
  %s78 = scalar_lea.smem %s0, 39
  %s79 = sld [smem:[%s78]]
  %s80 = scalar_lea.smem %s0, 40
  %s81 = sld [smem:[%s80]]
  %s82 = scalar_lea.smem %s0, 41
  %s83 = sld [smem:[%s82]]
  %s84 = scalar_lea.smem %s0, 42
  %s85 = sld [smem:[%s84]]
  %s86 = scalar_lea.smem %s0, 43
  %s87 = sld [smem:[%s86]]
  %s88 = scalar_lea.smem %s0, 44
  %s89 = sld [smem:[%s88]]
  %s90 = scalar_lea.smem %s0, 45
  %s91 = sld [smem:[%s90]]
  %s92 = sld [smem:[#allocation0]]
  $region213: #{oad_transformer_forward.1} parent=0
    _
  %s94 = ssub.s32 1, %s92
  %s95 = scalar_select 0, %s94, %s92
  loop: start=0, step=1, limit=4
  $region2: #{oad_transformer_forward.1} parent=0 // loop_pre_header
    _
  $region3: #{oad_transformer_forward.1} parent=0 // loop_header
    %s97 = sphi 0, %s101
    %p98 = scmp.ge.s32.totalorder %s97, 4
    %s107 = sphi 0, %s109
    %s110 = sphi 0, %s107
    %s111 = sphi 0, %s110
    %s127 = sphi 0, %s111
    %s131 = sphi 0, %s131
    %s133 = sphi 0, %s131
    %s134 = sphi 0, %s133
    %s148 = sphi 0, %s134
    %s152 = sphi 0, %s152
    %s154 = sphi 0, %s152
    %s155 = sphi 0, %s154
    %s169 = sphi 0, %s155
    %s173 = sphi 0, %s173
    %s175 = sphi 0, %s173
    %s176 = sphi 0, %s175
    %s190 = sphi 0, %s176
    %s194 = sphi 0, %s194
    %s196 = sphi 0, %s194
    %s197 = sphi 0, %s196
    %s211 = sphi 0, %s197
    %s215 = sphi 0, %s215
    %s217 = sphi 0, %s215
    %s218 = sphi 0, %s217
    %s232 = sphi 0, %s218
    %s236 = sphi 0, %s236
    %s238 = sphi 0, %s236
    %s239 = sphi 0, %s238
    %s253 = sphi 0, %s239
    %s257 = sphi 0, %s257
    %s259 = sphi 0, %s257
    %s260 = sphi 0, %s259
    %s274 = sphi 0, %s260
    %s278 = sphi 0, %s278
    %s280 = sphi 0, %s278
    %s281 = sphi 0, %s280
    %s295 = sphi 0, %s281
    %s299 = sphi 0, %s299
    %s301 = sphi 0, %s299
    %s302 = sphi 0, %s301
    %s316 = sphi 0, %s302
    %s320 = sphi 0, %s320
    %s322 = sphi 0, %s320
    %s323 = sphi 0, %s322
    %s337 = sphi 0, %s323
    %s341 = sphi 0, %s341
    %s343 = sphi 0, %s341
    %s344 = sphi 0, %s343
    %s358 = sphi 0, %s344
    %s362 = sphi 0, %s362
    %s364 = sphi 0, %s362
    %s365 = sphi 0, %s364
    %s379 = sphi 0, %s365
    %s383 = sphi 0, %s383
    %s385 = sphi 0, %s383
    %s386 = sphi 0, %s385
    %s400 = sphi 0, %s386
    %s404 = sphi 0, %s404
    %s406 = sphi 0, %s404
    %s407 = sphi 0, %s406
    %s421 = sphi 0, %s407
    %s425 = sphi 0, %s425
    %s427 = sphi 0, %s425
    %s428 = sphi 0, %s427
    %s442 = sphi 0, %s428
    %s446 = sphi 0, %s446
    %s448 = sphi 0, %s446
    %s449 = sphi 0, %s448
    %s463 = sphi 0, %s449
    %s467 = sphi 0, %s467
    %s469 = sphi 0, %s467
    %s470 = sphi 0, %s469
    %s484 = sphi 0, %s470
    %s488 = sphi 0, %s488
    %s490 = sphi 0, %s488
    %s491 = sphi 0, %s490
    %s505 = sphi 0, %s491
    %s509 = sphi 0, %s509
    %s511 = sphi 0, %s509
    %s512 = sphi 0, %s511
    %s526 = sphi 0, %s512
    %s530 = sphi 0, %s530
    %s532 = sphi 0, %s530
    %s533 = sphi 0, %s532
    %s547 = sphi 0, %s533
    %s551 = sphi 0, %s551
    %s553 = sphi 0, %s551
    %s554 = sphi 0, %s553
    %s568 = sphi 0, %s554
    %s572 = sphi 0, %s572
    %s574 = sphi 0, %s572
    %s575 = sphi 0, %s574
    %s589 = sphi 0, %s575
    %s593 = sphi 0, %s593
    %s595 = sphi 0, %s593
    %s596 = sphi 0, %s595
    %s610 = sphi 0, %s596
    %s614 = sphi 0, %s614
    %s616 = sphi 0, %s614
    %s617 = sphi 0, %s616
    %s631 = sphi 0, %s617
    %s635 = sphi 0, %s635
    %s637 = sphi 0, %s635
    %s638 = sphi 0, %s637
    %s652 = sphi 0, %s638
    %s656 = sphi 0, %s656
    %s658 = sphi 0, %s656
    %s659 = sphi 0, %s658
    %s673 = sphi 0, %s659
    %s677 = sphi 0, %s677
    %s679 = sphi 0, %s677
    %s680 = sphi 0, %s679
    %s694 = sphi 0, %s680
    %s698 = sphi 0, %s698
    %s700 = sphi 0, %s698
    %s701 = sphi 0, %s700
    %s715 = sphi 0, %s701
    %s719 = sphi 0, %s719
    %s721 = sphi 0, %s719
    %s722 = sphi 0, %s721
    %s736 = sphi 0, %s722
    %s740 = sphi 0, %s740
    %s742 = sphi 0, %s740
    %s743 = sphi 0, %s742
    %s757 = sphi 0, %s743
    %s761 = sphi 0, %s761
    %s763 = sphi 0, %s761
    %s764 = sphi 0, %s763
    %s778 = sphi 0, %s764
    %s782 = sphi 0, %s782
    %s784 = sphi 0, %s782
    %s785 = sphi 0, %s784
    %s799 = sphi 0, %s785
    %s803 = sphi 0, %s803
    %s805 = sphi 0, %s803
    %s806 = sphi 0, %s805
    %s820 = sphi 0, %s806
    %s824 = sphi 0, %s824
    %s826 = sphi 0, %s824
    %s827 = sphi 0, %s826
    %s841 = sphi 0, %s827
    %s845 = sphi 0, %s845
    %s847 = sphi 0, %s845
    %s848 = sphi 0, %s847
    %s862 = sphi 0, %s848
    %s866 = sphi 0, %s866
    %s868 = sphi 0, %s866
    %s869 = sphi 0, %s868
    %s883 = sphi 0, %s869
    %s887 = sphi 0, %s887
    %s889 = sphi 0, %s887
    %s890 = sphi 0, %s889
    %s904 = sphi 0, %s890
    %s908 = sphi 0, %s908
    %s910 = sphi 0, %s908
    %s911 = sphi 0, %s910
    %s925 = sphi 0, %s911
    %s929 = sphi 0, %s929
    %s931 = sphi 0, %s929
    %s932 = sphi 0, %s931
    %s946 = sphi 0, %s932
    %s950 = sphi 0, %s950
    %s952 = sphi 0, %s950
    %s953 = sphi 0, %s952
    %s967 = sphi 0, %s953
    %s971 = sphi 0, %s971
    %s973 = sphi 0, %s971
    %s974 = sphi 0, %s973
    %s988 = sphi 0, %s974
    %s992 = sphi 0, %s992
    %s994 = sphi 0, %s992
    %s995 = sphi 0, %s994
    %s1009 = sphi 0, %s995
    %s1013 = sphi 0, %s1013
    %s1015 = sphi 0, %s1013
    %s1016 = sphi 0, %s1015
    %s1030 = sphi 0, %s1016
    %s1034 = sphi 0, %s1034
    %s1036 = sphi 0, %s1034
    %s1037 = sphi 0, %s1036
    %s1051 = sphi 0, %s1037
    %s1057 = sphi 0, %s1059
    %s1060 = sphi 0, %s1057
    %s1061 = sphi 0, %s1060
    %s1077 = sphi 0, %s1061
  $region4: #{oad_transformer_forward.1} parent=0 // loop_header_branch
    %100 = sbr.rel (%p98) target = $region8
  $region5: #{oad_transformer_forward.1} parent=0 // loop_body
    %s102 = ssub.s32 %s97, 1
    %s103 = ssub.s32 %s97, 2
    %s104 = sadd.s32 %s97, 1
    %s105 = ssub.s32 %s97, %s104
    %p106 = scmp.eq.s32.totalorder %s105, 0
    %s108 = sadd.s32 %s107, 1
    %s109 = scalar_select %p106, %s107, %s108
    %p112 = pneg %p106
    %p113 = scmp.eq.s32.totalorder %s97, 1
    %p114 = por %p112, %p113
    %p115 = scmp.ne.s32.totalorder %s107, %s110
    %p116 = scmp.eq.s32.totalorder %s97, 0
    %p117 = por %p115, %p116
    %p118 = scmp.ne.s32.totalorder %s107, %s110
    %p119 = scmp.eq.s32.totalorder %s102, 1
    %p120 = por %p118, %p119
    %p121 = scmp.ne.s32.totalorder %s110, %s111
    %p122 = scmp.eq.s32.totalorder %s102, 0
    %p123 = por %p121, %p122
    %p124 = scmp.ne.s32.totalorder %s110, %s111
    %p125 = scmp.eq.s32.totalorder %s103, 1
    %p126 = por %p124, %p125
    %p128 = scmp.ne.s32.totalorder %s111, %s127
    %p129 = scmp.eq.s32.totalorder %s103, 0
    %p130 = por %p128, %p129
    %s132 = sadd.s32 %s131, 1
    %p135 = scmp.eq.s32.totalorder %s97, 1
    %p136 = scmp.ne.s32.totalorder %s131, %s133
    %p137 = scmp.eq.s32.totalorder %s97, 0
    %p138 = por %p136, %p137
    %p139 = scmp.ne.s32.totalorder %s131, %s133
    %p140 = scmp.eq.s32.totalorder %s102, 1
    %p141 = por %p139, %p140
    %p142 = scmp.ne.s32.totalorder %s133, %s134
    %p143 = scmp.eq.s32.totalorder %s102, 0
    %p144 = por %p142, %p143
    %p145 = scmp.ne.s32.totalorder %s133, %s134
    %p146 = scmp.eq.s32.totalorder %s103, 1
    %p147 = por %p145, %p146
    %p149 = scmp.ne.s32.totalorder %s134, %s148
    %p150 = scmp.eq.s32.totalorder %s103, 0
    %p151 = por %p149, %p150
    %s153 = sadd.s32 %s152, 1
    %p156 = scmp.eq.s32.totalorder %s97, 1
    %p157 = scmp.ne.s32.totalorder %s152, %s154
    %p158 = scmp.eq.s32.totalorder %s97, 0
    %p159 = por %p157, %p158
    %p160 = scmp.ne.s32.totalorder %s152, %s154
    %p161 = scmp.eq.s32.totalorder %s102, 1
    %p162 = por %p160, %p161
    %p163 = scmp.ne.s32.totalorder %s154, %s155
    %p164 = scmp.eq.s32.totalorder %s102, 0
    %p165 = por %p163, %p164
    %p166 = scmp.ne.s32.totalorder %s154, %s155
    %p167 = scmp.eq.s32.totalorder %s103, 1
    %p168 = por %p166, %p167
    %p170 = scmp.ne.s32.totalorder %s155, %s169
    %p171 = scmp.eq.s32.totalorder %s103, 0
    %p172 = por %p170, %p171
    %s174 = sadd.s32 %s173, 1
    %p177 = scmp.eq.s32.totalorder %s97, 1
    %p178 = scmp.ne.s32.totalorder %s173, %s175
    %p179 = scmp.eq.s32.totalorder %s97, 0
    %p180 = por %p178, %p179
    %p181 = scmp.ne.s32.totalorder %s173, %s175
    %p182 = scmp.eq.s32.totalorder %s102, 1
    %p183 = por %p181, %p182
    %p184 = scmp.ne.s32.totalorder %s175, %s176
    %p185 = scmp.eq.s32.totalorder %s102, 0
    %p186 = por %p184, %p185
    %p187 = scmp.ne.s32.totalorder %s175, %s176
    %p188 = scmp.eq.s32.totalorder %s103, 1
    %p189 = por %p187, %p188
    %p191 = scmp.ne.s32.totalorder %s176, %s190
    %p192 = scmp.eq.s32.totalorder %s103, 0
    %p193 = por %p191, %p192
    %s195 = sadd.s32 %s194, 1
    %p198 = scmp.eq.s32.totalorder %s97, 1
    %p199 = scmp.ne.s32.totalorder %s194, %s196
    %p200 = scmp.eq.s32.totalorder %s97, 0
    %p201 = por %p199, %p200
    %p202 = scmp.ne.s32.totalorder %s194, %s196
    %p203 = scmp.eq.s32.totalorder %s102, 1
    %p204 = por %p202, %p203
    %p205 = scmp.ne.s32.totalorder %s196, %s197
    %p206 = scmp.eq.s32.totalorder %s102, 0
    %p207 = por %p205, %p206
    %p208 = scmp.ne.s32.totalorder %s196, %s197
    %p209 = scmp.eq.s32.totalorder %s103, 1
    %p210 = por %p208, %p209
    %p212 = scmp.ne.s32.totalorder %s197, %s211
    %p213 = scmp.eq.s32.totalorder %s103, 0
    %p214 = por %p212, %p213
    %s216 = sadd.s32 %s215, 1
    %p219 = scmp.eq.s32.totalorder %s97, 1
    %p220 = scmp.ne.s32.totalorder %s215, %s217
    %p221 = scmp.eq.s32.totalorder %s97, 0
    %p222 = por %p220, %p221
    %p223 = scmp.ne.s32.totalorder %s215, %s217
    %p224 = scmp.eq.s32.totalorder %s102, 1
    %p225 = por %p223, %p224
    %p226 = scmp.ne.s32.totalorder %s217, %s218
    %p227 = scmp.eq.s32.totalorder %s102, 0
    %p228 = por %p226, %p227
    %p229 = scmp.ne.s32.totalorder %s217, %s218
    %p230 = scmp.eq.s32.totalorder %s103, 1
    %p231 = por %p229, %p230
    %p233 = scmp.ne.s32.totalorder %s218, %s232
    %p234 = scmp.eq.s32.totalorder %s103, 0
    %p235 = por %p233, %p234
    %s237 = sadd.s32 %s236, 1
    %p240 = scmp.eq.s32.totalorder %s97, 1
    %p241 = scmp.ne.s32.totalorder %s236, %s238
    %p242 = scmp.eq.s32.totalorder %s97, 0
    %p243 = por %p241, %p242
    %p244 = scmp.ne.s32.totalorder %s236, %s238
    %p245 = scmp.eq.s32.totalorder %s102, 1
    %p246 = por %p244, %p245
    %p247 = scmp.ne.s32.totalorder %s238, %s239
    %p248 = scmp.eq.s32.totalorder %s102, 0
    %p249 = por %p247, %p248
    %p250 = scmp.ne.s32.totalorder %s238, %s239
    %p251 = scmp.eq.s32.totalorder %s103, 1
    %p252 = por %p250, %p251
    %p254 = scmp.ne.s32.totalorder %s239, %s253
    %p255 = scmp.eq.s32.totalorder %s103, 0
    %p256 = por %p254, %p255
    %s258 = sadd.s32 %s257, 1
    %p261 = scmp.eq.s32.totalorder %s97, 1
    %p262 = scmp.ne.s32.totalorder %s257, %s259
    %p263 = scmp.eq.s32.totalorder %s97, 0
    %p264 = por %p262, %p263
    %p265 = scmp.ne.s32.totalorder %s257, %s259
    %p266 = scmp.eq.s32.totalorder %s102, 1
    %p267 = por %p265, %p266
    %p268 = scmp.ne.s32.totalorder %s259, %s260
    %p269 = scmp.eq.s32.totalorder %s102, 0
    %p270 = por %p268, %p269
    %p271 = scmp.ne.s32.totalorder %s259, %s260
    %p272 = scmp.eq.s32.totalorder %s103, 1
    %p273 = por %p271, %p272
    %p275 = scmp.ne.s32.totalorder %s260, %s274
    %p276 = scmp.eq.s32.totalorder %s103, 0
    %p277 = por %p275, %p276
    %s279 = sadd.s32 %s278, 1
    %p282 = scmp.eq.s32.totalorder %s97, 1
    %p283 = scmp.ne.s32.totalorder %s278, %s280
    %p284 = scmp.eq.s32.totalorder %s97, 0
    %p285 = por %p283, %p284
    %p286 = scmp.ne.s32.totalorder %s278, %s280
    %p287 = scmp.eq.s32.totalorder %s102, 1
    %p288 = por %p286, %p287
    %p289 = scmp.ne.s32.totalorder %s280, %s281
    %p290 = scmp.eq.s32.totalorder %s102, 0
    %p291 = por %p289, %p290
    %p292 = scmp.ne.s32.totalorder %s280, %s281
    %p293 = scmp.eq.s32.totalorder %s103, 1
    %p294 = por %p292, %p293
    %p296 = scmp.ne.s32.totalorder %s281, %s295
    %p297 = scmp.eq.s32.totalorder %s103, 0
    %p298 = por %p296, %p297
    %s300 = sadd.s32 %s299, 1
    %p303 = scmp.eq.s32.totalorder %s97, 1
    %p304 = scmp.ne.s32.totalorder %s299, %s301
    %p305 = scmp.eq.s32.totalorder %s97, 0
    %p306 = por %p304, %p305
    %p307 = scmp.ne.s32.totalorder %s299, %s301
    %p308 = scmp.eq.s32.totalorder %s102, 1
    %p309 = por %p307, %p308
    %p310 = scmp.ne.s32.totalorder %s301, %s302
    %p311 = scmp.eq.s32.totalorder %s102, 0
    %p312 = por %p310, %p311
    %p313 = scmp.ne.s32.totalorder %s301, %s302
    %p314 = scmp.eq.s32.totalorder %s103, 1
    %p315 = por %p313, %p314
    %p317 = scmp.ne.s32.totalorder %s302, %s316
    %p318 = scmp.eq.s32.totalorder %s103, 0
    %p319 = por %p317, %p318
    %s321 = sadd.s32 %s320, 1
    %p324 = scmp.eq.s32.totalorder %s97, 1
    %p325 = scmp.ne.s32.totalorder %s320, %s322
    %p326 = scmp.eq.s32.totalorder %s97, 0
    %p327 = por %p325, %p326
    %p328 = scmp.ne.s32.totalorder %s320, %s322
    %p329 = scmp.eq.s32.totalorder %s102, 1
    %p330 = por %p328, %p329
    %p331 = scmp.ne.s32.totalorder %s322, %s323
    %p332 = scmp.eq.s32.totalorder %s102, 0
    %p333 = por %p331, %p332
    %p334 = scmp.ne.s32.totalorder %s322, %s323
    %p335 = scmp.eq.s32.totalorder %s103, 1
    %p336 = por %p334, %p335
    %p338 = scmp.ne.s32.totalorder %s323, %s337
    %p339 = scmp.eq.s32.totalorder %s103, 0
    %p340 = por %p338, %p339
    %s342 = sadd.s32 %s341, 1
    %p345 = scmp.eq.s32.totalorder %s97, 1
    %p346 = scmp.ne.s32.totalorder %s341, %s343
    %p347 = scmp.eq.s32.totalorder %s97, 0
    %p348 = por %p346, %p347
    %p349 = scmp.ne.s32.totalorder %s341, %s343
    %p350 = scmp.eq.s32.totalorder %s102, 1
    %p351 = por %p349, %p350
    %p352 = scmp.ne.s32.totalorder %s343, %s344
    %p353 = scmp.eq.s32.totalorder %s102, 0
    %p354 = por %p352, %p353
    %p355 = scmp.ne.s32.totalorder %s343, %s344
    %p356 = scmp.eq.s32.totalorder %s103, 1
    %p357 = por %p355, %p356
    %p359 = scmp.ne.s32.totalorder %s344, %s358
    %p360 = scmp.eq.s32.totalorder %s103, 0
    %p361 = por %p359, %p360
    %s363 = sadd.s32 %s362, 1
    %p366 = scmp.eq.s32.totalorder %s97, 1
    %p367 = scmp.ne.s32.totalorder %s362, %s364
    %p368 = scmp.eq.s32.totalorder %s97, 0
    %p369 = por %p367, %p368
    %p370 = scmp.ne.s32.totalorder %s362, %s364
    %p371 = scmp.eq.s32.totalorder %s102, 1
    %p372 = por %p370, %p371
    %p373 = scmp.ne.s32.totalorder %s364, %s365
    %p374 = scmp.eq.s32.totalorder %s102, 0
    %p375 = por %p373, %p374
    %p376 = scmp.ne.s32.totalorder %s364, %s365
    %p377 = scmp.eq.s32.totalorder %s103, 1
    %p378 = por %p376, %p377
    %p380 = scmp.ne.s32.totalorder %s365, %s379
    %p381 = scmp.eq.s32.totalorder %s103, 0
    %p382 = por %p380, %p381
    %s384 = sadd.s32 %s383, 1
    %p387 = scmp.eq.s32.totalorder %s97, 1
    %p388 = scmp.ne.s32.totalorder %s383, %s385
    %p389 = scmp.eq.s32.totalorder %s97, 0
    %p390 = por %p388, %p389
    %p391 = scmp.ne.s32.totalorder %s383, %s385
    %p392 = scmp.eq.s32.totalorder %s102, 1
    %p393 = por %p391, %p392
    %p394 = scmp.ne.s32.totalorder %s385, %s386
    %p395 = scmp.eq.s32.totalorder %s102, 0
    %p396 = por %p394, %p395
    %p397 = scmp.ne.s32.totalorder %s385, %s386
    %p398 = scmp.eq.s32.totalorder %s103, 1
    %p399 = por %p397, %p398
    %p401 = scmp.ne.s32.totalorder %s386, %s400
    %p402 = scmp.eq.s32.totalorder %s103, 0
    %p403 = por %p401, %p402
    %s405 = sadd.s32 %s404, 1
    %p408 = scmp.eq.s32.totalorder %s97, 1
    %p409 = scmp.ne.s32.totalorder %s404, %s406
    %p410 = scmp.eq.s32.totalorder %s97, 0
    %p411 = por %p409, %p410
    %p412 = scmp.ne.s32.totalorder %s404, %s406
    %p413 = scmp.eq.s32.totalorder %s102, 1
    %p414 = por %p412, %p413
    %p415 = scmp.ne.s32.totalorder %s406, %s407
    %p416 = scmp.eq.s32.totalorder %s102, 0
    %p417 = por %p415, %p416
    %p418 = scmp.ne.s32.totalorder %s406, %s407
    %p419 = scmp.eq.s32.totalorder %s103, 1
    %p420 = por %p418, %p419
    %p422 = scmp.ne.s32.totalorder %s407, %s421
    %p423 = scmp.eq.s32.totalorder %s103, 0
    %p424 = por %p422, %p423
    %s426 = sadd.s32 %s425, 1
    %p429 = scmp.eq.s32.totalorder %s97, 1
    %p430 = scmp.ne.s32.totalorder %s425, %s427
    %p431 = scmp.eq.s32.totalorder %s97, 0
    %p432 = por %p430, %p431
    %p433 = scmp.ne.s32.totalorder %s425, %s427
    %p434 = scmp.eq.s32.totalorder %s102, 1
    %p435 = por %p433, %p434
    %p436 = scmp.ne.s32.totalorder %s427, %s428
    %p437 = scmp.eq.s32.totalorder %s102, 0
    %p438 = por %p436, %p437
    %p439 = scmp.ne.s32.totalorder %s427, %s428
    %p440 = scmp.eq.s32.totalorder %s103, 1
    %p441 = por %p439, %p440
    %p443 = scmp.ne.s32.totalorder %s428, %s442
    %p444 = scmp.eq.s32.totalorder %s103, 0
    %p445 = por %p443, %p444
    %s447 = sadd.s32 %s446, 1
    %p450 = scmp.eq.s32.totalorder %s97, 1
    %p451 = scmp.ne.s32.totalorder %s446, %s448
    %p452 = scmp.eq.s32.totalorder %s97, 0
    %p453 = por %p451, %p452
    %p454 = scmp.ne.s32.totalorder %s446, %s448
    %p455 = scmp.eq.s32.totalorder %s102, 1
    %p456 = por %p454, %p455
    %p457 = scmp.ne.s32.totalorder %s448, %s449
    %p458 = scmp.eq.s32.totalorder %s102, 0
    %p459 = por %p457, %p458
    %p460 = scmp.ne.s32.totalorder %s448, %s449
    %p461 = scmp.eq.s32.totalorder %s103, 1
    %p462 = por %p460, %p461
    %p464 = scmp.ne.s32.totalorder %s449, %s463
    %p465 = scmp.eq.s32.totalorder %s103, 0
    %p466 = por %p464, %p465
    %s468 = sadd.s32 %s467, 1
    %p471 = scmp.eq.s32.totalorder %s97, 1
    %p472 = scmp.ne.s32.totalorder %s467, %s469
    %p473 = scmp.eq.s32.totalorder %s97, 0
    %p474 = por %p472, %p473
    %p475 = scmp.ne.s32.totalorder %s467, %s469
    %p476 = scmp.eq.s32.totalorder %s102, 1
    %p477 = por %p475, %p476
    %p478 = scmp.ne.s32.totalorder %s469, %s470
    %p479 = scmp.eq.s32.totalorder %s102, 0
    %p480 = por %p478, %p479
    %p481 = scmp.ne.s32.totalorder %s469, %s470
    %p482 = scmp.eq.s32.totalorder %s103, 1
    %p483 = por %p481, %p482
    %p485 = scmp.ne.s32.totalorder %s470, %s484
    %p486 = scmp.eq.s32.totalorder %s103, 0
    %p487 = por %p485, %p486
    %s489 = sadd.s32 %s488, 1
    %p492 = scmp.eq.s32.totalorder %s97, 1
    %p493 = scmp.ne.s32.totalorder %s488, %s490
    %p494 = scmp.eq.s32.totalorder %s97, 0
    %p495 = por %p493, %p494
    %p496 = scmp.ne.s32.totalorder %s488, %s490
    %p497 = scmp.eq.s32.totalorder %s102, 1
    %p498 = por %p496, %p497
    %p499 = scmp.ne.s32.totalorder %s490, %s491
    %p500 = scmp.eq.s32.totalorder %s102, 0
    %p501 = por %p499, %p500
    %p502 = scmp.ne.s32.totalorder %s490, %s491
    %p503 = scmp.eq.s32.totalorder %s103, 1
    %p504 = por %p502, %p503
    %p506 = scmp.ne.s32.totalorder %s491, %s505
    %p507 = scmp.eq.s32.totalorder %s103, 0
    %p508 = por %p506, %p507
    %s510 = sadd.s32 %s509, 1
    %p513 = scmp.eq.s32.totalorder %s97, 1
    %p514 = scmp.ne.s32.totalorder %s509, %s511
    %p515 = scmp.eq.s32.totalorder %s97, 0
    %p516 = por %p514, %p515
    %p517 = scmp.ne.s32.totalorder %s509, %s511
    %p518 = scmp.eq.s32.totalorder %s102, 1
    %p519 = por %p517, %p518
    %p520 = scmp.ne.s32.totalorder %s511, %s512
    %p521 = scmp.eq.s32.totalorder %s102, 0
    %p522 = por %p520, %p521
    %p523 = scmp.ne.s32.totalorder %s511, %s512
    %p524 = scmp.eq.s32.totalorder %s103, 1
    %p525 = por %p523, %p524
    %p527 = scmp.ne.s32.totalorder %s512, %s526
    %p528 = scmp.eq.s32.totalorder %s103, 0
    %p529 = por %p527, %p528
    %s531 = sadd.s32 %s530, 1
    %p534 = scmp.eq.s32.totalorder %s97, 1
    %p535 = scmp.ne.s32.totalorder %s530, %s532
    %p536 = scmp.eq.s32.totalorder %s97, 0
    %p537 = por %p535, %p536
    %p538 = scmp.ne.s32.totalorder %s530, %s532
    %p539 = scmp.eq.s32.totalorder %s102, 1
    %p540 = por %p538, %p539
    %p541 = scmp.ne.s32.totalorder %s532, %s533
    %p542 = scmp.eq.s32.totalorder %s102, 0
    %p543 = por %p541, %p542
    %p544 = scmp.ne.s32.totalorder %s532, %s533
    %p545 = scmp.eq.s32.totalorder %s103, 1
    %p546 = por %p544, %p545
    %p548 = scmp.ne.s32.totalorder %s533, %s547
    %p549 = scmp.eq.s32.totalorder %s103, 0
    %p550 = por %p548, %p549
    %s552 = sadd.s32 %s551, 1
    %p555 = scmp.eq.s32.totalorder %s97, 1
    %p556 = scmp.ne.s32.totalorder %s551, %s553
    %p557 = scmp.eq.s32.totalorder %s97, 0
    %p558 = por %p556, %p557
    %p559 = scmp.ne.s32.totalorder %s551, %s553
    %p560 = scmp.eq.s32.totalorder %s102, 1
    %p561 = por %p559, %p560
    %p562 = scmp.ne.s32.totalorder %s553, %s554
    %p563 = scmp.eq.s32.totalorder %s102, 0
    %p564 = por %p562, %p563
    %p565 = scmp.ne.s32.totalorder %s553, %s554
    %p566 = scmp.eq.s32.totalorder %s103, 1
    %p567 = por %p565, %p566
    %p569 = scmp.ne.s32.totalorder %s554, %s568
    %p570 = scmp.eq.s32.totalorder %s103, 0
    %p571 = por %p569, %p570
    %s573 = sadd.s32 %s572, 1
    %p576 = scmp.eq.s32.totalorder %s97, 1
    %p577 = scmp.ne.s32.totalorder %s572, %s574
    %p578 = scmp.eq.s32.totalorder %s97, 0
    %p579 = por %p577, %p578
    %p580 = scmp.ne.s32.totalorder %s572, %s574
    %p581 = scmp.eq.s32.totalorder %s102, 1
    %p582 = por %p580, %p581
    %p583 = scmp.ne.s32.totalorder %s574, %s575
    %p584 = scmp.eq.s32.totalorder %s102, 0
    %p585 = por %p583, %p584
    %p586 = scmp.ne.s32.totalorder %s574, %s575
    %p587 = scmp.eq.s32.totalorder %s103, 1
    %p588 = por %p586, %p587
    %p590 = scmp.ne.s32.totalorder %s575, %s589
    %p591 = scmp.eq.s32.totalorder %s103, 0
    %p592 = por %p590, %p591
    %s594 = sadd.s32 %s593, 1
    %p597 = scmp.eq.s32.totalorder %s97, 1
    %p598 = scmp.ne.s32.totalorder %s593, %s595
    %p599 = scmp.eq.s32.totalorder %s97, 0
    %p600 = por %p598, %p599
    %p601 = scmp.ne.s32.totalorder %s593, %s595
    %p602 = scmp.eq.s32.totalorder %s102, 1
    %p603 = por %p601, %p602
    %p604 = scmp.ne.s32.totalorder %s595, %s596
    %p605 = scmp.eq.s32.totalorder %s102, 0
    %p606 = por %p604, %p605
    %p607 = scmp.ne.s32.totalorder %s595, %s596
    %p608 = scmp.eq.s32.totalorder %s103, 1
    %p609 = por %p607, %p608
    %p611 = scmp.ne.s32.totalorder %s596, %s610
    %p612 = scmp.eq.s32.totalorder %s103, 0
    %p613 = por %p611, %p612
    %s615 = sadd.s32 %s614, 1
    %p618 = scmp.eq.s32.totalorder %s97, 1
    %p619 = scmp.ne.s32.totalorder %s614, %s616
    %p620 = scmp.eq.s32.totalorder %s97, 0
    %p621 = por %p619, %p620
    %p622 = scmp.ne.s32.totalorder %s614, %s616
    %p623 = scmp.eq.s32.totalorder %s102, 1
    %p624 = por %p622, %p623
    %p625 = scmp.ne.s32.totalorder %s616, %s617
    %p626 = scmp.eq.s32.totalorder %s102, 0
    %p627 = por %p625, %p626
    %p628 = scmp.ne.s32.totalorder %s616, %s617
    %p629 = scmp.eq.s32.totalorder %s103, 1
    %p630 = por %p628, %p629
    %p632 = scmp.ne.s32.totalorder %s617, %s631
    %p633 = scmp.eq.s32.totalorder %s103, 0
    %p634 = por %p632, %p633
    %s636 = sadd.s32 %s635, 1
    %p639 = scmp.eq.s32.totalorder %s97, 1
    %p640 = scmp.ne.s32.totalorder %s635, %s637
    %p641 = scmp.eq.s32.totalorder %s97, 0
    %p642 = por %p640, %p641
    %p643 = scmp.ne.s32.totalorder %s635, %s637
    %p644 = scmp.eq.s32.totalorder %s102, 1
    %p645 = por %p643, %p644
    %p646 = scmp.ne.s32.totalorder %s637, %s638
    %p647 = scmp.eq.s32.totalorder %s102, 0
    %p648 = por %p646, %p647
    %p649 = scmp.ne.s32.totalorder %s637, %s638
    %p650 = scmp.eq.s32.totalorder %s103, 1
    %p651 = por %p649, %p650
    %p653 = scmp.ne.s32.totalorder %s638, %s652
    %p654 = scmp.eq.s32.totalorder %s103, 0
    %p655 = por %p653, %p654
    %s657 = sadd.s32 %s656, 1
    %p660 = scmp.eq.s32.totalorder %s97, 1
    %p661 = scmp.ne.s32.totalorder %s656, %s658
    %p662 = scmp.eq.s32.totalorder %s97, 0
    %p663 = por %p661, %p662
    %p664 = scmp.ne.s32.totalorder %s656, %s658
    %p665 = scmp.eq.s32.totalorder %s102, 1
    %p666 = por %p664, %p665
    %p667 = scmp.ne.s32.totalorder %s658, %s659
    %p668 = scmp.eq.s32.totalorder %s102, 0
    %p669 = por %p667, %p668
    %p670 = scmp.ne.s32.totalorder %s658, %s659
    %p671 = scmp.eq.s32.totalorder %s103, 1
    %p672 = por %p670, %p671
    %p674 = scmp.ne.s32.totalorder %s659, %s673
    %p675 = scmp.eq.s32.totalorder %s103, 0
    %p676 = por %p674, %p675
    %s678 = sadd.s32 %s677, 1
    %p681 = scmp.eq.s32.totalorder %s97, 1
    %p682 = scmp.ne.s32.totalorder %s677, %s679
    %p683 = scmp.eq.s32.totalorder %s97, 0
    %p684 = por %p682, %p683
    %p685 = scmp.ne.s32.totalorder %s677, %s679
    %p686 = scmp.eq.s32.totalorder %s102, 1
    %p687 = por %p685, %p686
    %p688 = scmp.ne.s32.totalorder %s679, %s680
    %p689 = scmp.eq.s32.totalorder %s102, 0
    %p690 = por %p688, %p689
    %p691 = scmp.ne.s32.totalorder %s679, %s680
    %p692 = scmp.eq.s32.totalorder %s103, 1
    %p693 = por %p691, %p692
    %p695 = scmp.ne.s32.totalorder %s680, %s694
    %p696 = scmp.eq.s32.totalorder %s103, 0
    %p697 = por %p695, %p696
    %s699 = sadd.s32 %s698, 1
    %p702 = scmp.eq.s32.totalorder %s97, 1
    %p703 = scmp.ne.s32.totalorder %s698, %s700
    %p704 = scmp.eq.s32.totalorder %s97, 0
    %p705 = por %p703, %p704
    %p706 = scmp.ne.s32.totalorder %s698, %s700
    %p707 = scmp.eq.s32.totalorder %s102, 1
    %p708 = por %p706, %p707
    %p709 = scmp.ne.s32.totalorder %s700, %s701
    %p710 = scmp.eq.s32.totalorder %s102, 0
    %p711 = por %p709, %p710
    %p712 = scmp.ne.s32.totalorder %s700, %s701
    %p713 = scmp.eq.s32.totalorder %s103, 1
    %p714 = por %p712, %p713
    %p716 = scmp.ne.s32.totalorder %s701, %s715
    %p717 = scmp.eq.s32.totalorder %s103, 0
    %p718 = por %p716, %p717
    %s720 = sadd.s32 %s719, 1
    %p723 = scmp.eq.s32.totalorder %s97, 1
    %p724 = scmp.ne.s32.totalorder %s719, %s721
    %p725 = scmp.eq.s32.totalorder %s97, 0
    %p726 = por %p724, %p725
    %p727 = scmp.ne.s32.totalorder %s719, %s721
    %p728 = scmp.eq.s32.totalorder %s102, 1
    %p729 = por %p727, %p728
    %p730 = scmp.ne.s32.totalorder %s721, %s722
    %p731 = scmp.eq.s32.totalorder %s102, 0
    %p732 = por %p730, %p731
    %p733 = scmp.ne.s32.totalorder %s721, %s722
    %p734 = scmp.eq.s32.totalorder %s103, 1
    %p735 = por %p733, %p734
    %p737 = scmp.ne.s32.totalorder %s722, %s736
    %p738 = scmp.eq.s32.totalorder %s103, 0
    %p739 = por %p737, %p738
    %s741 = sadd.s32 %s740, 1
    %p744 = scmp.eq.s32.totalorder %s97, 1
    %p745 = scmp.ne.s32.totalorder %s740, %s742
    %p746 = scmp.eq.s32.totalorder %s97, 0
    %p747 = por %p745, %p746
    %p748 = scmp.ne.s32.totalorder %s740, %s742
    %p749 = scmp.eq.s32.totalorder %s102, 1
    %p750 = por %p748, %p749
    %p751 = scmp.ne.s32.totalorder %s742, %s743
    %p752 = scmp.eq.s32.totalorder %s102, 0
    %p753 = por %p751, %p752
    %p754 = scmp.ne.s32.totalorder %s742, %s743
    %p755 = scmp.eq.s32.totalorder %s103, 1
    %p756 = por %p754, %p755
    %p758 = scmp.ne.s32.totalorder %s743, %s757
    %p759 = scmp.eq.s32.totalorder %s103, 0
    %p760 = por %p758, %p759
    %s762 = sadd.s32 %s761, 1
    %p765 = scmp.eq.s32.totalorder %s97, 1
    %p766 = scmp.ne.s32.totalorder %s761, %s763
    %p767 = scmp.eq.s32.totalorder %s97, 0
    %p768 = por %p766, %p767
    %p769 = scmp.ne.s32.totalorder %s761, %s763
    %p770 = scmp.eq.s32.totalorder %s102, 1
    %p771 = por %p769, %p770
    %p772 = scmp.ne.s32.totalorder %s763, %s764
    %p773 = scmp.eq.s32.totalorder %s102, 0
    %p774 = por %p772, %p773
    %p775 = scmp.ne.s32.totalorder %s763, %s764
    %p776 = scmp.eq.s32.totalorder %s103, 1
    %p777 = por %p775, %p776
    %p779 = scmp.ne.s32.totalorder %s764, %s778
    %p780 = scmp.eq.s32.totalorder %s103, 0
    %p781 = por %p779, %p780
    %s783 = sadd.s32 %s782, 1
    %p786 = scmp.eq.s32.totalorder %s97, 1
    %p787 = scmp.ne.s32.totalorder %s782, %s784
    %p788 = scmp.eq.s32.totalorder %s97, 0
    %p789 = por %p787, %p788
    %p790 = scmp.ne.s32.totalorder %s782, %s784
    %p791 = scmp.eq.s32.totalorder %s102, 1
    %p792 = por %p790, %p791
    %p793 = scmp.ne.s32.totalorder %s784, %s785
    %p794 = scmp.eq.s32.totalorder %s102, 0
    %p795 = por %p793, %p794
    %p796 = scmp.ne.s32.totalorder %s784, %s785
    %p797 = scmp.eq.s32.totalorder %s103, 1
    %p798 = por %p796, %p797
    %p800 = scmp.ne.s32.totalorder %s785, %s799
    %p801 = scmp.eq.s32.totalorder %s103, 0
    %p802 = por %p800, %p801
    %s804 = sadd.s32 %s803, 1
    %p807 = scmp.eq.s32.totalorder %s97, 1
    %p808 = scmp.ne.s32.totalorder %s803, %s805
    %p809 = scmp.eq.s32.totalorder %s97, 0
    %p810 = por %p808, %p809
    %p811 = scmp.ne.s32.totalorder %s803, %s805
    %p812 = scmp.eq.s32.totalorder %s102, 1
    %p813 = por %p811, %p812
    %p814 = scmp.ne.s32.totalorder %s805, %s806
    %p815 = scmp.eq.s32.totalorder %s102, 0
    %p816 = por %p814, %p815
    %p817 = scmp.ne.s32.totalorder %s805, %s806
    %p818 = scmp.eq.s32.totalorder %s103, 1
    %p819 = por %p817, %p818
    %p821 = scmp.ne.s32.totalorder %s806, %s820
    %p822 = scmp.eq.s32.totalorder %s103, 0
    %p823 = por %p821, %p822
    %s825 = sadd.s32 %s824, 1
    %p828 = scmp.eq.s32.totalorder %s97, 1
    %p829 = scmp.ne.s32.totalorder %s824, %s826
    %p830 = scmp.eq.s32.totalorder %s97, 0
    %p831 = por %p829, %p830
    %p832 = scmp.ne.s32.totalorder %s824, %s826
    %p833 = scmp.eq.s32.totalorder %s102, 1
    %p834 = por %p832, %p833
    %p835 = scmp.ne.s32.totalorder %s826, %s827
    %p836 = scmp.eq.s32.totalorder %s102, 0
    %p837 = por %p835, %p836
    %p838 = scmp.ne.s32.totalorder %s826, %s827
    %p839 = scmp.eq.s32.totalorder %s103, 1
    %p840 = por %p838, %p839
    %p842 = scmp.ne.s32.totalorder %s827, %s841
    %p843 = scmp.eq.s32.totalorder %s103, 0
    %p844 = por %p842, %p843
    %s846 = sadd.s32 %s845, 1
    %p849 = scmp.eq.s32.totalorder %s97, 1
    %p850 = scmp.ne.s32.totalorder %s845, %s847
    %p851 = scmp.eq.s32.totalorder %s97, 0
    %p852 = por %p850, %p851
    %p853 = scmp.ne.s32.totalorder %s845, %s847
    %p854 = scmp.eq.s32.totalorder %s102, 1
    %p855 = por %p853, %p854
    %p856 = scmp.ne.s32.totalorder %s847, %s848
    %p857 = scmp.eq.s32.totalorder %s102, 0
    %p858 = por %p856, %p857
    %p859 = scmp.ne.s32.totalorder %s847, %s848
    %p860 = scmp.eq.s32.totalorder %s103, 1
    %p861 = por %p859, %p860
    %p863 = scmp.ne.s32.totalorder %s848, %s862
    %p864 = scmp.eq.s32.totalorder %s103, 0
    %p865 = por %p863, %p864
    %s867 = sadd.s32 %s866, 1
    %p870 = scmp.eq.s32.totalorder %s97, 1
    %p871 = scmp.ne.s32.totalorder %s866, %s868
    %p872 = scmp.eq.s32.totalorder %s97, 0
    %p873 = por %p871, %p872
    %p874 = scmp.ne.s32.totalorder %s866, %s868
    %p875 = scmp.eq.s32.totalorder %s102, 1
    %p876 = por %p874, %p875
    %p877 = scmp.ne.s32.totalorder %s868, %s869
    %p878 = scmp.eq.s32.totalorder %s102, 0
    %p879 = por %p877, %p878
    %p880 = scmp.ne.s32.totalorder %s868, %s869
    %p881 = scmp.eq.s32.totalorder %s103, 1
    %p882 = por %p880, %p881
    %p884 = scmp.ne.s32.totalorder %s869, %s883
    %p885 = scmp.eq.s32.totalorder %s103, 0
    %p886 = por %p884, %p885
    %s888 = sadd.s32 %s887, 1
    %p891 = scmp.eq.s32.totalorder %s97, 1
    %p892 = scmp.ne.s32.totalorder %s887, %s889
    %p893 = scmp.eq.s32.totalorder %s97, 0
    %p894 = por %p892, %p893
    %p895 = scmp.ne.s32.totalorder %s887, %s889
    %p896 = scmp.eq.s32.totalorder %s102, 1
    %p897 = por %p895, %p896
    %p898 = scmp.ne.s32.totalorder %s889, %s890
    %p899 = scmp.eq.s32.totalorder %s102, 0
    %p900 = por %p898, %p899
    %p901 = scmp.ne.s32.totalorder %s889, %s890
    %p902 = scmp.eq.s32.totalorder %s103, 1
    %p903 = por %p901, %p902
    %p905 = scmp.ne.s32.totalorder %s890, %s904
    %p906 = scmp.eq.s32.totalorder %s103, 0
    %p907 = por %p905, %p906
    %s909 = sadd.s32 %s908, 1
    %p912 = scmp.eq.s32.totalorder %s97, 1
    %p913 = scmp.ne.s32.totalorder %s908, %s910
    %p914 = scmp.eq.s32.totalorder %s97, 0
    %p915 = por %p913, %p914
    %p916 = scmp.ne.s32.totalorder %s908, %s910
    %p917 = scmp.eq.s32.totalorder %s102, 1
    %p918 = por %p916, %p917
    %p919 = scmp.ne.s32.totalorder %s910, %s911
    %p920 = scmp.eq.s32.totalorder %s102, 0
    %p921 = por %p919, %p920
    %p922 = scmp.ne.s32.totalorder %s910, %s911
    %p923 = scmp.eq.s32.totalorder %s103, 1
    %p924 = por %p922, %p923
    %p926 = scmp.ne.s32.totalorder %s911, %s925
    %p927 = scmp.eq.s32.totalorder %s103, 0
    %p928 = por %p926, %p927
    %s930 = sadd.s32 %s929, 1
    %p933 = scmp.eq.s32.totalorder %s97, 1
    %p934 = scmp.ne.s32.totalorder %s929, %s931
    %p935 = scmp.eq.s32.totalorder %s97, 0
    %p936 = por %p934, %p935
    %p937 = scmp.ne.s32.totalorder %s929, %s931
    %p938 = scmp.eq.s32.totalorder %s102, 1
    %p939 = por %p937, %p938
    %p940 = scmp.ne.s32.totalorder %s931, %s932
    %p941 = scmp.eq.s32.totalorder %s102, 0
    %p942 = por %p940, %p941
    %p943 = scmp.ne.s32.totalorder %s931, %s932
    %p944 = scmp.eq.s32.totalorder %s103, 1
    %p945 = por %p943, %p944
    %p947 = scmp.ne.s32.totalorder %s932, %s946
    %p948 = scmp.eq.s32.totalorder %s103, 0
    %p949 = por %p947, %p948
    %s951 = sadd.s32 %s950, 1
    %p954 = scmp.eq.s32.totalorder %s97, 1
    %p955 = scmp.ne.s32.totalorder %s950, %s952
    %p956 = scmp.eq.s32.totalorder %s97, 0
    %p957 = por %p955, %p956
    %p958 = scmp.ne.s32.totalorder %s950, %s952
    %p959 = scmp.eq.s32.totalorder %s102, 1
    %p960 = por %p958, %p959
    %p961 = scmp.ne.s32.totalorder %s952, %s953
    %p962 = scmp.eq.s32.totalorder %s102, 0
    %p963 = por %p961, %p962
    %p964 = scmp.ne.s32.totalorder %s952, %s953
    %p965 = scmp.eq.s32.totalorder %s103, 1
    %p966 = por %p964, %p965
    %p968 = scmp.ne.s32.totalorder %s953, %s967
    %p969 = scmp.eq.s32.totalorder %s103, 0
    %p970 = por %p968, %p969
    %s972 = sadd.s32 %s971, 1
    %p975 = scmp.eq.s32.totalorder %s97, 1
    %p976 = scmp.ne.s32.totalorder %s971, %s973
    %p977 = scmp.eq.s32.totalorder %s97, 0
    %p978 = por %p976, %p977
    %p979 = scmp.ne.s32.totalorder %s971, %s973
    %p980 = scmp.eq.s32.totalorder %s102, 1
    %p981 = por %p979, %p980
    %p982 = scmp.ne.s32.totalorder %s973, %s974
    %p983 = scmp.eq.s32.totalorder %s102, 0
    %p984 = por %p982, %p983
    %p985 = scmp.ne.s32.totalorder %s973, %s974
    %p986 = scmp.eq.s32.totalorder %s103, 1
    %p987 = por %p985, %p986
    %p989 = scmp.ne.s32.totalorder %s974, %s988
    %p990 = scmp.eq.s32.totalorder %s103, 0
    %p991 = por %p989, %p990
    %s993 = sadd.s32 %s992, 1
    %p996 = scmp.eq.s32.totalorder %s97, 1
    %p997 = scmp.ne.s32.totalorder %s992, %s994
    %p998 = scmp.eq.s32.totalorder %s97, 0
    %p999 = por %p997, %p998
    %p1000 = scmp.ne.s32.totalorder %s992, %s994
    %p1001 = scmp.eq.s32.totalorder %s102, 1
    %p1002 = por %p1000, %p1001
    %p1003 = scmp.ne.s32.totalorder %s994, %s995
    %p1004 = scmp.eq.s32.totalorder %s102, 0
    %p1005 = por %p1003, %p1004
    %p1006 = scmp.ne.s32.totalorder %s994, %s995
    %p1007 = scmp.eq.s32.totalorder %s103, 1
    %p1008 = por %p1006, %p1007
    %p1010 = scmp.ne.s32.totalorder %s995, %s1009
    %p1011 = scmp.eq.s32.totalorder %s103, 0
    %p1012 = por %p1010, %p1011
    %s1014 = sadd.s32 %s1013, 1
    %p1017 = scmp.eq.s32.totalorder %s97, 1
    %p1018 = scmp.ne.s32.totalorder %s1013, %s1015
    %p1019 = scmp.eq.s32.totalorder %s97, 0
    %p1020 = por %p1018, %p1019
    %p1021 = scmp.ne.s32.totalorder %s1013, %s1015
    %p1022 = scmp.eq.s32.totalorder %s102, 1
    %p1023 = por %p1021, %p1022
    %p1024 = scmp.ne.s32.totalorder %s1015, %s1016
    %p1025 = scmp.eq.s32.totalorder %s102, 0
    %p1026 = por %p1024, %p1025
    %p1027 = scmp.ne.s32.totalorder %s1015, %s1016
    %p1028 = scmp.eq.s32.totalorder %s103, 1
    %p1029 = por %p1027, %p1028
    %p1031 = scmp.ne.s32.totalorder %s1016, %s1030
    %p1032 = scmp.eq.s32.totalorder %s103, 0
    %p1033 = por %p1031, %p1032
    %s1035 = sadd.s32 %s1034, 1
    %p1038 = scmp.eq.s32.totalorder %s97, 1
    %p1039 = scmp.ne.s32.totalorder %s1034, %s1036
    %p1040 = scmp.eq.s32.totalorder %s97, 0
    %p1041 = por %p1039, %p1040
    %p1042 = scmp.ne.s32.totalorder %s1034, %s1036
    %p1043 = scmp.eq.s32.totalorder %s102, 1
    %p1044 = por %p1042, %p1043
    %p1045 = scmp.ne.s32.totalorder %s1036, %s1037
    %p1046 = scmp.eq.s32.totalorder %s102, 0
    %p1047 = por %p1045, %p1046
    %p1048 = scmp.ne.s32.totalorder %s1036, %s1037
    %p1049 = scmp.eq.s32.totalorder %s103, 1
    %p1050 = por %p1048, %p1049
    %p1052 = scmp.ne.s32.totalorder %s1037, %s1051
    %p1053 = scmp.eq.s32.totalorder %s103, 0
    %p1054 = por %p1052, %p1053
    %s1055 = ssub.s32 %s97, %s104
    %p1056 = scmp.eq.s32.totalorder %s1055, 0
    %s1058 = sadd.s32 %s1057, 1
    %s1059 = scalar_select %p1056, %s1057, %s1058
    %p1062 = pneg %p1056
    %p1063 = scmp.eq.s32.totalorder %s97, 1
    %p1064 = por %p1062, %p1063
    %p1065 = scmp.ne.s32.totalorder %s1057, %s1060
    %p1066 = scmp.eq.s32.totalorder %s97, 0
    %p1067 = por %p1065, %p1066
    %p1068 = scmp.ne.s32.totalorder %s1057, %s1060
    %p1069 = scmp.eq.s32.totalorder %s102, 1
    %p1070 = por %p1068, %p1069
    %p1071 = scmp.ne.s32.totalorder %s1060, %s1061
    %p1072 = scmp.eq.s32.totalorder %s102, 0
    %p1073 = por %p1071, %p1072
    %p1074 = scmp.ne.s32.totalorder %s1060, %s1061
    %p1075 = scmp.eq.s32.totalorder %s103, 1
    %p1076 = por %p1074, %p1075
    %p1078 = scmp.ne.s32.totalorder %s1061, %s1077
    %p1079 = scmp.eq.s32.totalorder %s103, 0
    %p1080 = por %p1078, %p1079
    %p1081 = scmp.le.s32.totalorder 1, %s97
    %p1082 = scmp.lt.s32.totalorder %s97, 3
    %p1083 = pnand %p1081, %p1082
    %p1084 = pneg %p1083
    // Predicated region
    $region9: #{oad_transformer_forward.1} parent=5 // pred_check
      _
    $region10: #{oad_transformer_forward.1} parent=5 // pred_check_branch
      %1086 = sbr.rel (%p1083) target = $region12
    $region11: #{oad_transformer_forward.1} parent=5 // pred_region
      %s1087 = ssub.s32 %s97, 1
      // Predicated region
      $region13: #{oad_transformer_forward.1} parent=11 // pred_check
        %p1088 = pneg %p144
      $region14: #{oad_transformer_forward.1} parent=11 // pred_check_branch
        %1090 = sbr.rel (%p1088) target = $region16
      $region15: #{oad_transformer_forward.1} parent=11 // pred_region
        _
      $region16: #{oad_transformer_forward.1} parent=11 // pred_fallthru
        _
      // Predicated region
      $region17: #{oad_transformer_forward.1} parent=11 // pred_check
        %p1091 = pneg %p165
      $region18: #{oad_transformer_forward.1} parent=11 // pred_check_branch
        %1093 = sbr.rel (%p1091) target = $region20
      $region19: #{oad_transformer_forward.1} parent=11 // pred_region
        _
      $region20: #{oad_transformer_forward.1} parent=11 // pred_fallthru
        _
      // Predicated region
      $region21: #{oad_transformer_forward.1} parent=11 // pred_check
        %p1094 = pneg %p186
      $region22: #{oad_transformer_forward.1} parent=11 // pred_check_branch
        %1096 = sbr.rel (%p1094) target = $region24
      $region23: #{oad_transformer_forward.1} parent=11 // pred_region
        _
      $region24: #{oad_transformer_forward.1} parent=11 // pred_fallthru
        _
      // Predicated region
      $region25: #{oad_transformer_forward.1} parent=11 // pred_check
        %p1097 = pneg %p207
      $region26: #{oad_transformer_forward.1} parent=11 // pred_check_branch
        %1099 = sbr.rel (%p1097) target = $region28
      $region27: #{oad_transformer_forward.1} parent=11 // pred_region
        _
      $region28: #{oad_transformer_forward.1} parent=11 // pred_fallthru
        _
      // Predicated region
      $region29: #{oad_transformer_forward.1} parent=11 // pred_check
        %p1100 = pneg %p228
      $region30: #{oad_transformer_forward.1} parent=11 // pred_check_branch
        %1102 = sbr.rel (%p1100) target = $region32
      $region31: #{oad_transformer_forward.1} parent=11 // pred_region
        _
      $region32: #{oad_transformer_forward.1} parent=11 // pred_fallthru
        _
      // Predicated region
      $region33: #{oad_transformer_forward.1} parent=11 // pred_check
        %p1103 = pneg %p249
      $region34: #{oad_transformer_forward.1} parent=11 // pred_check_branch
        %1105 = sbr.rel (%p1103) target = $region36
      $region35: #{oad_transformer_forward.1} parent=11 // pred_region
        _
      $region36: #{oad_transformer_forward.1} parent=11 // pred_fallthru
        _
      // Predicated region
      $region37: #{oad_transformer_forward.1} parent=11 // pred_check
        %p1106 = pneg %p270
      $region38: #{oad_transformer_forward.1} parent=11 // pred_check_branch
        %1108 = sbr.rel (%p1106) target = $region40
      $region39: #{oad_transformer_forward.1} parent=11 // pred_region
        _
      $region40: #{oad_transformer_forward.1} parent=11 // pred_fallthru
        _
      // Predicated region
      $region41: #{oad_transformer_forward.1} parent=11 // pred_check
        %p1109 = pneg %p291
      $region42: #{oad_transformer_forward.1} parent=11 // pred_check_branch
        %1111 = sbr.rel (%p1109) target = $region44
      $region43: #{oad_transformer_forward.1} parent=11 // pred_region
        _
      $region44: #{oad_transformer_forward.1} parent=11 // pred_fallthru
        _
      // Predicated region
      $region45: #{oad_transformer_forward.1} parent=11 // pred_check
        %p1112 = pneg %p312
      $region46: #{oad_transformer_forward.1} parent=11 // pred_check_branch
        %1114 = sbr.rel (%p1112) target = $region48
      $region47: #{oad_transformer_forward.1} parent=11 // pred_region
        _
      $region48: #{oad_transformer_forward.1} parent=11 // pred_fallthru
        _
      // Predicated region
      $region49: #{oad_transformer_forward.1} parent=11 // pred_check
        %p1115 = pneg %p333
      $region50: #{oad_transformer_forward.1} parent=11 // pred_check_branch
        %1117 = sbr.rel (%p1115) target = $region52
      $region51: #{oad_transformer_forward.1} parent=11 // pred_region
        _
      $region52: #{oad_transformer_forward.1} parent=11 // pred_fallthru
        _
      // Predicated region
      $region53: #{oad_transformer_forward.1} parent=11 // pred_check
        %p1118 = pneg %p354
      $region54: #{oad_transformer_forward.1} parent=11 // pred_check_branch
        %1120 = sbr.rel (%p1118) target = $region56
      $region55: #{oad_transformer_forward.1} parent=11 // pred_region
        _
      $region56: #{oad_transformer_forward.1} parent=11 // pred_fallthru
        _
      // Predicated region
      $region57: #{oad_transformer_forward.1} parent=11 // pred_check
        %p1121 = pneg %p375
      $region58: #{oad_transformer_forward.1} parent=11 // pred_check_branch
        %1123 = sbr.rel (%p1121) target = $region60
      $region59: #{oad_transformer_forward.1} parent=11 // pred_region
        _
      $region60: #{oad_transformer_forward.1} parent=11 // pred_fallthru
        _
      // Predicated region
      $region61: #{oad_transformer_forward.1} parent=11 // pred_check
        %p1124 = pneg %p396
      $region62: #{oad_transformer_forward.1} parent=11 // pred_check_branch
        %1126 = sbr.rel (%p1124) target = $region64
      $region63: #{oad_transformer_forward.1} parent=11 // pred_region
        _
      $region64: #{oad_transformer_forward.1} parent=11 // pred_fallthru
        _
      // Predicated region
      $region65: #{oad_transformer_forward.1} parent=11 // pred_check
        %p1127 = pneg %p417
      $region66: #{oad_transformer_forward.1} parent=11 // pred_check_branch
        %1129 = sbr.rel (%p1127) target = $region68
      $region67: #{oad_transformer_forward.1} parent=11 // pred_region
        _
      $region68: #{oad_transformer_forward.1} parent=11 // pred_fallthru
        _
      // Predicated region
      $region69: #{oad_transformer_forward.1} parent=11 // pred_check
        %p1130 = pneg %p438
      $region70: #{oad_transformer_forward.1} parent=11 // pred_check_branch
        %1132 = sbr.rel (%p1130) target = $region72
      $region71: #{oad_transformer_forward.1} parent=11 // pred_region
        _
      $region72: #{oad_transformer_forward.1} parent=11 // pred_fallthru
        _
      // Predicated region
      $region73: #{oad_transformer_forward.1} parent=11 // pred_check
        %p1133 = pneg %p459
      $region74: #{oad_transformer_forward.1} parent=11 // pred_check_branch
        %1135 = sbr.rel (%p1133) target = $region76
      $region75: #{oad_transformer_forward.1} parent=11 // pred_region
        _
      $region76: #{oad_transformer_forward.1} parent=11 // pred_fallthru
        _
      // Predicated region
      $region77: #{oad_transformer_forward.1} parent=11 // pred_check
        %p1136 = pneg %p480
      $region78: #{oad_transformer_forward.1} parent=11 // pred_check_branch
        %1138 = sbr.rel (%p1136) target = $region80
      $region79: #{oad_transformer_forward.1} parent=11 // pred_region
        _
      $region80: #{oad_transformer_forward.1} parent=11 // pred_fallthru
        _
      // Predicated region
      $region81: #{oad_transformer_forward.1} parent=11 // pred_check
        %p1139 = pneg %p501
      $region82: #{oad_transformer_forward.1} parent=11 // pred_check_branch
        %1141 = sbr.rel (%p1139) target = $region84
      $region83: #{oad_transformer_forward.1} parent=11 // pred_region
        _
      $region84: #{oad_transformer_forward.1} parent=11 // pred_fallthru
        _
      // Predicated region
      $region85: #{oad_transformer_forward.1} parent=11 // pred_check
        %p1142 = pneg %p522
      $region86: #{oad_transformer_forward.1} parent=11 // pred_check_branch
        %1144 = sbr.rel (%p1142) target = $region88
      $region87: #{oad_transformer_forward.1} parent=11 // pred_region
        _
      $region88: #{oad_transformer_forward.1} parent=11 // pred_fallthru
        _
      // Predicated region
      $region89: #{oad_transformer_forward.1} parent=11 // pred_check
        %p1145 = pneg %p543
      $region90: #{oad_transformer_forward.1} parent=11 // pred_check_branch
        %1147 = sbr.rel (%p1145) target = $region92
      $region91: #{oad_transformer_forward.1} parent=11 // pred_region
        _
      $region92: #{oad_transformer_forward.1} parent=11 // pred_fallthru
        _
      // Predicated region
      $region93: #{oad_transformer_forward.1} parent=11 // pred_check
        %p1148 = pneg %p564
      $region94: #{oad_transformer_forward.1} parent=11 // pred_check_branch
        %1150 = sbr.rel (%p1148) target = $region96
      $region95: #{oad_transformer_forward.1} parent=11 // pred_region
        _
      $region96: #{oad_transformer_forward.1} parent=11 // pred_fallthru
        _
      // Predicated region
      $region97: #{oad_transformer_forward.1} parent=11 // pred_check
        %p1151 = pneg %p585
      $region98: #{oad_transformer_forward.1} parent=11 // pred_check_branch
        %1153 = sbr.rel (%p1151) target = $region100
      $region99: #{oad_transformer_forward.1} parent=11 // pred_region
        _
      $region100: #{oad_transformer_forward.1} parent=11 // pred_fallthru
        _
      // Predicated region
      $region101: #{oad_transformer_forward.1} parent=11 // pred_check
        %p1154 = pneg %p606
      $region102: #{oad_transformer_forward.1} parent=11 // pred_check_branch
        %1156 = sbr.rel (%p1154) target = $region104
      $region103: #{oad_transformer_forward.1} parent=11 // pred_region
        _
      $region104: #{oad_transformer_forward.1} parent=11 // pred_fallthru
        _
      // Predicated region
      $region105: #{oad_transformer_forward.1} parent=11 // pred_check
        %p1157 = pneg %p627
      $region106: #{oad_transformer_forward.1} parent=11 // pred_check_branch
        %1159 = sbr.rel (%p1157) target = $region108
      $region107: #{oad_transformer_forward.1} parent=11 // pred_region
        _
      $region108: #{oad_transformer_forward.1} parent=11 // pred_fallthru
        _
      // Predicated region
      $region109: #{oad_transformer_forward.1} parent=11 // pred_check
        %p1160 = pneg %p648
      $region110: #{oad_transformer_forward.1} parent=11 // pred_check_branch
        %1162 = sbr.rel (%p1160) target = $region112
      $region111: #{oad_transformer_forward.1} parent=11 // pred_region
        _
      $region112: #{oad_transformer_forward.1} parent=11 // pred_fallthru
        _
      // Predicated region
      $region113: #{oad_transformer_forward.1} parent=11 // pred_check
        %p1163 = pneg %p669
      $region114: #{oad_transformer_forward.1} parent=11 // pred_check_branch
        %1165 = sbr.rel (%p1163) target = $region116
      $region115: #{oad_transformer_forward.1} parent=11 // pred_region
        _
      $region116: #{oad_transformer_forward.1} parent=11 // pred_fallthru
        _
      // Predicated region
      $region117: #{oad_transformer_forward.1} parent=11 // pred_check
        %p1166 = pneg %p690
      $region118: #{oad_transformer_forward.1} parent=11 // pred_check_branch
        %1168 = sbr.rel (%p1166) target = $region120
      $region119: #{oad_transformer_forward.1} parent=11 // pred_region
        _
      $region120: #{oad_transformer_forward.1} parent=11 // pred_fallthru
        _
      // Predicated region
      $region121: #{oad_transformer_forward.1} parent=11 // pred_check
        %p1169 = pneg %p711
      $region122: #{oad_transformer_forward.1} parent=11 // pred_check_branch
        %1171 = sbr.rel (%p1169) target = $region124
      $region123: #{oad_transformer_forward.1} parent=11 // pred_region
        _
      $region124: #{oad_transformer_forward.1} parent=11 // pred_fallthru
        _
      // Predicated region
      $region125: #{oad_transformer_forward.1} parent=11 // pred_check
        %p1172 = pneg %p732
      $region126: #{oad_transformer_forward.1} parent=11 // pred_check_branch
        %1174 = sbr.rel (%p1172) target = $region128
      $region127: #{oad_transformer_forward.1} parent=11 // pred_region
        _
      $region128: #{oad_transformer_forward.1} parent=11 // pred_fallthru
        _
      // Predicated region
      $region129: #{oad_transformer_forward.1} parent=11 // pred_check
        %p1175 = pneg %p753
      $region130: #{oad_transformer_forward.1} parent=11 // pred_check_branch
        %1177 = sbr.rel (%p1175) target = $region132
      $region131: #{oad_transformer_forward.1} parent=11 // pred_region
        _
      $region132: #{oad_transformer_forward.1} parent=11 // pred_fallthru
        _
      // Predicated region
      $region133: #{oad_transformer_forward.1} parent=11 // pred_check
        %p1178 = pneg %p774
      $region134: #{oad_transformer_forward.1} parent=11 // pred_check_branch
        %1180 = sbr.rel (%p1178) target = $region136
      $region135: #{oad_transformer_forward.1} parent=11 // pred_region
        _
      $region136: #{oad_transformer_forward.1} parent=11 // pred_fallthru
        _
      // Predicated region
      $region137: #{oad_transformer_forward.1} parent=11 // pred_check
        %p1181 = pneg %p795
      $region138: #{oad_transformer_forward.1} parent=11 // pred_check_branch
        %1183 = sbr.rel (%p1181) target = $region140
      $region139: #{oad_transformer_forward.1} parent=11 // pred_region
        _
      $region140: #{oad_transformer_forward.1} parent=11 // pred_fallthru
        _
      // Predicated region
      $region141: #{oad_transformer_forward.1} parent=11 // pred_check
        %p1184 = pneg %p816
      $region142: #{oad_transformer_forward.1} parent=11 // pred_check_branch
        %1186 = sbr.rel (%p1184) target = $region144
      $region143: #{oad_transformer_forward.1} parent=11 // pred_region
        _
      $region144: #{oad_transformer_forward.1} parent=11 // pred_fallthru
        _
      // Predicated region
      $region145: #{oad_transformer_forward.1} parent=11 // pred_check
        %p1187 = pneg %p837
      $region146: #{oad_transformer_forward.1} parent=11 // pred_check_branch
        %1189 = sbr.rel (%p1187) target = $region148
      $region147: #{oad_transformer_forward.1} parent=11 // pred_region
        _
      $region148: #{oad_transformer_forward.1} parent=11 // pred_fallthru
        _
      // Predicated region
      $region149: #{oad_transformer_forward.1} parent=11 // pred_check
        %p1190 = pneg %p858
      $region150: #{oad_transformer_forward.1} parent=11 // pred_check_branch
        %1192 = sbr.rel (%p1190) target = $region152
      $region151: #{oad_transformer_forward.1} parent=11 // pred_region
        _
      $region152: #{oad_transformer_forward.1} parent=11 // pred_fallthru
        _
      // Predicated region
      $region153: #{oad_transformer_forward.1} parent=11 // pred_check
        %p1193 = pneg %p879
      $region154: #{oad_transformer_forward.1} parent=11 // pred_check_branch
        %1195 = sbr.rel (%p1193) target = $region156
      $region155: #{oad_transformer_forward.1} parent=11 // pred_region
        _
      $region156: #{oad_transformer_forward.1} parent=11 // pred_fallthru
        _
      // Predicated region
      $region157: #{oad_transformer_forward.1} parent=11 // pred_check
        %p1196 = pneg %p900
      $region158: #{oad_transformer_forward.1} parent=11 // pred_check_branch
        %1198 = sbr.rel (%p1196) target = $region160
      $region159: #{oad_transformer_forward.1} parent=11 // pred_region
        _
      $region160: #{oad_transformer_forward.1} parent=11 // pred_fallthru
        _
      // Predicated region
      $region161: #{oad_transformer_forward.1} parent=11 // pred_check
        %p1199 = pneg %p921
      $region162: #{oad_transformer_forward.1} parent=11 // pred_check_branch
        %1201 = sbr.rel (%p1199) target = $region164
      $region163: #{oad_transformer_forward.1} parent=11 // pred_region
        _
      $region164: #{oad_transformer_forward.1} parent=11 // pred_fallthru
        _
      // Predicated region
      $region165: #{oad_transformer_forward.1} parent=11 // pred_check
        %p1202 = pneg %p942
      $region166: #{oad_transformer_forward.1} parent=11 // pred_check_branch
        %1204 = sbr.rel (%p1202) target = $region168
      $region167: #{oad_transformer_forward.1} parent=11 // pred_region
        _
      $region168: #{oad_transformer_forward.1} parent=11 // pred_fallthru
        _
      // Predicated region
      $region169: #{oad_transformer_forward.1} parent=11 // pred_check
        %p1205 = pneg %p963
      $region170: #{oad_transformer_forward.1} parent=11 // pred_check_branch
        %1207 = sbr.rel (%p1205) target = $region172
      $region171: #{oad_transformer_forward.1} parent=11 // pred_region
        _
      $region172: #{oad_transformer_forward.1} parent=11 // pred_fallthru
        _
      // Predicated region
      $region173: #{oad_transformer_forward.1} parent=11 // pred_check
        %p1208 = pneg %p984
      $region174: #{oad_transformer_forward.1} parent=11 // pred_check_branch
        %1210 = sbr.rel (%p1208) target = $region176
      $region175: #{oad_transformer_forward.1} parent=11 // pred_region
        _
      $region176: #{oad_transformer_forward.1} parent=11 // pred_fallthru
        _
      // Predicated region
      $region177: #{oad_transformer_forward.1} parent=11 // pred_check
        %p1211 = pneg %p1005
      $region178: #{oad_transformer_forward.1} parent=11 // pred_check_branch
        %1213 = sbr.rel (%p1211) target = $region180
      $region179: #{oad_transformer_forward.1} parent=11 // pred_region
        _
      $region180: #{oad_transformer_forward.1} parent=11 // pred_fallthru
        _
      // Predicated region
      $region181: #{oad_transformer_forward.1} parent=11 // pred_check
        %p1214 = pneg %p1026
      $region182: #{oad_transformer_forward.1} parent=11 // pred_check_branch
        %1216 = sbr.rel (%p1214) target = $region184
      $region183: #{oad_transformer_forward.1} parent=11 // pred_region
        _
      $region184: #{oad_transformer_forward.1} parent=11 // pred_fallthru
        _
      // Predicated region
      $region185: #{oad_transformer_forward.1} parent=11 // pred_check
        %p1217 = pneg %p1047
      $region186: #{oad_transformer_forward.1} parent=11 // pred_check_branch
        %1219 = sbr.rel (%p1217) target = $region188
      $region187: #{oad_transformer_forward.1} parent=11 // pred_region
        _
      $region188: #{oad_transformer_forward.1} parent=11 // pred_fallthru
        _
    $region12: #{oad_transformer_forward.1} parent=5 // pred_fallthru
      _
    %p1220 = scmp.lt.s32.totalorder %s97, 2
    // Predicated region
    $region189: #{oad_transformer_forward.1} parent=5 // pred_check
      %p1221 = pneg %p1220
    $region190: #{oad_transformer_forward.1} parent=5 // pred_check_branch
      %1223 = sbr.rel (%p1221) target = $region192
    $region191: #{oad_transformer_forward.1} parent=5 // pred_region
      // Predicated region
      $region193: #{oad_transformer_forward.1} parent=191 // pred_check
        %p1224 = pneg %p117
      $region194: #{oad_transformer_forward.1} parent=191 // pred_check_branch
        %1226 = sbr.rel (%p1224) target = $region196
      $region195: #{oad_transformer_forward.1} parent=191 // pred_region
        %p1227 = scmp.lt.s32.totalorder %s97, 1
        %s1228 = scalar_select %p1227, %s97, 1
        %s1229 = smul.addr %s1228, 8
        %s1230 = scalar_lea.vmem %s1, %s1229
      $region196: #{oad_transformer_forward.1} parent=191 // pred_fallthru
        _
    $region192: #{oad_transformer_forward.1} parent=5 // pred_fallthru
      _
    %p1231 = scmp.le.s32.totalorder 1, %s97
    %p1232 = scmp.lt.s32.totalorder %s97, 3
    %p1233 = pnand %p1231, %p1232
    %p1234 = pneg %p1233
    // Predicated region
    $region197: #{oad_transformer_forward.1} parent=5 // pred_check
      _
    $region198: #{oad_transformer_forward.1} parent=5 // pred_check_branch
      %1236 = sbr.rel (%p1233) target = $region200
    $region199: #{oad_transformer_forward.1} parent=5 // pred_region
      %s1237 = ssub.s32 %s97, 1
      %p1238 = scmp.lt.s32.totalorder %s102, 1
      %s1239 = scalar_select %p1238, %s102, 1
      %s1240 = smul.addr %s1239, 8
      %s1241 = scalar_lea.vmem %s1, %s1240
      %p1242 = pneg %p123
      %p1243 = pneg %p120
      %p1244 = pneg %p144
      %p1245 = pneg %p141
      %p1246 = pneg %p165
      %p1247 = pneg %p162
      %p1248 = pneg %p186
      %p1249 = pneg %p183
      %p1250 = pneg %p207
      %p1251 = pneg %p204
      %p1252 = pneg %p228
      %p1253 = pneg %p225
      %p1254 = pneg %p249
      %p1255 = pneg %p246
      %p1256 = pneg %p270
      %p1257 = pneg %p267
      %p1258 = pneg %p291
      %p1259 = pneg %p288
      %p1260 = pneg %p312
      %p1261 = pneg %p309
      %p1262 = pneg %p333
      %p1263 = pneg %p330
      %p1264 = pneg %p354
      %p1265 = pneg %p351
      %p1266 = pneg %p375
      %p1267 = pneg %p372
      %p1268 = pneg %p396
      %p1269 = pneg %p393
      %p1270 = pneg %p417
      %p1271 = pneg %p414
      %p1272 = pneg %p438
      %p1273 = pneg %p435
      %p1274 = pneg %p459
      %p1275 = pneg %p456
      %p1276 = pneg %p480
      %p1277 = pneg %p477
      %p1278 = pneg %p501
      %p1279 = pneg %p498
      %p1280 = pneg %p522
      %p1281 = pneg %p519
      %p1282 = pneg %p543
      %p1283 = pneg %p540
      %p1284 = pneg %p564
      %p1285 = pneg %p561
      %p1286 = pneg %p585
      %p1287 = pneg %p582
      %p1288 = pneg %p606
      %p1289 = pneg %p603
      %p1290 = pneg %p627
      %p1291 = pneg %p624
      %p1292 = pneg %p648
      %p1293 = pneg %p645
      %p1294 = pneg %p669
      %p1295 = pneg %p666
      %p1296 = pneg %p690
      %p1297 = pneg %p687
      %p1298 = pneg %p711
      %p1299 = pneg %p708
      %p1300 = pneg %p732
      %p1301 = pneg %p729
      %p1302 = pneg %p753
      %p1303 = pneg %p750
      %p1304 = pneg %p774
      %p1305 = pneg %p771
      %p1306 = pneg %p795
      %p1307 = pneg %p792
      %p1308 = pneg %p816
      %p1309 = pneg %p813
      %p1310 = pneg %p837
      %p1311 = pneg %p834
      %p1312 = pneg %p858
      %p1313 = pneg %p855
      %p1314 = pneg %p879
      %p1315 = pneg %p876
      %p1316 = pneg %p900
      %p1317 = pneg %p897
      %p1318 = pneg %p921
      %p1319 = pneg %p918
      %p1320 = pneg %p942
      %p1321 = pneg %p939
      %p1322 = pneg %p963
      %p1323 = pneg %p960
      %p1324 = pneg %p984
      %p1325 = pneg %p981
      %p1326 = pneg %p1005
      %p1327 = pneg %p1002
      %p1328 = pneg %p1026
      %p1329 = pneg %p1023
      %p1330 = pneg %p1047
      %p1331 = pneg %p1044
      %p1332 = pneg %p1073
      %p1333 = pneg %p1070
      %p1334 = scmp.lt.s32.totalorder %s102, 1
      %s1335 = scalar_select %p1334, %s102, 1
      %s1336 = smul.addr %s1335, 2
      %s1337 = smul.addr %s1336, 8
      %s1338 = scalar_lea.vmem %s91, %s1337
      %p1339 = scmp.lt.s32.totalorder %s102, 1
      %s1340 = scalar_select %p1339, %s102, 1
      %s1341 = smul.addr %s1340, 8
      %s1342 = scalar_lea.vmem %s1, %s1341
      %p1343 = scmp.lt.s32.totalorder %s102, 1
      %s1344 = scalar_select %p1343, %s102, 1
      %s1345 = smul.addr %s1344, 2
      %s1346 = smul.addr %s1345, 8
      %s1347 = scalar_lea.vmem %s91, %s1346
      %v1349 = vld [vmem:[%s1342] sm:$0xff]
      %v1350 = vld [vmem:[%s3] sm:$0x1]
      %v1351 = vld [vmem:[%s5] sm:$0xff]
      %v1352 = vld [vmem:[%s5 + $0x8] sm:$0x1]
      %v1353 = vadd.f32 %v1349, %v1351
      %v1354 = vadd.f32 %v1350, %v1352
      %v1355 = vld [vmem:[%s23] sm:$0x1]
      %v1356 = vld [vmem:[%s25] sm:$0x1]
      %vm1357 = vcmask 261120
      %v1358 = vsel %vm1357, %v1353, 0.0
      %1359 = vadd.xlane.f32.xlu0 %v1358
      %v1360 = vpop.xlane.xlu0 %1359
      %vm1361 = vcmask 253952
      %v1362 = vsel %vm1361, %v1354, 0.0
      %1363 = vadd.xlane.f32.xlu0 %v1362
      %v1364 = vpop.xlane.xlu0 %1363
      %v1365 = vrcp.pop 32.0
      %v1366 = vmul.f32 32.0, %v1365
      %v1367 = vsub.f32 1.0, %v1366
      %v1368 = vmul.f32 %v1365, %v1367
      %v1369 = vadd.f32 %v1365, %v1368
      %vm1370 = vweird.f32 %v1365
      %v1371 = vsel %vm1370, %v1365, %v1369
      %v1372 = vmul.f32 %v1360, %v1371
      %v1373 = vmul.f32 %v1364, %v1371
      %v1374 = vsub.f32 %v1353, %v1372
      %v1375 = vsub.f32 %v1354, %v1373
      %v1376 = vmul.f32 %v1374, %v1374
      %v1377 = vmul.f32 %v1375, %v1375
      %v1378 = vsel %vm1357, %v1376, 0.0
      %1379 = vadd.xlane.f32.xlu0 %v1378
      %v1380 = vpop.xlane.xlu0 %1379
      %v1381 = vsel %vm1361, %v1377, 0.0
      %1382 = vadd.xlane.f32.xlu0 %v1381
      %v1383 = vpop.xlane.xlu0 %1382
      %v1384 = vmul.f32 %v1380, %v1371
      %v1385 = vmul.f32 %v1383, %v1371
      %v1386 = vadd.f32 %v1384, 1e-05
      %v1387 = vadd.f32 %v1385, 1e-05
      %v1388 = vrsqrt.pop %v1386
      %v1389 = vmul.f32 %v1388, %v1386
      %v1390 = vmul.f32 %v1389, %v1388
      %v1391 = vmul.f32 0.5, %v1390
      %v1392 = vsub.f32 1.5, %v1391
      %v1393 = vmul.f32 %v1388, %v1392
      %vm1394 = vweird.f32 %v1386
      %vm1395 = vweird.f32 %v1388
      %vm1396 = vmor %vm1394, %vm1395
      %v1397 = vsel %vm1396, %v1388, %v1393
      %v1398 = vrsqrt.pop %v1387
      %v1399 = vmul.f32 %v1398, %v1387
      %v1400 = vmul.f32 %v1399, %v1398
      %v1401 = vmul.f32 0.5, %v1400
      %v1402 = vsub.f32 1.5, %v1401
      %v1403 = vmul.f32 %v1398, %v1402
      %vm1404 = vweird.f32 %v1387
      %vm1405 = vweird.f32 %v1398
      %vm1406 = vmor %vm1404, %vm1405
      %v1407 = vsel %vm1406, %v1398, %v1403
      %v1408 = vmul.f32 %v1374, %v1397
      %v1409 = vmul.f32 %v1375, %v1407
      %v1411 = vperm.slane %v1355, 0
      %v1413 = vmul.f32 %v1408, %v1411
      %v1414 = vmul.f32 %v1409, %v1411
      %v1416 = vperm.slane %v1356, 0
      %v1418 = vadd.f32 %v1413, %v1416
      %v1419 = vadd.f32 %v1414, %v1416
      %v1420 = vld [vmem:[%s27] sm:$0xf]
      %v1421 = vld [vmem:[%s27 + $0x4] sm:$0xf]
      %v1422 = vld [vmem:[%s27 + $0x8] sm:$0xf]
      %v1423 = vld [vmem:[%s27 + $0xc] sm:$0xf]
      %v1424 = vld [vmem:[%s29] sm:$0x1]
      %v1425 = vld [vmem:[%s31] sm:$0xf]
      %v1426 = vld [vmem:[%s31 + $0x4] sm:$0xf]
      %v1427 = vld [vmem:[%s31 + $0x8] sm:$0xf]
      %v1428 = vld [vmem:[%s31 + $0xc] sm:$0xf]
      %v1429 = vld [vmem:[%s33] sm:$0x1]
      %v1430 = vpack.c.bf16 %v1419, %v1418
      %v1432 = vperm.slane %v1424, 0
      %v1438 = vunpack.c.l.b16 %v1420
      %v1439 = vunpack.c.l.b16 %v1421
      %v1440 = vunpack.c.l.b16 %v1422
      %v1441 = vunpack.c.l.b16 %v1423
      %v1442 = vpack.c.b16 %v1439, %v1438
      %v1443 = vpack.c.b16 %v1441, %v1440
      %v1447 = vsel %vm1357, %v1430, 0
      %1449 = vmatpush.bf16.msra.mxu0 0
      %1450 = vmatpush.bf16.msra.mxu0 0
      %1451 = vmatpush.bf16.msra.mxu0 0
      %1452 = vmatpush.bf16.msra.mxu0 0
      %1453 = vmatpush.bf16.msra.mxu0 0
      %1454 = vmatpush.bf16.msra.mxu0 0
      %1455 = vmatpush.bf16.msra.mxu0 %v1443
      %1456 = vmatpush.bf16.msra.mxu0 %v1442
      %1457 = vmatmul.bf16.gmra.mxu0 %v1447
      %v1458 = vpop.f32.mrf.mxu0
      %v1459 = vadd.f32 %v1432, %v1458
      %v1460 = vpop.f32.mrf.mxu0
      %v1461 = vadd.f32 %v1432, %v1460
      %1462 = vdwg.mxu0
      %v1463 = vmul.f32 %v1459, 0.5
      %v1464 = vmul.f32 %v1461, 0.5
      %v1465 = vpack.c.bf16 %v1464, %v1463
      %v1466 = vpack.c.bf16 %v1461, %v1459
      %1468 = vrot.lane.b32.xlu0 %v1466, 96
      %v1469 = vpop.permute.xlu0 %1468
      %vm1470 = vcmask 31744
      %v1472 = vsel %vm1470, %v1465, 0
      %v1475 = vsel %vm1470, %v1469, 0
      %1477 = vmatpush.bf16.xpose.msra.mxu0 0
      %1478 = vmatpush.bf16.xpose.msra.mxu0 0
      %1479 = vmatpush.bf16.xpose.msra.mxu0 0
      %1480 = vmatpush.bf16.xpose.msra.mxu0 0
      %1481 = vmatpush.bf16.xpose.msra.mxu0 0
      %1482 = vmatpush.bf16.xpose.msra.mxu0 0
      %1483 = vmatpush.bf16.xpose.msra.mxu0 0
      %1484 = vmatpush.bf16.xpose.msra.mxu0 %v1475
      %1485 = vmatmul.bf16.gmra.mxu0 %v1472
      %v1486 = vpop.f32.mrf.mxu0
      %v1487 = vadd.f32 0.0, %v1486
      %v1488 = vpop.f32.mrf.mxu0
      %v1489 = vadd.f32 0.0, %v1488
      %1490 = vdwg.mxu0
      %vm1491 = vcmask 72704
      %v1492 = vsel %vm1491, %v1487, -inf
      %1493 = vmax.xlane.f32.xlu0 %v1492
      %v1494 = vpop.xlane.xlu0 %1493
      %vm1495 = vcmask 65536
      %v1496 = vsel %vm1495, %v1489, -inf
      %1497 = vmax.xlane.f32.xlu0 %v1496
      %v1498 = vpop.xlane.xlu0 %1497
      %v1499 = vsub.f32 %v1487, %v1494
      %v1500 = vsub.f32 %v1489, %v1498
      %v1501 = vmul.f32 %v1499, 1.442695
      %v1502 = vpow.pop %v1501
      %v1503 = vmul.f32 %v1500, 1.442695
      %v1504 = vpow.pop %v1503
      %v1505 = vsel %vm1491, %v1502, 0.0
      %1506 = vadd.xlane.f32.xlu0 %v1505
      %v1507 = vpop.xlane.xlu0 %1506
      %v1508 = vsel %vm1495, %v1504, 0.0
      %1509 = vadd.xlane.f32.xlu0 %v1508
      %v1510 = vpop.xlane.xlu0 %1509
      %v1511 = vpack.c.bf16 %v1504, %v1502
      %1512 = vrot.lane.b32.xlu0 %v1466, 64
      %v1513 = vpop.permute.xlu0 %1512
      %v1515 = vsel %vm1491, %v1511, 0
      %vm1517 = vcmask 1043456
      %vm1518 = vcmask 1044480
      %v1519 = vsel %vm1517, 4294967295, 65535
      %v1520 = vsel %vm1518, %v1519, 0
      %v1522 = vand.u32 %v1513, %v1520
      %1524 = vmatpush.bf16.msra.mxu0 0
      %1525 = vmatpush.bf16.msra.mxu0 0
      %1526 = vmatpush.bf16.msra.mxu0 0
      %1527 = vmatpush.bf16.msra.mxu0 0
      %1528 = vmatpush.bf16.msra.mxu0 0
      %1529 = vmatpush.bf16.msra.mxu0 0
      %1530 = vmatpush.bf16.msra.mxu0 0
      %1531 = vmatpush.bf16.msra.mxu0 %v1522
      %1532 = vmatmul.bf16.gmra.mxu0 %v1515
      %v1533 = vpop.f32.mrf.mxu0
      %v1534 = vadd.f32 0.0, %v1533
      %v1535 = vpop.f32.mrf.mxu0
      %v1536 = vadd.f32 0.0, %v1535
      %1537 = vdwg.mxu0
      %v1538 = vrcp.pop %v1507
      %v1539 = vrcp.pop %v1510
      %v1540 = vmul.f32 %v1534, %v1538
      %v1541 = vmul.f32 %v1536, %v1539
      %1543 = vrot.lane.b32.xlu0 %v1465, 124
      %v1544 = vpop.permute.xlu0 %1543
      %1545 = vrot.lane.b32.xlu0 %v1466, 92
      %v1546 = vpop.permute.xlu0 %1545
      %v1548 = vsel %vm1470, %v1544, 0
      %v1551 = vsel %vm1470, %v1546, 0
      %1553 = vmatpush.bf16.xpose.msra.mxu0 0
      %1554 = vmatpush.bf16.xpose.msra.mxu0 0
      %1555 = vmatpush.bf16.xpose.msra.mxu0 0
      %1556 = vmatpush.bf16.xpose.msra.mxu0 0
      %1557 = vmatpush.bf16.xpose.msra.mxu0 0
      %1558 = vmatpush.bf16.xpose.msra.mxu0 0
      %1559 = vmatpush.bf16.xpose.msra.mxu0 0
      %1560 = vmatpush.bf16.xpose.msra.mxu0 %v1551
      %1561 = vmatmul.bf16.gmra.mxu0 %v1548
      %v1562 = vpop.f32.mrf.mxu0
      %v1563 = vadd.f32 0.0, %v1562
      %v1564 = vpop.f32.mrf.mxu0
      %v1565 = vadd.f32 0.0, %v1564
      %1566 = vdwg.mxu0
      %v1567 = vsel %vm1491, %v1563, -inf
      %1568 = vmax.xlane.f32.xlu0 %v1567
      %v1569 = vpop.xlane.xlu0 %1568
      %v1570 = vsel %vm1495, %v1565, -inf
      %1571 = vmax.xlane.f32.xlu0 %v1570
      %v1572 = vpop.xlane.xlu0 %1571
      %v1573 = vsub.f32 %v1563, %v1569
      %v1574 = vsub.f32 %v1565, %v1572
      %v1575 = vmul.f32 %v1573, 1.442695
      %v1576 = vpow.pop %v1575
      %v1577 = vmul.f32 %v1574, 1.442695
      %v1578 = vpow.pop %v1577
      %v1579 = vsel %vm1491, %v1576, 0.0
      %1580 = vadd.xlane.f32.xlu0 %v1579
      %v1581 = vpop.xlane.xlu0 %1580
      %v1582 = vsel %vm1495, %v1578, 0.0
      %1583 = vadd.xlane.f32.xlu0 %v1582
      %v1584 = vpop.xlane.xlu0 %1583
      %v1585 = vpack.c.bf16 %v1578, %v1576
      %1586 = vrot.lane.b32.xlu0 %v1466, 60
      %v1587 = vpop.permute.xlu0 %1586
      %v1589 = vsel %vm1491, %v1585, 0
      %v1592 = vand.u32 %v1587, %v1520
      %1594 = vmatpush.bf16.msra.mxu0 0
      %1595 = vmatpush.bf16.msra.mxu0 0
      %1596 = vmatpush.bf16.msra.mxu0 0
      %1597 = vmatpush.bf16.msra.mxu0 0
      %1598 = vmatpush.bf16.msra.mxu0 0
      %1599 = vmatpush.bf16.msra.mxu0 0
      %1600 = vmatpush.bf16.msra.mxu0 0
      %1601 = vmatpush.bf16.msra.mxu0 %v1592
      %1602 = vmatmul.bf16.gmra.mxu0 %v1589
      %v1603 = vpop.f32.mrf.mxu0
      %v1604 = vadd.f32 0.0, %v1603
      %v1605 = vpop.f32.mrf.mxu0
      %v1606 = vadd.f32 0.0, %v1605
      %1607 = vdwg.mxu0
      %v1608 = vrcp.pop %v1581
      %v1609 = vrcp.pop %v1584
      %v1610 = vmul.f32 %v1604, %v1608
      %v1611 = vmul.f32 %v1606, %v1609
      %1612 = vrot.lane.b32.xlu0 %v1465, 120
      %v1613 = vpop.permute.xlu0 %1612
      %1614 = vrot.lane.b32.xlu0 %v1466, 88
      %v1615 = vpop.permute.xlu0 %1614
      %v1617 = vsel %vm1470, %v1613, 0
      %v1620 = vsel %vm1470, %v1615, 0
      %1622 = vmatpush.bf16.xpose.msra.mxu0 0
      %1623 = vmatpush.bf16.xpose.msra.mxu0 0
      %1624 = vmatpush.bf16.xpose.msra.mxu0 0
      %1625 = vmatpush.bf16.xpose.msra.mxu0 0
      %1626 = vmatpush.bf16.xpose.msra.mxu0 0
      %1627 = vmatpush.bf16.xpose.msra.mxu0 0
      %1628 = vmatpush.bf16.xpose.msra.mxu0 0
      %1629 = vmatpush.bf16.xpose.msra.mxu0 %v1620
      %1630 = vmatmul.bf16.gmra.mxu0 %v1617
      %v1631 = vpop.f32.mrf.mxu0
      %v1632 = vadd.f32 0.0, %v1631
      %v1633 = vpop.f32.mrf.mxu0
      %v1634 = vadd.f32 0.0, %v1633
      %1635 = vdwg.mxu0
      %v1636 = vsel %vm1491, %v1632, -inf
      %1637 = vmax.xlane.f32.xlu0 %v1636
      %v1638 = vpop.xlane.xlu0 %1637
      %v1639 = vsel %vm1495, %v1634, -inf
      %1640 = vmax.xlane.f32.xlu0 %v1639
      %v1641 = vpop.xlane.xlu0 %1640
      %v1642 = vsub.f32 %v1632, %v1638
      %v1643 = vsub.f32 %v1634, %v1641
      %v1644 = vmul.f32 %v1642, 1.442695
      %v1645 = vpow.pop %v1644
      %v1646 = vmul.f32 %v1643, 1.442695
      %v1647 = vpow.pop %v1646
      %v1648 = vsel %vm1491, %v1645, 0.0
      %1649 = vadd.xlane.f32.xlu0 %v1648
      %v1650 = vpop.xlane.xlu0 %1649
      %v1651 = vsel %vm1495, %v1647, 0.0
      %1652 = vadd.xlane.f32.xlu0 %v1651
      %v1653 = vpop.xlane.xlu0 %1652
      %v1654 = vpack.c.bf16 %v1647, %v1645
      %1655 = vrot.lane.b32.xlu0 %v1466, 56
      %v1656 = vpop.permute.xlu0 %1655
      %v1658 = vsel %vm1491, %v1654, 0
      %v1661 = vand.u32 %v1656, %v1520
      %1663 = vmatpush.bf16.msra.mxu0 0
      %1664 = vmatpush.bf16.msra.mxu0 0
      %1665 = vmatpush.bf16.msra.mxu0 0
      %1666 = vmatpush.bf16.msra.mxu0 0
      %1667 = vmatpush.bf16.msra.mxu0 0
      %1668 = vmatpush.bf16.msra.mxu0 0
      %1669 = vmatpush.bf16.msra.mxu0 0
      %1670 = vmatpush.bf16.msra.mxu0 %v1661
      %1671 = vmatmul.bf16.gmra.mxu0 %v1658
      %v1672 = vpop.f32.mrf.mxu0
      %v1673 = vadd.f32 0.0, %v1672
      %v1674 = vpop.f32.mrf.mxu0
      %v1675 = vadd.f32 0.0, %v1674
      %1676 = vdwg.mxu0
      %v1677 = vrcp.pop %v1650
      %v1678 = vrcp.pop %v1653
      %v1679 = vmul.f32 %v1673, %v1677
      %v1680 = vmul.f32 %v1675, %v1678
      %1681 = vrot.lane.b32.xlu0 %v1465, 116
      %v1682 = vpop.permute.xlu0 %1681
      %1683 = vrot.lane.b32.xlu0 %v1466, 84
      %v1684 = vpop.permute.xlu0 %1683
      %v1686 = vsel %vm1470, %v1682, 0
      %v1689 = vsel %vm1470, %v1684, 0
      %1691 = vmatpush.bf16.xpose.msra.mxu0 0
      %1692 = vmatpush.bf16.xpose.msra.mxu0 0
      %1693 = vmatpush.bf16.xpose.msra.mxu0 0
      %1694 = vmatpush.bf16.xpose.msra.mxu0 0
      %1695 = vmatpush.bf16.xpose.msra.mxu0 0
      %1696 = vmatpush.bf16.xpose.msra.mxu0 0
      %1697 = vmatpush.bf16.xpose.msra.mxu0 0
      %1698 = vmatpush.bf16.xpose.msra.mxu0 %v1689
      %1699 = vmatmul.bf16.gmra.mxu0 %v1686
      %v1700 = vpop.f32.mrf.mxu0
      %v1701 = vadd.f32 0.0, %v1700
      %v1702 = vpop.f32.mrf.mxu0
      %v1703 = vadd.f32 0.0, %v1702
      %1704 = vdwg.mxu0
      %v1705 = vsel %vm1491, %v1701, -inf
      %1706 = vmax.xlane.f32.xlu0 %v1705
      %v1707 = vpop.xlane.xlu0 %1706
      %v1708 = vsel %vm1495, %v1703, -inf
      %1709 = vmax.xlane.f32.xlu0 %v1708
      %v1710 = vpop.xlane.xlu0 %1709
      %v1711 = vsub.f32 %v1701, %v1707
      %v1712 = vsub.f32 %v1703, %v1710
      %v1713 = vmul.f32 %v1711, 1.442695
      %v1714 = vpow.pop %v1713
      %v1715 = vmul.f32 %v1712, 1.442695
      %v1716 = vpow.pop %v1715
      %v1717 = vsel %vm1491, %v1714, 0.0
      %1718 = vadd.xlane.f32.xlu0 %v1717
      %v1719 = vpop.xlane.xlu0 %1718
      %v1720 = vsel %vm1495, %v1716, 0.0
      %1721 = vadd.xlane.f32.xlu0 %v1720
      %v1722 = vpop.xlane.xlu0 %1721
      %v1723 = vpack.c.bf16 %v1716, %v1714
      %1724 = vrot.lane.b32.xlu0 %v1466, 52
      %v1725 = vpop.permute.xlu0 %1724
      %v1727 = vsel %vm1491, %v1723, 0
      %v1730 = vand.u32 %v1725, %v1520
      %1732 = vmatpush.bf16.msra.mxu0 0
      %1733 = vmatpush.bf16.msra.mxu0 0
      %1734 = vmatpush.bf16.msra.mxu0 0
      %1735 = vmatpush.bf16.msra.mxu0 0
      %1736 = vmatpush.bf16.msra.mxu0 0
      %1737 = vmatpush.bf16.msra.mxu0 0
      %1738 = vmatpush.bf16.msra.mxu0 0
      %1739 = vmatpush.bf16.msra.mxu0 %v1730
      %1740 = vmatmul.bf16.gmra.mxu0 %v1727
      %v1741 = vpop.f32.mrf.mxu0
      %v1742 = vadd.f32 0.0, %v1741
      %v1743 = vpop.f32.mrf.mxu0
      %v1744 = vadd.f32 0.0, %v1743
      %1745 = vdwg.mxu0
      %v1746 = vrcp.pop %v1719
      %v1747 = vrcp.pop %v1722
      %v1748 = vmul.f32 %v1742, %v1746
      %v1749 = vmul.f32 %v1744, %v1747
      %1750 = vrot.lane.b32.xlu0 %v1465, 112
      %v1751 = vpop.permute.xlu0 %1750
      %1752 = vrot.lane.b32.xlu0 %v1466, 80
      %v1753 = vpop.permute.xlu0 %1752
      %v1755 = vsel %vm1470, %v1751, 0
      %v1758 = vsel %vm1470, %v1753, 0
      %1760 = vmatpush.bf16.xpose.msra.mxu0 0
      %1761 = vmatpush.bf16.xpose.msra.mxu0 0
      %1762 = vmatpush.bf16.xpose.msra.mxu0 0
      %1763 = vmatpush.bf16.xpose.msra.mxu0 0
      %1764 = vmatpush.bf16.xpose.msra.mxu0 0
      %1765 = vmatpush.bf16.xpose.msra.mxu0 0
      %1766 = vmatpush.bf16.xpose.msra.mxu0 0
      %1767 = vmatpush.bf16.xpose.msra.mxu0 %v1758
      %1768 = vmatmul.bf16.gmra.mxu0 %v1755
      %v1769 = vpop.f32.mrf.mxu0
      %v1770 = vadd.f32 0.0, %v1769
      %v1771 = vpop.f32.mrf.mxu0
      %v1772 = vadd.f32 0.0, %v1771
      %1773 = vdwg.mxu0
      %v1774 = vsel %vm1491, %v1770, -inf
      %1775 = vmax.xlane.f32.xlu0 %v1774
      %v1776 = vpop.xlane.xlu0 %1775
      %v1777 = vsel %vm1495, %v1772, -inf
      %1778 = vmax.xlane.f32.xlu0 %v1777
      %v1779 = vpop.xlane.xlu0 %1778
      %v1780 = vsub.f32 %v1770, %v1776
      %v1781 = vsub.f32 %v1772, %v1779
      %v1782 = vmul.f32 %v1780, 1.442695
      %v1783 = vpow.pop %v1782
      %v1784 = vmul.f32 %v1781, 1.442695
      %v1785 = vpow.pop %v1784
      %v1786 = vsel %vm1491, %v1783, 0.0
      %1787 = vadd.xlane.f32.xlu0 %v1786
      %v1788 = vpop.xlane.xlu0 %1787
      %v1789 = vsel %vm1495, %v1785, 0.0
      %1790 = vadd.xlane.f32.xlu0 %v1789
      %v1791 = vpop.xlane.xlu0 %1790
      %v1792 = vpack.c.bf16 %v1785, %v1783
      %1793 = vrot.lane.b32.xlu0 %v1466, 48
      %v1794 = vpop.permute.xlu0 %1793
      %v1796 = vsel %vm1491, %v1792, 0
      %v1799 = vand.u32 %v1794, %v1520
      %1801 = vmatpush.bf16.msra.mxu0 0
      %1802 = vmatpush.bf16.msra.mxu0 0
      %1803 = vmatpush.bf16.msra.mxu0 0
      %1804 = vmatpush.bf16.msra.mxu0 0
      %1805 = vmatpush.bf16.msra.mxu0 0
      %1806 = vmatpush.bf16.msra.mxu0 0
      %1807 = vmatpush.bf16.msra.mxu0 0
      %1808 = vmatpush.bf16.msra.mxu0 %v1799
      %1809 = vmatmul.bf16.gmra.mxu0 %v1796
      %v1810 = vpop.f32.mrf.mxu0
      %v1811 = vadd.f32 0.0, %v1810
      %v1812 = vpop.f32.mrf.mxu0
      %v1813 = vadd.f32 0.0, %v1812
      %1814 = vdwg.mxu0
      %v1815 = vrcp.pop %v1788
      %v1816 = vrcp.pop %v1791
      %v1817 = vmul.f32 %v1811, %v1815
      %v1818 = vmul.f32 %v1813, %v1816
      %1819 = vrot.lane.b32.xlu0 %v1465, 108
      %v1820 = vpop.permute.xlu0 %1819
      %1821 = vrot.lane.b32.xlu0 %v1466, 76
      %v1822 = vpop.permute.xlu0 %1821
      %v1824 = vsel %vm1470, %v1820, 0
      %v1827 = vsel %vm1470, %v1822, 0
      %1829 = vmatpush.bf16.xpose.msra.mxu0 0
      %1830 = vmatpush.bf16.xpose.msra.mxu0 0
      %1831 = vmatpush.bf16.xpose.msra.mxu0 0
      %1832 = vmatpush.bf16.xpose.msra.mxu0 0
      %1833 = vmatpush.bf16.xpose.msra.mxu0 0
      %1834 = vmatpush.bf16.xpose.msra.mxu0 0
      %1835 = vmatpush.bf16.xpose.msra.mxu0 0
      %1836 = vmatpush.bf16.xpose.msra.mxu0 %v1827
      %1837 = vmatmul.bf16.gmra.mxu0 %v1824
      %v1838 = vpop.f32.mrf.mxu0
      %v1839 = vadd.f32 0.0, %v1838
      %v1840 = vpop.f32.mrf.mxu0
      %v1841 = vadd.f32 0.0, %v1840
      %1842 = vdwg.mxu0
      %v1843 = vsel %vm1491, %v1839, -inf
      %1844 = vmax.xlane.f32.xlu0 %v1843
      %v1845 = vpop.xlane.xlu0 %1844
      %v1846 = vsel %vm1495, %v1841, -inf
      %1847 = vmax.xlane.f32.xlu0 %v1846
      %v1848 = vpop.xlane.xlu0 %1847
      %v1849 = vsub.f32 %v1839, %v1845
      %v1850 = vsub.f32 %v1841, %v1848
      %v1851 = vmul.f32 %v1849, 1.442695
      %v1852 = vpow.pop %v1851
      %v1853 = vmul.f32 %v1850, 1.442695
      %v1854 = vpow.pop %v1853
      %v1855 = vsel %vm1491, %v1852, 0.0
      %1856 = vadd.xlane.f32.xlu0 %v1855
      %v1857 = vpop.xlane.xlu0 %1856
      %v1858 = vsel %vm1495, %v1854, 0.0
      %1859 = vadd.xlane.f32.xlu0 %v1858
      %v1860 = vpop.xlane.xlu0 %1859
      %v1861 = vpack.c.bf16 %v1854, %v1852
      %1862 = vrot.lane.b32.xlu0 %v1466, 44
      %v1863 = vpop.permute.xlu0 %1862
      %v1865 = vsel %vm1491, %v1861, 0
      %v1868 = vand.u32 %v1863, %v1520
      %1870 = vmatpush.bf16.msra.mxu0 0
      %1871 = vmatpush.bf16.msra.mxu0 0
      %1872 = vmatpush.bf16.msra.mxu0 0
      %1873 = vmatpush.bf16.msra.mxu0 0
      %1874 = vmatpush.bf16.msra.mxu0 0
      %1875 = vmatpush.bf16.msra.mxu0 0
      %1876 = vmatpush.bf16.msra.mxu0 0
      %1877 = vmatpush.bf16.msra.mxu0 %v1868
      %1878 = vmatmul.bf16.gmra.mxu0 %v1865
      %v1879 = vpop.f32.mrf.mxu0
      %v1880 = vadd.f32 0.0, %v1879
      %v1881 = vpop.f32.mrf.mxu0
      %v1882 = vadd.f32 0.0, %v1881
      %1883 = vdwg.mxu0
      %v1884 = vrcp.pop %v1857
      %v1885 = vrcp.pop %v1860
      %v1886 = vmul.f32 %v1880, %v1884
      %v1887 = vmul.f32 %v1882, %v1885
      %1888 = vrot.lane.b32.xlu0 %v1465, 104
      %v1889 = vpop.permute.xlu0 %1888
      %1890 = vrot.lane.b32.xlu0 %v1466, 72
      %v1891 = vpop.permute.xlu0 %1890
      %v1893 = vsel %vm1470, %v1889, 0
      %v1896 = vsel %vm1470, %v1891, 0
      %1898 = vmatpush.bf16.xpose.msra.mxu0 0
      %1899 = vmatpush.bf16.xpose.msra.mxu0 0
      %1900 = vmatpush.bf16.xpose.msra.mxu0 0
      %1901 = vmatpush.bf16.xpose.msra.mxu0 0
      %1902 = vmatpush.bf16.xpose.msra.mxu0 0
      %1903 = vmatpush.bf16.xpose.msra.mxu0 0
      %1904 = vmatpush.bf16.xpose.msra.mxu0 0
      %1905 = vmatpush.bf16.xpose.msra.mxu0 %v1896
      %1906 = vmatmul.bf16.gmra.mxu0 %v1893
      %v1907 = vpop.f32.mrf.mxu0
      %v1908 = vadd.f32 0.0, %v1907
      %v1909 = vpop.f32.mrf.mxu0
      %v1910 = vadd.f32 0.0, %v1909
      %1911 = vdwg.mxu0
      %v1912 = vsel %vm1491, %v1908, -inf
      %1913 = vmax.xlane.f32.xlu0 %v1912
      %v1914 = vpop.xlane.xlu0 %1913
      %v1915 = vsel %vm1495, %v1910, -inf
      %1916 = vmax.xlane.f32.xlu0 %v1915
      %v1917 = vpop.xlane.xlu0 %1916
      %v1918 = vsub.f32 %v1908, %v1914
      %v1919 = vsub.f32 %v1910, %v1917
      %v1920 = vmul.f32 %v1918, 1.442695
      %v1921 = vpow.pop %v1920
      %v1922 = vmul.f32 %v1919, 1.442695
      %v1923 = vpow.pop %v1922
      %v1924 = vsel %vm1491, %v1921, 0.0
      %1925 = vadd.xlane.f32.xlu0 %v1924
      %v1926 = vpop.xlane.xlu0 %1925
      %v1927 = vsel %vm1495, %v1923, 0.0
      %1928 = vadd.xlane.f32.xlu0 %v1927
      %v1929 = vpop.xlane.xlu0 %1928
      %v1930 = vpack.c.bf16 %v1923, %v1921
      %1931 = vrot.lane.b32.xlu0 %v1466, 40
      %v1932 = vpop.permute.xlu0 %1931
      %v1934 = vsel %vm1491, %v1930, 0
      %v1937 = vand.u32 %v1932, %v1520
      %1939 = vmatpush.bf16.msra.mxu0 0
      %1940 = vmatpush.bf16.msra.mxu0 0
      %1941 = vmatpush.bf16.msra.mxu0 0
      %1942 = vmatpush.bf16.msra.mxu0 0
      %1943 = vmatpush.bf16.msra.mxu0 0
      %1944 = vmatpush.bf16.msra.mxu0 0
      %1945 = vmatpush.bf16.msra.mxu0 0
      %1946 = vmatpush.bf16.msra.mxu0 %v1937
      %1947 = vmatmul.bf16.gmra.mxu0 %v1934
      %v1948 = vpop.f32.mrf.mxu0
      %v1949 = vadd.f32 0.0, %v1948
      %v1950 = vpop.f32.mrf.mxu0
      %v1951 = vadd.f32 0.0, %v1950
      %1952 = vdwg.mxu0
      %v1953 = vrcp.pop %v1926
      %v1954 = vrcp.pop %v1929
      %v1955 = vmul.f32 %v1949, %v1953
      %v1956 = vmul.f32 %v1951, %v1954
      %1957 = vrot.lane.b32.xlu0 %v1465, 100
      %v1958 = vpop.permute.xlu0 %1957
      %1959 = vrot.lane.b32.xlu0 %v1466, 68
      %v1960 = vpop.permute.xlu0 %1959
      %v1962 = vsel %vm1470, %v1958, 0
      %v1965 = vsel %vm1470, %v1960, 0
      %1967 = vmatpush.bf16.xpose.msra.mxu0 0
      %1968 = vmatpush.bf16.xpose.msra.mxu0 0
      %1969 = vmatpush.bf16.xpose.msra.mxu0 0
      %1970 = vmatpush.bf16.xpose.msra.mxu0 0
      %1971 = vmatpush.bf16.xpose.msra.mxu0 0
      %1972 = vmatpush.bf16.xpose.msra.mxu0 0
      %1973 = vmatpush.bf16.xpose.msra.mxu0 0
      %1974 = vmatpush.bf16.xpose.msra.mxu0 %v1965
      %1975 = vmatmul.bf16.gmra.mxu0 %v1962
      %v1976 = vpop.f32.mrf.mxu0
      %v1977 = vadd.f32 0.0, %v1976
      %v1978 = vpop.f32.mrf.mxu0
      %v1979 = vadd.f32 0.0, %v1978
      %1980 = vdwg.mxu0
      %v1981 = vsel %vm1491, %v1977, -inf
      %1982 = vmax.xlane.f32.xlu0 %v1981
      %v1983 = vpop.xlane.xlu0 %1982
      %v1984 = vsel %vm1495, %v1979, -inf
      %1985 = vmax.xlane.f32.xlu0 %v1984
      %v1986 = vpop.xlane.xlu0 %1985
      %v1987 = vsub.f32 %v1977, %v1983
      %v1988 = vsub.f32 %v1979, %v1986
      %v1989 = vmul.f32 %v1987, 1.442695
      %v1990 = vpow.pop %v1989
      %v1991 = vmul.f32 %v1988, 1.442695
      %v1992 = vpow.pop %v1991
      %v1993 = vsel %vm1491, %v1990, 0.0
      %1994 = vadd.xlane.f32.xlu0 %v1993
      %v1995 = vpop.xlane.xlu0 %1994
      %v1996 = vsel %vm1495, %v1992, 0.0
      %1997 = vadd.xlane.f32.xlu0 %v1996
      %v1998 = vpop.xlane.xlu0 %1997
      %v1999 = vpack.c.bf16 %v1992, %v1990
      %2000 = vrot.lane.b32.xlu0 %v1466, 36
      %v2001 = vpop.permute.xlu0 %2000
      %v2003 = vsel %vm1491, %v1999, 0
      %v2006 = vand.u32 %v2001, %v1520
      %2008 = vmatpush.bf16.msra.mxu0 0
      %2009 = vmatpush.bf16.msra.mxu0 0
      %2010 = vmatpush.bf16.msra.mxu0 0
      %2011 = vmatpush.bf16.msra.mxu0 0
      %2012 = vmatpush.bf16.msra.mxu0 0
      %2013 = vmatpush.bf16.msra.mxu0 0
      %2014 = vmatpush.bf16.msra.mxu0 0
      %2015 = vmatpush.bf16.msra.mxu0 %v2006
      %2016 = vmatmul.bf16.gmra.mxu0 %v2003
      %v2017 = vpop.f32.mrf.mxu0
      %v2018 = vadd.f32 0.0, %v2017
      %v2019 = vpop.f32.mrf.mxu0
      %v2020 = vadd.f32 0.0, %v2019
      %2021 = vdwg.mxu0
      %v2022 = vrcp.pop %v1995
      %v2023 = vrcp.pop %v1998
      %v2024 = vmul.f32 %v2018, %v2022
      %v2025 = vmul.f32 %v2020, %v2023
      %2028 = vrot.lane.b32.xlu0 %v1610, 4
      %v2029 = vpop.permute.xlu0 %2028
      %2030 = vrot.lane.b32.xlu0 %v1611, 4
      %v2031 = vpop.permute.xlu0 %2030
      %2036 = vrot.lane.b32.xlu0 %v1679, 8
      %v2037 = vpop.permute.xlu0 %2036
      %2038 = vrot.lane.b32.xlu0 %v1680, 8
      %v2039 = vpop.permute.xlu0 %2038
      %2044 = vrot.lane.b32.xlu0 %v1748, 12
      %v2045 = vpop.permute.xlu0 %2044
      %2046 = vrot.lane.b32.xlu0 %v1749, 12
      %v2047 = vpop.permute.xlu0 %2046
      %2052 = vrot.lane.b32.xlu0 %v1817, 16
      %v2053 = vpop.permute.xlu0 %2052
      %2054 = vrot.lane.b32.xlu0 %v1818, 16
      %v2055 = vpop.permute.xlu0 %2054
      %2060 = vrot.lane.b32.xlu0 %v1886, 20
      %v2061 = vpop.permute.xlu0 %2060
      %2062 = vrot.lane.b32.xlu0 %v1887, 20
      %v2063 = vpop.permute.xlu0 %2062
      %2068 = vrot.lane.b32.xlu0 %v1955, 24
      %v2069 = vpop.permute.xlu0 %2068
      %2070 = vrot.lane.b32.xlu0 %v1956, 24
      %v2071 = vpop.permute.xlu0 %2070
      %2076 = vrot.lane.b32.xlu0 %v2024, 28
      %v2077 = vpop.permute.xlu0 %2076
      %2078 = vrot.lane.b32.xlu0 %v2025, 28
      %v2079 = vpop.permute.xlu0 %2078
      %v2082 = vsel %vm1470, %v1540, %v2029
      %v2083 = vsel %vm1470, %v1541, %v2031
      %vm2084 = vcmask 64512
      %v2085 = vsel %vm2084, %v2082, %v2037
      %v2086 = vsel %vm2084, %v2083, %v2039
      %vm2087 = vcmask 97280
      %v2088 = vsel %vm2087, %v2085, %v2045
      %v2089 = vsel %vm2087, %v2086, %v2047
      %vm2090 = vcmask 130048
      %v2091 = vsel %vm2090, %v2088, %v2053
      %v2092 = vsel %vm2090, %v2089, %v2055
      %vm2093 = vcmask 162816
      %v2094 = vsel %vm2093, %v2091, %v2061
      %v2095 = vsel %vm2093, %v2092, %v2063
      %vm2096 = vcmask 195584
      %v2097 = vsel %vm2096, %v2094, %v2069
      %v2098 = vsel %vm2096, %v2095, %v2071
      %vm2099 = vcmask 228352
      %v2100 = vsel %vm2099, %v2097, %v2077
      %v2101 = vsel %vm2099, %v2098, %v2079
      %v2102 = vpack.c.bf16 %v2101, %v2100
      %v2104 = vperm.slane %v1429, 0
      %v2110 = vunpack.c.l.b16 %v1425
      %v2111 = vunpack.c.l.b16 %v1426
      %v2112 = vunpack.c.l.b16 %v1427
      %v2113 = vunpack.c.l.b16 %v1428
      %v2114 = vpack.c.b16 %v2111, %v2110
      %v2115 = vpack.c.b16 %v2113, %v2112
      %v2119 = vsel %vm1357, %v2102, 0
      %2121 = vmatpush.bf16.msra.mxu0 0
      %2122 = vmatpush.bf16.msra.mxu0 0
      %2123 = vmatpush.bf16.msra.mxu0 0
      %2124 = vmatpush.bf16.msra.mxu0 0
      %2125 = vmatpush.bf16.msra.mxu0 0
      %2126 = vmatpush.bf16.msra.mxu0 0
      %2127 = vmatpush.bf16.msra.mxu0 %v2115
      %2128 = vmatpush.bf16.msra.mxu0 %v2114
      %2129 = vmatmul.bf16.gmra.mxu0 %v2119
      %v2130 = vpop.f32.mrf.mxu0
      %v2131 = vadd.f32 %v2104, %v2130
      %v2132 = vpop.f32.mrf.mxu0
      %v2133 = vadd.f32 %v2104, %v2132
      %2134 = vdwg.mxu0
      %v2135 = vadd.f32 %v1353, %v2131
      %v2136 = vadd.f32 %v1354, %v2133
      %v2137 = vld [vmem:[%s35] sm:$0x1]
      %v2138 = vld [vmem:[%s37] sm:$0x1]
      %v2139 = vsel %vm1357, %v2135, 0.0
      %2140 = vadd.xlane.f32.xlu0 %v2139
      %v2141 = vpop.xlane.xlu0 %2140
      %v2142 = vsel %vm1361, %v2136, 0.0
      %2143 = vadd.xlane.f32.xlu0 %v2142
      %v2144 = vpop.xlane.xlu0 %2143
      %v2145 = vmul.f32 %v2141, %v1371
      %v2146 = vmul.f32 %v2144, %v1371
      %v2147 = vsub.f32 %v2135, %v2145
      %v2148 = vsub.f32 %v2136, %v2146
      %v2149 = vmul.f32 %v2147, %v2147
      %v2150 = vmul.f32 %v2148, %v2148
      %v2151 = vsel %vm1357, %v2149, 0.0
      %2152 = vadd.xlane.f32.xlu0 %v2151
      %v2153 = vpop.xlane.xlu0 %2152
      %v2154 = vsel %vm1361, %v2150, 0.0
      %2155 = vadd.xlane.f32.xlu0 %v2154
      %v2156 = vpop.xlane.xlu0 %2155
      %v2157 = vmul.f32 %v2153, %v1371
      %v2158 = vmul.f32 %v2156, %v1371
      %v2159 = vadd.f32 %v2157, 1e-05
      %v2160 = vadd.f32 %v2158, 1e-05
      %v2161 = vrsqrt.pop %v2159
      %v2162 = vmul.f32 %v2161, %v2159
      %v2163 = vmul.f32 %v2162, %v2161
      %v2164 = vmul.f32 0.5, %v2163
      %v2165 = vsub.f32 1.5, %v2164
      %v2166 = vmul.f32 %v2161, %v2165
      %vm2167 = vweird.f32 %v2159
      %vm2168 = vweird.f32 %v2161
      %vm2169 = vmor %vm2167, %vm2168
      %v2170 = vsel %vm2169, %v2161, %v2166
      %v2171 = vrsqrt.pop %v2160
      %v2172 = vmul.f32 %v2171, %v2160
      %v2173 = vmul.f32 %v2172, %v2171
      %v2174 = vmul.f32 0.5, %v2173
      %v2175 = vsub.f32 1.5, %v2174
      %v2176 = vmul.f32 %v2171, %v2175
      %vm2177 = vweird.f32 %v2160
      %vm2178 = vweird.f32 %v2171
      %vm2179 = vmor %vm2177, %vm2178
      %v2180 = vsel %vm2179, %v2171, %v2176
      %v2181 = vmul.f32 %v2147, %v2170
      %v2182 = vmul.f32 %v2148, %v2180
      %v2184 = vperm.slane %v2137, 0
      %v2186 = vmul.f32 %v2181, %v2184
      %v2187 = vmul.f32 %v2182, %v2184
      %v2189 = vperm.slane %v2138, 0
      %v2191 = vadd.f32 %v2186, %v2189
      %v2192 = vadd.f32 %v2187, %v2189
      %v2193 = vld [vmem:[%s39] sm:$0xf]
      %v2194 = vld [vmem:[%s39 + $0x4] sm:$0xf]
      %v2195 = vld [vmem:[%s39 + $0x8] sm:$0xf]
      %v2196 = vld [vmem:[%s39 + $0xc] sm:$0xf]
      %v2197 = vld [vmem:[%s41] sm:$0x1]
      %v2198 = vld [vmem:[%s43] sm:$0xf]
      %v2199 = vld [vmem:[%s43 + $0x4] sm:$0xf]
      %v2200 = vld [vmem:[%s43 + $0x8] sm:$0xf]
      %v2201 = vld [vmem:[%s43 + $0xc] sm:$0xf]
      %v2202 = vld [vmem:[%s43 + $0x10] sm:$0xf]
      %v2203 = vld [vmem:[%s43 + $0x14] sm:$0xf]
      %v2204 = vld [vmem:[%s43 + $0x18] sm:$0xf]
      %v2205 = vld [vmem:[%s43 + $0x1c] sm:$0xf]
      %v2206 = vld [vmem:[%s43 + $0x20] sm:$0xf]
      %v2207 = vld [vmem:[%s43 + $0x24] sm:$0xf]
      %v2208 = vld [vmem:[%s43 + $0x28] sm:$0xf]
      %v2209 = vld [vmem:[%s43 + $0x2c] sm:$0xf]
      %v2210 = vld [vmem:[%s43 + $0x30] sm:$0xf]
      %v2211 = vld [vmem:[%s43 + $0x34] sm:$0xf]
      %v2212 = vld [vmem:[%s43 + $0x38] sm:$0xf]
      %v2213 = vld [vmem:[%s43 + $0x3c] sm:$0xf]
      %v2214 = vld [vmem:[%s45] sm:$0x1]
      %v2215 = vpack.c.bf16 %v2192, %v2191
      %v2217 = vperm.slane %v2197, 0
      %v2223 = vunpack.c.l.b16 %v2193
      %v2224 = vunpack.c.l.b16 %v2194
      %v2225 = vunpack.c.l.b16 %v2195
      %v2226 = vunpack.c.l.b16 %v2196
      %v2227 = vpack.c.b16 %v2224, %v2223
      %v2228 = vpack.c.b16 %v2226, %v2225
      %v2232 = vsel %vm1357, %v2215, 0
      %2234 = vmatpush.bf16.msra.mxu0 0
      %2235 = vmatpush.bf16.msra.mxu0 0
      %2236 = vmatpush.bf16.msra.mxu0 0
      %2237 = vmatpush.bf16.msra.mxu0 0
      %2238 = vmatpush.bf16.msra.mxu0 0
      %2239 = vmatpush.bf16.msra.mxu0 0
      %2240 = vmatpush.bf16.msra.mxu0 %v2228
      %2241 = vmatpush.bf16.msra.mxu0 %v2227
      %2242 = vmatmul.bf16.gmra.mxu0 %v2232
      %v2243 = vpop.f32.mrf.mxu0
      %v2244 = vadd.f32 %v2217, %v2243
      %v2245 = vpop.f32.mrf.mxu0
      %v2246 = vadd.f32 %v2217, %v2245
      %2247 = vdwg.mxu0
      %v2248 = vmul.f32 %v2244, 0.5
      %v2249 = vmul.f32 %v2246, 0.5
      %v2250 = vmul.f32 %v2244, 0.70710677
      %v2251 = vmul.f32 %v2246, 0.70710677
      %v2252 = vand.u32 2147483647, %v2250
      %v2253 = vand.u32 2147483647, %v2251
      %v2254 = vmul.f32 %v2252, 0.3275911
      %v2255 = vmul.f32 %v2253, 0.3275911
      %v2256 = vadd.f32 %v2254, 1.0
      %v2257 = vadd.f32 %v2255, 1.0
      %v2258 = vrcp.pop %v2256
      %v2259 = vmul.f32 %v2256, %v2258
      %v2260 = vsub.f32 1.0, %v2259
      %v2261 = vmul.f32 %v2258, %v2260
      %v2262 = vadd.f32 %v2258, %v2261
      %vm2263 = vweird.f32 %v2256
      %vm2264 = vweird.f32 %v2258
      %vm2265 = vmor %vm2263, %vm2264
      %v2266 = vsel %vm2265, %v2258, %v2262
      %v2267 = vand.u32 2147483647, %v2256
      %vm2268 = vcmp.eq.f32.partialorder %v2267, 8.507059e+37
      %v2269 = vand.u32 %v2256, 2147483648
      %v2270 = vor.u32 1.1754944e-38, %v2269
      %v2271 = vsel %vm2268, %v2270, %v2266
      %v2272 = vmul.f32 1.0, %v2271
      %v2273 = vrcp.pop %v2257
      %v2274 = vmul.f32 %v2257, %v2273
      %v2275 = vsub.f32 1.0, %v2274
      %v2276 = vmul.f32 %v2273, %v2275
      %v2277 = vadd.f32 %v2273, %v2276
      %vm2278 = vweird.f32 %v2257
      %vm2279 = vweird.f32 %v2273
      %vm2280 = vmor %vm2278, %vm2279
      %v2281 = vsel %vm2280, %v2273, %v2277
      %v2282 = vand.u32 2147483647, %v2257
      %vm2283 = vcmp.eq.f32.partialorder %v2282, 8.507059e+37
      %v2284 = vand.u32 %v2257, 2147483648
      %v2285 = vor.u32 1.1754944e-38, %v2284
      %v2286 = vsel %vm2283, %v2285, %v2281
      %v2287 = vmul.f32 1.0, %v2286
      %v2288 = vmul.f32 %v2272, 1.0614054
      %v2289 = vmul.f32 %v2287, 1.0614054
      %v2290 = vadd.f32 %v2288, -1.4531521
      %v2291 = vadd.f32 %v2289, -1.4531521
      %v2292 = vmul.f32 %v2290, %v2272
      %v2293 = vmul.f32 %v2291, %v2287
      %v2294 = vadd.f32 %v2292, 1.4214138
      %v2295 = vadd.f32 %v2293, 1.4214138
      %v2296 = vmul.f32 %v2294, %v2272
      %v2297 = vmul.f32 %v2295, %v2287
      %v2298 = vadd.f32 %v2296, -0.28449672
      %v2299 = vadd.f32 %v2297, -0.28449672
      %v2300 = vmul.f32 %v2298, %v2272
      %v2301 = vmul.f32 %v2299, %v2287
      %v2302 = vadd.f32 %v2300, 0.2548296
      %v2303 = vadd.f32 %v2301, 0.2548296
      %v2304 = vmul.f32 %v2302, %v2272
      %v2305 = vmul.f32 %v2303, %v2287
      %v2306 = vsub.f32 0.0, %v2252
      %v2307 = vsub.f32 0.0, %v2253
      %v2308 = vmul.f32 %v2306, %v2252
      %v2309 = vmul.f32 %v2307, %v2253
      %v2310 = vmul.f32 %v2308, 1.442695
      %v2311 = vpow.pop %v2310
      %v2312 = vmul.f32 %v2309, 1.442695
      %v2313 = vpow.pop %v2312
      %v2314 = vmul.f32 %v2304, %v2311
      %v2315 = vmul.f32 %v2305, %v2313
      %v2316 = vsub.f32 1.0, %v2314
      %v2317 = vsub.f32 1.0, %v2315
      %vm2318 = vcmp.ge.f32.partialorder %v2250, 0.0
      %vm2319 = vcmp.ge.f32.partialorder %v2251, 0.0
      %v2320 = vsub.f32 0.0, %v2316
      %v2321 = vsub.f32 0.0, %v2317
      %v2322 = vsel %vm2318, %v2316, %v2320
      %v2323 = vsel %vm2319, %v2317, %v2321
      %v2324 = vadd.f32 %v2322, 1.0
      %v2325 = vadd.f32 %v2323, 1.0
      %v2326 = vmul.f32 %v2248, %v2324
      %v2327 = vmul.f32 %v2249, %v2325
      %v2328 = vpack.c.bf16 %v2327, %v2326
      %v2330 = vperm.slane %v2214, 0
      %v2348 = vunpack.c.l.b16 %v2198
      %v2349 = vunpack.c.l.b16 %v2199
      %v2350 = vunpack.c.l.b16 %v2200
      %v2351 = vunpack.c.l.b16 %v2201
      %v2352 = vunpack.c.l.b16 %v2202
      %v2353 = vunpack.c.l.b16 %v2203
      %v2354 = vunpack.c.l.b16 %v2204
      %v2355 = vunpack.c.l.b16 %v2205
      %v2356 = vunpack.c.l.b16 %v2206
      %v2357 = vunpack.c.l.b16 %v2207
      %v2358 = vunpack.c.l.b16 %v2208
      %v2359 = vunpack.c.l.b16 %v2209
      %v2360 = vunpack.c.l.b16 %v2210
      %v2361 = vunpack.c.l.b16 %v2211
      %v2362 = vunpack.c.l.b16 %v2212
      %v2363 = vunpack.c.l.b16 %v2213
      %v2364 = vpack.c.b16 %v2349, %v2348
      %v2365 = vpack.c.b16 %v2351, %v2350
      %v2366 = vpack.c.b16 %v2353, %v2352
      %v2367 = vpack.c.b16 %v2355, %v2354
      %v2368 = vpack.c.b16 %v2357, %v2356
      %v2369 = vpack.c.b16 %v2359, %v2358
      %v2370 = vpack.c.b16 %v2361, %v2360
      %v2371 = vpack.c.b16 %v2363, %v2362
      %2380 = vmatpush.bf16.msra.mxu0 %v2371
      %2381 = vmatpush.bf16.msra.mxu0 %v2370
      %2382 = vmatpush.bf16.msra.mxu0 %v2369
      %2383 = vmatpush.bf16.msra.mxu0 %v2368
      %2384 = vmatpush.bf16.msra.mxu0 %v2367
      %2385 = vmatpush.bf16.msra.mxu0 %v2366
      %2386 = vmatpush.bf16.msra.mxu0 %v2365
      %2387 = vmatpush.bf16.msra.mxu0 %v2364
      %2388 = vmatmul.bf16.gmra.mxu0 %v2328
      %v2389 = vpop.f32.mrf.mxu0
      %v2390 = vadd.f32 %v2330, %v2389
      %v2391 = vpop.f32.mrf.mxu0
      %v2392 = vadd.f32 %v2330, %v2391
      %2393 = vdwg.mxu0
      %v2394 = vadd.f32 %v2135, %v2390
      %v2395 = vadd.f32 %v2136, %v2392
      %s2396 = scalar_lea.vmem %s23, 1
      %v2397 = vld [vmem:[%s2396] sm:$0x1]
      %s2398 = scalar_lea.vmem %s25, 1
      %v2399 = vld [vmem:[%s2398] sm:$0x1]
      %v2400 = vsel %vm1357, %v2394, 0.0
      %2401 = vadd.xlane.f32.xlu0 %v2400
      %v2402 = vpop.xlane.xlu0 %2401
      %v2403 = vsel %vm1361, %v2395, 0.0
      %2404 = vadd.xlane.f32.xlu0 %v2403
      %v2405 = vpop.xlane.xlu0 %2404
      %v2406 = vmul.f32 %v2402, %v1371
      %v2407 = vmul.f32 %v2405, %v1371
      %v2408 = vsub.f32 %v2394, %v2406
      %v2409 = vsub.f32 %v2395, %v2407
      %v2410 = vmul.f32 %v2408, %v2408
      %v2411 = vmul.f32 %v2409, %v2409
      %v2412 = vsel %vm1357, %v2410, 0.0
      %2413 = vadd.xlane.f32.xlu0 %v2412
      %v2414 = vpop.xlane.xlu0 %2413
      %v2415 = vsel %vm1361, %v2411, 0.0
      %2416 = vadd.xlane.f32.xlu0 %v2415
      %v2417 = vpop.xlane.xlu0 %2416
      %v2418 = vmul.f32 %v2414, %v1371
      %v2419 = vmul.f32 %v2417, %v1371
      %v2420 = vadd.f32 %v2418, 1e-05
      %v2421 = vadd.f32 %v2419, 1e-05
      %v2422 = vrsqrt.pop %v2420
      %v2423 = vmul.f32 %v2422, %v2420
      %v2424 = vmul.f32 %v2423, %v2422
      %v2425 = vmul.f32 0.5, %v2424
      %v2426 = vsub.f32 1.5, %v2425
      %v2427 = vmul.f32 %v2422, %v2426
      %vm2428 = vweird.f32 %v2420
      %vm2429 = vweird.f32 %v2422
      %vm2430 = vmor %vm2428, %vm2429
      %v2431 = vsel %vm2430, %v2422, %v2427
      %v2432 = vrsqrt.pop %v2421
      %v2433 = vmul.f32 %v2432, %v2421
      %v2434 = vmul.f32 %v2433, %v2432
      %v2435 = vmul.f32 0.5, %v2434
      %v2436 = vsub.f32 1.5, %v2435
      %v2437 = vmul.f32 %v2432, %v2436
      %vm2438 = vweird.f32 %v2421
      %vm2439 = vweird.f32 %v2432
      %vm2440 = vmor %vm2438, %vm2439
      %v2441 = vsel %vm2440, %v2432, %v2437
      %v2442 = vmul.f32 %v2408, %v2431
      %v2443 = vmul.f32 %v2409, %v2441
      %v2445 = vperm.slane %v2397, 0
      %v2447 = vmul.f32 %v2442, %v2445
      %v2448 = vmul.f32 %v2443, %v2445
      %v2450 = vperm.slane %v2399, 0
      %v2452 = vadd.f32 %v2447, %v2450
      %v2453 = vadd.f32 %v2448, %v2450
      %s2454 = scalar_lea.vmem %s27, 16
      %v2455 = vld [vmem:[%s2454] sm:$0xf]
      %v2456 = vld [vmem:[%s2454 + $0x4] sm:$0xf]
      %v2457 = vld [vmem:[%s2454 + $0x8] sm:$0xf]
      %v2458 = vld [vmem:[%s2454 + $0xc] sm:$0xf]
      %s2459 = scalar_lea.vmem %s29, 1
      %v2460 = vld [vmem:[%s2459] sm:$0x1]
      %s2461 = scalar_lea.vmem %s31, 16
      %v2462 = vld [vmem:[%s2461] sm:$0xf]
      %v2463 = vld [vmem:[%s2461 + $0x4] sm:$0xf]
      %v2464 = vld [vmem:[%s2461 + $0x8] sm:$0xf]
      %v2465 = vld [vmem:[%s2461 + $0xc] sm:$0xf]
      %s2466 = scalar_lea.vmem %s33, 1
      %v2467 = vld [vmem:[%s2466] sm:$0x1]
      %v2468 = vpack.c.bf16 %v2453, %v2452
      %v2470 = vperm.slane %v2460, 0
      %v2476 = vunpack.c.l.b16 %v2455
      %v2477 = vunpack.c.l.b16 %v2456
      %v2478 = vunpack.c.l.b16 %v2457
      %v2479 = vunpack.c.l.b16 %v2458
      %v2480 = vpack.c.b16 %v2477, %v2476
      %v2481 = vpack.c.b16 %v2479, %v2478
      %v2485 = vsel %vm1357, %v2468, 0
      %2487 = vmatpush.bf16.msra.mxu0 0
      %2488 = vmatpush.bf16.msra.mxu0 0
      %2489 = vmatpush.bf16.msra.mxu0 0
      %2490 = vmatpush.bf16.msra.mxu0 0
      %2491 = vmatpush.bf16.msra.mxu0 0
      %2492 = vmatpush.bf16.msra.mxu0 0
      %2493 = vmatpush.bf16.msra.mxu0 %v2481
      %2494 = vmatpush.bf16.msra.mxu0 %v2480
      %2495 = vmatmul.bf16.gmra.mxu0 %v2485
      %v2496 = vpop.f32.mrf.mxu0
      %v2497 = vadd.f32 %v2470, %v2496
      %v2498 = vpop.f32.mrf.mxu0
      %v2499 = vadd.f32 %v2470, %v2498
      %2500 = vdwg.mxu0
      %v2501 = vmul.f32 %v2497, 0.5
      %v2502 = vmul.f32 %v2499, 0.5
      %v2503 = vpack.c.bf16 %v2502, %v2501
      %v2504 = vpack.c.bf16 %v2499, %v2497
      %2506 = vrot.lane.b32.xlu0 %v2504, 96
      %v2507 = vpop.permute.xlu0 %2506
      %v2509 = vsel %vm1470, %v2503, 0
      %v2512 = vsel %vm1470, %v2507, 0
      %2514 = vmatpush.bf16.xpose.msra.mxu0 0
      %2515 = vmatpush.bf16.xpose.msra.mxu0 0
      %2516 = vmatpush.bf16.xpose.msra.mxu0 0
      %2517 = vmatpush.bf16.xpose.msra.mxu0 0
      %2518 = vmatpush.bf16.xpose.msra.mxu0 0
      %2519 = vmatpush.bf16.xpose.msra.mxu0 0
      %2520 = vmatpush.bf16.xpose.msra.mxu0 0
      %2521 = vmatpush.bf16.xpose.msra.mxu0 %v2512
      %2522 = vmatmul.bf16.gmra.mxu0 %v2509
      %v2523 = vpop.f32.mrf.mxu0
      %v2524 = vadd.f32 0.0, %v2523
      %v2525 = vpop.f32.mrf.mxu0
      %v2526 = vadd.f32 0.0, %v2525
      %2527 = vdwg.mxu0
      %v2528 = vsel %vm1491, %v2524, -inf
      %2529 = vmax.xlane.f32.xlu0 %v2528
      %v2530 = vpop.xlane.xlu0 %2529
      %v2531 = vsel %vm1495, %v2526, -inf
      %2532 = vmax.xlane.f32.xlu0 %v2531
      %v2533 = vpop.xlane.xlu0 %2532
      %v2534 = vsub.f32 %v2524, %v2530
      %v2535 = vsub.f32 %v2526, %v2533
      %v2536 = vmul.f32 %v2534, 1.442695
      %v2537 = vpow.pop %v2536
      %v2538 = vmul.f32 %v2535, 1.442695
      %v2539 = vpow.pop %v2538
      %v2540 = vsel %vm1491, %v2537, 0.0
      %2541 = vadd.xlane.f32.xlu0 %v2540
      %v2542 = vpop.xlane.xlu0 %2541
      %v2543 = vsel %vm1495, %v2539, 0.0
      %2544 = vadd.xlane.f32.xlu0 %v2543
      %v2545 = vpop.xlane.xlu0 %2544
      %v2546 = vpack.c.bf16 %v2539, %v2537
      %2547 = vrot.lane.b32.xlu0 %v2504, 64
      %v2548 = vpop.permute.xlu0 %2547
      %v2550 = vsel %vm1491, %v2546, 0
      %v2553 = vand.u32 %v2548, %v1520
      %2555 = vmatpush.bf16.msra.mxu0 0
      %2556 = vmatpush.bf16.msra.mxu0 0
      %2557 = vmatpush.bf16.msra.mxu0 0
      %2558 = vmatpush.bf16.msra.mxu0 0
      %2559 = vmatpush.bf16.msra.mxu0 0
      %2560 = vmatpush.bf16.msra.mxu0 0
      %2561 = vmatpush.bf16.msra.mxu0 0
      %2562 = vmatpush.bf16.msra.mxu0 %v2553
      %2563 = vmatmul.bf16.gmra.mxu0 %v2550
      %v2564 = vpop.f32.mrf.mxu0
      %v2565 = vadd.f32 0.0, %v2564
      %v2566 = vpop.f32.mrf.mxu0
      %v2567 = vadd.f32 0.0, %v2566
      %2568 = vdwg.mxu0
      %v2569 = vrcp.pop %v2542
      %v2570 = vrcp.pop %v2545
      %v2571 = vmul.f32 %v2565, %v2569
      %v2572 = vmul.f32 %v2567, %v2570
      %2574 = vrot.lane.b32.xlu0 %v2503, 124
      %v2575 = vpop.permute.xlu0 %2574
      %2576 = vrot.lane.b32.xlu0 %v2504, 92
      %v2577 = vpop.permute.xlu0 %2576
      %v2579 = vsel %vm1470, %v2575, 0
      %v2582 = vsel %vm1470, %v2577, 0
      %2584 = vmatpush.bf16.xpose.msra.mxu0 0
      %2585 = vmatpush.bf16.xpose.msra.mxu0 0
      %2586 = vmatpush.bf16.xpose.msra.mxu0 0
      %2587 = vmatpush.bf16.xpose.msra.mxu0 0
      %2588 = vmatpush.bf16.xpose.msra.mxu0 0
      %2589 = vmatpush.bf16.xpose.msra.mxu0 0
      %2590 = vmatpush.bf16.xpose.msra.mxu0 0
      %2591 = vmatpush.bf16.xpose.msra.mxu0 %v2582
      %2592 = vmatmul.bf16.gmra.mxu0 %v2579
      %v2593 = vpop.f32.mrf.mxu0
      %v2594 = vadd.f32 0.0, %v2593
      %v2595 = vpop.f32.mrf.mxu0
      %v2596 = vadd.f32 0.0, %v2595
      %2597 = vdwg.mxu0
      %v2598 = vsel %vm1491, %v2594, -inf
      %2599 = vmax.xlane.f32.xlu0 %v2598
      %v2600 = vpop.xlane.xlu0 %2599
      %v2601 = vsel %vm1495, %v2596, -inf
      %2602 = vmax.xlane.f32.xlu0 %v2601
      %v2603 = vpop.xlane.xlu0 %2602
      %v2604 = vsub.f32 %v2594, %v2600
      %v2605 = vsub.f32 %v2596, %v2603
      %v2606 = vmul.f32 %v2604, 1.442695
      %v2607 = vpow.pop %v2606
      %v2608 = vmul.f32 %v2605, 1.442695
      %v2609 = vpow.pop %v2608
      %v2610 = vsel %vm1491, %v2607, 0.0
      %2611 = vadd.xlane.f32.xlu0 %v2610
      %v2612 = vpop.xlane.xlu0 %2611
      %v2613 = vsel %vm1495, %v2609, 0.0
      %2614 = vadd.xlane.f32.xlu0 %v2613
      %v2615 = vpop.xlane.xlu0 %2614
      %v2616 = vpack.c.bf16 %v2609, %v2607
      %2617 = vrot.lane.b32.xlu0 %v2504, 60
      %v2618 = vpop.permute.xlu0 %2617
      %v2620 = vsel %vm1491, %v2616, 0
      %v2623 = vand.u32 %v2618, %v1520
      %2625 = vmatpush.bf16.msra.mxu0 0
      %2626 = vmatpush.bf16.msra.mxu0 0
      %2627 = vmatpush.bf16.msra.mxu0 0
      %2628 = vmatpush.bf16.msra.mxu0 0
      %2629 = vmatpush.bf16.msra.mxu0 0
      %2630 = vmatpush.bf16.msra.mxu0 0
      %2631 = vmatpush.bf16.msra.mxu0 0
      %2632 = vmatpush.bf16.msra.mxu0 %v2623
      %2633 = vmatmul.bf16.gmra.mxu0 %v2620
      %v2634 = vpop.f32.mrf.mxu0
      %v2635 = vadd.f32 0.0, %v2634
      %v2636 = vpop.f32.mrf.mxu0
      %v2637 = vadd.f32 0.0, %v2636
      %2638 = vdwg.mxu0
      %v2639 = vrcp.pop %v2612
      %v2640 = vrcp.pop %v2615
      %v2641 = vmul.f32 %v2635, %v2639
      %v2642 = vmul.f32 %v2637, %v2640
      %2643 = vrot.lane.b32.xlu0 %v2503, 120
      %v2644 = vpop.permute.xlu0 %2643
      %2645 = vrot.lane.b32.xlu0 %v2504, 88
      %v2646 = vpop.permute.xlu0 %2645
      %v2648 = vsel %vm1470, %v2644, 0
      %v2651 = vsel %vm1470, %v2646, 0
      %2653 = vmatpush.bf16.xpose.msra.mxu0 0
      %2654 = vmatpush.bf16.xpose.msra.mxu0 0
      %2655 = vmatpush.bf16.xpose.msra.mxu0 0
      %2656 = vmatpush.bf16.xpose.msra.mxu0 0
      %2657 = vmatpush.bf16.xpose.msra.mxu0 0
      %2658 = vmatpush.bf16.xpose.msra.mxu0 0
      %2659 = vmatpush.bf16.xpose.msra.mxu0 0
      %2660 = vmatpush.bf16.xpose.msra.mxu0 %v2651
      %2661 = vmatmul.bf16.gmra.mxu0 %v2648
      %v2662 = vpop.f32.mrf.mxu0
      %v2663 = vadd.f32 0.0, %v2662
      %v2664 = vpop.f32.mrf.mxu0
      %v2665 = vadd.f32 0.0, %v2664
      %2666 = vdwg.mxu0
      %v2667 = vsel %vm1491, %v2663, -inf
      %2668 = vmax.xlane.f32.xlu0 %v2667
      %v2669 = vpop.xlane.xlu0 %2668
      %v2670 = vsel %vm1495, %v2665, -inf
      %2671 = vmax.xlane.f32.xlu0 %v2670
      %v2672 = vpop.xlane.xlu0 %2671
      %v2673 = vsub.f32 %v2663, %v2669
      %v2674 = vsub.f32 %v2665, %v2672
      %v2675 = vmul.f32 %v2673, 1.442695
      %v2676 = vpow.pop %v2675
      %v2677 = vmul.f32 %v2674, 1.442695
      %v2678 = vpow.pop %v2677
      %v2679 = vsel %vm1491, %v2676, 0.0
      %2680 = vadd.xlane.f32.xlu0 %v2679
      %v2681 = vpop.xlane.xlu0 %2680
      %v2682 = vsel %vm1495, %v2678, 0.0
      %2683 = vadd.xlane.f32.xlu0 %v2682
      %v2684 = vpop.xlane.xlu0 %2683
      %v2685 = vpack.c.bf16 %v2678, %v2676
      %2686 = vrot.lane.b32.xlu0 %v2504, 56
      %v2687 = vpop.permute.xlu0 %2686
      %v2689 = vsel %vm1491, %v2685, 0
      %v2692 = vand.u32 %v2687, %v1520
      %2694 = vmatpush.bf16.msra.mxu0 0
      %2695 = vmatpush.bf16.msra.mxu0 0
      %2696 = vmatpush.bf16.msra.mxu0 0
      %2697 = vmatpush.bf16.msra.mxu0 0
      %2698 = vmatpush.bf16.msra.mxu0 0
      %2699 = vmatpush.bf16.msra.mxu0 0
      %2700 = vmatpush.bf16.msra.mxu0 0
      %2701 = vmatpush.bf16.msra.mxu0 %v2692
      %2702 = vmatmul.bf16.gmra.mxu0 %v2689
      %v2703 = vpop.f32.mrf.mxu0
      %v2704 = vadd.f32 0.0, %v2703
      %v2705 = vpop.f32.mrf.mxu0
      %v2706 = vadd.f32 0.0, %v2705
      %2707 = vdwg.mxu0
      %v2708 = vrcp.pop %v2681
      %v2709 = vrcp.pop %v2684
      %v2710 = vmul.f32 %v2704, %v2708
      %v2711 = vmul.f32 %v2706, %v2709
      %2712 = vrot.lane.b32.xlu0 %v2503, 116
      %v2713 = vpop.permute.xlu0 %2712
      %2714 = vrot.lane.b32.xlu0 %v2504, 84
      %v2715 = vpop.permute.xlu0 %2714
      %v2717 = vsel %vm1470, %v2713, 0
      %v2720 = vsel %vm1470, %v2715, 0
      %2722 = vmatpush.bf16.xpose.msra.mxu0 0
      %2723 = vmatpush.bf16.xpose.msra.mxu0 0
      %2724 = vmatpush.bf16.xpose.msra.mxu0 0
      %2725 = vmatpush.bf16.xpose.msra.mxu0 0
      %2726 = vmatpush.bf16.xpose.msra.mxu0 0
      %2727 = vmatpush.bf16.xpose.msra.mxu0 0
      %2728 = vmatpush.bf16.xpose.msra.mxu0 0
      %2729 = vmatpush.bf16.xpose.msra.mxu0 %v2720
      %2730 = vmatmul.bf16.gmra.mxu0 %v2717
      %v2731 = vpop.f32.mrf.mxu0
      %v2732 = vadd.f32 0.0, %v2731
      %v2733 = vpop.f32.mrf.mxu0
      %v2734 = vadd.f32 0.0, %v2733
      %2735 = vdwg.mxu0
      %v2736 = vsel %vm1491, %v2732, -inf
      %2737 = vmax.xlane.f32.xlu0 %v2736
      %v2738 = vpop.xlane.xlu0 %2737
      %v2739 = vsel %vm1495, %v2734, -inf
      %2740 = vmax.xlane.f32.xlu0 %v2739
      %v2741 = vpop.xlane.xlu0 %2740
      %v2742 = vsub.f32 %v2732, %v2738
      %v2743 = vsub.f32 %v2734, %v2741
      %v2744 = vmul.f32 %v2742, 1.442695
      %v2745 = vpow.pop %v2744
      %v2746 = vmul.f32 %v2743, 1.442695
      %v2747 = vpow.pop %v2746
      %v2748 = vsel %vm1491, %v2745, 0.0
      %2749 = vadd.xlane.f32.xlu0 %v2748
      %v2750 = vpop.xlane.xlu0 %2749
      %v2751 = vsel %vm1495, %v2747, 0.0
      %2752 = vadd.xlane.f32.xlu0 %v2751
      %v2753 = vpop.xlane.xlu0 %2752
      %v2754 = vpack.c.bf16 %v2747, %v2745
      %2755 = vrot.lane.b32.xlu0 %v2504, 52
      %v2756 = vpop.permute.xlu0 %2755
      %v2758 = vsel %vm1491, %v2754, 0
      %v2761 = vand.u32 %v2756, %v1520
      %2763 = vmatpush.bf16.msra.mxu0 0
      %2764 = vmatpush.bf16.msra.mxu0 0
      %2765 = vmatpush.bf16.msra.mxu0 0
      %2766 = vmatpush.bf16.msra.mxu0 0
      %2767 = vmatpush.bf16.msra.mxu0 0
      %2768 = vmatpush.bf16.msra.mxu0 0
      %2769 = vmatpush.bf16.msra.mxu0 0
      %2770 = vmatpush.bf16.msra.mxu0 %v2761
      %2771 = vmatmul.bf16.gmra.mxu0 %v2758
      %v2772 = vpop.f32.mrf.mxu0
      %v2773 = vadd.f32 0.0, %v2772
      %v2774 = vpop.f32.mrf.mxu0
      %v2775 = vadd.f32 0.0, %v2774
      %2776 = vdwg.mxu0
      %v2777 = vrcp.pop %v2750
      %v2778 = vrcp.pop %v2753
      %v2779 = vmul.f32 %v2773, %v2777
      %v2780 = vmul.f32 %v2775, %v2778
      %2781 = vrot.lane.b32.xlu0 %v2503, 112
      %v2782 = vpop.permute.xlu0 %2781
      %2783 = vrot.lane.b32.xlu0 %v2504, 80
      %v2784 = vpop.permute.xlu0 %2783
      %v2786 = vsel %vm1470, %v2782, 0
      %v2789 = vsel %vm1470, %v2784, 0
      %2791 = vmatpush.bf16.xpose.msra.mxu0 0
      %2792 = vmatpush.bf16.xpose.msra.mxu0 0
      %2793 = vmatpush.bf16.xpose.msra.mxu0 0
      %2794 = vmatpush.bf16.xpose.msra.mxu0 0
      %2795 = vmatpush.bf16.xpose.msra.mxu0 0
      %2796 = vmatpush.bf16.xpose.msra.mxu0 0
      %2797 = vmatpush.bf16.xpose.msra.mxu0 0
      %2798 = vmatpush.bf16.xpose.msra.mxu0 %v2789
      %2799 = vmatmul.bf16.gmra.mxu0 %v2786
      %v2800 = vpop.f32.mrf.mxu0
      %v2801 = vadd.f32 0.0, %v2800
      %v2802 = vpop.f32.mrf.mxu0
      %v2803 = vadd.f32 0.0, %v2802
      %2804 = vdwg.mxu0
      %v2805 = vsel %vm1491, %v2801, -inf
      %2806 = vmax.xlane.f32.xlu0 %v2805
      %v2807 = vpop.xlane.xlu0 %2806
      %v2808 = vsel %vm1495, %v2803, -inf
      %2809 = vmax.xlane.f32.xlu0 %v2808
      %v2810 = vpop.xlane.xlu0 %2809
      %v2811 = vsub.f32 %v2801, %v2807
      %v2812 = vsub.f32 %v2803, %v2810
      %v2813 = vmul.f32 %v2811, 1.442695
      %v2814 = vpow.pop %v2813
      %v2815 = vmul.f32 %v2812, 1.442695
      %v2816 = vpow.pop %v2815
      %v2817 = vsel %vm1491, %v2814, 0.0
      %2818 = vadd.xlane.f32.xlu0 %v2817
      %v2819 = vpop.xlane.xlu0 %2818
      %v2820 = vsel %vm1495, %v2816, 0.0
      %2821 = vadd.xlane.f32.xlu0 %v2820
      %v2822 = vpop.xlane.xlu0 %2821
      %v2823 = vpack.c.bf16 %v2816, %v2814
      %2824 = vrot.lane.b32.xlu0 %v2504, 48
      %v2825 = vpop.permute.xlu0 %2824
      %v2827 = vsel %vm1491, %v2823, 0
      %v2830 = vand.u32 %v2825, %v1520
      %2832 = vmatpush.bf16.msra.mxu0 0
      %2833 = vmatpush.bf16.msra.mxu0 0
      %2834 = vmatpush.bf16.msra.mxu0 0
      %2835 = vmatpush.bf16.msra.mxu0 0
      %2836 = vmatpush.bf16.msra.mxu0 0
      %2837 = vmatpush.bf16.msra.mxu0 0
      %2838 = vmatpush.bf16.msra.mxu0 0
      %2839 = vmatpush.bf16.msra.mxu0 %v2830
      %2840 = vmatmul.bf16.gmra.mxu0 %v2827
      %v2841 = vpop.f32.mrf.mxu0
      %v2842 = vadd.f32 0.0, %v2841
      %v2843 = vpop.f32.mrf.mxu0
      %v2844 = vadd.f32 0.0, %v2843
      %2845 = vdwg.mxu0
      %v2846 = vrcp.pop %v2819
      %v2847 = vrcp.pop %v2822
      %v2848 = vmul.f32 %v2842, %v2846
      %v2849 = vmul.f32 %v2844, %v2847
      %2850 = vrot.lane.b32.xlu0 %v2503, 108
      %v2851 = vpop.permute.xlu0 %2850
      %2852 = vrot.lane.b32.xlu0 %v2504, 76
      %v2853 = vpop.permute.xlu0 %2852
      %v2855 = vsel %vm1470, %v2851, 0
      %v2858 = vsel %vm1470, %v2853, 0
      %2860 = vmatpush.bf16.xpose.msra.mxu0 0
      %2861 = vmatpush.bf16.xpose.msra.mxu0 0
      %2862 = vmatpush.bf16.xpose.msra.mxu0 0
      %2863 = vmatpush.bf16.xpose.msra.mxu0 0
      %2864 = vmatpush.bf16.xpose.msra.mxu0 0
      %2865 = vmatpush.bf16.xpose.msra.mxu0 0
      %2866 = vmatpush.bf16.xpose.msra.mxu0 0
      %2867 = vmatpush.bf16.xpose.msra.mxu0 %v2858
      %2868 = vmatmul.bf16.gmra.mxu0 %v2855
      %v2869 = vpop.f32.mrf.mxu0
      %v2870 = vadd.f32 0.0, %v2869
      %v2871 = vpop.f32.mrf.mxu0
      %v2872 = vadd.f32 0.0, %v2871
      %2873 = vdwg.mxu0
      %v2874 = vsel %vm1491, %v2870, -inf
      %2875 = vmax.xlane.f32.xlu0 %v2874
      %v2876 = vpop.xlane.xlu0 %2875
      %v2877 = vsel %vm1495, %v2872, -inf
      %2878 = vmax.xlane.f32.xlu0 %v2877
      %v2879 = vpop.xlane.xlu0 %2878
      %v2880 = vsub.f32 %v2870, %v2876
      %v2881 = vsub.f32 %v2872, %v2879
      %v2882 = vmul.f32 %v2880, 1.442695
      %v2883 = vpow.pop %v2882
      %v2884 = vmul.f32 %v2881, 1.442695
      %v2885 = vpow.pop %v2884
      %v2886 = vsel %vm1491, %v2883, 0.0
      %2887 = vadd.xlane.f32.xlu0 %v2886
      %v2888 = vpop.xlane.xlu0 %2887
      %v2889 = vsel %vm1495, %v2885, 0.0
      %2890 = vadd.xlane.f32.xlu0 %v2889
      %v2891 = vpop.xlane.xlu0 %2890
      %v2892 = vpack.c.bf16 %v2885, %v2883
      %2893 = vrot.lane.b32.xlu0 %v2504, 44
      %v2894 = vpop.permute.xlu0 %2893
      %v2896 = vsel %vm1491, %v2892, 0
      %v2899 = vand.u32 %v2894, %v1520
      %2901 = vmatpush.bf16.msra.mxu0 0
      %2902 = vmatpush.bf16.msra.mxu0 0
      %2903 = vmatpush.bf16.msra.mxu0 0
      %2904 = vmatpush.bf16.msra.mxu0 0
      %2905 = vmatpush.bf16.msra.mxu0 0
      %2906 = vmatpush.bf16.msra.mxu0 0
      %2907 = vmatpush.bf16.msra.mxu0 0
      %2908 = vmatpush.bf16.msra.mxu0 %v2899
      %2909 = vmatmul.bf16.gmra.mxu0 %v2896
      %v2910 = vpop.f32.mrf.mxu0
      %v2911 = vadd.f32 0.0, %v2910
      %v2912 = vpop.f32.mrf.mxu0
      %v2913 = vadd.f32 0.0, %v2912
      %2914 = vdwg.mxu0
      %v2915 = vrcp.pop %v2888
      %v2916 = vrcp.pop %v2891
      %v2917 = vmul.f32 %v2911, %v2915
      %v2918 = vmul.f32 %v2913, %v2916
      %2919 = vrot.lane.b32.xlu0 %v2503, 104
      %v2920 = vpop.permute.xlu0 %2919
      %2921 = vrot.lane.b32.xlu0 %v2504, 72
      %v2922 = vpop.permute.xlu0 %2921
      %v2924 = vsel %vm1470, %v2920, 0
      %v2927 = vsel %vm1470, %v2922, 0
      %2929 = vmatpush.bf16.xpose.msra.mxu0 0
      %2930 = vmatpush.bf16.xpose.msra.mxu0 0
      %2931 = vmatpush.bf16.xpose.msra.mxu0 0
      %2932 = vmatpush.bf16.xpose.msra.mxu0 0
      %2933 = vmatpush.bf16.xpose.msra.mxu0 0
      %2934 = vmatpush.bf16.xpose.msra.mxu0 0
      %2935 = vmatpush.bf16.xpose.msra.mxu0 0
      %2936 = vmatpush.bf16.xpose.msra.mxu0 %v2927
      %2937 = vmatmul.bf16.gmra.mxu0 %v2924
      %v2938 = vpop.f32.mrf.mxu0
      %v2939 = vadd.f32 0.0, %v2938
      %v2940 = vpop.f32.mrf.mxu0
      %v2941 = vadd.f32 0.0, %v2940
      %2942 = vdwg.mxu0
      %v2943 = vsel %vm1491, %v2939, -inf
      %2944 = vmax.xlane.f32.xlu0 %v2943
      %v2945 = vpop.xlane.xlu0 %2944
      %v2946 = vsel %vm1495, %v2941, -inf
      %2947 = vmax.xlane.f32.xlu0 %v2946
      %v2948 = vpop.xlane.xlu0 %2947
      %v2949 = vsub.f32 %v2939, %v2945
      %v2950 = vsub.f32 %v2941, %v2948
      %v2951 = vmul.f32 %v2949, 1.442695
      %v2952 = vpow.pop %v2951
      %v2953 = vmul.f32 %v2950, 1.442695
      %v2954 = vpow.pop %v2953
      %v2955 = vsel %vm1491, %v2952, 0.0
      %2956 = vadd.xlane.f32.xlu0 %v2955
      %v2957 = vpop.xlane.xlu0 %2956
      %v2958 = vsel %vm1495, %v2954, 0.0
      %2959 = vadd.xlane.f32.xlu0 %v2958
      %v2960 = vpop.xlane.xlu0 %2959
      %v2961 = vpack.c.bf16 %v2954, %v2952
      %2962 = vrot.lane.b32.xlu0 %v2504, 40
      %v2963 = vpop.permute.xlu0 %2962
      %v2965 = vsel %vm1491, %v2961, 0
      %v2968 = vand.u32 %v2963, %v1520
      %2970 = vmatpush.bf16.msra.mxu0 0
      %2971 = vmatpush.bf16.msra.mxu0 0
      %2972 = vmatpush.bf16.msra.mxu0 0
      %2973 = vmatpush.bf16.msra.mxu0 0
      %2974 = vmatpush.bf16.msra.mxu0 0
      %2975 = vmatpush.bf16.msra.mxu0 0
      %2976 = vmatpush.bf16.msra.mxu0 0
      %2977 = vmatpush.bf16.msra.mxu0 %v2968
      %2978 = vmatmul.bf16.gmra.mxu0 %v2965
      %v2979 = vpop.f32.mrf.mxu0
      %v2980 = vadd.f32 0.0, %v2979
      %v2981 = vpop.f32.mrf.mxu0
      %v2982 = vadd.f32 0.0, %v2981
      %2983 = vdwg.mxu0
      %v2984 = vrcp.pop %v2957
      %v2985 = vrcp.pop %v2960
      %v2986 = vmul.f32 %v2980, %v2984
      %v2987 = vmul.f32 %v2982, %v2985
      %2988 = vrot.lane.b32.xlu0 %v2503, 100
      %v2989 = vpop.permute.xlu0 %2988
      %2990 = vrot.lane.b32.xlu0 %v2504, 68
      %v2991 = vpop.permute.xlu0 %2990
      %v2993 = vsel %vm1470, %v2989, 0
      %v2996 = vsel %vm1470, %v2991, 0
      %2998 = vmatpush.bf16.xpose.msra.mxu0 0
      %2999 = vmatpush.bf16.xpose.msra.mxu0 0
      %3000 = vmatpush.bf16.xpose.msra.mxu0 0
      %3001 = vmatpush.bf16.xpose.msra.mxu0 0
      %3002 = vmatpush.bf16.xpose.msra.mxu0 0
      %3003 = vmatpush.bf16.xpose.msra.mxu0 0
      %3004 = vmatpush.bf16.xpose.msra.mxu0 0
      %3005 = vmatpush.bf16.xpose.msra.mxu0 %v2996
      %3006 = vmatmul.bf16.gmra.mxu0 %v2993
      %v3007 = vpop.f32.mrf.mxu0
      %v3008 = vadd.f32 0.0, %v3007
      %v3009 = vpop.f32.mrf.mxu0
      %v3010 = vadd.f32 0.0, %v3009
      %3011 = vdwg.mxu0
      %v3012 = vsel %vm1491, %v3008, -inf
      %3013 = vmax.xlane.f32.xlu0 %v3012
      %v3014 = vpop.xlane.xlu0 %3013
      %v3015 = vsel %vm1495, %v3010, -inf
      %3016 = vmax.xlane.f32.xlu0 %v3015
      %v3017 = vpop.xlane.xlu0 %3016
      %v3018 = vsub.f32 %v3008, %v3014
      %v3019 = vsub.f32 %v3010, %v3017
      %v3020 = vmul.f32 %v3018, 1.442695
      %v3021 = vpow.pop %v3020
      %v3022 = vmul.f32 %v3019, 1.442695
      %v3023 = vpow.pop %v3022
      %v3024 = vsel %vm1491, %v3021, 0.0
      %3025 = vadd.xlane.f32.xlu0 %v3024
      %v3026 = vpop.xlane.xlu0 %3025
      %v3027 = vsel %vm1495, %v3023, 0.0
      %3028 = vadd.xlane.f32.xlu0 %v3027
      %v3029 = vpop.xlane.xlu0 %3028
      %v3030 = vpack.c.bf16 %v3023, %v3021
      %3031 = vrot.lane.b32.xlu0 %v2504, 36
      %v3032 = vpop.permute.xlu0 %3031
      %v3034 = vsel %vm1491, %v3030, 0
      %v3037 = vand.u32 %v3032, %v1520
      %3039 = vmatpush.bf16.msra.mxu0 0
      %3040 = vmatpush.bf16.msra.mxu0 0
      %3041 = vmatpush.bf16.msra.mxu0 0
      %3042 = vmatpush.bf16.msra.mxu0 0
      %3043 = vmatpush.bf16.msra.mxu0 0
      %3044 = vmatpush.bf16.msra.mxu0 0
      %3045 = vmatpush.bf16.msra.mxu0 0
      %3046 = vmatpush.bf16.msra.mxu0 %v3037
      %3047 = vmatmul.bf16.gmra.mxu0 %v3034
      %v3048 = vpop.f32.mrf.mxu0
      %v3049 = vadd.f32 0.0, %v3048
      %v3050 = vpop.f32.mrf.mxu0
      %v3051 = vadd.f32 0.0, %v3050
      %3052 = vdwg.mxu0
      %v3053 = vrcp.pop %v3026
      %v3054 = vrcp.pop %v3029
      %v3055 = vmul.f32 %v3049, %v3053
      %v3056 = vmul.f32 %v3051, %v3054
      %3059 = vrot.lane.b32.xlu0 %v2641, 4
      %v3060 = vpop.permute.xlu0 %3059
      %3061 = vrot.lane.b32.xlu0 %v2642, 4
      %v3062 = vpop.permute.xlu0 %3061
      %3067 = vrot.lane.b32.xlu0 %v2710, 8
      %v3068 = vpop.permute.xlu0 %3067
      %3069 = vrot.lane.b32.xlu0 %v2711, 8
      %v3070 = vpop.permute.xlu0 %3069
      %3075 = vrot.lane.b32.xlu0 %v2779, 12
      %v3076 = vpop.permute.xlu0 %3075
      %3077 = vrot.lane.b32.xlu0 %v2780, 12
      %v3078 = vpop.permute.xlu0 %3077
      %3083 = vrot.lane.b32.xlu0 %v2848, 16
      %v3084 = vpop.permute.xlu0 %3083
      %3085 = vrot.lane.b32.xlu0 %v2849, 16
      %v3086 = vpop.permute.xlu0 %3085
      %3091 = vrot.lane.b32.xlu0 %v2917, 20
      %v3092 = vpop.permute.xlu0 %3091
      %3093 = vrot.lane.b32.xlu0 %v2918, 20
      %v3094 = vpop.permute.xlu0 %3093
      %3099 = vrot.lane.b32.xlu0 %v2986, 24
      %v3100 = vpop.permute.xlu0 %3099
      %3101 = vrot.lane.b32.xlu0 %v2987, 24
      %v3102 = vpop.permute.xlu0 %3101
      %3107 = vrot.lane.b32.xlu0 %v3055, 28
      %v3108 = vpop.permute.xlu0 %3107
      %3109 = vrot.lane.b32.xlu0 %v3056, 28
      %v3110 = vpop.permute.xlu0 %3109
      %v3113 = vsel %vm1470, %v2571, %v3060
      %v3114 = vsel %vm1470, %v2572, %v3062
      %v3115 = vsel %vm2084, %v3113, %v3068
      %v3116 = vsel %vm2084, %v3114, %v3070
      %v3117 = vsel %vm2087, %v3115, %v3076
      %v3118 = vsel %vm2087, %v3116, %v3078
      %v3119 = vsel %vm2090, %v3117, %v3084
      %v3120 = vsel %vm2090, %v3118, %v3086
      %v3121 = vsel %vm2093, %v3119, %v3092
      %v3122 = vsel %vm2093, %v3120, %v3094
      %v3123 = vsel %vm2096, %v3121, %v3100
      %v3124 = vsel %vm2096, %v3122, %v3102
      %v3125 = vsel %vm2099, %v3123, %v3108
      %v3126 = vsel %vm2099, %v3124, %v3110
      %v3127 = vpack.c.bf16 %v3126, %v3125
      %v3129 = vperm.slane %v2467, 0
      %v3135 = vunpack.c.l.b16 %v2462
      %v3136 = vunpack.c.l.b16 %v2463
      %v3137 = vunpack.c.l.b16 %v2464
      %v3138 = vunpack.c.l.b16 %v2465
      %v3139 = vpack.c.b16 %v3136, %v3135
      %v3140 = vpack.c.b16 %v3138, %v3137
      %v3144 = vsel %vm1357, %v3127, 0
      %3146 = vmatpush.bf16.msra.mxu0 0
      %3147 = vmatpush.bf16.msra.mxu0 0
      %3148 = vmatpush.bf16.msra.mxu0 0
      %3149 = vmatpush.bf16.msra.mxu0 0
      %3150 = vmatpush.bf16.msra.mxu0 0
      %3151 = vmatpush.bf16.msra.mxu0 0
      %3152 = vmatpush.bf16.msra.mxu0 %v3140
      %3153 = vmatpush.bf16.msra.mxu0 %v3139
      %3154 = vmatmul.bf16.gmra.mxu0 %v3144
      %v3155 = vpop.f32.mrf.mxu0
      %v3156 = vadd.f32 %v3129, %v3155
      %v3157 = vpop.f32.mrf.mxu0
      %v3158 = vadd.f32 %v3129, %v3157
      %3159 = vdwg.mxu0
      %v3160 = vadd.f32 %v2394, %v3156
      %v3161 = vadd.f32 %v2395, %v3158
      %s3162 = scalar_lea.vmem %s35, 1
      %v3163 = vld [vmem:[%s3162] sm:$0x1]
      %s3164 = scalar_lea.vmem %s37, 1
      %v3165 = vld [vmem:[%s3164] sm:$0x1]
      %v3166 = vsel %vm1357, %v3160, 0.0
      %3167 = vadd.xlane.f32.xlu0 %v3166
      %v3168 = vpop.xlane.xlu0 %3167
      %v3169 = vsel %vm1361, %v3161, 0.0
      %3170 = vadd.xlane.f32.xlu0 %v3169
      %v3171 = vpop.xlane.xlu0 %3170
      %v3172 = vmul.f32 %v3168, %v1371
      %v3173 = vmul.f32 %v3171, %v1371
      %v3174 = vsub.f32 %v3160, %v3172
      %v3175 = vsub.f32 %v3161, %v3173
      %v3176 = vmul.f32 %v3174, %v3174
      %v3177 = vmul.f32 %v3175, %v3175
      %v3178 = vsel %vm1357, %v3176, 0.0
      %3179 = vadd.xlane.f32.xlu0 %v3178
      %v3180 = vpop.xlane.xlu0 %3179
      %v3181 = vsel %vm1361, %v3177, 0.0
      %3182 = vadd.xlane.f32.xlu0 %v3181
      %v3183 = vpop.xlane.xlu0 %3182
      %v3184 = vmul.f32 %v3180, %v1371
      %v3185 = vmul.f32 %v3183, %v1371
      %v3186 = vadd.f32 %v3184, 1e-05
      %v3187 = vadd.f32 %v3185, 1e-05
      %v3188 = vrsqrt.pop %v3186
      %v3189 = vmul.f32 %v3188, %v3186
      %v3190 = vmul.f32 %v3189, %v3188
      %v3191 = vmul.f32 0.5, %v3190
      %v3192 = vsub.f32 1.5, %v3191
      %v3193 = vmul.f32 %v3188, %v3192
      %vm3194 = vweird.f32 %v3186
      %vm3195 = vweird.f32 %v3188
      %vm3196 = vmor %vm3194, %vm3195
      %v3197 = vsel %vm3196, %v3188, %v3193
      %v3198 = vrsqrt.pop %v3187
      %v3199 = vmul.f32 %v3198, %v3187
      %v3200 = vmul.f32 %v3199, %v3198
      %v3201 = vmul.f32 0.5, %v3200
      %v3202 = vsub.f32 1.5, %v3201
      %v3203 = vmul.f32 %v3198, %v3202
      %vm3204 = vweird.f32 %v3187
      %vm3205 = vweird.f32 %v3198
      %vm3206 = vmor %vm3204, %vm3205
      %v3207 = vsel %vm3206, %v3198, %v3203
      %v3208 = vmul.f32 %v3174, %v3197
      %v3209 = vmul.f32 %v3175, %v3207
      %v3211 = vperm.slane %v3163, 0
      %v3213 = vmul.f32 %v3208, %v3211
      %v3214 = vmul.f32 %v3209, %v3211
      %v3216 = vperm.slane %v3165, 0
      %v3218 = vadd.f32 %v3213, %v3216
      %v3219 = vadd.f32 %v3214, %v3216
      %s3220 = scalar_lea.vmem %s39, 16
      %v3221 = vld [vmem:[%s3220] sm:$0xf]
      %v3222 = vld [vmem:[%s3220 + $0x4] sm:$0xf]
      %v3223 = vld [vmem:[%s3220 + $0x8] sm:$0xf]
      %v3224 = vld [vmem:[%s3220 + $0xc] sm:$0xf]
      %s3225 = scalar_lea.vmem %s41, 1
      %v3226 = vld [vmem:[%s3225] sm:$0x1]
      %s3227 = scalar_lea.vmem %s43, 64
      %v3228 = vld [vmem:[%s3227] sm:$0xf]
      %v3229 = vld [vmem:[%s3227 + $0x4] sm:$0xf]
      %v3230 = vld [vmem:[%s3227 + $0x8] sm:$0xf]
      %v3231 = vld [vmem:[%s3227 + $0xc] sm:$0xf]
      %v3232 = vld [vmem:[%s3227 + $0x10] sm:$0xf]
      %v3233 = vld [vmem:[%s3227 + $0x14] sm:$0xf]
      %v3234 = vld [vmem:[%s3227 + $0x18] sm:$0xf]
      %v3235 = vld [vmem:[%s3227 + $0x1c] sm:$0xf]
      %v3236 = vld [vmem:[%s3227 + $0x20] sm:$0xf]
      %v3237 = vld [vmem:[%s3227 + $0x24] sm:$0xf]
      %v3238 = vld [vmem:[%s3227 + $0x28] sm:$0xf]
      %v3239 = vld [vmem:[%s3227 + $0x2c] sm:$0xf]
      %v3240 = vld [vmem:[%s3227 + $0x30] sm:$0xf]
      %v3241 = vld [vmem:[%s3227 + $0x34] sm:$0xf]
      %v3242 = vld [vmem:[%s3227 + $0x38] sm:$0xf]
      %v3243 = vld [vmem:[%s3227 + $0x3c] sm:$0xf]
      %s3244 = scalar_lea.vmem %s45, 1
      %v3245 = vld [vmem:[%s3244] sm:$0x1]
      %v3246 = vpack.c.bf16 %v3219, %v3218
      %v3248 = vperm.slane %v3226, 0
      %v3254 = vunpack.c.l.b16 %v3221
      %v3255 = vunpack.c.l.b16 %v3222
      %v3256 = vunpack.c.l.b16 %v3223
      %v3257 = vunpack.c.l.b16 %v3224
      %v3258 = vpack.c.b16 %v3255, %v3254
      %v3259 = vpack.c.b16 %v3257, %v3256
      %v3263 = vsel %vm1357, %v3246, 0
      %3265 = vmatpush.bf16.msra.mxu0 0
      %3266 = vmatpush.bf16.msra.mxu0 0
      %3267 = vmatpush.bf16.msra.mxu0 0
      %3268 = vmatpush.bf16.msra.mxu0 0
      %3269 = vmatpush.bf16.msra.mxu0 0
      %3270 = vmatpush.bf16.msra.mxu0 0
      %3271 = vmatpush.bf16.msra.mxu0 %v3259
      %3272 = vmatpush.bf16.msra.mxu0 %v3258
      %3273 = vmatmul.bf16.gmra.mxu0 %v3263
      %v3274 = vpop.f32.mrf.mxu0
      %v3275 = vadd.f32 %v3248, %v3274
      %v3276 = vpop.f32.mrf.mxu0
      %v3277 = vadd.f32 %v3248, %v3276
      %3278 = vdwg.mxu0
      %v3279 = vmul.f32 %v3275, 0.5
      %v3280 = vmul.f32 %v3277, 0.5
      %v3281 = vmul.f32 %v3275, 0.70710677
      %v3282 = vmul.f32 %v3277, 0.70710677
      %v3283 = vand.u32 2147483647, %v3281
      %v3284 = vand.u32 2147483647, %v3282
      %v3285 = vmul.f32 %v3283, 0.3275911
      %v3286 = vmul.f32 %v3284, 0.3275911
      %v3287 = vadd.f32 %v3285, 1.0
      %v3288 = vadd.f32 %v3286, 1.0
      %v3289 = vrcp.pop %v3287
      %v3290 = vmul.f32 %v3287, %v3289
      %v3291 = vsub.f32 1.0, %v3290
      %v3292 = vmul.f32 %v3289, %v3291
      %v3293 = vadd.f32 %v3289, %v3292
      %vm3294 = vweird.f32 %v3287
      %vm3295 = vweird.f32 %v3289
      %vm3296 = vmor %vm3294, %vm3295
      %v3297 = vsel %vm3296, %v3289, %v3293
      %v3298 = vand.u32 2147483647, %v3287
      %vm3299 = vcmp.eq.f32.partialorder %v3298, 8.507059e+37
      %v3300 = vand.u32 %v3287, 2147483648
      %v3301 = vor.u32 1.1754944e-38, %v3300
      %v3302 = vsel %vm3299, %v3301, %v3297
      %v3303 = vmul.f32 1.0, %v3302
      %v3304 = vrcp.pop %v3288
      %v3305 = vmul.f32 %v3288, %v3304
      %v3306 = vsub.f32 1.0, %v3305
      %v3307 = vmul.f32 %v3304, %v3306
      %v3308 = vadd.f32 %v3304, %v3307
      %vm3309 = vweird.f32 %v3288
      %vm3310 = vweird.f32 %v3304
      %vm3311 = vmor %vm3309, %vm3310
      %v3312 = vsel %vm3311, %v3304, %v3308
      %v3313 = vand.u32 2147483647, %v3288
      %vm3314 = vcmp.eq.f32.partialorder %v3313, 8.507059e+37
      %v3315 = vand.u32 %v3288, 2147483648
      %v3316 = vor.u32 1.1754944e-38, %v3315
      %v3317 = vsel %vm3314, %v3316, %v3312
      %v3318 = vmul.f32 1.0, %v3317
      %v3319 = vmul.f32 %v3303, 1.0614054
      %v3320 = vmul.f32 %v3318, 1.0614054
      %v3321 = vadd.f32 %v3319, -1.4531521
      %v3322 = vadd.f32 %v3320, -1.4531521
      %v3323 = vmul.f32 %v3321, %v3303
      %v3324 = vmul.f32 %v3322, %v3318
      %v3325 = vadd.f32 %v3323, 1.4214138
      %v3326 = vadd.f32 %v3324, 1.4214138
      %v3327 = vmul.f32 %v3325, %v3303
      %v3328 = vmul.f32 %v3326, %v3318
      %v3329 = vadd.f32 %v3327, -0.28449672
      %v3330 = vadd.f32 %v3328, -0.28449672
      %v3331 = vmul.f32 %v3329, %v3303
      %v3332 = vmul.f32 %v3330, %v3318
      %v3333 = vadd.f32 %v3331, 0.2548296
      %v3334 = vadd.f32 %v3332, 0.2548296
      %v3335 = vmul.f32 %v3333, %v3303
      %v3336 = vmul.f32 %v3334, %v3318
      %v3337 = vsub.f32 0.0, %v3283
      %v3338 = vsub.f32 0.0, %v3284
      %v3339 = vmul.f32 %v3337, %v3283
      %v3340 = vmul.f32 %v3338, %v3284
      %v3341 = vmul.f32 %v3339, 1.442695
      %v3342 = vpow.pop %v3341
      %v3343 = vmul.f32 %v3340, 1.442695
      %v3344 = vpow.pop %v3343
      %v3345 = vmul.f32 %v3335, %v3342
      %v3346 = vmul.f32 %v3336, %v3344
      %v3347 = vsub.f32 1.0, %v3345
      %v3348 = vsub.f32 1.0, %v3346
      %vm3349 = vcmp.ge.f32.partialorder %v3281, 0.0
      %vm3350 = vcmp.ge.f32.partialorder %v3282, 0.0
      %v3351 = vsub.f32 0.0, %v3347
      %v3352 = vsub.f32 0.0, %v3348
      %v3353 = vsel %vm3349, %v3347, %v3351
      %v3354 = vsel %vm3350, %v3348, %v3352
      %v3355 = vadd.f32 %v3353, 1.0
      %v3356 = vadd.f32 %v3354, 1.0
      %v3357 = vmul.f32 %v3279, %v3355
      %v3358 = vmul.f32 %v3280, %v3356
      %v3359 = vpack.c.bf16 %v3358, %v3357
      %v3361 = vperm.slane %v3245, 0
      %v3379 = vunpack.c.l.b16 %v3228
      %v3380 = vunpack.c.l.b16 %v3229
      %v3381 = vunpack.c.l.b16 %v3230
      %v3382 = vunpack.c.l.b16 %v3231
      %v3383 = vunpack.c.l.b16 %v3232
      %v3384 = vunpack.c.l.b16 %v3233
      %v3385 = vunpack.c.l.b16 %v3234
      %v3386 = vunpack.c.l.b16 %v3235
      %v3387 = vunpack.c.l.b16 %v3236
      %v3388 = vunpack.c.l.b16 %v3237
      %v3389 = vunpack.c.l.b16 %v3238
      %v3390 = vunpack.c.l.b16 %v3239
      %v3391 = vunpack.c.l.b16 %v3240
      %v3392 = vunpack.c.l.b16 %v3241
      %v3393 = vunpack.c.l.b16 %v3242
      %v3394 = vunpack.c.l.b16 %v3243
      %v3395 = vpack.c.b16 %v3380, %v3379
      %v3396 = vpack.c.b16 %v3382, %v3381
      %v3397 = vpack.c.b16 %v3384, %v3383
      %v3398 = vpack.c.b16 %v3386, %v3385
      %v3399 = vpack.c.b16 %v3388, %v3387
      %v3400 = vpack.c.b16 %v3390, %v3389
      %v3401 = vpack.c.b16 %v3392, %v3391
      %v3402 = vpack.c.b16 %v3394, %v3393
      %3411 = vmatpush.bf16.msra.mxu0 %v3402
      %3412 = vmatpush.bf16.msra.mxu0 %v3401
      %3413 = vmatpush.bf16.msra.mxu0 %v3400
      %3414 = vmatpush.bf16.msra.mxu0 %v3399
      %3415 = vmatpush.bf16.msra.mxu0 %v3398
      %3416 = vmatpush.bf16.msra.mxu0 %v3397
      %3417 = vmatpush.bf16.msra.mxu0 %v3396
      %3418 = vmatpush.bf16.msra.mxu0 %v3395
      %3419 = vmatmul.bf16.gmra.mxu0 %v3359
      %v3420 = vpop.f32.mrf.mxu0
      %v3421 = vadd.f32 %v3361, %v3420
      %v3422 = vpop.f32.mrf.mxu0
      %v3423 = vadd.f32 %v3361, %v3422
      %3424 = vdwg.mxu0
      %v3425 = vadd.f32 %v3160, %v3421
      %v3426 = vadd.f32 %v3161, %v3423
      %v3427 = vld [vmem:[%s9] sm:$0x1]
      %v3428 = vld [vmem:[%s11] sm:$0x1]
      %v3429 = vsel %vm1357, %v3425, 0.0
      %3430 = vadd.xlane.f32.xlu0 %v3429
      %v3431 = vpop.xlane.xlu0 %3430
      %v3432 = vsel %vm1361, %v3426, 0.0
      %3433 = vadd.xlane.f32.xlu0 %v3432
      %v3434 = vpop.xlane.xlu0 %3433
      %v3435 = vmul.f32 %v3431, %v1371
      %v3436 = vmul.f32 %v3434, %v1371
      %v3437 = vsub.f32 %v3425, %v3435
      %v3438 = vsub.f32 %v3426, %v3436
      %v3439 = vmul.f32 %v3437, %v3437
      %v3440 = vmul.f32 %v3438, %v3438
      %v3441 = vsel %vm1357, %v3439, 0.0
      %3442 = vadd.xlane.f32.xlu0 %v3441
      %v3443 = vpop.xlane.xlu0 %3442
      %v3444 = vsel %vm1361, %v3440, 0.0
      %3445 = vadd.xlane.f32.xlu0 %v3444
      %v3446 = vpop.xlane.xlu0 %3445
      %v3447 = vmul.f32 %v3443, %v1371
      %v3448 = vmul.f32 %v3446, %v1371
      %v3449 = vadd.f32 %v3447, 1e-05
      %v3450 = vadd.f32 %v3448, 1e-05
      %v3451 = vrsqrt.pop %v3449
      %v3452 = vmul.f32 %v3451, %v3449
      %v3453 = vmul.f32 %v3452, %v3451
      %v3454 = vmul.f32 0.5, %v3453
      %v3455 = vsub.f32 1.5, %v3454
      %v3456 = vmul.f32 %v3451, %v3455
      %vm3457 = vweird.f32 %v3449
      %vm3458 = vweird.f32 %v3451
      %vm3459 = vmor %vm3457, %vm3458
      %v3460 = vsel %vm3459, %v3451, %v3456
      %v3461 = vrsqrt.pop %v3450
      %v3462 = vmul.f32 %v3461, %v3450
      %v3463 = vmul.f32 %v3462, %v3461
      %v3464 = vmul.f32 0.5, %v3463
      %v3465 = vsub.f32 1.5, %v3464
      %v3466 = vmul.f32 %v3461, %v3465
      %vm3467 = vweird.f32 %v3450
      %vm3468 = vweird.f32 %v3461
      %vm3469 = vmor %vm3467, %vm3468
      %v3470 = vsel %vm3469, %v3461, %v3466
      %v3471 = vmul.f32 %v3437, %v3460
      %v3472 = vmul.f32 %v3438, %v3470
      %v3474 = vperm.slane %v3427, 0
      %v3476 = vmul.f32 %v3471, %v3474
      %v3477 = vmul.f32 %v3472, %v3474
      %v3479 = vperm.slane %v3428, 0
      %v3481 = vadd.f32 %v3476, %v3479
      %v3482 = vadd.f32 %v3477, %v3479
      %v3483 = vld [vmem:[%s7] sm:$0xff]
      %v3484 = vlaneseq
      %v3485 = vshrl.u32 %v3484, 7
      %v3486 = vlaneseq
      %v3487 = vand.u32 %v3486, 127
      %vm3488 = vcmp.gt.s32.totalorder %v3487, %v3485
      %v3489 = vld [vmem:[%s47] sm:$0x1]
      %v3490 = vld [vmem:[%s49] sm:$0x1]
      %v3491 = vsel %vm1357, %v3483, 0.0
      %3492 = vadd.xlane.f32.xlu0 %v3491
      %v3493 = vpop.xlane.xlu0 %3492
      %v3494 = vmul.f32 %v3493, %v1371
      %v3495 = vsub.f32 %v3483, %v3494
      %v3496 = vmul.f32 %v3495, %v3495
      %v3497 = vsel %vm1357, %v3496, 0.0
      %3498 = vadd.xlane.f32.xlu0 %v3497
      %v3499 = vpop.xlane.xlu0 %3498
      %v3500 = vmul.f32 %v3499, %v1371
      %v3501 = vadd.f32 %v3500, 1e-05
      %v3502 = vrsqrt.pop %v3501
      %v3503 = vmul.f32 %v3502, %v3501
      %v3504 = vmul.f32 %v3503, %v3502
      %v3505 = vmul.f32 0.5, %v3504
      %v3506 = vsub.f32 1.5, %v3505
      %v3507 = vmul.f32 %v3502, %v3506
      %vm3508 = vweird.f32 %v3501
      %vm3509 = vweird.f32 %v3502
      %vm3510 = vmor %vm3508, %vm3509
      %v3511 = vsel %vm3510, %v3502, %v3507
      %v3512 = vmul.f32 %v3495, %v3511
      %v3514 = vperm.slane %v3489, 0
      %v3516 = vmul.f32 %v3512, %v3514
      %v3518 = vperm.slane %v3490, 0
      %v3520 = vadd.f32 %v3516, %v3518
      %v3521 = vld [vmem:[%s51] sm:$0xf]
      %v3522 = vld [vmem:[%s51 + $0x4] sm:$0xf]
      %v3523 = vld [vmem:[%s51 + $0x8] sm:$0xf]
      %v3524 = vld [vmem:[%s51 + $0xc] sm:$0xf]
      %v3525 = vld [vmem:[%s53] sm:$0x1]
      %v3526 = vld [vmem:[%s55] sm:$0xf]
      %v3527 = vld [vmem:[%s55 + $0x4] sm:$0xf]
      %v3528 = vld [vmem:[%s55 + $0x8] sm:$0xf]
      %v3529 = vld [vmem:[%s55 + $0xc] sm:$0xf]
      %v3530 = vld [vmem:[%s57] sm:$0x1]
      %v3531 = vpack.c.bf16 %v3520, %v3520
      %v3533 = vperm.slane %v3525, 0
      %v3539 = vunpack.c.l.b16 %v3521
      %v3540 = vunpack.c.l.b16 %v3522
      %v3541 = vunpack.c.l.b16 %v3523
      %v3542 = vunpack.c.l.b16 %v3524
      %v3543 = vpack.c.b16 %v3540, %v3539
      %v3544 = vpack.c.b16 %v3542, %v3541
      %v3548 = vsel %vm1357, %v3531, 0
      %3550 = vmatpush.bf16.msra.mxu0 0
      %3551 = vmatpush.bf16.msra.mxu0 0
      %3552 = vmatpush.bf16.msra.mxu0 0
      %3553 = vmatpush.bf16.msra.mxu0 0
      %3554 = vmatpush.bf16.msra.mxu0 0
      %3555 = vmatpush.bf16.msra.mxu0 0
      %3556 = vmatpush.bf16.msra.mxu0 %v3544
      %3557 = vmatpush.bf16.msra.mxu0 %v3543
      %3558 = vmatmul.bf16.gmra.mxu0 %v3548
      %v3559 = vpop.f32.mrf.mxu0
      %v3560 = vadd.f32 %v3533, %v3559
      %v3561 = vpop.f32.mrf.mxu0
      %3562 = vdwg.mxu0
      %v3563 = vmul.f32 %v3560, 0.35355338
      %v3564 = vpack.c.bf16 %v3563, %v3563
      %v3565 = vpack.c.bf16 %v3560, %v3560
      %3567 = vrot.lane.b32.xlu0 %v3565, 96
      %v3568 = vpop.permute.xlu0 %3567
      %v3570 = vsel %vm2084, %v3564, 0
      %v3573 = vsel %vm2084, %v3568, 0
      %3575 = vmatpush.bf16.xpose.msra.mxu0 0
      %3576 = vmatpush.bf16.xpose.msra.mxu0 0
      %3577 = vmatpush.bf16.xpose.msra.mxu0 0
      %3578 = vmatpush.bf16.xpose.msra.mxu0 0
      %3579 = vmatpush.bf16.xpose.msra.mxu0 0
      %3580 = vmatpush.bf16.xpose.msra.mxu0 0
      %3581 = vmatpush.bf16.xpose.msra.mxu0 0
      %3582 = vmatpush.bf16.xpose.msra.mxu0 %v3573
      %3583 = vmatmul.bf16.gmra.mxu0 %v3570
      %v3584 = vpop.f32.mrf.mxu0
      %v3585 = vadd.f32 0.0, %v3584
      %v3586 = vpop.f32.mrf.mxu0
      %3587 = vdwg.mxu0
      %v3588 = vsel %vm3488, -inf, %v3585
      %v3589 = vsel %vm2084, %v3588, -inf
      %3590 = vmax.xlane.f32.xlu0 %v3589
      %v3591 = vpop.xlane.xlu0 %3590
      %v3592 = vsub.f32 %v3588, %v3591
      %v3593 = vmul.f32 %v3592, 1.442695
      %v3594 = vpow.pop %v3593
      %v3595 = vsel %vm2084, %v3594, 0.0
      %3596 = vadd.xlane.f32.xlu0 %v3595
      %v3597 = vpop.xlane.xlu0 %3596
      %v3598 = vpack.c.bf16 %v3594, %v3594
      %3599 = vrot.lane.b32.xlu0 %v3565, 64
      %v3600 = vpop.permute.xlu0 %3599
      %v3602 = vsel %vm2084, %v3598, 0
      %v3605 = vsel %vm1517, %v3600, 0
      %3607 = vmatpush.bf16.msra.mxu0 0
      %3608 = vmatpush.bf16.msra.mxu0 0
      %3609 = vmatpush.bf16.msra.mxu0 0
      %3610 = vmatpush.bf16.msra.mxu0 0
      %3611 = vmatpush.bf16.msra.mxu0 0
      %3612 = vmatpush.bf16.msra.mxu0 0
      %3613 = vmatpush.bf16.msra.mxu0 0
      %3614 = vmatpush.bf16.msra.mxu0 %v3605
      %3615 = vmatmul.bf16.gmra.mxu0 %v3602
      %v3616 = vpop.f32.mrf.mxu0
      %v3617 = vadd.f32 0.0, %v3616
      %v3618 = vpop.f32.mrf.mxu0
      %3619 = vdwg.mxu0
      %v3620 = vrcp.pop %v3597
      %v3621 = vmul.f32 %v3617, %v3620
      %3623 = vrot.lane.b32.xlu0 %v3564, 120
      %v3624 = vpop.permute.xlu0 %3623
      %3625 = vrot.lane.b32.xlu0 %v3565, 88
      %v3626 = vpop.permute.xlu0 %3625
      %v3628 = vsel %vm2084, %v3624, 0
      %v3631 = vsel %vm2084, %v3626, 0
      %3633 = vmatpush.bf16.xpose.msra.mxu0 0
      %3634 = vmatpush.bf16.xpose.msra.mxu0 0
      %3635 = vmatpush.bf16.xpose.msra.mxu0 0
      %3636 = vmatpush.bf16.xpose.msra.mxu0 0
      %3637 = vmatpush.bf16.xpose.msra.mxu0 0
      %3638 = vmatpush.bf16.xpose.msra.mxu0 0
      %3639 = vmatpush.bf16.xpose.msra.mxu0 0
      %3640 = vmatpush.bf16.xpose.msra.mxu0 %v3631
      %3641 = vmatmul.bf16.gmra.mxu0 %v3628
      %v3642 = vpop.f32.mrf.mxu0
      %v3643 = vadd.f32 0.0, %v3642
      %v3644 = vpop.f32.mrf.mxu0
      %3645 = vdwg.mxu0
      %v3646 = vsel %vm3488, -inf, %v3643
      %v3647 = vsel %vm2084, %v3646, -inf
      %3648 = vmax.xlane.f32.xlu0 %v3647
      %v3649 = vpop.xlane.xlu0 %3648
      %v3650 = vsub.f32 %v3646, %v3649
      %v3651 = vmul.f32 %v3650, 1.442695
      %v3652 = vpow.pop %v3651
      %v3653 = vsel %vm2084, %v3652, 0.0
      %3654 = vadd.xlane.f32.xlu0 %v3653
      %v3655 = vpop.xlane.xlu0 %3654
      %v3656 = vpack.c.bf16 %v3652, %v3652
      %3657 = vrot.lane.b32.xlu0 %v3565, 56
      %v3658 = vpop.permute.xlu0 %3657
      %v3660 = vsel %vm2084, %v3656, 0
      %v3663 = vsel %vm1517, %v3658, 0
      %3665 = vmatpush.bf16.msra.mxu0 0
      %3666 = vmatpush.bf16.msra.mxu0 0
      %3667 = vmatpush.bf16.msra.mxu0 0
      %3668 = vmatpush.bf16.msra.mxu0 0
      %3669 = vmatpush.bf16.msra.mxu0 0
      %3670 = vmatpush.bf16.msra.mxu0 0
      %3671 = vmatpush.bf16.msra.mxu0 0
      %3672 = vmatpush.bf16.msra.mxu0 %v3663
      %3673 = vmatmul.bf16.gmra.mxu0 %v3660
      %v3674 = vpop.f32.mrf.mxu0
      %v3675 = vadd.f32 0.0, %v3674
      %v3676 = vpop.f32.mrf.mxu0
      %3677 = vdwg.mxu0
      %v3678 = vrcp.pop %v3655
      %v3679 = vmul.f32 %v3675, %v3678
      %3680 = vrot.lane.b32.xlu0 %v3564, 112
      %v3681 = vpop.permute.xlu0 %3680
      %3682 = vrot.lane.b32.xlu0 %v3565, 80
      %v3683 = vpop.permute.xlu0 %3682
      %v3685 = vsel %vm2084, %v3681, 0
      %v3688 = vsel %vm2084, %v3683, 0
      %3690 = vmatpush.bf16.xpose.msra.mxu0 0
      %3691 = vmatpush.bf16.xpose.msra.mxu0 0
      %3692 = vmatpush.bf16.xpose.msra.mxu0 0
      %3693 = vmatpush.bf16.xpose.msra.mxu0 0
      %3694 = vmatpush.bf16.xpose.msra.mxu0 0
      %3695 = vmatpush.bf16.xpose.msra.mxu0 0
      %3696 = vmatpush.bf16.xpose.msra.mxu0 0
      %3697 = vmatpush.bf16.xpose.msra.mxu0 %v3688
      %3698 = vmatmul.bf16.gmra.mxu0 %v3685
      %v3699 = vpop.f32.mrf.mxu0
      %v3700 = vadd.f32 0.0, %v3699
      %v3701 = vpop.f32.mrf.mxu0
      %3702 = vdwg.mxu0
      %v3703 = vsel %vm3488, -inf, %v3700
      %v3704 = vsel %vm2084, %v3703, -inf
      %3705 = vmax.xlane.f32.xlu0 %v3704
      %v3706 = vpop.xlane.xlu0 %3705
      %v3707 = vsub.f32 %v3703, %v3706
      %v3708 = vmul.f32 %v3707, 1.442695
      %v3709 = vpow.pop %v3708
      %v3710 = vsel %vm2084, %v3709, 0.0
      %3711 = vadd.xlane.f32.xlu0 %v3710
      %v3712 = vpop.xlane.xlu0 %3711
      %v3713 = vpack.c.bf16 %v3709, %v3709
      %3714 = vrot.lane.b32.xlu0 %v3565, 48
      %v3715 = vpop.permute.xlu0 %3714
      %v3717 = vsel %vm2084, %v3713, 0
      %v3720 = vsel %vm1517, %v3715, 0
      %3722 = vmatpush.bf16.msra.mxu0 0
      %3723 = vmatpush.bf16.msra.mxu0 0
      %3724 = vmatpush.bf16.msra.mxu0 0
      %3725 = vmatpush.bf16.msra.mxu0 0
      %3726 = vmatpush.bf16.msra.mxu0 0
      %3727 = vmatpush.bf16.msra.mxu0 0
      %3728 = vmatpush.bf16.msra.mxu0 0
      %3729 = vmatpush.bf16.msra.mxu0 %v3720
      %3730 = vmatmul.bf16.gmra.mxu0 %v3717
      %v3731 = vpop.f32.mrf.mxu0
      %v3732 = vadd.f32 0.0, %v3731
      %v3733 = vpop.f32.mrf.mxu0
      %3734 = vdwg.mxu0
      %v3735 = vrcp.pop %v3712
      %v3736 = vmul.f32 %v3732, %v3735
      %3737 = vrot.lane.b32.xlu0 %v3564, 104
      %v3738 = vpop.permute.xlu0 %3737
      %3739 = vrot.lane.b32.xlu0 %v3565, 72
      %v3740 = vpop.permute.xlu0 %3739
      %v3742 = vsel %vm2084, %v3738, 0
      %v3745 = vsel %vm2084, %v3740, 0
      %3747 = vmatpush.bf16.xpose.msra.mxu0 0
      %3748 = vmatpush.bf16.xpose.msra.mxu0 0
      %3749 = vmatpush.bf16.xpose.msra.mxu0 0
      %3750 = vmatpush.bf16.xpose.msra.mxu0 0
      %3751 = vmatpush.bf16.xpose.msra.mxu0 0
      %3752 = vmatpush.bf16.xpose.msra.mxu0 0
      %3753 = vmatpush.bf16.xpose.msra.mxu0 0
      %3754 = vmatpush.bf16.xpose.msra.mxu0 %v3745
      %3755 = vmatmul.bf16.gmra.mxu0 %v3742
      %v3756 = vpop.f32.mrf.mxu0
      %v3757 = vadd.f32 0.0, %v3756
      %v3758 = vpop.f32.mrf.mxu0
      %3759 = vdwg.mxu0
      %v3760 = vsel %vm3488, -inf, %v3757
      %v3761 = vsel %vm2084, %v3760, -inf
      %3762 = vmax.xlane.f32.xlu0 %v3761
      %v3763 = vpop.xlane.xlu0 %3762
      %v3764 = vsub.f32 %v3760, %v3763
      %v3765 = vmul.f32 %v3764, 1.442695
      %v3766 = vpow.pop %v3765
      %v3767 = vsel %vm2084, %v3766, 0.0
      %3768 = vadd.xlane.f32.xlu0 %v3767
      %v3769 = vpop.xlane.xlu0 %3768
      %v3770 = vpack.c.bf16 %v3766, %v3766
      %3771 = vrot.lane.b32.xlu0 %v3565, 40
      %v3772 = vpop.permute.xlu0 %3771
      %v3774 = vsel %vm2084, %v3770, 0
      %v3777 = vsel %vm1517, %v3772, 0
      %3779 = vmatpush.bf16.msra.mxu0 0
      %3780 = vmatpush.bf16.msra.mxu0 0
      %3781 = vmatpush.bf16.msra.mxu0 0
      %3782 = vmatpush.bf16.msra.mxu0 0
      %3783 = vmatpush.bf16.msra.mxu0 0
      %3784 = vmatpush.bf16.msra.mxu0 0
      %3785 = vmatpush.bf16.msra.mxu0 0
      %3786 = vmatpush.bf16.msra.mxu0 %v3777
      %3787 = vmatmul.bf16.gmra.mxu0 %v3774
      %v3788 = vpop.f32.mrf.mxu0
      %v3789 = vadd.f32 0.0, %v3788
      %v3790 = vpop.f32.mrf.mxu0
      %3791 = vdwg.mxu0
      %v3792 = vrcp.pop %v3769
      %v3793 = vmul.f32 %v3789, %v3792
      %3795 = vrot.lane.b32.xlu0 %v3679, 8
      %v3796 = vpop.permute.xlu0 %3795
      %3799 = vrot.lane.b32.xlu0 %v3736, 16
      %v3800 = vpop.permute.xlu0 %3799
      %3803 = vrot.lane.b32.xlu0 %v3793, 24
      %v3804 = vpop.permute.xlu0 %3803
      %v3806 = vsel %vm2084, %v3621, %v3796
      %v3807 = vsel %vm2090, %v3806, %v3800
      %v3808 = vsel %vm2096, %v3807, %v3804
      %v3809 = vpack.c.bf16 %v3808, %v3808
      %v3811 = vperm.slane %v3530, 0
      %v3817 = vunpack.c.l.b16 %v3526
      %v3818 = vunpack.c.l.b16 %v3527
      %v3819 = vunpack.c.l.b16 %v3528
      %v3820 = vunpack.c.l.b16 %v3529
      %v3821 = vpack.c.b16 %v3818, %v3817
      %v3822 = vpack.c.b16 %v3820, %v3819
      %v3826 = vsel %vm1357, %v3809, 0
      %3828 = vmatpush.bf16.msra.mxu0 0
      %3829 = vmatpush.bf16.msra.mxu0 0
      %3830 = vmatpush.bf16.msra.mxu0 0
      %3831 = vmatpush.bf16.msra.mxu0 0
      %3832 = vmatpush.bf16.msra.mxu0 0
      %3833 = vmatpush.bf16.msra.mxu0 0
      %3834 = vmatpush.bf16.msra.mxu0 %v3822
      %3835 = vmatpush.bf16.msra.mxu0 %v3821
      %3836 = vmatmul.bf16.gmra.mxu0 %v3826
      %v3837 = vpop.f32.mrf.mxu0
      %v3838 = vadd.f32 %v3811, %v3837
      %v3839 = vpop.f32.mrf.mxu0
      %3840 = vdwg.mxu0
      %v3841 = vadd.f32 %v3483, %v3838
      %v3842 = vld [vmem:[%s59] sm:$0x1]
      %v3843 = vld [vmem:[%s61] sm:$0x1]
      %v3844 = vsel %vm1357, %v3841, 0.0
      %3845 = vadd.xlane.f32.xlu0 %v3844
      %v3846 = vpop.xlane.xlu0 %3845
      %v3847 = vmul.f32 %v3846, %v1371
      %v3848 = vsub.f32 %v3841, %v3847
      %v3849 = vmul.f32 %v3848, %v3848
      %v3850 = vsel %vm1357, %v3849, 0.0
      %3851 = vadd.xlane.f32.xlu0 %v3850
      %v3852 = vpop.xlane.xlu0 %3851
      %v3853 = vmul.f32 %v3852, %v1371
      %v3854 = vadd.f32 %v3853, 1e-05
      %v3855 = vrsqrt.pop %v3854
      %v3856 = vmul.f32 %v3855, %v3854
      %v3857 = vmul.f32 %v3856, %v3855
      %v3858 = vmul.f32 0.5, %v3857
      %v3859 = vsub.f32 1.5, %v3858
      %v3860 = vmul.f32 %v3855, %v3859
      %vm3861 = vweird.f32 %v3854
      %vm3862 = vweird.f32 %v3855
      %vm3863 = vmor %vm3861, %vm3862
      %v3864 = vsel %vm3863, %v3855, %v3860
      %v3865 = vmul.f32 %v3848, %v3864
      %v3867 = vperm.slane %v3842, 0
      %v3869 = vmul.f32 %v3865, %v3867
      %v3871 = vperm.slane %v3843, 0
      %v3873 = vadd.f32 %v3869, %v3871
      %v3874 = vld [vmem:[%s63] sm:$0x1]
      %v3875 = vld [vmem:[%s65] sm:$0x1]
      %v3876 = vsel %vm1357, %v3481, 0.0
      %3877 = vadd.xlane.f32.xlu0 %v3876
      %v3878 = vpop.xlane.xlu0 %3877
      %v3879 = vsel %vm1361, %v3482, 0.0
      %3880 = vadd.xlane.f32.xlu0 %v3879
      %v3881 = vpop.xlane.xlu0 %3880
      %v3882 = vmul.f32 %v3878, %v1371
      %v3883 = vmul.f32 %v3881, %v1371
      %v3884 = vsub.f32 %v3481, %v3882
      %v3885 = vsub.f32 %v3482, %v3883
      %v3886 = vmul.f32 %v3884, %v3884
      %v3887 = vmul.f32 %v3885, %v3885
      %v3888 = vsel %vm1357, %v3886, 0.0
      %3889 = vadd.xlane.f32.xlu0 %v3888
      %v3890 = vpop.xlane.xlu0 %3889
      %v3891 = vsel %vm1361, %v3887, 0.0
      %3892 = vadd.xlane.f32.xlu0 %v3891
      %v3893 = vpop.xlane.xlu0 %3892
      %v3894 = vmul.f32 %v3890, %v1371
      %v3895 = vmul.f32 %v3893, %v1371
      %v3896 = vadd.f32 %v3894, 1e-05
      %v3897 = vadd.f32 %v3895, 1e-05
      %v3898 = vrsqrt.pop %v3896
      %v3899 = vmul.f32 %v3898, %v3896
      %v3900 = vmul.f32 %v3899, %v3898
      %v3901 = vmul.f32 0.5, %v3900
      %v3902 = vsub.f32 1.5, %v3901
      %v3903 = vmul.f32 %v3898, %v3902
      %vm3904 = vweird.f32 %v3896
      %vm3905 = vweird.f32 %v3898
      %vm3906 = vmor %vm3904, %vm3905
      %v3907 = vsel %vm3906, %v3898, %v3903
      %v3908 = vrsqrt.pop %v3897
      %v3909 = vmul.f32 %v3908, %v3897
      %v3910 = vmul.f32 %v3909, %v3908
      %v3911 = vmul.f32 0.5, %v3910
      %v3912 = vsub.f32 1.5, %v3911
      %v3913 = vmul.f32 %v3908, %v3912
      %vm3914 = vweird.f32 %v3897
      %vm3915 = vweird.f32 %v3908
      %vm3916 = vmor %vm3914, %vm3915
      %v3917 = vsel %vm3916, %v3908, %v3913
      %v3918 = vmul.f32 %v3884, %v3907
      %v3919 = vmul.f32 %v3885, %v3917
      %v3921 = vperm.slane %v3874, 0
      %v3923 = vmul.f32 %v3918, %v3921
      %v3924 = vmul.f32 %v3919, %v3921
      %v3926 = vperm.slane %v3875, 0
      %v3928 = vadd.f32 %v3923, %v3926
      %v3929 = vadd.f32 %v3924, %v3926
      %v3930 = vld [vmem:[%s67] sm:$0xf]
      %v3931 = vld [vmem:[%s67 + $0x4] sm:$0xf]
      %v3932 = vld [vmem:[%s67 + $0x8] sm:$0xf]
      %v3933 = vld [vmem:[%s67 + $0xc] sm:$0xf]
      %v3934 = vld [vmem:[%s69] sm:$0x1]
      %v3935 = vld [vmem:[%s71] sm:$0xf]
      %v3936 = vld [vmem:[%s71 + $0x4] sm:$0xf]
      %v3937 = vld [vmem:[%s71 + $0x8] sm:$0xf]
      %v3938 = vld [vmem:[%s71 + $0xc] sm:$0xf]
      %v3939 = vld [vmem:[%s73] sm:$0x1]
      %v3940 = vld [vmem:[%s75] sm:$0xf]
      %v3941 = vld [vmem:[%s75 + $0x4] sm:$0xf]
      %v3942 = vld [vmem:[%s75 + $0x8] sm:$0xf]
      %v3943 = vld [vmem:[%s75 + $0xc] sm:$0xf]
      %v3944 = vld [vmem:[%s77] sm:$0x1]
      %v3945 = vpack.c.bf16 %v3873, %v3873
      %v3947 = vperm.slane %v3934, 0
      %v3953 = vunpack.c.l.b16 %v3930
      %v3954 = vunpack.c.l.b16 %v3931
      %v3955 = vunpack.c.l.b16 %v3932
      %v3956 = vunpack.c.l.b16 %v3933
      %v3957 = vpack.c.b16 %v3954, %v3953
      %v3958 = vpack.c.b16 %v3956, %v3955
      %v3962 = vsel %vm1357, %v3945, 0
      %3964 = vmatpush.bf16.msra.mxu0 0
      %3965 = vmatpush.bf16.msra.mxu0 0
      %3966 = vmatpush.bf16.msra.mxu0 0
      %3967 = vmatpush.bf16.msra.mxu0 0
      %3968 = vmatpush.bf16.msra.mxu0 0
      %3969 = vmatpush.bf16.msra.mxu0 0
      %3970 = vmatpush.bf16.msra.mxu0 %v3958
      %3971 = vmatpush.bf16.msra.mxu0 %v3957
      %3972 = vmatmul.bf16.gmra.mxu0 %v3962
      %v3973 = vpop.f32.mrf.mxu0
      %v3974 = vadd.f32 %v3947, %v3973
      %v3975 = vpop.f32.mrf.mxu0
      %3976 = vdwg.mxu0
      %v3977 = vmul.f32 %v3974, 0.35355338
      %v3978 = vpack.c.bf16 %v3929, %v3928
      %v3980 = vperm.slane %v3939, 0
      %v3986 = vunpack.c.l.b16 %v3935
      %v3987 = vunpack.c.l.b16 %v3936
      %v3988 = vunpack.c.l.b16 %v3937
      %v3989 = vunpack.c.l.b16 %v3938
      %v3990 = vpack.c.b16 %v3987, %v3986
      %v3991 = vpack.c.b16 %v3989, %v3988
      %v3995 = vsel %vm1357, %v3978, 0
      %3997 = vmatpush.bf16.msra.mxu0 0
      %3998 = vmatpush.bf16.msra.mxu0 0
      %3999 = vmatpush.bf16.msra.mxu0 0
      %4000 = vmatpush.bf16.msra.mxu0 0
      %4001 = vmatpush.bf16.msra.mxu0 0
      %4002 = vmatpush.bf16.msra.mxu0 0
      %4003 = vmatpush.bf16.msra.mxu0 %v3991
      %4004 = vmatpush.bf16.msra.mxu0 %v3990
      %4005 = vmatmul.bf16.gmra.mxu0 %v3995
      %v4006 = vpop.f32.mrf.mxu0
      %v4007 = vadd.f32 %v3980, %v4006
      %v4008 = vpop.f32.mrf.mxu0
      %v4009 = vadd.f32 %v3980, %v4008
      %4010 = vdwg.mxu0
      %v4011 = vpack.c.bf16 %v3977, %v3977
      %v4012 = vpack.c.bf16 %v4009, %v4007
      %v4014 = vsel %vm2084, %v4011, 0
      %v4017 = vsel %vm2084, %v4012, 0
      %4019 = vmatpush.bf16.xpose.msra.mxu0 0
      %4020 = vmatpush.bf16.xpose.msra.mxu0 0
      %4021 = vmatpush.bf16.xpose.msra.mxu0 0
      %4022 = vmatpush.bf16.xpose.msra.mxu0 0
      %4023 = vmatpush.bf16.xpose.msra.mxu0 0
      %4024 = vmatpush.bf16.xpose.msra.mxu0 0
      %4025 = vmatpush.bf16.xpose.msra.mxu0 0
      %4026 = vmatpush.bf16.xpose.msra.mxu0 %v4017
      %4027 = vmatmul.bf16.gmra.mxu0 %v4014
      %v4028 = vpop.f32.mrf.mxu0
      %v4029 = vadd.f32 0.0, %v4028
      %v4030 = vpop.f32.mrf.mxu0
      %4031 = vdwg.mxu0
      %v4032 = vsel %vm1491, %v4029, -inf
      %4033 = vmax.xlane.f32.xlu0 %v4032
      %v4034 = vpop.xlane.xlu0 %4033
      %v4035 = vsub.f32 %v4029, %v4034
      %v4036 = vmul.f32 %v4035, 1.442695
      %v4037 = vpow.pop %v4036
      %v4038 = vsel %vm1491, %v4037, 0.0
      %4039 = vadd.xlane.f32.xlu0 %v4038
      %v4040 = vpop.xlane.xlu0 %4039
      %v4041 = vpack.c.bf16 %v4037, %v4037
      %4043 = vrot.lane.b32.xlu0 %v4012, 96
      %v4044 = vpop.permute.xlu0 %4043
      %v4046 = vsel %vm1491, %v4041, 0
      %v4049 = vand.u32 %v4044, %v1520
      %4051 = vmatpush.bf16.msra.mxu0 0
      %4052 = vmatpush.bf16.msra.mxu0 0
      %4053 = vmatpush.bf16.msra.mxu0 0
      %4054 = vmatpush.bf16.msra.mxu0 0
      %4055 = vmatpush.bf16.msra.mxu0 0
      %4056 = vmatpush.bf16.msra.mxu0 0
      %4057 = vmatpush.bf16.msra.mxu0 0
      %4058 = vmatpush.bf16.msra.mxu0 %v4049
      %4059 = vmatmul.bf16.gmra.mxu0 %v4046
      %v4060 = vpop.f32.mrf.mxu0
      %v4061 = vadd.f32 0.0, %v4060
      %v4062 = vpop.f32.mrf.mxu0
      %4063 = vdwg.mxu0
      %v4064 = vrcp.pop %v4040
      %v4065 = vmul.f32 %v4061, %v4064
      %4067 = vrot.lane.b32.xlu0 %v4011, 120
      %v4068 = vpop.permute.xlu0 %4067
      %4069 = vrot.lane.b32.xlu0 %v4012, 120
      %v4070 = vpop.permute.xlu0 %4069
      %v4072 = vsel %vm2084, %v4068, 0
      %v4075 = vsel %vm2084, %v4070, 0
      %4077 = vmatpush.bf16.xpose.msra.mxu0 0
      %4078 = vmatpush.bf16.xpose.msra.mxu0 0
      %4079 = vmatpush.bf16.xpose.msra.mxu0 0
      %4080 = vmatpush.bf16.xpose.msra.mxu0 0
      %4081 = vmatpush.bf16.xpose.msra.mxu0 0
      %4082 = vmatpush.bf16.xpose.msra.mxu0 0
      %4083 = vmatpush.bf16.xpose.msra.mxu0 0
      %4084 = vmatpush.bf16.xpose.msra.mxu0 %v4075
      %4085 = vmatmul.bf16.gmra.mxu0 %v4072
      %v4086 = vpop.f32.mrf.mxu0
      %v4087 = vadd.f32 0.0, %v4086
      %v4088 = vpop.f32.mrf.mxu0
      %4089 = vdwg.mxu0
      %v4090 = vsel %vm1491, %v4087, -inf
      %4091 = vmax.xlane.f32.xlu0 %v4090
      %v4092 = vpop.xlane.xlu0 %4091
      %v4093 = vsub.f32 %v4087, %v4092
      %v4094 = vmul.f32 %v4093, 1.442695
      %v4095 = vpow.pop %v4094
      %v4096 = vsel %vm1491, %v4095, 0.0
      %4097 = vadd.xlane.f32.xlu0 %v4096
      %v4098 = vpop.xlane.xlu0 %4097
      %v4099 = vpack.c.bf16 %v4095, %v4095
      %4100 = vrot.lane.b32.xlu0 %v4012, 88
      %v4101 = vpop.permute.xlu0 %4100
      %v4103 = vsel %vm1491, %v4099, 0
      %v4106 = vand.u32 %v4101, %v1520
      %4108 = vmatpush.bf16.msra.mxu0 0
      %4109 = vmatpush.bf16.msra.mxu0 0
      %4110 = vmatpush.bf16.msra.mxu0 0
      %4111 = vmatpush.bf16.msra.mxu0 0
      %4112 = vmatpush.bf16.msra.mxu0 0
      %4113 = vmatpush.bf16.msra.mxu0 0
      %4114 = vmatpush.bf16.msra.mxu0 0
      %4115 = vmatpush.bf16.msra.mxu0 %v4106
      %4116 = vmatmul.bf16.gmra.mxu0 %v4103
      %v4117 = vpop.f32.mrf.mxu0
      %v4118 = vadd.f32 0.0, %v4117
      %v4119 = vpop.f32.mrf.mxu0
      %4120 = vdwg.mxu0
      %v4121 = vrcp.pop %v4098
      %v4122 = vmul.f32 %v4118, %v4121
      %4123 = vrot.lane.b32.xlu0 %v4011, 112
      %v4124 = vpop.permute.xlu0 %4123
      %4125 = vrot.lane.b32.xlu0 %v4012, 112
      %v4126 = vpop.permute.xlu0 %4125
      %v4128 = vsel %vm2084, %v4124, 0
      %v4131 = vsel %vm2084, %v4126, 0
      %4133 = vmatpush.bf16.xpose.msra.mxu0 0
      %4134 = vmatpush.bf16.xpose.msra.mxu0 0
      %4135 = vmatpush.bf16.xpose.msra.mxu0 0
      %4136 = vmatpush.bf16.xpose.msra.mxu0 0
      %4137 = vmatpush.bf16.xpose.msra.mxu0 0
      %4138 = vmatpush.bf16.xpose.msra.mxu0 0
      %4139 = vmatpush.bf16.xpose.msra.mxu0 0
      %4140 = vmatpush.bf16.xpose.msra.mxu0 %v4131
      %4141 = vmatmul.bf16.gmra.mxu0 %v4128
      %v4142 = vpop.f32.mrf.mxu0
      %v4143 = vadd.f32 0.0, %v4142
      %v4144 = vpop.f32.mrf.mxu0
      %4145 = vdwg.mxu0
      %v4146 = vsel %vm1491, %v4143, -inf
      %4147 = vmax.xlane.f32.xlu0 %v4146
      %v4148 = vpop.xlane.xlu0 %4147
      %v4149 = vsub.f32 %v4143, %v4148
      %v4150 = vmul.f32 %v4149, 1.442695
      %v4151 = vpow.pop %v4150
      %v4152 = vsel %vm1491, %v4151, 0.0
      %4153 = vadd.xlane.f32.xlu0 %v4152
      %v4154 = vpop.xlane.xlu0 %4153
      %v4155 = vpack.c.bf16 %v4151, %v4151
      %4156 = vrot.lane.b32.xlu0 %v4012, 80
      %v4157 = vpop.permute.xlu0 %4156
      %v4159 = vsel %vm1491, %v4155, 0
      %v4162 = vand.u32 %v4157, %v1520
      %4164 = vmatpush.bf16.msra.mxu0 0
      %4165 = vmatpush.bf16.msra.mxu0 0
      %4166 = vmatpush.bf16.msra.mxu0 0
      %4167 = vmatpush.bf16.msra.mxu0 0
      %4168 = vmatpush.bf16.msra.mxu0 0
      %4169 = vmatpush.bf16.msra.mxu0 0
      %4170 = vmatpush.bf16.msra.mxu0 0
      %4171 = vmatpush.bf16.msra.mxu0 %v4162
      %4172 = vmatmul.bf16.gmra.mxu0 %v4159
      %v4173 = vpop.f32.mrf.mxu0
      %v4174 = vadd.f32 0.0, %v4173
      %v4175 = vpop.f32.mrf.mxu0
      %4176 = vdwg.mxu0
      %v4177 = vrcp.pop %v4154
      %v4178 = vmul.f32 %v4174, %v4177
      %4179 = vrot.lane.b32.xlu0 %v4011, 104
      %v4180 = vpop.permute.xlu0 %4179
      %4181 = vrot.lane.b32.xlu0 %v4012, 104
      %v4182 = vpop.permute.xlu0 %4181
      %v4184 = vsel %vm2084, %v4180, 0
      %v4187 = vsel %vm2084, %v4182, 0
      %4189 = vmatpush.bf16.xpose.msra.mxu0 0
      %4190 = vmatpush.bf16.xpose.msra.mxu0 0
      %4191 = vmatpush.bf16.xpose.msra.mxu0 0
      %4192 = vmatpush.bf16.xpose.msra.mxu0 0
      %4193 = vmatpush.bf16.xpose.msra.mxu0 0
      %4194 = vmatpush.bf16.xpose.msra.mxu0 0
      %4195 = vmatpush.bf16.xpose.msra.mxu0 0
      %4196 = vmatpush.bf16.xpose.msra.mxu0 %v4187
      %4197 = vmatmul.bf16.gmra.mxu0 %v4184
      %v4198 = vpop.f32.mrf.mxu0
      %v4199 = vadd.f32 0.0, %v4198
      %v4200 = vpop.f32.mrf.mxu0
      %4201 = vdwg.mxu0
      %v4202 = vsel %vm1491, %v4199, -inf
      %4203 = vmax.xlane.f32.xlu0 %v4202
      %v4204 = vpop.xlane.xlu0 %4203
      %v4205 = vsub.f32 %v4199, %v4204
      %v4206 = vmul.f32 %v4205, 1.442695
      %v4207 = vpow.pop %v4206
      %v4208 = vsel %vm1491, %v4207, 0.0
      %4209 = vadd.xlane.f32.xlu0 %v4208
      %v4210 = vpop.xlane.xlu0 %4209
      %v4211 = vpack.c.bf16 %v4207, %v4207
      %4212 = vrot.lane.b32.xlu0 %v4012, 72
      %v4213 = vpop.permute.xlu0 %4212
      %v4215 = vsel %vm1491, %v4211, 0
      %v4218 = vand.u32 %v4213, %v1520
      %4220 = vmatpush.bf16.msra.mxu0 0
      %4221 = vmatpush.bf16.msra.mxu0 0
      %4222 = vmatpush.bf16.msra.mxu0 0
      %4223 = vmatpush.bf16.msra.mxu0 0
      %4224 = vmatpush.bf16.msra.mxu0 0
      %4225 = vmatpush.bf16.msra.mxu0 0
      %4226 = vmatpush.bf16.msra.mxu0 0
      %4227 = vmatpush.bf16.msra.mxu0 %v4218
      %4228 = vmatmul.bf16.gmra.mxu0 %v4215
      %v4229 = vpop.f32.mrf.mxu0
      %v4230 = vadd.f32 0.0, %v4229
      %v4231 = vpop.f32.mrf.mxu0
      %4232 = vdwg.mxu0
      %v4233 = vrcp.pop %v4210
      %v4234 = vmul.f32 %v4230, %v4233
      %4236 = vrot.lane.b32.xlu0 %v4122, 8
      %v4237 = vpop.permute.xlu0 %4236
      %4240 = vrot.lane.b32.xlu0 %v4178, 16
      %v4241 = vpop.permute.xlu0 %4240
      %4244 = vrot.lane.b32.xlu0 %v4234, 24
      %v4245 = vpop.permute.xlu0 %4244
      %v4247 = vsel %vm2084, %v4065, %v4237
      %v4248 = vsel %vm2090, %v4247, %v4241
      %v4249 = vsel %vm2096, %v4248, %v4245
      %v4250 = vpack.c.bf16 %v4249, %v4249
      %v4252 = vperm.slane %v3944, 0
      %v4258 = vunpack.c.l.b16 %v3940
      %v4259 = vunpack.c.l.b16 %v3941
      %v4260 = vunpack.c.l.b16 %v3942
      %v4261 = vunpack.c.l.b16 %v3943
      %v4262 = vpack.c.b16 %v4259, %v4258
      %v4263 = vpack.c.b16 %v4261, %v4260
      %v4267 = vsel %vm1357, %v4250, 0
      %4269 = vmatpush.bf16.msra.mxu0 0
      %4270 = vmatpush.bf16.msra.mxu0 0
      %4271 = vmatpush.bf16.msra.mxu0 0
      %4272 = vmatpush.bf16.msra.mxu0 0
      %4273 = vmatpush.bf16.msra.mxu0 0
      %4274 = vmatpush.bf16.msra.mxu0 0
      %4275 = vmatpush.bf16.msra.mxu0 %v4263
      %4276 = vmatpush.bf16.msra.mxu0 %v4262
      %4277 = vmatmul.bf16.gmra.mxu0 %v4267
      %v4278 = vpop.f32.mrf.mxu0
      %v4279 = vadd.f32 %v4252, %v4278
      %v4280 = vpop.f32.mrf.mxu0
      %4281 = vdwg.mxu0
      %v4282 = vadd.f32 %v3841, %v4279
      %v4283 = vld [vmem:[%s79] sm:$0x1]
      %v4284 = vld [vmem:[%s81] sm:$0x1]
      %v4285 = vsel %vm1357, %v4282, 0.0
      %4286 = vadd.xlane.f32.xlu0 %v4285
      %v4287 = vpop.xlane.xlu0 %4286
      %v4288 = vmul.f32 %v4287, %v1371
      %v4289 = vsub.f32 %v4282, %v4288
      %v4290 = vmul.f32 %v4289, %v4289
      %v4291 = vsel %vm1357, %v4290, 0.0
      %4292 = vadd.xlane.f32.xlu0 %v4291
      %v4293 = vpop.xlane.xlu0 %4292
      %v4294 = vmul.f32 %v4293, %v1371
      %v4295 = vadd.f32 %v4294, 1e-05
      %v4296 = vrsqrt.pop %v4295
      %v4297 = vmul.f32 %v4296, %v4295
      %v4298 = vmul.f32 %v4297, %v4296
      %v4299 = vmul.f32 0.5, %v4298
      %v4300 = vsub.f32 1.5, %v4299
      %v4301 = vmul.f32 %v4296, %v4300
      %vm4302 = vweird.f32 %v4295
      %vm4303 = vweird.f32 %v4296
      %vm4304 = vmor %vm4302, %vm4303
      %v4305 = vsel %vm4304, %v4296, %v4301
      %v4306 = vmul.f32 %v4289, %v4305
      %v4308 = vperm.slane %v4283, 0
      %v4310 = vmul.f32 %v4306, %v4308
      %v4312 = vperm.slane %v4284, 0
      %v4314 = vadd.f32 %v4310, %v4312
      %v4315 = vld [vmem:[%s83] sm:$0xf]
      %v4316 = vld [vmem:[%s83 + $0x4] sm:$0xf]
      %v4317 = vld [vmem:[%s83 + $0x8] sm:$0xf]
      %v4318 = vld [vmem:[%s83 + $0xc] sm:$0xf]
      %v4319 = vld [vmem:[%s85] sm:$0x1]
      %v4320 = vld [vmem:[%s87] sm:$0xf]
      %v4321 = vld [vmem:[%s87 + $0x4] sm:$0xf]
      %v4322 = vld [vmem:[%s87 + $0x8] sm:$0xf]
      %v4323 = vld [vmem:[%s87 + $0xc] sm:$0xf]
      %v4324 = vld [vmem:[%s87 + $0x10] sm:$0xf]
      %v4325 = vld [vmem:[%s87 + $0x14] sm:$0xf]
      %v4326 = vld [vmem:[%s87 + $0x18] sm:$0xf]
      %v4327 = vld [vmem:[%s87 + $0x1c] sm:$0xf]
      %v4328 = vld [vmem:[%s87 + $0x20] sm:$0xf]
      %v4329 = vld [vmem:[%s87 + $0x24] sm:$0xf]
      %v4330 = vld [vmem:[%s87 + $0x28] sm:$0xf]
      %v4331 = vld [vmem:[%s87 + $0x2c] sm:$0xf]
      %v4332 = vld [vmem:[%s87 + $0x30] sm:$0xf]
      %v4333 = vld [vmem:[%s87 + $0x34] sm:$0xf]
      %v4334 = vld [vmem:[%s87 + $0x38] sm:$0xf]
      %v4335 = vld [vmem:[%s87 + $0x3c] sm:$0xf]
      %v4336 = vld [vmem:[%s89] sm:$0x1]
      %v4337 = vpack.c.bf16 %v4314, %v4314
      %v4339 = vperm.slane %v4319, 0
      %v4345 = vunpack.c.l.b16 %v4315
      %v4346 = vunpack.c.l.b16 %v4316
      %v4347 = vunpack.c.l.b16 %v4317
      %v4348 = vunpack.c.l.b16 %v4318
      %v4349 = vpack.c.b16 %v4346, %v4345
      %v4350 = vpack.c.b16 %v4348, %v4347
      %v4354 = vsel %vm1357, %v4337, 0
      %4356 = vmatpush.bf16.msra.mxu0 0
      %4357 = vmatpush.bf16.msra.mxu0 0
      %4358 = vmatpush.bf16.msra.mxu0 0
      %4359 = vmatpush.bf16.msra.mxu0 0
      %4360 = vmatpush.bf16.msra.mxu0 0
      %4361 = vmatpush.bf16.msra.mxu0 0
      %4362 = vmatpush.bf16.msra.mxu0 %v4350
      %4363 = vmatpush.bf16.msra.mxu0 %v4349
      %4364 = vmatmul.bf16.gmra.mxu0 %v4354
      %v4365 = vpop.f32.mrf.mxu0
      %v4366 = vadd.f32 %v4339, %v4365
      %v4367 = vpop.f32.mrf.mxu0
      %4368 = vdwg.mxu0
      %v4369 = vmul.f32 %v4366, 0.5
      %v4370 = vmul.f32 %v4366, 0.70710677
      %v4371 = vand.u32 2147483647, %v4370
      %v4372 = vmul.f32 %v4371, 0.3275911
      %v4373 = vadd.f32 %v4372, 1.0
      %v4374 = vrcp.pop %v4373
      %v4375 = vmul.f32 %v4373, %v4374
      %v4376 = vsub.f32 1.0, %v4375
      %v4377 = vmul.f32 %v4374, %v4376
      %v4378 = vadd.f32 %v4374, %v4377
      %vm4379 = vweird.f32 %v4373
      %vm4380 = vweird.f32 %v4374
      %vm4381 = vmor %vm4379, %vm4380
      %v4382 = vsel %vm4381, %v4374, %v4378
      %v4383 = vand.u32 2147483647, %v4373
      %vm4384 = vcmp.eq.f32.partialorder %v4383, 8.507059e+37
      %v4385 = vand.u32 %v4373, 2147483648
      %v4386 = vor.u32 1.1754944e-38, %v4385
      %v4387 = vsel %vm4384, %v4386, %v4382
      %v4388 = vmul.f32 1.0, %v4387
      %v4389 = vmul.f32 %v4388, 1.0614054
      %v4390 = vadd.f32 %v4389, -1.4531521
      %v4391 = vmul.f32 %v4390, %v4388
      %v4392 = vadd.f32 %v4391, 1.4214138
      %v4393 = vmul.f32 %v4392, %v4388
      %v4394 = vadd.f32 %v4393, -0.28449672
      %v4395 = vmul.f32 %v4394, %v4388
      %v4396 = vadd.f32 %v4395, 0.2548296
      %v4397 = vmul.f32 %v4396, %v4388
      %v4398 = vsub.f32 0.0, %v4371
      %v4399 = vmul.f32 %v4398, %v4371
      %v4400 = vmul.f32 %v4399, 1.442695
      %v4401 = vpow.pop %v4400
      %v4402 = vmul.f32 %v4397, %v4401
      %v4403 = vsub.f32 1.0, %v4402
      %vm4404 = vcmp.ge.f32.partialorder %v4370, 0.0
      %v4405 = vsub.f32 0.0, %v4403
      %v4406 = vsel %vm4404, %v4403, %v4405
      %v4407 = vadd.f32 %v4406, 1.0
      %v4408 = vmul.f32 %v4369, %v4407
      %v4409 = vpack.c.bf16 %v4408, %v4408
      %v4411 = vperm.slane %v4336, 0
      %v4429 = vunpack.c.l.b16 %v4320
      %v4430 = vunpack.c.l.b16 %v4321
      %v4431 = vunpack.c.l.b16 %v4322
      %v4432 = vunpack.c.l.b16 %v4323
      %v4433 = vunpack.c.l.b16 %v4324
      %v4434 = vunpack.c.l.b16 %v4325
      %v4435 = vunpack.c.l.b16 %v4326
      %v4436 = vunpack.c.l.b16 %v4327
      %v4437 = vunpack.c.l.b16 %v4328
      %v4438 = vunpack.c.l.b16 %v4329
      %v4439 = vunpack.c.l.b16 %v4330
      %v4440 = vunpack.c.l.b16 %v4331
      %v4441 = vunpack.c.l.b16 %v4332
      %v4442 = vunpack.c.l.b16 %v4333
      %v4443 = vunpack.c.l.b16 %v4334
      %v4444 = vunpack.c.l.b16 %v4335
      %v4445 = vpack.c.b16 %v4430, %v4429
      %v4446 = vpack.c.b16 %v4432, %v4431
      %v4447 = vpack.c.b16 %v4434, %v4433
      %v4448 = vpack.c.b16 %v4436, %v4435
      %v4449 = vpack.c.b16 %v4438, %v4437
      %v4450 = vpack.c.b16 %v4440, %v4439
      %v4451 = vpack.c.b16 %v4442, %v4441
      %v4452 = vpack.c.b16 %v4444, %v4443
      %4461 = vmatpush.bf16.msra.mxu0 %v4452
      %4462 = vmatpush.bf16.msra.mxu0 %v4451
      %4463 = vmatpush.bf16.msra.mxu0 %v4450
      %4464 = vmatpush.bf16.msra.mxu0 %v4449
      %4465 = vmatpush.bf16.msra.mxu0 %v4448
      %4466 = vmatpush.bf16.msra.mxu0 %v4447
      %4467 = vmatpush.bf16.msra.mxu0 %v4446
      %4468 = vmatpush.bf16.msra.mxu0 %v4445
      %4469 = vmatmul.bf16.gmra.mxu0 %v4409
      %v4470 = vpop.f32.mrf.mxu0
      %v4471 = vadd.f32 %v4411, %v4470
      %v4472 = vpop.f32.mrf.mxu0
      %4473 = vdwg.mxu0
      %v4474 = vadd.f32 %v4282, %v4471
      %s4475 = scalar_lea.vmem %s47, 1
      %v4476 = vld [vmem:[%s4475] sm:$0x1]
      %s4477 = scalar_lea.vmem %s49, 1
      %v4478 = vld [vmem:[%s4477] sm:$0x1]
      %v4479 = vsel %vm1357, %v4474, 0.0
      %4480 = vadd.xlane.f32.xlu0 %v4479
      %v4481 = vpop.xlane.xlu0 %4480
      %v4482 = vmul.f32 %v4481, %v1371
      %v4483 = vsub.f32 %v4474, %v4482
      %v4484 = vmul.f32 %v4483, %v4483
      %v4485 = vsel %vm1357, %v4484, 0.0
      %4486 = vadd.xlane.f32.xlu0 %v4485
      %v4487 = vpop.xlane.xlu0 %4486
      %v4488 = vmul.f32 %v4487, %v1371
      %v4489 = vadd.f32 %v4488, 1e-05
      %v4490 = vrsqrt.pop %v4489
      %v4491 = vmul.f32 %v4490, %v4489
      %v4492 = vmul.f32 %v4491, %v4490
      %v4493 = vmul.f32 0.5, %v4492
      %v4494 = vsub.f32 1.5, %v4493
      %v4495 = vmul.f32 %v4490, %v4494
      %vm4496 = vweird.f32 %v4489
      %vm4497 = vweird.f32 %v4490
      %vm4498 = vmor %vm4496, %vm4497
      %v4499 = vsel %vm4498, %v4490, %v4495
      %v4500 = vmul.f32 %v4483, %v4499
      %v4502 = vperm.slane %v4476, 0
      %v4504 = vmul.f32 %v4500, %v4502
      %v4506 = vperm.slane %v4478, 0
      %v4508 = vadd.f32 %v4504, %v4506
      %s4509 = scalar_lea.vmem %s51, 16
      %v4510 = vld [vmem:[%s4509] sm:$0xf]
      %v4511 = vld [vmem:[%s4509 + $0x4] sm:$0xf]
      %v4512 = vld [vmem:[%s4509 + $0x8] sm:$0xf]
      %v4513 = vld [vmem:[%s4509 + $0xc] sm:$0xf]
      %s4514 = scalar_lea.vmem %s53, 1
      %v4515 = vld [vmem:[%s4514] sm:$0x1]
      %s4516 = scalar_lea.vmem %s55, 16
      %v4517 = vld [vmem:[%s4516] sm:$0xf]
      %v4518 = vld [vmem:[%s4516 + $0x4] sm:$0xf]
      %v4519 = vld [vmem:[%s4516 + $0x8] sm:$0xf]
      %v4520 = vld [vmem:[%s4516 + $0xc] sm:$0xf]
      %s4521 = scalar_lea.vmem %s57, 1
      %v4522 = vld [vmem:[%s4521] sm:$0x1]
      %v4523 = vpack.c.bf16 %v4508, %v4508
      %v4525 = vperm.slane %v4515, 0
      %v4531 = vunpack.c.l.b16 %v4510
      %v4532 = vunpack.c.l.b16 %v4511
      %v4533 = vunpack.c.l.b16 %v4512
      %v4534 = vunpack.c.l.b16 %v4513
      %v4535 = vpack.c.b16 %v4532, %v4531
      %v4536 = vpack.c.b16 %v4534, %v4533
      %v4540 = vsel %vm1357, %v4523, 0
      %4542 = vmatpush.bf16.msra.mxu0 0
      %4543 = vmatpush.bf16.msra.mxu0 0
      %4544 = vmatpush.bf16.msra.mxu0 0
      %4545 = vmatpush.bf16.msra.mxu0 0
      %4546 = vmatpush.bf16.msra.mxu0 0
      %4547 = vmatpush.bf16.msra.mxu0 0
      %4548 = vmatpush.bf16.msra.mxu0 %v4536
      %4549 = vmatpush.bf16.msra.mxu0 %v4535
      %4550 = vmatmul.bf16.gmra.mxu0 %v4540
      %v4551 = vpop.f32.mrf.mxu0
      %v4552 = vadd.f32 %v4525, %v4551
      %v4553 = vpop.f32.mrf.mxu0
      %4554 = vdwg.mxu0
      %v4555 = vmul.f32 %v4552, 0.35355338
      %v4556 = vpack.c.bf16 %v4555, %v4555
      %v4557 = vpack.c.bf16 %v4552, %v4552
      %4559 = vrot.lane.b32.xlu0 %v4557, 96
      %v4560 = vpop.permute.xlu0 %4559
      %v4562 = vsel %vm2084, %v4556, 0
      %v4565 = vsel %vm2084, %v4560, 0
      %4567 = vmatpush.bf16.xpose.msra.mxu0 0
      %4568 = vmatpush.bf16.xpose.msra.mxu0 0
      %4569 = vmatpush.bf16.xpose.msra.mxu0 0
      %4570 = vmatpush.bf16.xpose.msra.mxu0 0
      %4571 = vmatpush.bf16.xpose.msra.mxu0 0
      %4572 = vmatpush.bf16.xpose.msra.mxu0 0
      %4573 = vmatpush.bf16.xpose.msra.mxu0 0
      %4574 = vmatpush.bf16.xpose.msra.mxu0 %v4565
      %4575 = vmatmul.bf16.gmra.mxu0 %v4562
      %v4576 = vpop.f32.mrf.mxu0
      %v4577 = vadd.f32 0.0, %v4576
      %v4578 = vpop.f32.mrf.mxu0
      %4579 = vdwg.mxu0
      %v4580 = vsel %vm3488, -inf, %v4577
      %v4581 = vsel %vm2084, %v4580, -inf
      %4582 = vmax.xlane.f32.xlu0 %v4581
      %v4583 = vpop.xlane.xlu0 %4582
      %v4584 = vsub.f32 %v4580, %v4583
      %v4585 = vmul.f32 %v4584, 1.442695
      %v4586 = vpow.pop %v4585
      %v4587 = vsel %vm2084, %v4586, 0.0
      %4588 = vadd.xlane.f32.xlu0 %v4587
      %v4589 = vpop.xlane.xlu0 %4588
      %v4590 = vpack.c.bf16 %v4586, %v4586
      %4591 = vrot.lane.b32.xlu0 %v4557, 64
      %v4592 = vpop.permute.xlu0 %4591
      %v4594 = vsel %vm2084, %v4590, 0
      %v4597 = vsel %vm1517, %v4592, 0
      %4599 = vmatpush.bf16.msra.mxu0 0
      %4600 = vmatpush.bf16.msra.mxu0 0
      %4601 = vmatpush.bf16.msra.mxu0 0
      %4602 = vmatpush.bf16.msra.mxu0 0
      %4603 = vmatpush.bf16.msra.mxu0 0
      %4604 = vmatpush.bf16.msra.mxu0 0
      %4605 = vmatpush.bf16.msra.mxu0 0
      %4606 = vmatpush.bf16.msra.mxu0 %v4597
      %4607 = vmatmul.bf16.gmra.mxu0 %v4594
      %v4608 = vpop.f32.mrf.mxu0
      %v4609 = vadd.f32 0.0, %v4608
      %v4610 = vpop.f32.mrf.mxu0
      %4611 = vdwg.mxu0
      %v4612 = vrcp.pop %v4589
      %v4613 = vmul.f32 %v4609, %v4612
      %4615 = vrot.lane.b32.xlu0 %v4556, 120
      %v4616 = vpop.permute.xlu0 %4615
      %4617 = vrot.lane.b32.xlu0 %v4557, 88
      %v4618 = vpop.permute.xlu0 %4617
      %v4620 = vsel %vm2084, %v4616, 0
      %v4623 = vsel %vm2084, %v4618, 0
      %4625 = vmatpush.bf16.xpose.msra.mxu0 0
      %4626 = vmatpush.bf16.xpose.msra.mxu0 0
      %4627 = vmatpush.bf16.xpose.msra.mxu0 0
      %4628 = vmatpush.bf16.xpose.msra.mxu0 0
      %4629 = vmatpush.bf16.xpose.msra.mxu0 0
      %4630 = vmatpush.bf16.xpose.msra.mxu0 0
      %4631 = vmatpush.bf16.xpose.msra.mxu0 0
      %4632 = vmatpush.bf16.xpose.msra.mxu0 %v4623
      %4633 = vmatmul.bf16.gmra.mxu0 %v4620
      %v4634 = vpop.f32.mrf.mxu0
      %v4635 = vadd.f32 0.0, %v4634
      %v4636 = vpop.f32.mrf.mxu0
      %4637 = vdwg.mxu0
      %v4638 = vsel %vm3488, -inf, %v4635
      %v4639 = vsel %vm2084, %v4638, -inf
      %4640 = vmax.xlane.f32.xlu0 %v4639
      %v4641 = vpop.xlane.xlu0 %4640
      %v4642 = vsub.f32 %v4638, %v4641
      %v4643 = vmul.f32 %v4642, 1.442695
      %v4644 = vpow.pop %v4643
      %v4645 = vsel %vm2084, %v4644, 0.0
      %4646 = vadd.xlane.f32.xlu0 %v4645
      %v4647 = vpop.xlane.xlu0 %4646
      %v4648 = vpack.c.bf16 %v4644, %v4644
      %4649 = vrot.lane.b32.xlu0 %v4557, 56
      %v4650 = vpop.permute.xlu0 %4649
      %v4652 = vsel %vm2084, %v4648, 0
      %v4655 = vsel %vm1517, %v4650, 0
      %4657 = vmatpush.bf16.msra.mxu0 0
      %4658 = vmatpush.bf16.msra.mxu0 0
      %4659 = vmatpush.bf16.msra.mxu0 0
      %4660 = vmatpush.bf16.msra.mxu0 0
      %4661 = vmatpush.bf16.msra.mxu0 0
      %4662 = vmatpush.bf16.msra.mxu0 0
      %4663 = vmatpush.bf16.msra.mxu0 0
      %4664 = vmatpush.bf16.msra.mxu0 %v4655
      %4665 = vmatmul.bf16.gmra.mxu0 %v4652
      %v4666 = vpop.f32.mrf.mxu0
      %v4667 = vadd.f32 0.0, %v4666
      %v4668 = vpop.f32.mrf.mxu0
      %4669 = vdwg.mxu0
      %v4670 = vrcp.pop %v4647
      %v4671 = vmul.f32 %v4667, %v4670
      %4672 = vrot.lane.b32.xlu0 %v4556, 112
      %v4673 = vpop.permute.xlu0 %4672
      %4674 = vrot.lane.b32.xlu0 %v4557, 80
      %v4675 = vpop.permute.xlu0 %4674
      %v4677 = vsel %vm2084, %v4673, 0
      %v4680 = vsel %vm2084, %v4675, 0
      %4682 = vmatpush.bf16.xpose.msra.mxu0 0
      %4683 = vmatpush.bf16.xpose.msra.mxu0 0
      %4684 = vmatpush.bf16.xpose.msra.mxu0 0
      %4685 = vmatpush.bf16.xpose.msra.mxu0 0
      %4686 = vmatpush.bf16.xpose.msra.mxu0 0
      %4687 = vmatpush.bf16.xpose.msra.mxu0 0
      %4688 = vmatpush.bf16.xpose.msra.mxu0 0
      %4689 = vmatpush.bf16.xpose.msra.mxu0 %v4680
      %4690 = vmatmul.bf16.gmra.mxu0 %v4677
      %v4691 = vpop.f32.mrf.mxu0
      %v4692 = vadd.f32 0.0, %v4691
      %v4693 = vpop.f32.mrf.mxu0
      %4694 = vdwg.mxu0
      %v4695 = vsel %vm3488, -inf, %v4692
      %v4696 = vsel %vm2084, %v4695, -inf
      %4697 = vmax.xlane.f32.xlu0 %v4696
      %v4698 = vpop.xlane.xlu0 %4697
      %v4699 = vsub.f32 %v4695, %v4698
      %v4700 = vmul.f32 %v4699, 1.442695
      %v4701 = vpow.pop %v4700
      %v4702 = vsel %vm2084, %v4701, 0.0
      %4703 = vadd.xlane.f32.xlu0 %v4702
      %v4704 = vpop.xlane.xlu0 %4703
      %v4705 = vpack.c.bf16 %v4701, %v4701
      %4706 = vrot.lane.b32.xlu0 %v4557, 48
      %v4707 = vpop.permute.xlu0 %4706
      %v4709 = vsel %vm2084, %v4705, 0
      %v4712 = vsel %vm1517, %v4707, 0
      %4714 = vmatpush.bf16.msra.mxu0 0
      %4715 = vmatpush.bf16.msra.mxu0 0
      %4716 = vmatpush.bf16.msra.mxu0 0
      %4717 = vmatpush.bf16.msra.mxu0 0
      %4718 = vmatpush.bf16.msra.mxu0 0
      %4719 = vmatpush.bf16.msra.mxu0 0
      %4720 = vmatpush.bf16.msra.mxu0 0
      %4721 = vmatpush.bf16.msra.mxu0 %v4712
      %4722 = vmatmul.bf16.gmra.mxu0 %v4709
      %v4723 = vpop.f32.mrf.mxu0
      %v4724 = vadd.f32 0.0, %v4723
      %v4725 = vpop.f32.mrf.mxu0
      %4726 = vdwg.mxu0
      %v4727 = vrcp.pop %v4704
      %v4728 = vmul.f32 %v4724, %v4727
      %4729 = vrot.lane.b32.xlu0 %v4556, 104
      %v4730 = vpop.permute.xlu0 %4729
      %4731 = vrot.lane.b32.xlu0 %v4557, 72
      %v4732 = vpop.permute.xlu0 %4731
      %v4734 = vsel %vm2084, %v4730, 0
      %v4737 = vsel %vm2084, %v4732, 0
      %4739 = vmatpush.bf16.xpose.msra.mxu0 0
      %4740 = vmatpush.bf16.xpose.msra.mxu0 0
      %4741 = vmatpush.bf16.xpose.msra.mxu0 0
      %4742 = vmatpush.bf16.xpose.msra.mxu0 0
      %4743 = vmatpush.bf16.xpose.msra.mxu0 0
      %4744 = vmatpush.bf16.xpose.msra.mxu0 0
      %4745 = vmatpush.bf16.xpose.msra.mxu0 0
      %4746 = vmatpush.bf16.xpose.msra.mxu0 %v4737
      %4747 = vmatmul.bf16.gmra.mxu0 %v4734
      %v4748 = vpop.f32.mrf.mxu0
      %v4749 = vadd.f32 0.0, %v4748
      %v4750 = vpop.f32.mrf.mxu0
      %4751 = vdwg.mxu0
      %v4752 = vsel %vm3488, -inf, %v4749
      %v4753 = vsel %vm2084, %v4752, -inf
      %4754 = vmax.xlane.f32.xlu0 %v4753
      %v4755 = vpop.xlane.xlu0 %4754
      %v4756 = vsub.f32 %v4752, %v4755
      %v4757 = vmul.f32 %v4756, 1.442695
      %v4758 = vpow.pop %v4757
      %v4759 = vsel %vm2084, %v4758, 0.0
      %4760 = vadd.xlane.f32.xlu0 %v4759
      %v4761 = vpop.xlane.xlu0 %4760
      %v4762 = vpack.c.bf16 %v4758, %v4758
      %4763 = vrot.lane.b32.xlu0 %v4557, 40
      %v4764 = vpop.permute.xlu0 %4763
      %v4766 = vsel %vm2084, %v4762, 0
      %v4769 = vsel %vm1517, %v4764, 0
      %4771 = vmatpush.bf16.msra.mxu0 0
      %4772 = vmatpush.bf16.msra.mxu0 0
      %4773 = vmatpush.bf16.msra.mxu0 0
      %4774 = vmatpush.bf16.msra.mxu0 0
      %4775 = vmatpush.bf16.msra.mxu0 0
      %4776 = vmatpush.bf16.msra.mxu0 0
      %4777 = vmatpush.bf16.msra.mxu0 0
      %4778 = vmatpush.bf16.msra.mxu0 %v4769
      %4779 = vmatmul.bf16.gmra.mxu0 %v4766
      %v4780 = vpop.f32.mrf.mxu0
      %v4781 = vadd.f32 0.0, %v4780
      %v4782 = vpop.f32.mrf.mxu0
      %4783 = vdwg.mxu0
      %v4784 = vrcp.pop %v4761
      %v4785 = vmul.f32 %v4781, %v4784
      %4787 = vrot.lane.b32.xlu0 %v4671, 8
      %v4788 = vpop.permute.xlu0 %4787
      %4791 = vrot.lane.b32.xlu0 %v4728, 16
      %v4792 = vpop.permute.xlu0 %4791
      %4795 = vrot.lane.b32.xlu0 %v4785, 24
      %v4796 = vpop.permute.xlu0 %4795
      %v4798 = vsel %vm2084, %v4613, %v4788
      %v4799 = vsel %vm2090, %v4798, %v4792
      %v4800 = vsel %vm2096, %v4799, %v4796
      %v4801 = vpack.c.bf16 %v4800, %v4800
      %v4803 = vperm.slane %v4522, 0
      %v4809 = vunpack.c.l.b16 %v4517
      %v4810 = vunpack.c.l.b16 %v4518
      %v4811 = vunpack.c.l.b16 %v4519
      %v4812 = vunpack.c.l.b16 %v4520
      %v4813 = vpack.c.b16 %v4810, %v4809
      %v4814 = vpack.c.b16 %v4812, %v4811
      %v4818 = vsel %vm1357, %v4801, 0
      %4820 = vmatpush.bf16.msra.mxu0 0
      %4821 = vmatpush.bf16.msra.mxu0 0
      %4822 = vmatpush.bf16.msra.mxu0 0
      %4823 = vmatpush.bf16.msra.mxu0 0
      %4824 = vmatpush.bf16.msra.mxu0 0
      %4825 = vmatpush.bf16.msra.mxu0 0
      %4826 = vmatpush.bf16.msra.mxu0 %v4814
      %4827 = vmatpush.bf16.msra.mxu0 %v4813
      %4828 = vmatmul.bf16.gmra.mxu0 %v4818
      %v4829 = vpop.f32.mrf.mxu0
      %v4830 = vadd.f32 %v4803, %v4829
      %v4831 = vpop.f32.mrf.mxu0
      %4832 = vdwg.mxu0
      %v4833 = vadd.f32 %v4474, %v4830
      %s4834 = scalar_lea.vmem %s59, 1
      %v4835 = vld [vmem:[%s4834] sm:$0x1]
      %s4836 = scalar_lea.vmem %s61, 1
      %v4837 = vld [vmem:[%s4836] sm:$0x1]
      %v4838 = vsel %vm1357, %v4833, 0.0
      %4839 = vadd.xlane.f32.xlu0 %v4838
      %v4840 = vpop.xlane.xlu0 %4839
      %v4841 = vmul.f32 %v4840, %v1371
      %v4842 = vsub.f32 %v4833, %v4841
      %v4843 = vmul.f32 %v4842, %v4842
      %v4844 = vsel %vm1357, %v4843, 0.0
      %4845 = vadd.xlane.f32.xlu0 %v4844
      %v4846 = vpop.xlane.xlu0 %4845
      %v4847 = vmul.f32 %v4846, %v1371
      %v4848 = vadd.f32 %v4847, 1e-05
      %v4849 = vrsqrt.pop %v4848
      %v4850 = vmul.f32 %v4849, %v4848
      %v4851 = vmul.f32 %v4850, %v4849
      %v4852 = vmul.f32 0.5, %v4851
      %v4853 = vsub.f32 1.5, %v4852
      %v4854 = vmul.f32 %v4849, %v4853
      %vm4855 = vweird.f32 %v4848
      %vm4856 = vweird.f32 %v4849
      %vm4857 = vmor %vm4855, %vm4856
      %v4858 = vsel %vm4857, %v4849, %v4854
      %v4859 = vmul.f32 %v4842, %v4858
      %v4861 = vperm.slane %v4835, 0
      %v4863 = vmul.f32 %v4859, %v4861
      %v4865 = vperm.slane %v4837, 0
      %v4867 = vadd.f32 %v4863, %v4865
      %s4868 = scalar_lea.vmem %s63, 1
      %v4869 = vld [vmem:[%s4868] sm:$0x1]
      %s4870 = scalar_lea.vmem %s65, 1
      %v4871 = vld [vmem:[%s4870] sm:$0x1]
      %v4873 = vperm.slane %v4869, 0
      %v4875 = vmul.f32 %v3918, %v4873
      %v4876 = vmul.f32 %v3919, %v4873
      %v4878 = vperm.slane %v4871, 0
      %v4880 = vadd.f32 %v4875, %v4878
      %v4881 = vadd.f32 %v4876, %v4878
      %s4882 = scalar_lea.vmem %s67, 16
      %v4883 = vld [vmem:[%s4882] sm:$0xf]
      %v4884 = vld [vmem:[%s4882 + $0x4] sm:$0xf]
      %v4885 = vld [vmem:[%s4882 + $0x8] sm:$0xf]
      %v4886 = vld [vmem:[%s4882 + $0xc] sm:$0xf]
      %s4887 = scalar_lea.vmem %s69, 1
      %v4888 = vld [vmem:[%s4887] sm:$0x1]
      %s4889 = scalar_lea.vmem %s71, 16
      %v4890 = vld [vmem:[%s4889] sm:$0xf]
      %v4891 = vld [vmem:[%s4889 + $0x4] sm:$0xf]
      %v4892 = vld [vmem:[%s4889 + $0x8] sm:$0xf]
      %v4893 = vld [vmem:[%s4889 + $0xc] sm:$0xf]
      %s4894 = scalar_lea.vmem %s73, 1
      %v4895 = vld [vmem:[%s4894] sm:$0x1]
      %s4896 = scalar_lea.vmem %s75, 16
      %v4897 = vld [vmem:[%s4896] sm:$0xf]
      %v4898 = vld [vmem:[%s4896 + $0x4] sm:$0xf]
      %v4899 = vld [vmem:[%s4896 + $0x8] sm:$0xf]
      %v4900 = vld [vmem:[%s4896 + $0xc] sm:$0xf]
      %s4901 = scalar_lea.vmem %s77, 1
      %v4902 = vld [vmem:[%s4901] sm:$0x1]
      %v4903 = vpack.c.bf16 %v4867, %v4867
      %v4905 = vperm.slane %v4888, 0
      %v4911 = vunpack.c.l.b16 %v4883
      %v4912 = vunpack.c.l.b16 %v4884
      %v4913 = vunpack.c.l.b16 %v4885
      %v4914 = vunpack.c.l.b16 %v4886
      %v4915 = vpack.c.b16 %v4912, %v4911
      %v4916 = vpack.c.b16 %v4914, %v4913
      %v4920 = vsel %vm1357, %v4903, 0
      %4922 = vmatpush.bf16.msra.mxu0 0
      %4923 = vmatpush.bf16.msra.mxu0 0
      %4924 = vmatpush.bf16.msra.mxu0 0
      %4925 = vmatpush.bf16.msra.mxu0 0
      %4926 = vmatpush.bf16.msra.mxu0 0
      %4927 = vmatpush.bf16.msra.mxu0 0
      %4928 = vmatpush.bf16.msra.mxu0 %v4916
      %4929 = vmatpush.bf16.msra.mxu0 %v4915
      %4930 = vmatmul.bf16.gmra.mxu0 %v4920
      %v4931 = vpop.f32.mrf.mxu0
      %v4932 = vadd.f32 %v4905, %v4931
      %v4933 = vpop.f32.mrf.mxu0
      %4934 = vdwg.mxu0
      %v4935 = vmul.f32 %v4932, 0.35355338
      %v4936 = vpack.c.bf16 %v4881, %v4880
      %v4938 = vperm.slane %v4895, 0
      %v4944 = vunpack.c.l.b16 %v4890
      %v4945 = vunpack.c.l.b16 %v4891
      %v4946 = vunpack.c.l.b16 %v4892
      %v4947 = vunpack.c.l.b16 %v4893
      %v4948 = vpack.c.b16 %v4945, %v4944
      %v4949 = vpack.c.b16 %v4947, %v4946
      %v4953 = vsel %vm1357, %v4936, 0
      %4955 = vmatpush.bf16.msra.mxu0 0
      %4956 = vmatpush.bf16.msra.mxu0 0
      %4957 = vmatpush.bf16.msra.mxu0 0
      %4958 = vmatpush.bf16.msra.mxu0 0
      %4959 = vmatpush.bf16.msra.mxu0 0
      %4960 = vmatpush.bf16.msra.mxu0 0
      %4961 = vmatpush.bf16.msra.mxu0 %v4949
      %4962 = vmatpush.bf16.msra.mxu0 %v4948
      %4963 = vmatmul.bf16.gmra.mxu0 %v4953
      %v4964 = vpop.f32.mrf.mxu0
      %v4965 = vadd.f32 %v4938, %v4964
      %v4966 = vpop.f32.mrf.mxu0
      %v4967 = vadd.f32 %v4938, %v4966
      %4968 = vdwg.mxu0
      %v4969 = vpack.c.bf16 %v4935, %v4935
      %v4970 = vpack.c.bf16 %v4967, %v4965
      %v4972 = vsel %vm2084, %v4969, 0
      %v4975 = vsel %vm2084, %v4970, 0
      %4977 = vmatpush.bf16.xpose.msra.mxu0 0
      %4978 = vmatpush.bf16.xpose.msra.mxu0 0
      %4979 = vmatpush.bf16.xpose.msra.mxu0 0
      %4980 = vmatpush.bf16.xpose.msra.mxu0 0
      %4981 = vmatpush.bf16.xpose.msra.mxu0 0
      %4982 = vmatpush.bf16.xpose.msra.mxu0 0
      %4983 = vmatpush.bf16.xpose.msra.mxu0 0
      %4984 = vmatpush.bf16.xpose.msra.mxu0 %v4975
      %4985 = vmatmul.bf16.gmra.mxu0 %v4972
      %v4986 = vpop.f32.mrf.mxu0
      %v4987 = vadd.f32 0.0, %v4986
      %v4988 = vpop.f32.mrf.mxu0
      %4989 = vdwg.mxu0
      %v4990 = vsel %vm1491, %v4987, -inf
      %4991 = vmax.xlane.f32.xlu0 %v4990
      %v4992 = vpop.xlane.xlu0 %4991
      %v4993 = vsub.f32 %v4987, %v4992
      %v4994 = vmul.f32 %v4993, 1.442695
      %v4995 = vpow.pop %v4994
      %v4996 = vsel %vm1491, %v4995, 0.0
      %4997 = vadd.xlane.f32.xlu0 %v4996
      %v4998 = vpop.xlane.xlu0 %4997
      %v4999 = vpack.c.bf16 %v4995, %v4995
      %5001 = vrot.lane.b32.xlu0 %v4970, 96
      %v5002 = vpop.permute.xlu0 %5001
      %v5004 = vsel %vm1491, %v4999, 0
      %v5007 = vand.u32 %v5002, %v1520
      %5009 = vmatpush.bf16.msra.mxu0 0
      %5010 = vmatpush.bf16.msra.mxu0 0
      %5011 = vmatpush.bf16.msra.mxu0 0
      %5012 = vmatpush.bf16.msra.mxu0 0
      %5013 = vmatpush.bf16.msra.mxu0 0
      %5014 = vmatpush.bf16.msra.mxu0 0
      %5015 = vmatpush.bf16.msra.mxu0 0
      %5016 = vmatpush.bf16.msra.mxu0 %v5007
      %5017 = vmatmul.bf16.gmra.mxu0 %v5004
      %v5018 = vpop.f32.mrf.mxu0
      %v5019 = vadd.f32 0.0, %v5018
      %v5020 = vpop.f32.mrf.mxu0
      %5021 = vdwg.mxu0
      %v5022 = vrcp.pop %v4998
      %v5023 = vmul.f32 %v5019, %v5022
      %5025 = vrot.lane.b32.xlu0 %v4969, 120
      %v5026 = vpop.permute.xlu0 %5025
      %5027 = vrot.lane.b32.xlu0 %v4970, 120
      %v5028 = vpop.permute.xlu0 %5027
      %v5030 = vsel %vm2084, %v5026, 0
      %v5033 = vsel %vm2084, %v5028, 0
      %5035 = vmatpush.bf16.xpose.msra.mxu0 0
      %5036 = vmatpush.bf16.xpose.msra.mxu0 0
      %5037 = vmatpush.bf16.xpose.msra.mxu0 0
      %5038 = vmatpush.bf16.xpose.msra.mxu0 0
      %5039 = vmatpush.bf16.xpose.msra.mxu0 0
      %5040 = vmatpush.bf16.xpose.msra.mxu0 0
      %5041 = vmatpush.bf16.xpose.msra.mxu0 0
      %5042 = vmatpush.bf16.xpose.msra.mxu0 %v5033
      %5043 = vmatmul.bf16.gmra.mxu0 %v5030
      %v5044 = vpop.f32.mrf.mxu0
      %v5045 = vadd.f32 0.0, %v5044
      %v5046 = vpop.f32.mrf.mxu0
      %5047 = vdwg.mxu0
      %v5048 = vsel %vm1491, %v5045, -inf
      %5049 = vmax.xlane.f32.xlu0 %v5048
      %v5050 = vpop.xlane.xlu0 %5049
      %v5051 = vsub.f32 %v5045, %v5050
      %v5052 = vmul.f32 %v5051, 1.442695
      %v5053 = vpow.pop %v5052
      %v5054 = vsel %vm1491, %v5053, 0.0
      %5055 = vadd.xlane.f32.xlu0 %v5054
      %v5056 = vpop.xlane.xlu0 %5055
      %v5057 = vpack.c.bf16 %v5053, %v5053
      %5058 = vrot.lane.b32.xlu0 %v4970, 88
      %v5059 = vpop.permute.xlu0 %5058
      %v5061 = vsel %vm1491, %v5057, 0
      %v5064 = vand.u32 %v5059, %v1520
      %5066 = vmatpush.bf16.msra.mxu0 0
      %5067 = vmatpush.bf16.msra.mxu0 0
      %5068 = vmatpush.bf16.msra.mxu0 0
      %5069 = vmatpush.bf16.msra.mxu0 0
      %5070 = vmatpush.bf16.msra.mxu0 0
      %5071 = vmatpush.bf16.msra.mxu0 0
      %5072 = vmatpush.bf16.msra.mxu0 0
      %5073 = vmatpush.bf16.msra.mxu0 %v5064
      %5074 = vmatmul.bf16.gmra.mxu0 %v5061
      %v5075 = vpop.f32.mrf.mxu0
      %v5076 = vadd.f32 0.0, %v5075
      %v5077 = vpop.f32.mrf.mxu0
      %5078 = vdwg.mxu0
      %v5079 = vrcp.pop %v5056
      %v5080 = vmul.f32 %v5076, %v5079
      %5081 = vrot.lane.b32.xlu0 %v4969, 112
      %v5082 = vpop.permute.xlu0 %5081
      %5083 = vrot.lane.b32.xlu0 %v4970, 112
      %v5084 = vpop.permute.xlu0 %5083
      %v5086 = vsel %vm2084, %v5082, 0
      %v5089 = vsel %vm2084, %v5084, 0
      %5091 = vmatpush.bf16.xpose.msra.mxu0 0
      %5092 = vmatpush.bf16.xpose.msra.mxu0 0
      %5093 = vmatpush.bf16.xpose.msra.mxu0 0
      %5094 = vmatpush.bf16.xpose.msra.mxu0 0
      %5095 = vmatpush.bf16.xpose.msra.mxu0 0
      %5096 = vmatpush.bf16.xpose.msra.mxu0 0
      %5097 = vmatpush.bf16.xpose.msra.mxu0 0
      %5098 = vmatpush.bf16.xpose.msra.mxu0 %v5089
      %5099 = vmatmul.bf16.gmra.mxu0 %v5086
      %v5100 = vpop.f32.mrf.mxu0
      %v5101 = vadd.f32 0.0, %v5100
      %v5102 = vpop.f32.mrf.mxu0
      %5103 = vdwg.mxu0
      %v5104 = vsel %vm1491, %v5101, -inf
      %5105 = vmax.xlane.f32.xlu0 %v5104
      %v5106 = vpop.xlane.xlu0 %5105
      %v5107 = vsub.f32 %v5101, %v5106
      %v5108 = vmul.f32 %v5107, 1.442695
      %v5109 = vpow.pop %v5108
      %v5110 = vsel %vm1491, %v5109, 0.0
      %5111 = vadd.xlane.f32.xlu0 %v5110
      %v5112 = vpop.xlane.xlu0 %5111
      %v5113 = vpack.c.bf16 %v5109, %v5109
      %5114 = vrot.lane.b32.xlu0 %v4970, 80
      %v5115 = vpop.permute.xlu0 %5114
      %v5117 = vsel %vm1491, %v5113, 0
      %v5120 = vand.u32 %v5115, %v1520
      %5122 = vmatpush.bf16.msra.mxu0 0
      %5123 = vmatpush.bf16.msra.mxu0 0
      %5124 = vmatpush.bf16.msra.mxu0 0
      %5125 = vmatpush.bf16.msra.mxu0 0
      %5126 = vmatpush.bf16.msra.mxu0 0
      %5127 = vmatpush.bf16.msra.mxu0 0
      %5128 = vmatpush.bf16.msra.mxu0 0
      %5129 = vmatpush.bf16.msra.mxu0 %v5120
      %5130 = vmatmul.bf16.gmra.mxu0 %v5117
      %v5131 = vpop.f32.mrf.mxu0
      %v5132 = vadd.f32 0.0, %v5131
      %v5133 = vpop.f32.mrf.mxu0
      %5134 = vdwg.mxu0
      %v5135 = vrcp.pop %v5112
      %v5136 = vmul.f32 %v5132, %v5135
      %5137 = vrot.lane.b32.xlu0 %v4969, 104
      %v5138 = vpop.permute.xlu0 %5137
      %5139 = vrot.lane.b32.xlu0 %v4970, 104
      %v5140 = vpop.permute.xlu0 %5139
      %v5142 = vsel %vm2084, %v5138, 0
      %v5145 = vsel %vm2084, %v5140, 0
      %5147 = vmatpush.bf16.xpose.msra.mxu0 0
      %5148 = vmatpush.bf16.xpose.msra.mxu0 0
      %5149 = vmatpush.bf16.xpose.msra.mxu0 0
      %5150 = vmatpush.bf16.xpose.msra.mxu0 0
      %5151 = vmatpush.bf16.xpose.msra.mxu0 0
      %5152 = vmatpush.bf16.xpose.msra.mxu0 0
      %5153 = vmatpush.bf16.xpose.msra.mxu0 0
      %5154 = vmatpush.bf16.xpose.msra.mxu0 %v5145
      %5155 = vmatmul.bf16.gmra.mxu0 %v5142
      %v5156 = vpop.f32.mrf.mxu0
      %v5157 = vadd.f32 0.0, %v5156
      %v5158 = vpop.f32.mrf.mxu0
      %5159 = vdwg.mxu0
      %v5160 = vsel %vm1491, %v5157, -inf
      %5161 = vmax.xlane.f32.xlu0 %v5160
      %v5162 = vpop.xlane.xlu0 %5161
      %v5163 = vsub.f32 %v5157, %v5162
      %v5164 = vmul.f32 %v5163, 1.442695
      %v5165 = vpow.pop %v5164
      %v5166 = vsel %vm1491, %v5165, 0.0
      %5167 = vadd.xlane.f32.xlu0 %v5166
      %v5168 = vpop.xlane.xlu0 %5167
      %v5169 = vpack.c.bf16 %v5165, %v5165
      %5170 = vrot.lane.b32.xlu0 %v4970, 72
      %v5171 = vpop.permute.xlu0 %5170
      %v5173 = vsel %vm1491, %v5169, 0
      %v5176 = vand.u32 %v5171, %v1520
      %5178 = vmatpush.bf16.msra.mxu0 0
      %5179 = vmatpush.bf16.msra.mxu0 0
      %5180 = vmatpush.bf16.msra.mxu0 0
      %5181 = vmatpush.bf16.msra.mxu0 0
      %5182 = vmatpush.bf16.msra.mxu0 0
      %5183 = vmatpush.bf16.msra.mxu0 0
      %5184 = vmatpush.bf16.msra.mxu0 0
      %5185 = vmatpush.bf16.msra.mxu0 %v5176
      %5186 = vmatmul.bf16.gmra.mxu0 %v5173
      %v5187 = vpop.f32.mrf.mxu0
      %v5188 = vadd.f32 0.0, %v5187
      %v5189 = vpop.f32.mrf.mxu0
      %5190 = vdwg.mxu0
      %v5191 = vrcp.pop %v5168
      %v5192 = vmul.f32 %v5188, %v5191
      %5194 = vrot.lane.b32.xlu0 %v5080, 8
      %v5195 = vpop.permute.xlu0 %5194
      %5198 = vrot.lane.b32.xlu0 %v5136, 16
      %v5199 = vpop.permute.xlu0 %5198
      %5202 = vrot.lane.b32.xlu0 %v5192, 24
      %v5203 = vpop.permute.xlu0 %5202
      %v5205 = vsel %vm2084, %v5023, %v5195
      %v5206 = vsel %vm2090, %v5205, %v5199
      %v5207 = vsel %vm2096, %v5206, %v5203
      %v5208 = vpack.c.bf16 %v5207, %v5207
      %v5210 = vperm.slane %v4902, 0
      %v5216 = vunpack.c.l.b16 %v4897
      %v5217 = vunpack.c.l.b16 %v4898
      %v5218 = vunpack.c.l.b16 %v4899
      %v5219 = vunpack.c.l.b16 %v4900
      %v5220 = vpack.c.b16 %v5217, %v5216
      %v5221 = vpack.c.b16 %v5219, %v5218
      %v5225 = vsel %vm1357, %v5208, 0
      %5227 = vmatpush.bf16.msra.mxu0 0
      %5228 = vmatpush.bf16.msra.mxu0 0
      %5229 = vmatpush.bf16.msra.mxu0 0
      %5230 = vmatpush.bf16.msra.mxu0 0
      %5231 = vmatpush.bf16.msra.mxu0 0
      %5232 = vmatpush.bf16.msra.mxu0 0
      %5233 = vmatpush.bf16.msra.mxu0 %v5221
      %5234 = vmatpush.bf16.msra.mxu0 %v5220
      %5235 = vmatmul.bf16.gmra.mxu0 %v5225
      %v5236 = vpop.f32.mrf.mxu0
      %v5237 = vadd.f32 %v5210, %v5236
      %v5238 = vpop.f32.mrf.mxu0
      %5239 = vdwg.mxu0
      %v5240 = vadd.f32 %v4833, %v5237
      %s5241 = scalar_lea.vmem %s79, 1
      %v5242 = vld [vmem:[%s5241] sm:$0x1]
      %s5243 = scalar_lea.vmem %s81, 1
      %v5244 = vld [vmem:[%s5243] sm:$0x1]
      %v5245 = vsel %vm1357, %v5240, 0.0
      %5246 = vadd.xlane.f32.xlu0 %v5245
      %v5247 = vpop.xlane.xlu0 %5246
      %v5248 = vmul.f32 %v5247, %v1371
      %v5249 = vsub.f32 %v5240, %v5248
      %v5250 = vmul.f32 %v5249, %v5249
      %v5251 = vsel %vm1357, %v5250, 0.0
      %5252 = vadd.xlane.f32.xlu0 %v5251
      %v5253 = vpop.xlane.xlu0 %5252
      %v5254 = vmul.f32 %v5253, %v1371
      %v5255 = vadd.f32 %v5254, 1e-05
      %v5256 = vrsqrt.pop %v5255
      %v5257 = vmul.f32 %v5256, %v5255
      %v5258 = vmul.f32 %v5257, %v5256
      %v5259 = vmul.f32 0.5, %v5258
      %v5260 = vsub.f32 1.5, %v5259
      %v5261 = vmul.f32 %v5256, %v5260
      %vm5262 = vweird.f32 %v5255
      %vm5263 = vweird.f32 %v5256
      %vm5264 = vmor %vm5262, %vm5263
      %v5265 = vsel %vm5264, %v5256, %v5261
      %v5266 = vmul.f32 %v5249, %v5265
      %v5268 = vperm.slane %v5242, 0
      %v5270 = vmul.f32 %v5266, %v5268
      %v5272 = vperm.slane %v5244, 0
      %v5274 = vadd.f32 %v5270, %v5272
      %s5275 = scalar_lea.vmem %s83, 16
      %v5276 = vld [vmem:[%s5275] sm:$0xf]
      %v5277 = vld [vmem:[%s5275 + $0x4] sm:$0xf]
      %v5278 = vld [vmem:[%s5275 + $0x8] sm:$0xf]
      %v5279 = vld [vmem:[%s5275 + $0xc] sm:$0xf]
      %s5280 = scalar_lea.vmem %s85, 1
      %v5281 = vld [vmem:[%s5280] sm:$0x1]
      %s5282 = scalar_lea.vmem %s87, 64
      %v5283 = vld [vmem:[%s5282] sm:$0xf]
      %v5284 = vld [vmem:[%s5282 + $0x4] sm:$0xf]
      %v5285 = vld [vmem:[%s5282 + $0x8] sm:$0xf]
      %v5286 = vld [vmem:[%s5282 + $0xc] sm:$0xf]
      %v5287 = vld [vmem:[%s5282 + $0x10] sm:$0xf]
      %v5288 = vld [vmem:[%s5282 + $0x14] sm:$0xf]
      %v5289 = vld [vmem:[%s5282 + $0x18] sm:$0xf]
      %v5290 = vld [vmem:[%s5282 + $0x1c] sm:$0xf]
      %v5291 = vld [vmem:[%s5282 + $0x20] sm:$0xf]
      %v5292 = vld [vmem:[%s5282 + $0x24] sm:$0xf]
      %v5293 = vld [vmem:[%s5282 + $0x28] sm:$0xf]
      %v5294 = vld [vmem:[%s5282 + $0x2c] sm:$0xf]
      %v5295 = vld [vmem:[%s5282 + $0x30] sm:$0xf]
      %v5296 = vld [vmem:[%s5282 + $0x34] sm:$0xf]
      %v5297 = vld [vmem:[%s5282 + $0x38] sm:$0xf]
      %v5298 = vld [vmem:[%s5282 + $0x3c] sm:$0xf]
      %s5299 = scalar_lea.vmem %s89, 1
      %v5300 = vld [vmem:[%s5299] sm:$0x1]
      %v5301 = vpack.c.bf16 %v5274, %v5274
      %v5303 = vperm.slane %v5281, 0
      %v5309 = vunpack.c.l.b16 %v5276
      %v5310 = vunpack.c.l.b16 %v5277
      %v5311 = vunpack.c.l.b16 %v5278
      %v5312 = vunpack.c.l.b16 %v5279
      %v5313 = vpack.c.b16 %v5310, %v5309
      %v5314 = vpack.c.b16 %v5312, %v5311
      %v5318 = vsel %vm1357, %v5301, 0
      %5320 = vmatpush.bf16.msra.mxu0 0
      %5321 = vmatpush.bf16.msra.mxu0 0
      %5322 = vmatpush.bf16.msra.mxu0 0
      %5323 = vmatpush.bf16.msra.mxu0 0
      %5324 = vmatpush.bf16.msra.mxu0 0
      %5325 = vmatpush.bf16.msra.mxu0 0
      %5326 = vmatpush.bf16.msra.mxu0 %v5314
      %5327 = vmatpush.bf16.msra.mxu0 %v5313
      %5328 = vmatmul.bf16.gmra.mxu0 %v5318
      %v5329 = vpop.f32.mrf.mxu0
      %v5330 = vadd.f32 %v5303, %v5329
      %v5331 = vpop.f32.mrf.mxu0
      %5332 = vdwg.mxu0
      %v5333 = vmul.f32 %v5330, 0.5
      %v5334 = vmul.f32 %v5330, 0.70710677
      %v5335 = vand.u32 2147483647, %v5334
      %v5336 = vmul.f32 %v5335, 0.3275911
      %v5337 = vadd.f32 %v5336, 1.0
      %v5338 = vrcp.pop %v5337
      %v5339 = vmul.f32 %v5337, %v5338
      %v5340 = vsub.f32 1.0, %v5339
      %v5341 = vmul.f32 %v5338, %v5340
      %v5342 = vadd.f32 %v5338, %v5341
      %vm5343 = vweird.f32 %v5337
      %vm5344 = vweird.f32 %v5338
      %vm5345 = vmor %vm5343, %vm5344
      %v5346 = vsel %vm5345, %v5338, %v5342
      %v5347 = vand.u32 2147483647, %v5337
      %vm5348 = vcmp.eq.f32.partialorder %v5347, 8.507059e+37
      %v5349 = vand.u32 %v5337, 2147483648
      %v5350 = vor.u32 1.1754944e-38, %v5349
      %v5351 = vsel %vm5348, %v5350, %v5346
      %v5352 = vmul.f32 1.0, %v5351
      %v5353 = vmul.f32 %v5352, 1.0614054
      %v5354 = vadd.f32 %v5353, -1.4531521
      %v5355 = vmul.f32 %v5354, %v5352
      %v5356 = vadd.f32 %v5355, 1.4214138
      %v5357 = vmul.f32 %v5356, %v5352
      %v5358 = vadd.f32 %v5357, -0.28449672
      %v5359 = vmul.f32 %v5358, %v5352
      %v5360 = vadd.f32 %v5359, 0.2548296
      %v5361 = vmul.f32 %v5360, %v5352
      %v5362 = vsub.f32 0.0, %v5335
      %v5363 = vmul.f32 %v5362, %v5335
      %v5364 = vmul.f32 %v5363, 1.442695
      %v5365 = vpow.pop %v5364
      %v5366 = vmul.f32 %v5361, %v5365
      %v5367 = vsub.f32 1.0, %v5366
      %vm5368 = vcmp.ge.f32.partialorder %v5334, 0.0
      %v5369 = vsub.f32 0.0, %v5367
      %v5370 = vsel %vm5368, %v5367, %v5369
      %v5371 = vadd.f32 %v5370, 1.0
      %v5372 = vmul.f32 %v5333, %v5371
      %v5373 = vpack.c.bf16 %v5372, %v5372
      %v5375 = vperm.slane %v5300, 0
      %v5393 = vunpack.c.l.b16 %v5283
      %v5394 = vunpack.c.l.b16 %v5284
      %v5395 = vunpack.c.l.b16 %v5285
      %v5396 = vunpack.c.l.b16 %v5286
      %v5397 = vunpack.c.l.b16 %v5287
      %v5398 = vunpack.c.l.b16 %v5288
      %v5399 = vunpack.c.l.b16 %v5289
      %v5400 = vunpack.c.l.b16 %v5290
      %v5401 = vunpack.c.l.b16 %v5291
      %v5402 = vunpack.c.l.b16 %v5292
      %v5403 = vunpack.c.l.b16 %v5293
      %v5404 = vunpack.c.l.b16 %v5294
      %v5405 = vunpack.c.l.b16 %v5295
      %v5406 = vunpack.c.l.b16 %v5296
      %v5407 = vunpack.c.l.b16 %v5297
      %v5408 = vunpack.c.l.b16 %v5298
      %v5409 = vpack.c.b16 %v5394, %v5393
      %v5410 = vpack.c.b16 %v5396, %v5395
      %v5411 = vpack.c.b16 %v5398, %v5397
      %v5412 = vpack.c.b16 %v5400, %v5399
      %v5413 = vpack.c.b16 %v5402, %v5401
      %v5414 = vpack.c.b16 %v5404, %v5403
      %v5415 = vpack.c.b16 %v5406, %v5405
      %v5416 = vpack.c.b16 %v5408, %v5407
      %5425 = vmatpush.bf16.msra.mxu0 %v5416
      %5426 = vmatpush.bf16.msra.mxu0 %v5415
      %5427 = vmatpush.bf16.msra.mxu0 %v5414
      %5428 = vmatpush.bf16.msra.mxu0 %v5413
      %5429 = vmatpush.bf16.msra.mxu0 %v5412
      %5430 = vmatpush.bf16.msra.mxu0 %v5411
      %5431 = vmatpush.bf16.msra.mxu0 %v5410
      %5432 = vmatpush.bf16.msra.mxu0 %v5409
      %5433 = vmatmul.bf16.gmra.mxu0 %v5373
      %v5434 = vpop.f32.mrf.mxu0
      %v5435 = vadd.f32 %v5375, %v5434
      %v5436 = vpop.f32.mrf.mxu0
      %5437 = vdwg.mxu0
      %v5438 = vadd.f32 %v5240, %v5435
      %v5439 = vsel %vm1357, %v5438, 0.0
      %v5440 = vrot.slane %v5439, 4
      %v5441 = vadd.f32 %v5439, %v5440
      %v5442 = vrot.slane %v5441, 2
      %v5443 = vadd.f32 %v5441, %v5442
      %v5444 = vrot.slane %v5443, 1
      %v5445 = vadd.f32 %v5443, %v5444
      %v5446 = vrcp.pop 8.0
      %v5447 = vmul.f32 8.0, %v5446
      %v5448 = vsub.f32 1.0, %v5447
      %v5449 = vmul.f32 %v5446, %v5448
      %v5450 = vadd.f32 %v5446, %v5449
      %vm5451 = vweird.f32 %v5446
      %v5452 = vsel %vm5451, %v5446, %v5450
      %v5453 = vmul.f32 %v5445, %v5452
      %v5454 = vpack.c.bf16 %v5438, %v5438
      %v5455 = vld [vmem:[%s13] sm:$0xf]
      %v5456 = vld [vmem:[%s13 + $0x4] sm:$0xf]
      %v5457 = vld [vmem:[%s13 + $0x8] sm:$0xf]
      %v5458 = vld [vmem:[%s13 + $0xc] sm:$0xf]
      %v5459 = vld [vmem:[%s15] sm:$0x1]
      %v5461 = vperm.slane %v5459, 0
      %v5467 = vunpack.c.l.b16 %v5455
      %v5468 = vunpack.c.l.b16 %v5456
      %v5469 = vunpack.c.l.b16 %v5457
      %v5470 = vunpack.c.l.b16 %v5458
      %v5471 = vpack.c.b16 %v5468, %v5467
      %v5472 = vpack.c.b16 %v5470, %v5469
      %v5476 = vsel %vm1357, %v5454, 0
      %5478 = vmatpush.bf16.msra.mxu0 0
      %5479 = vmatpush.bf16.msra.mxu0 0
      %5480 = vmatpush.bf16.msra.mxu0 0
      %5481 = vmatpush.bf16.msra.mxu0 0
      %5482 = vmatpush.bf16.msra.mxu0 0
      %5483 = vmatpush.bf16.msra.mxu0 0
      %5484 = vmatpush.bf16.msra.mxu0 %v5472
      %5485 = vmatpush.bf16.msra.mxu0 %v5471
      %5486 = vmatmul.bf16.gmra.mxu0 %v5476
      %v5487 = vpop.f32.mrf.mxu0
      %v5488 = vadd.f32 %v5461, %v5487
      %v5489 = vpop.f32.mrf.mxu0
      %5490 = vdwg.mxu0
      %v5491 = vpack.c.bf16 %v3482, %v3482
      %v5492 = vld [vmem:[%s17] sm:$0xf]
      %v5493 = vld [vmem:[%s17 + $0x4] sm:$0xf]
      %v5494 = vld [vmem:[%s17 + $0x8] sm:$0xf]
      %v5495 = vld [vmem:[%s17 + $0xc] sm:$0xf]
      %v5496 = vpack.c.bf16 %v5453, %v5453
      %v5497 = vld [vmem:[%s19] sm:$0xf]
      %v5498 = vld [vmem:[%s19 + $0x4] sm:$0xf]
      %v5499 = vld [vmem:[%s19 + $0x8] sm:$0xf]
      %v5500 = vld [vmem:[%s19 + $0xc] sm:$0xf]
      %v5505 = vunpack.c.l.b16 %v5497
      %v5506 = vunpack.c.l.b16 %v5498
      %v5507 = vunpack.c.l.b16 %v5499
      %v5508 = vunpack.c.l.b16 %v5500
      %v5509 = vpack.c.b16 %v5506, %v5505
      %v5510 = vpack.c.b16 %v5508, %v5507
      %v5514 = vsel %vm1357, %v5496, 0
      %5516 = vmatpush.bf16.msra.mxu0 0
      %5517 = vmatpush.bf16.msra.mxu0 0
      %5518 = vmatpush.bf16.msra.mxu0 0
      %5519 = vmatpush.bf16.msra.mxu0 0
      %5520 = vmatpush.bf16.msra.mxu0 0
      %5521 = vmatpush.bf16.msra.mxu0 0
      %5522 = vmatpush.bf16.msra.mxu0 %v5510
      %5523 = vmatpush.bf16.msra.mxu0 %v5509
      %5524 = vmatmul.bf16.gmra.mxu0 %v5514
      %v5525 = vpop.f32.mrf.mxu0
      %v5526 = vadd.f32 0.0, %v5525
      %v5527 = vpop.f32.mrf.mxu0
      %5528 = vdwg.mxu0
      %v5533 = vunpack.c.l.b16 %v5492
      %v5534 = vunpack.c.l.b16 %v5493
      %v5535 = vunpack.c.l.b16 %v5494
      %v5536 = vunpack.c.l.b16 %v5495
      %v5537 = vpack.c.b16 %v5534, %v5533
      %v5538 = vpack.c.b16 %v5536, %v5535
      %v5542 = vsel %vm1357, %v5491, 0
      %5544 = vmatpush.bf16.msra.mxu0 0
      %5545 = vmatpush.bf16.msra.mxu0 0
      %5546 = vmatpush.bf16.msra.mxu0 0
      %5547 = vmatpush.bf16.msra.mxu0 0
      %5548 = vmatpush.bf16.msra.mxu0 0
      %5549 = vmatpush.bf16.msra.mxu0 0
      %5550 = vmatpush.bf16.msra.mxu0 %v5538
      %5551 = vmatpush.bf16.msra.mxu0 %v5537
      %5552 = vmatmul.bf16.gmra.mxu0 %v5542
      %v5553 = vpop.f32.mrf.mxu0
      %v5554 = vadd.f32 %v5526, %v5553
      %v5555 = vpop.f32.mrf.mxu0
      %5556 = vdwg.mxu0
      %v5557 = vld [vmem:[%s21] sm:$0x1]
      %v5558 = vadd.f32 %v5554, %v5557
      %v5560 = vrot.slane %v5488, 7
      %vm5562 = vcmask 1040384
      %v5563 = vsel %vm5562, %v5558, %v5560
      %vm5564 = vcmask 80896
      %5565 = vst.msk [vmem:[%s1347] sm:$0xff] %vm5564, %v5563
      %vm5566 = vcmask 73728
      %5567 = vst.msk [vmem:[%s1347 + $0x8] sm:$0x1] %vm5566, %v5560
      %p5568 = scmp.lt.s32.totalorder %s102, 1
      %s5569 = scalar_select %p5568, %s102, 1
      %s5570 = smul.addr %s5569, 2
      %s5571 = smul.addr %s5570, 8
      %s5572 = scalar_lea.vmem %s91, %s5571
      // Predicated region
      $region201: #{oad_transformer_forward.1} parent=199 // pred_check
        %p5573 = pneg %p1070
      $region202: #{oad_transformer_forward.1} parent=199 // pred_check_branch
        %5575 = sbr.rel (%p5573) target = $region204
      $region203: #{oad_transformer_forward.1} parent=199 // pred_region
        _
      $region204: #{oad_transformer_forward.1} parent=199 // pred_fallthru
        _
    $region200: #{oad_transformer_forward.1} parent=5 // pred_fallthru
      _
    %p5576 = scmp.le.s32.totalorder 2, %s97
    // Predicated region
    $region205: #{oad_transformer_forward.1} parent=5 // pred_check
      %p5577 = pneg %p5576
    $region206: #{oad_transformer_forward.1} parent=5 // pred_check_branch
      %5579 = sbr.rel (%p5577) target = $region208
    $region207: #{oad_transformer_forward.1} parent=5 // pred_region
      %s5580 = ssub.s32 %s97, 2
      // Predicated region
      $region209: #{oad_transformer_forward.1} parent=207 // pred_check
        %p5581 = pneg %p1076
      $region210: #{oad_transformer_forward.1} parent=207 // pred_check_branch
        %5583 = sbr.rel (%p5581) target = $region212
      $region211: #{oad_transformer_forward.1} parent=207 // pred_region
        %p5584 = scmp.lt.s32.totalorder %s103, 1
        %s5585 = scalar_select %p5584, %s103, 1
        %s5586 = smul.addr %s5585, 2
        %s5587 = smul.addr %s5586, 8
        %s5588 = scalar_lea.vmem %s91, %s5587
      $region212: #{oad_transformer_forward.1} parent=207 // pred_fallthru
        _
    $region208: #{oad_transformer_forward.1} parent=5 // pred_fallthru
      _
  $region6: #{oad_transformer_forward.1} parent=0 // loop_footer
    %s101 = sadd.s32 1, %s97
  $region7: #{oad_transformer_forward.1} parent=0 // loop_footer_branch
    %96 = sbr.rel target = $region3
  $region8: #{oad_transformer_forward.1} parent=0 // loop_exit
    _

</llo_original>
